<compile_context>
chip_gen: v6e
topology: v6e:2x2x1
jax: 0.10.0
libtpu: 0.0.40
codegen_flags: <defaults>
</compile_context>

<pallas_src>
import functools

import jax
import jax.numpy as jnp
import numpy as np
from jax import lax
from jax.experimental import pallas as pl
from jax.experimental.pallas import tpu as pltpu

EPS = 1e-5


def _round_up(x, m):
    return ((x + m - 1) // m) * m


# ---------------------------------------------------------------------------
# In-kernel helpers
# ---------------------------------------------------------------------------

def _conv_from_window(window, w_ref, offsets, hp, tr):
    """window: (tr + 2*hp, C) rows of the padded-flat activation (bf16).
    Builds the (tr, 9*C) im2col slab in VMEM from 9 shifted slices and runs a
    single fused-K MXU matmul against w_ref (9*C, Cout). Returns (tr, Cout) f32."""
    taps = jnp.concatenate(
        [window[hp + off: hp + off + tr, :] for off in offsets], axis=1)
    return jnp.dot(taps, w_ref[...], preferred_element_type=jnp.float32)


def _masked_moments(vals, mask_col):
    """Per-channel (sum, sum_sq) over rows where mask_col > 0.5 -> (2, C) f32."""
    m = mask_col > 0.5
    s = jnp.sum(jnp.where(m, vals, 0.0), axis=0, keepdims=True)
    ss = jnp.sum(jnp.where(m, vals * vals, 0.0), axis=0, keepdims=True)
    return jnp.concatenate([s, ss], axis=0)


# ---------------------------------------------------------------------------
# Kernels
# ---------------------------------------------------------------------------

def _conv1_kernel(xin_cur, xin_nxt, mask_cur, w1_ref, raw1_ref, part1_ref,
                  *, offsets, hp, tr):
    """conv1 (fused-K 3x3) of one row tile + masked partial BN1 statistics."""
    window = jnp.concatenate([xin_cur[...], xin_nxt[0:2 * hp, :]], axis=0)
    acc = _conv_from_window(window, w1_ref, offsets, hp, tr)        # (tr, Cout) f32
    raw1_ref[...] = acc
    part1_ref[...] = _masked_moments(acc, mask_cur[...]).reshape(1, 2, -1)


def _conv2_kernel(*refs, offsets, hp, tr, has_projection):
    """BN1-apply + ReLU + conv2 (fused-K 3x3) + shortcut add + partial BN2 stats."""
    if has_projection:
        (raw1_cur, raw1_nxt, mask_cur, mask_nxt, xsc_ref, wsc_ref,
         w2_ref, scale1_ref, shift1_ref, raw2_ref, part2_ref) = refs
    else:
        (raw1_cur, raw1_nxt, mask_cur, mask_nxt, xsc_ref,
         w2_ref, scale1_ref, shift1_ref, raw2_ref, part2_ref) = refs

    win_raw = jnp.concatenate([raw1_cur[...], raw1_nxt[0:2 * hp, :]], axis=0)
    win_msk = jnp.concatenate([mask_cur[...], mask_nxt[0:2 * hp, :]], axis=0)

    # Apply precomputed per-channel BN1 scale/shift + ReLU; zero padding /
    # out-of-range rows so conv2's taps see proper zero spatial padding.
    h1 = jnp.maximum(win_raw * scale1_ref[...] + shift1_ref[...], 0.0)
    h1 = jnp.where(win_msk > 0.5, h1, 0.0).astype(jnp.bfloat16)

    acc = _conv_from_window(h1, w2_ref, offsets, hp, tr)            # (tr, Cout) f32

    if has_projection:   # 1x1 conv shortcut
        acc = acc + jnp.dot(xsc_ref[...], wsc_ref[...],
                            preferred_element_type=jnp.float32)
    else:                # identity shortcut: plain add, no eye() matmul
        acc = acc + xsc_ref[...].astype(jnp.float32)

    raw2_ref[...] = acc
    part2_ref[...] = _masked_moments(acc, win_msk[hp:hp + tr, :]).reshape(1, 2, -1)


def _bn2_relu_kernel(raw2_ref, scale2_ref, shift2_ref, out_ref):
    out_ref[...] = jnp.maximum(
        raw2_ref[...] * scale2_ref[...] + shift2_ref[...], 0.0)


# ---------------------------------------------------------------------------
# Wrapper
# ---------------------------------------------------------------------------

def residual_block_forward(x_nchw, params, *, row_tile=512):
    """Forward pass of ResidualBlock (training-mode BatchNorm), NCHW in/out."""
    n, cin, h, w = x_nchw.shape
    cout = params["w1"].shape[-1]
    has_projection = "w_sc" in params

    hp_dim, wp_dim = h + 2, w + 2                  # spatially padded extents
    rp = n * hp_dim * wp_dim                       # padded-flat row count
    hp = _round_up(wp_dim + 1, 8)                  # halo rows (>= max tap shift)
    # Largest row tile that fits VMEM wins; re-derive per generation
    # (v7x has 64 MiB VMEM -> shrink row_tile for wide channel counts).
    tr = _round_up(max(row_tile, 2 * hp), 64)
    g = -(-(rp + 2 * hp) // tr)                    # number of output row tiles
    rows_out = g * tr
    nhw = float(n * h * w)

    # ---- layout prep: single 1x copy of the input, no 9x tap duplication ----
    # TODO(synk): for realistic channel widths, pad C to a multiple of 128 (or
    # repack W*C into lanes) to get lane-dense, unmasked vector stores.
    x_nhwc = jnp.transpose(x_nchw, (0, 2, 3, 1)).astype(jnp.float32)
    xp_flat = jnp.pad(x_nhwc, ((0, 0), (1, 1), (1, 1), (0, 0))).reshape(rp, cin)
    x_bf16 = xp_flat.astype(jnp.bfloat16)

    # conv1 input, headered by 2*hp zero rows (windows never index below 0)
    x_in = jnp.zeros(((g + 2) * tr, cin), jnp.bfloat16).at[2 * hp:2 * hp + rp].set(x_bf16)
    # shortcut input, un-headered (row index == output row index)
    x_sc = jnp.zeros((rows_out, cin), jnp.bfloat16).at[:rp].set(x_bf16)
    # validity mask in the hp-headered layout (1.0 at interior pixels)
    interior = jnp.zeros((n, hp_dim, wp_dim), jnp.float32)
    interior = interior.at[:, 1:h + 1, 1:w + 1].set(1.0)
    mask_h = jnp.zeros(((g + 1) * tr, 1), jnp.float32).at[hp:hp + rp, 0].set(
        interior.reshape(rp))

    # 3x3 tap row offsets in the padded-flat layout + fused-K bf16 weights
    offsets = tuple((di - 1) * wp_dim + (dj - 1)
                    for di in range(3) for dj in range(3))
    w1 = params["w1"].reshape(9 * cin, cout).astype(jnp.bfloat16)
    w2 = params["w2"].reshape(9 * cout, cout).astype(jnp.bfloat16)
    # NOTE: conv biases (b1/b2/b_sc) are intentionally not used: constants added
    # before training-mode BatchNorm are cancelled exactly by mean subtraction.

    def tiled(c, shift=0):
        return pl.BlockSpec((tr, c), lambda i, _s=shift: (i + _s, 0))

    def whole2(d0, d1):
        return pl.BlockSpec((d0, d1), lambda i: (0, 0))

    part_spec = pl.BlockSpec((1, 2, cout), lambda i: (i, 0, 0))
    parallel = pltpu.CompilerParams(dimension_semantics=("parallel",))

    # ---- stage 1: conv1 + masked partial BN1 statistics ---------------------
    raw1, part1 = pl.pallas_call(
        functools.partial(_conv1_kernel, offsets=offsets, hp=hp, tr=tr),
        grid=(g + 1,),
        in_specs=[tiled(cin), tiled(cin, 1), tiled(1), whole2(9 * cin, cout)],
        out_specs=[tiled(cout), part_spec],
        out_shape=[jax.ShapeDtypeStruct(((g + 1) * tr, cout), jnp.float32),
                   jax.ShapeDtypeStruct((g + 1, 2, cout), jnp.float32)],
        compiler_params=parallel,
    )(x_in, x_in, mask_h, w1)

    def bn_coeffs(part, gamma, beta):
        tot = jnp.sum(part, axis=0)                          # (2, cout)
        mean = tot[0] / nhw
        var = jnp.maximum(tot[1] / nhw - mean * mean, 0.0)   # biased variance
        scale = gamma.reshape(-1) * lax.rsqrt(var + EPS)
        shift = beta.reshape(-1) - mean * scale
        return scale.reshape(1, cout), shift.reshape(1, cout)

    scale1, shift1 = bn_coeffs(part1, params["gamma1"], params["beta1"])

    # ---- stage 2: BN1-apply + ReLU + conv2 + shortcut + partial BN2 stats ---
    operands = [raw1, raw1, mask_h, mask_h, x_sc]
    in_specs = [tiled(cout), tiled(cout, 1), tiled(1), tiled(1, 1), tiled(cin)]
    if has_projection:
        operands.append(params["w_sc"].astype(jnp.bfloat16))
        in_specs.append(whole2(cin, cout))
    operands += [w2, scale1, shift1]
    in_specs += [whole2(9 * cout, cout), whole2(1, cout), whole2(1, cout)]

    raw2, part2 = pl.pallas_call(
        functools.partial(_conv2_kernel, offsets=offsets, hp=hp, tr=tr,
                          has_projection=has_projection),
        grid=(g,),
        in_specs=in_specs,
        out_specs=[tiled(cout), part_spec],
        out_shape=[jax.ShapeDtypeStruct((rows_out, cout), jnp.float32),
                   jax.ShapeDtypeStruct((g, 2, cout), jnp.float32)],
        compiler_params=parallel,
    )(*operands)

    scale2, shift2 = bn_coeffs(part2, params["gamma2"], params["beta2"])

    # ---- stage 3: BN2-apply + ReLU ------------------------------------------
    out_flat = pl.pallas_call(
        _bn2_relu_kernel,
        grid=(g,),
        in_specs=[tiled(cout), whole2(1, cout), whole2(1, cout)],
        out_specs=tiled(cout),
        out_shape=jax.ShapeDtypeStruct((rows_out, cout), jnp.float32),
        compiler_params=parallel,
    )(raw2, scale2, shift2)

    out = out_flat[:rp].reshape(n, hp_dim, wp_dim, cout)[:, 1:h + 1, 1:w + 1, :]
    return jnp.transpose(out, (0, 3, 1, 2))


# ---------------------------------------------------------------------------
# Parameters + pure-JAX reference
# ---------------------------------------------------------------------------

def make_params(key, in_channels, out_channels):
    ks = jax.random.split(key, 9)
    p = {
        "w1": 0.1 * jax.random.normal(ks[0], (3, 3, in_channels, out_channels), jnp.float32),
        "b1": 0.1 * jax.random.normal(ks[1], (out_channels,), jnp.float32),
        "w2": 0.1 * jax.random.normal(ks[2], (3, 3, out_channels, out_channels), jnp.float32),
        "b2": 0.1 * jax.random.normal(ks[3], (out_channels,), jnp.float32),
        "gamma1": 1.0 + 0.1 * jax.random.normal(ks[4], (out_channels,), jnp.float32),
        "beta1": 0.1 * jax.random.normal(ks[5], (out_channels,), jnp.float32),
        "gamma2": 1.0 + 0.1 * jax.random.normal(ks[6], (out_channels,), jnp.float32),
        "beta2": 0.1 * jax.random.normal(ks[7], (out_channels,), jnp.float32),
    }
    if in_channels != out_channels:
        kw, kb = jax.random.split(ks[8])
        p["w_sc"] = 0.1 * jax.random.normal(kw, (in_channels, out_channels), jnp.float32)
        p["b_sc"] = 0.1 * jax.random.normal(kb, (out_channels,), jnp.float32)
    return p


def _ref_forward(x_nchw, params):
    """Pure-JAX reference of the PyTorch module (training-mode BN, biases kept).
    Mirrors the kernel's bf16 rounding of matmul operands so the comparison
    isolates structural correctness (tap offsets, masks, BN plumbing)."""

    def q(t):
        return t.astype(jnp.bfloat16).astype(jnp.float32)

    def conv3x3(x, wgt, b):
        y = lax.conv_general_dilated(
            q(x), q(wgt), (1, 1), "SAME",
            dimension_numbers=("NHWC", "HWIO", "NHWC"),
            precision=lax.Precision.HIGHEST,
            preferred_element_type=jnp.float32)
        return y + b.reshape(1, 1, 1, -1)

    def bn_relu(x, gamma, beta):
        mean = jnp.mean(x, axis=(0, 1, 2), keepdims=True)
        var = jnp.mean((x - mean) ** 2, axis=(0, 1, 2), keepdims=True)
        y = (x - mean) * lax.rsqrt(var + EPS)
        y = y * gamma.reshape(1, 1, 1, -1) + beta.reshape(1, 1, 1, -1)
        return jnp.maximum(y, 0.0)

    x = jnp.transpose(x_nchw, (0, 2, 3, 1)).astype(jnp.float32)
    if "w_sc" in params:
        identity = (jnp.einsum("nhwc,cd->nhwd", q(x), q(params["w_sc"]),
                               precision=lax.Precision.HIGHEST)
                    + params["b_sc"].reshape(1, 1, 1, -1))
    else:
        identity = q(x)
    out = bn_relu(conv3x3(x, params["w1"], params["b1"]),
                  params["gamma1"], params["beta1"])
    out = conv3x3(out, params["w2"], params["b2"]) + identity
    out = bn_relu(out, params["gamma2"], params["beta2"])
    return jnp.transpose(out, (0, 3, 1, 2))


if __name__ == "__main__":
    forward = jax.jit(residual_block_forward)

    key = jax.random.PRNGKey(0)
    kx, kp, kx2, kp2 = jax.random.split(key, 4)

    # Case 1: projection shortcut (in_channels != out_channels)
    N, CIN, COUT, H, W = 2, 4, 8, 16, 16
    x = jax.random.normal(kx, (N, CIN, H, W), jnp.float32)      # NCHW like PyTorch
    params = make_params(kp, CIN, COUT)
    out = jax.block_until_ready(forward(x, params))
    ref = jax.block_until_ready(_ref_forward(x, params))
    assert out.shape == (N, COUT, H, W), out.shape
    np.testing.assert_allclose(np.asarray(out), np.asarray(ref), atol=1e-2, rtol=1e-2)

    # Case 2: identity shortcut (in_channels == out_channels)
    x2 = jax.random.normal(kx2, (N, COUT, H, W), jnp.float32)
    params2 = make_params(kp2, COUT, COUT)
    out2 = jax.block_until_ready(forward(x2, params2))
    ref2 = jax.block_until_ready(_ref_forward(x2, params2))
    assert out2.shape == (N, COUT, H, W), out2.shape
    np.testing.assert_allclose(np.asarray(out2), np.asarray(ref2), atol=1e-2, rtol=1e-2)

    print("KERNEL_OK")
</pallas_src>

<mosaic_0001>
module attributes {stable_mosaic.version = 11 : i64} {
  func.func @_conv1_kernel(%arg0: i32, %arg1: memref<512x4xbf16, #tpu.memory_space<vmem>>, %arg2: memref<512x4xbf16, #tpu.memory_space<vmem>>, %arg3: memref<512x1xf32, #tpu.memory_space<vmem>>, %arg4: memref<36x8xbf16, #tpu.memory_space<vmem>>, %arg5: memref<512x8xf32, #tpu.memory_space<vmem>>, %arg6: memref<1x2x8xf32, #tpu.memory_space<vmem>>) attributes {dimension_semantics = [#tpu.dimension_semantics<parallel>], iteration_bounds = array<i64: 3>, scalar_prefetch = 0 : i64, scratch_operands = 0 : i64, tpu.core_type = #tpu.core_type<tc>, window_params = [{transform_indices = @transform_0, window_bounds = array<i64: 512, 4>}, {transform_indices = @transform_1, window_bounds = array<i64: 512, 4>}, {transform_indices = @transform_2, window_bounds = array<i64: 512, 1>}, {pipeline_mode = #tpu.pipeline_mode<synchronous>, transform_indices = @transform_3, window_bounds = array<i64: 36, 8>}, {transform_indices = @transform_4, window_bounds = array<i64: 512, 8>}, {transform_indices = @transform_5, window_bounds = array<i64: 1, 2, 8>}]} {
    %c0 = arith.constant 0 : index
    %c0_0 = arith.constant 0 : index
    %0 = vector.load %arg1[%c0, %c0_0] : memref<512x4xbf16, #tpu.memory_space<vmem>>, vector<512x4xbf16>
    %c0_1 = arith.constant 0 : index
    %c0_2 = arith.constant 0 : index
    %1 = vector.load %arg2[%c0_1, %c0_2] : memref<512x4xbf16, #tpu.memory_space<vmem>>, vector<48x4xbf16>
    %2 = tpu.concatenate %0, %1 in 0 : vector<512x4xbf16>, vector<48x4xbf16> -> vector<560x4xbf16>
    %3 = vector.extract_strided_slice %2 {offsets = [5, 0], sizes = [512, 4], strides = [1, 1]} : vector<560x4xbf16> to vector<512x4xbf16>
    %4 = vector.extract_strided_slice %2 {offsets = [6, 0], sizes = [512, 4], strides = [1, 1]} : vector<560x4xbf16> to vector<512x4xbf16>
    %5 = vector.extract_strided_slice %2 {offsets = [7, 0], sizes = [512, 4], strides = [1, 1]} : vector<560x4xbf16> to vector<512x4xbf16>
    %6 = vector.extract_strided_slice %2 {offsets = [23, 0], sizes = [512, 4], strides = [1, 1]} : vector<560x4xbf16> to vector<512x4xbf16>
    %7 = vector.extract_strided_slice %2 {offsets = [24, 0], sizes = [512, 4], strides = [1, 1]} : vector<560x4xbf16> to vector<512x4xbf16>
    %8 = vector.extract_strided_slice %2 {offsets = [25, 0], sizes = [512, 4], strides = [1, 1]} : vector<560x4xbf16> to vector<512x4xbf16>
    %9 = vector.extract_strided_slice %2 {offsets = [41, 0], sizes = [512, 4], strides = [1, 1]} : vector<560x4xbf16> to vector<512x4xbf16>
    %10 = vector.extract_strided_slice %2 {offsets = [42, 0], sizes = [512, 4], strides = [1, 1]} : vector<560x4xbf16> to vector<512x4xbf16>
    %11 = vector.extract_strided_slice %2 {offsets = [43, 0], sizes = [512, 4], strides = [1, 1]} : vector<560x4xbf16> to vector<512x4xbf16>
    %12 = tpu.concatenate %3, %4, %5, %6, %7, %8, %9, %10, %11 in 1 : vector<512x4xbf16>, vector<512x4xbf16>, vector<512x4xbf16>, vector<512x4xbf16>, vector<512x4xbf16>, vector<512x4xbf16>, vector<512x4xbf16>, vector<512x4xbf16>, vector<512x4xbf16> -> vector<512x36xbf16>
    %c0_3 = arith.constant 0 : index
    %c0_4 = arith.constant 0 : index
    %13 = vector.load %arg4[%c0_3, %c0_4] : memref<36x8xbf16, #tpu.memory_space<vmem>>, vector<36x8xbf16>
    %cst = arith.constant dense<0.000000e+00> : vector<512x8xf32>
    %14 = tpu.matmul %12, %13, %cst {dimension_numbers = #tpu.dot_dimension_numbers<[1], [0], [0], [1], [0, 0, 1, 1], [], []>} : vector<512x36xbf16>, vector<36x8xbf16>, vector<512x8xf32> -> vector<512x8xf32>
    %c0_5 = arith.constant 0 : index
    %c0_6 = arith.constant 0 : index
    %15 = vector.load %arg5[%c0_5, %c0_6] : memref<512x8xf32, #tpu.memory_space<vmem>>, vector<512x8xf32>
    tpu.vector_store %arg5[%c0_5, %c0_6], %14 {strides = array<i32>} : memref<512x8xf32, #tpu.memory_space<vmem>>, vector<512x8xf32>,
    %c0_7 = arith.constant 0 : index
    %c0_8 = arith.constant 0 : index
    %16 = vector.load %arg3[%c0_7, %c0_8] : memref<512x1xf32, #tpu.memory_space<vmem>>, vector<512x1xf32>
    %cst_9 = arith.constant 5.000000e-01 : f32
    %17 = vector.broadcast %cst_9 : f32 to vector<512x1xf32>
    %18 = arith.cmpf ogt, %16, %17 : vector<512x1xf32>
    %cst_10 = arith.constant 0.000000e+00 : f32
    %19 = vector.shape_cast %18 : vector<512x1xi1> to vector<512x1xi1>
    %20 = vector.broadcast %19 : vector<512x1xi1> to vector<512x8xi1>
    %21 = vector.broadcast %cst_10 : f32 to vector<512x8xf32>
    %22 = arith.select %20, %14, %21 : vector<512x8xi1>, vector<512x8xf32>
    %cst_11 = arith.constant dense<0.000000e+00> : vector<8xf32>
    %23 = vector.multi_reduction <add>, %22, %cst_11 [0] : vector<512x8xf32> to vector<8xf32>
    %24 = vector.shape_cast %23 : vector<8xf32> to vector<1x8xf32>
    %25 = arith.mulf %14, %14 : vector<512x8xf32>
    %cst_12 = arith.constant 0.000000e+00 : f32
    %26 = vector.shape_cast %18 : vector<512x1xi1> to vector<512x1xi1>
    %27 = vector.broadcast %26 : vector<512x1xi1> to vector<512x8xi1>
    %28 = vector.broadcast %cst_12 : f32 to vector<512x8xf32>
    %29 = arith.select %27, %25, %28 : vector<512x8xi1>, vector<512x8xf32>
    %cst_13 = arith.constant dense<0.000000e+00> : vector<8xf32>
    %30 = vector.multi_reduction <add>, %29, %cst_13 [0] : vector<512x8xf32> to vector<8xf32>
    %31 = vector.shape_cast %30 : vector<8xf32> to vector<1x8xf32>
    %32 = tpu.concatenate %24, %31 in 0 : vector<1x8xf32>, vector<1x8xf32> -> vector<2x8xf32>
    %33 = vector.shape_cast %32 : vector<2x8xf32> to vector<1x2x8xf32>
    %c0_14 = arith.constant 0 : index
    %c0_15 = arith.constant 0 : index
    %c0_16 = arith.constant 0 : index
    %34 = vector.load %arg6[%c0_14, %c0_15, %c0_16] : memref<1x2x8xf32, #tpu.memory_space<vmem>>, vector<1x2x8xf32>
    tpu.vector_store %arg6[%c0_14, %c0_15, %c0_16], %33 {strides = array<i32>} : memref<1x2x8xf32, #tpu.memory_space<vmem>>, vector<1x2x8xf32>,
    return
  }
  func.func @transform_0(%arg0: i32) -> (i32, i32) {
    %c0_i32 = arith.constant 0 : i32
    %0 = arith.addi %arg0, %c0_i32 : i32
    %c0_i32_0 = arith.constant 0 : i32
    %c0_i32_1 = arith.constant 0 : i32
    return %0, %c0_i32_0 : i32, i32
  }
  func.func @transform_1(%arg0: i32) -> (i32, i32) {
    %c1_i32 = arith.constant 1 : i32
    %0 = arith.addi %arg0, %c1_i32 : i32
    %c0_i32 = arith.constant 0 : i32
    %c0_i32_0 = arith.constant 0 : i32
    return %0, %c0_i32 : i32, i32
  }
  func.func @transform_2(%arg0: i32) -> (i32, i32) {
    %c0_i32 = arith.constant 0 : i32
    %0 = arith.addi %arg0, %c0_i32 : i32
    %c0_i32_0 = arith.constant 0 : i32
    %c0_i32_1 = arith.constant 0 : i32
    return %0, %c0_i32_0 : i32, i32
  }
  func.func @transform_3(%arg0: i32) -> (i32, i32) {
    %c0_i32 = arith.constant 0 : i32
    %c0_i32_0 = arith.constant 0 : i32
    %c0_i32_1 = arith.constant 0 : i32
    return %c0_i32, %c0_i32_0 : i32, i32
  }
  func.func @transform_4(%arg0: i32) -> (i32, i32) {
    %c0_i32 = arith.constant 0 : i32
    %0 = arith.addi %arg0, %c0_i32 : i32
    %c0_i32_0 = arith.constant 0 : i32
    %c0_i32_1 = arith.constant 0 : i32
    return %0, %c0_i32_0 : i32, i32
  }
  func.func @transform_5(%arg0: i32) -> (i32, i32, i32) {
    %c0_i32 = arith.constant 0 : i32
    %c0_i32_0 = arith.constant 0 : i32
    %c0_i32_1 = arith.constant 0 : i32
    return %arg0, %c0_i32, %c0_i32_0 : i32, i32, i32
  }
}

module attributes {stable_mosaic.version = 11 : i64} {
  func.func @_bn2_relu_kernel(%arg0: i32, %arg1: memref<512x8xf32, #tpu.memory_space<vmem>>, %arg2: memref<1x8xf32, #tpu.memory_space<vmem>>, %arg3: memref<1x8xf32, #tpu.memory_space<vmem>>, %arg4: memref<512x8xf32, #tpu.memory_space<vmem>>) attributes {dimension_semantics = [#tpu.dimension_semantics<parallel>], iteration_bounds = array<i64: 2>, scalar_prefetch = 0 : i64, scratch_operands = 0 : i64, tpu.core_type = #tpu.core_type<tc>, window_params = [{transform_indices = @transform_0, window_bounds = array<i64: 512, 8>}, {pipeline_mode = #tpu.pipeline_mode<synchronous>, transform_indices = @transform_1, window_bounds = array<i64: 1, 8>}, {pipeline_mode = #tpu.pipeline_mode<synchronous>, transform_indices = @transform_2, window_bounds = array<i64: 1, 8>}, {transform_indices = @transform_3, window_bounds = array<i64: 512, 8>}]} {
    %c0 = arith.constant 0 : index
    %c0_0 = arith.constant 0 : index
    %0 = vector.load %arg1[%c0, %c0_0] : memref<512x8xf32, #tpu.memory_space<vmem>>, vector<512x8xf32>
    %c0_1 = arith.constant 0 : index
    %c0_2 = arith.constant 0 : index
    %1 = vector.load %arg2[%c0_1, %c0_2] : memref<1x8xf32, #tpu.memory_space<vmem>>, vector<1x8xf32>
    %2 = vector.broadcast %1 : vector<1x8xf32> to vector<512x8xf32>
    %3 = arith.mulf %0, %2 : vector<512x8xf32>
    %c0_3 = arith.constant 0 : index
    %c0_4 = arith.constant 0 : index
    %4 = vector.load %arg3[%c0_3, %c0_4] : memref<1x8xf32, #tpu.memory_space<vmem>>, vector<1x8xf32>
    %5 = vector.broadcast %4 : vector<1x8xf32> to vector<512x8xf32>
    %6 = arith.addf %3, %5 : vector<512x8xf32>
    %cst = arith.constant 0.000000e+00 : f32
    %7 = vector.broadcast %cst : f32 to vector<512x8xf32>
    %8 = arith.maximumf %6, %7 : vector<512x8xf32>
    %c0_5 = arith.constant 0 : index
    %c0_6 = arith.constant 0 : index
    %9 = vector.load %arg4[%c0_5, %c0_6] : memref<512x8xf32, #tpu.memory_space<vmem>>, vector<512x8xf32>
    tpu.vector_store %arg4[%c0_5, %c0_6], %8 {strides = array<i32>} : memref<512x8xf32, #tpu.memory_space<vmem>>, vector<512x8xf32>,
    return
  }
  func.func @transform_0(%arg0: i32) -> (i32, i32) {
    %c0_i32 = arith.constant 0 : i32
    %0 = arith.addi %arg0, %c0_i32 : i32
    %c0_i32_0 = arith.constant 0 : i32
    %c0_i32_1 = arith.constant 0 : i32
    return %0, %c0_i32_0 : i32, i32
  }
  func.func @transform_1(%arg0: i32) -> (i32, i32) {
    %c0_i32 = arith.constant 0 : i32
    %c0_i32_0 = arith.constant 0 : i32
    %c0_i32_1 = arith.constant 0 : i32
    return %c0_i32, %c0_i32_0 : i32, i32
  }
  func.func @transform_2(%arg0: i32) -> (i32, i32) {
    %c0_i32 = arith.constant 0 : i32
    %c0_i32_0 = arith.constant 0 : i32
    %c0_i32_1 = arith.constant 0 : i32
    return %c0_i32, %c0_i32_0 : i32, i32
  }
  func.func @transform_3(%arg0: i32) -> (i32, i32) {
    %c0_i32 = arith.constant 0 : i32
    %0 = arith.addi %arg0, %c0_i32 : i32
    %c0_i32_0 = arith.constant 0 : i32
    %c0_i32_1 = arith.constant 0 : i32
    return %0, %c0_i32_0 : i32, i32
  }
}

module attributes {stable_mosaic.version = 11 : i64} {
  func.func @_conv2_kernel(%arg0: i32, %arg1: memref<512x8xf32, #tpu.memory_space<vmem>>, %arg2: memref<512x8xf32, #tpu.memory_space<vmem>>, %arg3: memref<512x1xf32, #tpu.memory_space<vmem>>, %arg4: memref<512x1xf32, #tpu.memory_space<vmem>>, %arg5: memref<512x4xbf16, #tpu.memory_space<vmem>>, %arg6: memref<4x8xbf16, #tpu.memory_space<vmem>>, %arg7: memref<72x8xbf16, #tpu.memory_space<vmem>>, %arg8: memref<1x8xf32, #tpu.memory_space<vmem>>, %arg9: memref<1x8xf32, #tpu.memory_space<vmem>>, %arg10: memref<512x8xf32, #tpu.memory_space<vmem>>, %arg11: memref<1x2x8xf32, #tpu.memory_space<vmem>>) attributes {dimension_semantics = [#tpu.dimension_semantics<parallel>], iteration_bounds = array<i64: 2>, scalar_prefetch = 0 : i64, scratch_operands = 0 : i64, tpu.core_type = #tpu.core_type<tc>, window_params = [{transform_indices = @transform_0, window_bounds = array<i64: 512, 8>}, {transform_indices = @transform_1, window_bounds = array<i64: 512, 8>}, {transform_indices = @transform_2, window_bounds = array<i64: 512, 1>}, {transform_indices = @transform_3, window_bounds = array<i64: 512, 1>}, {transform_indices = @transform_4, window_bounds = array<i64: 512, 4>}, {pipeline_mode = #tpu.pipeline_mode<synchronous>, transform_indices = @transform_5, window_bounds = array<i64: 4, 8>}, {pipeline_mode = #tpu.pipeline_mode<synchronous>, transform_indices = @transform_6, window_bounds = array<i64: 72, 8>}, {pipeline_mode = #tpu.pipeline_mode<synchronous>, transform_indices = @transform_7, window_bounds = array<i64: 1, 8>}, {pipeline_mode = #tpu.pipeline_mode<synchronous>, transform_indices = @transform_8, window_bounds = array<i64: 1, 8>}, {transform_indices = @transform_9, window_bounds = array<i64: 512, 8>}, {transform_indices = @transform_10, window_bounds = array<i64: 1, 2, 8>}]} {
    %c0 = arith.constant 0 : index
    %c0_0 = arith.constant 0 : index
    %0 = vector.load %arg1[%c0, %c0_0] : memref<512x8xf32, #tpu.memory_space<vmem>>, vector<512x8xf32>
    %c0_1 = arith.constant 0 : index
    %c0_2 = arith.constant 0 : index
    %1 = vector.load %arg2[%c0_1, %c0_2] : memref<512x8xf32, #tpu.memory_space<vmem>>, vector<48x8xf32>
    %2 = tpu.concatenate %0, %1 in 0 : vector<512x8xf32>, vector<48x8xf32> -> vector<560x8xf32>
    %c0_3 = arith.constant 0 : index
    %c0_4 = arith.constant 0 : index
    %3 = vector.load %arg3[%c0_3, %c0_4] : memref<512x1xf32, #tpu.memory_space<vmem>>, vector<512x1xf32>
    %c0_5 = arith.constant 0 : index
    %c0_6 = arith.constant 0 : index
    %4 = vector.load %arg4[%c0_5, %c0_6] : memref<512x1xf32, #tpu.memory_space<vmem>>, vector<48x1xf32>
    %5 = tpu.concatenate %3, %4 in 0 : vector<512x1xf32>, vector<48x1xf32> -> vector<560x1xf32>
    %c0_7 = arith.constant 0 : index
    %c0_8 = arith.constant 0 : index
    %6 = vector.load %arg8[%c0_7, %c0_8] : memref<1x8xf32, #tpu.memory_space<vmem>>, vector<1x8xf32>
    %7 = vector.broadcast %6 : vector<1x8xf32> to vector<560x8xf32>
    %8 = arith.mulf %2, %7 : vector<560x8xf32>
    %c0_9 = arith.constant 0 : index
    %c0_10 = arith.constant 0 : index
    %9 = vector.load %arg9[%c0_9, %c0_10] : memref<1x8xf32, #tpu.memory_space<vmem>>, vector<1x8xf32>
    %10 = vector.broadcast %9 : vector<1x8xf32> to vector<560x8xf32>
    %11 = arith.addf %8, %10 : vector<560x8xf32>
    %cst = arith.constant 0.000000e+00 : f32
    %12 = vector.broadcast %cst : f32 to vector<560x8xf32>
    %13 = arith.maximumf %11, %12 : vector<560x8xf32>
    %cst_11 = arith.constant 5.000000e-01 : f32
    %14 = vector.broadcast %cst_11 : f32 to vector<560x1xf32>
    %15 = arith.cmpf ogt, %5, %14 : vector<560x1xf32>
    %cst_12 = arith.constant 0.000000e+00 : f32
    %16 = vector.shape_cast %15 : vector<560x1xi1> to vector<560x1xi1>
    %17 = vector.broadcast %16 : vector<560x1xi1> to vector<560x8xi1>
    %18 = vector.broadcast %cst_12 : f32 to vector<560x8xf32>
    %19 = arith.select %17, %13, %18 : vector<560x8xi1>, vector<560x8xf32>
    %20 = arith.truncf %19 : vector<560x8xf32> to vector<560x8xbf16>
    %21 = vector.extract_strided_slice %20 {offsets = [5, 0], sizes = [512, 8], strides = [1, 1]} : vector<560x8xbf16> to vector<512x8xbf16>
    %22 = vector.extract_strided_slice %20 {offsets = [6, 0], sizes = [512, 8], strides = [1, 1]} : vector<560x8xbf16> to vector<512x8xbf16>
    %23 = vector.extract_strided_slice %20 {offsets = [7, 0], sizes = [512, 8], strides = [1, 1]} : vector<560x8xbf16> to vector<512x8xbf16>
    %24 = vector.extract_strided_slice %20 {offsets = [23, 0], sizes = [512, 8], strides = [1, 1]} : vector<560x8xbf16> to vector<512x8xbf16>
    %25 = vector.extract_strided_slice %20 {offsets = [24, 0], sizes = [512, 8], strides = [1, 1]} : vector<560x8xbf16> to vector<512x8xbf16>
    %26 = vector.extract_strided_slice %20 {offsets = [25, 0], sizes = [512, 8], strides = [1, 1]} : vector<560x8xbf16> to vector<512x8xbf16>
    %27 = vector.extract_strided_slice %20 {offsets = [41, 0], sizes = [512, 8], strides = [1, 1]} : vector<560x8xbf16> to vector<512x8xbf16>
    %28 = vector.extract_strided_slice %20 {offsets = [42, 0], sizes = [512, 8], strides = [1, 1]} : vector<560x8xbf16> to vector<512x8xbf16>
    %29 = vector.extract_strided_slice %20 {offsets = [43, 0], sizes = [512, 8], strides = [1, 1]} : vector<560x8xbf16> to vector<512x8xbf16>
    %30 = tpu.concatenate %21, %22, %23, %24, %25, %26, %27, %28, %29 in 1 : vector<512x8xbf16>, vector<512x8xbf16>, vector<512x8xbf16>, vector<512x8xbf16>, vector<512x8xbf16>, vector<512x8xbf16>, vector<512x8xbf16>, vector<512x8xbf16>, vector<512x8xbf16> -> vector<512x72xbf16>
    %c0_13 = arith.constant 0 : index
    %c0_14 = arith.constant 0 : index
    %31 = vector.load %arg7[%c0_13, %c0_14] : memref<72x8xbf16, #tpu.memory_space<vmem>>, vector<72x8xbf16>
    %cst_15 = arith.constant dense<0.000000e+00> : vector<512x8xf32>
    %32 = tpu.matmul %30, %31, %cst_15 {dimension_numbers = #tpu.dot_dimension_numbers<[1], [0], [0], [1], [0, 0, 1, 1], [], []>} : vector<512x72xbf16>, vector<72x8xbf16>, vector<512x8xf32> -> vector<512x8xf32>
    %c0_16 = arith.constant 0 : index
    %c0_17 = arith.constant 0 : index
    %33 = vector.load %arg5[%c0_16, %c0_17] : memref<512x4xbf16, #tpu.memory_space<vmem>>, vector<512x4xbf16>
    %c0_18 = arith.constant 0 : index
    %c0_19 = arith.constant 0 : index
    %34 = vector.load %arg6[%c0_18, %c0_19] : memref<4x8xbf16, #tpu.memory_space<vmem>>, vector<4x8xbf16>
    %cst_20 = arith.constant dense<0.000000e+00> : vector<512x8xf32>
    %35 = tpu.matmul %33, %34, %cst_20 {dimension_numbers = #tpu.dot_dimension_numbers<[1], [0], [0], [1], [0, 0, 1, 1], [], []>} : vector<512x4xbf16>, vector<4x8xbf16>, vector<512x8xf32> -> vector<512x8xf32>
    %36 = arith.addf %32, %35 : vector<512x8xf32>
    %c0_21 = arith.constant 0 : index
    %c0_22 = arith.constant 0 : index
    %37 = vector.load %arg10[%c0_21, %c0_22] : memref<512x8xf32, #tpu.memory_space<vmem>>, vector<512x8xf32>
    tpu.vector_store %arg10[%c0_21, %c0_22], %36 {strides = array<i32>} : memref<512x8xf32, #tpu.memory_space<vmem>>, vector<512x8xf32>,
    %38 = vector.extract_strided_slice %5 {offsets = [24, 0], sizes = [512, 1], strides = [1, 1]} : vector<560x1xf32> to vector<512x1xf32>
    %cst_23 = arith.constant 5.000000e-01 : f32
    %39 = vector.broadcast %cst_23 : f32 to vector<512x1xf32>
    %40 = arith.cmpf ogt, %38, %39 : vector<512x1xf32>
    %cst_24 = arith.constant 0.000000e+00 : f32
    %41 = vector.shape_cast %40 : vector<512x1xi1> to vector<512x1xi1>
    %42 = vector.broadcast %41 : vector<512x1xi1> to vector<512x8xi1>
    %43 = vector.broadcast %cst_24 : f32 to vector<512x8xf32>
    %44 = arith.select %42, %36, %43 : vector<512x8xi1>, vector<512x8xf32>
    %cst_25 = arith.constant dense<0.000000e+00> : vector<8xf32>
    %45 = vector.multi_reduction <add>, %44, %cst_25 [0] : vector<512x8xf32> to vector<8xf32>
    %46 = vector.shape_cast %45 : vector<8xf32> to vector<1x8xf32>
    %47 = arith.mulf %36, %36 : vector<512x8xf32>
    %cst_26 = arith.constant 0.000000e+00 : f32
    %48 = vector.shape_cast %40 : vector<512x1xi1> to vector<512x1xi1>
    %49 = vector.broadcast %48 : vector<512x1xi1> to vector<512x8xi1>
    %50 = vector.broadcast %cst_26 : f32 to vector<512x8xf32>
    %51 = arith.select %49, %47, %50 : vector<512x8xi1>, vector<512x8xf32>
    %cst_27 = arith.constant dense<0.000000e+00> : vector<8xf32>
    %52 = vector.multi_reduction <add>, %51, %cst_27 [0] : vector<512x8xf32> to vector<8xf32>
    %53 = vector.shape_cast %52 : vector<8xf32> to vector<1x8xf32>
    %54 = tpu.concatenate %46, %53 in 0 : vector<1x8xf32>, vector<1x8xf32> -> vector<2x8xf32>
    %55 = vector.shape_cast %54 : vector<2x8xf32> to vector<1x2x8xf32>
    %c0_28 = arith.constant 0 : index
    %c0_29 = arith.constant 0 : index
    %c0_30 = arith.constant 0 : index
    %56 = vector.load %arg11[%c0_28, %c0_29, %c0_30] : memref<1x2x8xf32, #tpu.memory_space<vmem>>, vector<1x2x8xf32>
    tpu.vector_store %arg11[%c0_28, %c0_29, %c0_30], %55 {strides = array<i32>} : memref<1x2x8xf32, #tpu.memory_space<vmem>>, vector<1x2x8xf32>,
    return
  }
  func.func @transform_0(%arg0: i32) -> (i32, i32) {
    %c0_i32 = arith.constant 0 : i32
    %0 = arith.addi %arg0, %c0_i32 : i32
    %c0_i32_0 = arith.constant 0 : i32
    %c0_i32_1 = arith.constant 0 : i32
    return %0, %c0_i32_0 : i32, i32
  }
  func.func @transform_1(%arg0: i32) -> (i32, i32) {
    %c1_i32 = arith.constant 1 : i32
    %0 = arith.addi %arg0, %c1_i32 : i32
    %c0_i32 = arith.constant 0 : i32
    %c0_i32_0 = arith.constant 0 : i32
    return %0, %c0_i32 : i32, i32
  }
  func.func @transform_2(%arg0: i32) -> (i32, i32) {
    %c0_i32 = arith.constant 0 : i32
    %0 = arith.addi %arg0, %c0_i32 : i32
    %c0_i32_0 = arith.constant 0 : i32
    %c0_i32_1 = arith.constant 0 : i32
    return %0, %c0_i32_0 : i32, i32
  }
  func.func @transform_3(%arg0: i32) -> (i32, i32) {
    %c1_i32 = arith.constant 1 : i32
    %0 = arith.addi %arg0, %c1_i32 : i32
    %c0_i32 = arith.constant 0 : i32
    %c0_i32_0 = arith.constant 0 : i32
    return %0, %c0_i32 : i32, i32
  }
  func.func @transform_4(%arg0: i32) -> (i32, i32) {
    %c0_i32 = arith.constant 0 : i32
    %0 = arith.addi %arg0, %c0_i32 : i32
    %c0_i32_0 = arith.constant 0 : i32
    %c0_i32_1 = arith.constant 0 : i32
    return %0, %c0_i32_0 : i32, i32
  }
  func.func @transform_5(%arg0: i32) -> (i32, i32) {
    %c0_i32 = arith.constant 0 : i32
    %c0_i32_0 = arith.constant 0 : i32
    %c0_i32_1 = arith.constant 0 : i32
    return %c0_i32, %c0_i32_0 : i32, i32
  }
  func.func @transform_6(%arg0: i32) -> (i32, i32) {
    %c0_i32 = arith.constant 0 : i32
    %c0_i32_0 = arith.constant 0 : i32
    %c0_i32_1 = arith.constant 0 : i32
    return %c0_i32, %c0_i32_0 : i32, i32
  }
  func.func @transform_7(%arg0: i32) -> (i32, i32) {
    %c0_i32 = arith.constant 0 : i32
    %c0_i32_0 = arith.constant 0 : i32
    %c0_i32_1 = arith.constant 0 : i32
    return %c0_i32, %c0_i32_0 : i32, i32
  }
  func.func @transform_8(%arg0: i32) -> (i32, i32) {
    %c0_i32 = arith.constant 0 : i32
    %c0_i32_0 = arith.constant 0 : i32
    %c0_i32_1 = arith.constant 0 : i32
    return %c0_i32, %c0_i32_0 : i32, i32
  }
  func.func @transform_9(%arg0: i32) -> (i32, i32) {
    %c0_i32 = arith.constant 0 : i32
    %0 = arith.addi %arg0, %c0_i32 : i32
    %c0_i32_0 = arith.constant 0 : i32
    %c0_i32_1 = arith.constant 0 : i32
    return %0, %c0_i32_0 : i32, i32
  }
  func.func @transform_10(%arg0: i32) -> (i32, i32, i32) {
    %c0_i32 = arith.constant 0 : i32
    %c0_i32_0 = arith.constant 0 : i32
    %c0_i32_1 = arith.constant 0 : i32
    return %arg0, %c0_i32, %c0_i32_0 : i32, i32, i32
  }
}

</mosaic_0001>

<llo_original>
// kernel: residual_block_forward.5
$region0: #{residual_block_forward.5}
  #allocation0 [shape = 'u32[]', space=smem, size = 0x4, offset = 0x4, fixed_abs, tag = 'smem constant byte address 0x4 - core index']
  #allocation1 [shape = 'u32[144,128]{1,0:T(1,128)}', space=vmem, size = 0x12000, scoped, tag = 'internal scratch']
  %s0 = inlined_call_operand.vmem [shape: f32[1024,8], index: 0, kind: input, shape index: {}]
  %s1 = inlined_call_operand.vmem [shape: f32[1,8], index: 1, kind: input, shape index: {}]
  %s2 = inlined_call_operand.vmem [shape: f32[1,8], index: 2, kind: input, shape index: {}]
  %s3 = inlined_call_operand.vmem [shape: f32[1024,8], index: 3, kind: output, shape index: {}]
  %s4 = sld [smem:[#allocation0]]
  $region45: #{residual_block_forward.5} parent=0
    _
  %s6 = ssub.s32 1, %s4
  %s7 = scalar_select 0, %s6, %s4
  loop: start=0, step=1, limit=4
  $region2: #{residual_block_forward.5} parent=0 // loop_pre_header
    _
  $region3: #{residual_block_forward.5} parent=0 // loop_header
    %s9 = sphi 0, %s13
    %p10 = scmp.ge.s32.totalorder %s9, 4
    %s19 = sphi 0, %s21
    %s22 = sphi 0, %s19
    %s23 = sphi 0, %s22
    %s39 = sphi 0, %s23
    %s43 = sphi 0, %s43
    %s45 = sphi 0, %s43
    %s46 = sphi 0, %s45
    %s60 = sphi 0, %s46
    %s64 = sphi 0, %s64
    %s66 = sphi 0, %s64
    %s67 = sphi 0, %s66
    %s81 = sphi 0, %s67
    %s87 = sphi 0, %s89
    %s90 = sphi 0, %s87
    %s91 = sphi 0, %s90
    %s107 = sphi 0, %s91
  $region4: #{residual_block_forward.5} parent=0 // loop_header_branch
    %12 = sbr.rel (%p10) target = $region8
  $region5: #{residual_block_forward.5} parent=0 // loop_body
    %s14 = ssub.s32 %s9, 1
    %s15 = ssub.s32 %s9, 2
    %s16 = sadd.s32 %s9, 1
    %s17 = ssub.s32 %s9, %s16
    %p18 = scmp.eq.s32.totalorder %s17, 0
    %s20 = sadd.s32 %s19, 1
    %s21 = scalar_select %p18, %s19, %s20
    %p24 = pneg %p18
    %p25 = scmp.eq.s32.totalorder %s9, 1
    %p26 = por %p24, %p25
    %p27 = scmp.ne.s32.totalorder %s19, %s22
    %p28 = scmp.eq.s32.totalorder %s9, 0
    %p29 = por %p27, %p28
    %p30 = scmp.ne.s32.totalorder %s19, %s22
    %p31 = scmp.eq.s32.totalorder %s14, 1
    %p32 = por %p30, %p31
    %p33 = scmp.ne.s32.totalorder %s22, %s23
    %p34 = scmp.eq.s32.totalorder %s14, 0
    %p35 = por %p33, %p34
    %p36 = scmp.ne.s32.totalorder %s22, %s23
    %p37 = scmp.eq.s32.totalorder %s15, 1
    %p38 = por %p36, %p37
    %p40 = scmp.ne.s32.totalorder %s23, %s39
    %p41 = scmp.eq.s32.totalorder %s15, 0
    %p42 = por %p40, %p41
    %s44 = sadd.s32 %s43, 1
    %p47 = scmp.eq.s32.totalorder %s9, 1
    %p48 = scmp.ne.s32.totalorder %s43, %s45
    %p49 = scmp.eq.s32.totalorder %s9, 0
    %p50 = por %p48, %p49
    %p51 = scmp.ne.s32.totalorder %s43, %s45
    %p52 = scmp.eq.s32.totalorder %s14, 1
    %p53 = por %p51, %p52
    %p54 = scmp.ne.s32.totalorder %s45, %s46
    %p55 = scmp.eq.s32.totalorder %s14, 0
    %p56 = por %p54, %p55
    %p57 = scmp.ne.s32.totalorder %s45, %s46
    %p58 = scmp.eq.s32.totalorder %s15, 1
    %p59 = por %p57, %p58
    %p61 = scmp.ne.s32.totalorder %s46, %s60
    %p62 = scmp.eq.s32.totalorder %s15, 0
    %p63 = por %p61, %p62
    %s65 = sadd.s32 %s64, 1
    %p68 = scmp.eq.s32.totalorder %s9, 1
    %p69 = scmp.ne.s32.totalorder %s64, %s66
    %p70 = scmp.eq.s32.totalorder %s9, 0
    %p71 = por %p69, %p70
    %p72 = scmp.ne.s32.totalorder %s64, %s66
    %p73 = scmp.eq.s32.totalorder %s14, 1
    %p74 = por %p72, %p73
    %p75 = scmp.ne.s32.totalorder %s66, %s67
    %p76 = scmp.eq.s32.totalorder %s14, 0
    %p77 = por %p75, %p76
    %p78 = scmp.ne.s32.totalorder %s66, %s67
    %p79 = scmp.eq.s32.totalorder %s15, 1
    %p80 = por %p78, %p79
    %p82 = scmp.ne.s32.totalorder %s67, %s81
    %p83 = scmp.eq.s32.totalorder %s15, 0
    %p84 = por %p82, %p83
    %s85 = ssub.s32 %s9, %s16
    %p86 = scmp.eq.s32.totalorder %s85, 0
    %s88 = sadd.s32 %s87, 1
    %s89 = scalar_select %p86, %s87, %s88
    %p92 = pneg %p86
    %p93 = scmp.eq.s32.totalorder %s9, 1
    %p94 = por %p92, %p93
    %p95 = scmp.ne.s32.totalorder %s87, %s90
    %p96 = scmp.eq.s32.totalorder %s9, 0
    %p97 = por %p95, %p96
    %p98 = scmp.ne.s32.totalorder %s87, %s90
    %p99 = scmp.eq.s32.totalorder %s14, 1
    %p100 = por %p98, %p99
    %p101 = scmp.ne.s32.totalorder %s90, %s91
    %p102 = scmp.eq.s32.totalorder %s14, 0
    %p103 = por %p101, %p102
    %p104 = scmp.ne.s32.totalorder %s90, %s91
    %p105 = scmp.eq.s32.totalorder %s15, 1
    %p106 = por %p104, %p105
    %p108 = scmp.ne.s32.totalorder %s91, %s107
    %p109 = scmp.eq.s32.totalorder %s15, 0
    %p110 = por %p108, %p109
    %p111 = scmp.le.s32.totalorder 1, %s9
    %p112 = scmp.lt.s32.totalorder %s9, 3
    %p113 = pnand %p111, %p112
    %p114 = pneg %p113
    // Predicated region
    $region9: #{residual_block_forward.5} parent=5 // pred_check
      _
    $region10: #{residual_block_forward.5} parent=5 // pred_check_branch
      %116 = sbr.rel (%p113) target = $region12
    $region11: #{residual_block_forward.5} parent=5 // pred_region
      %s117 = ssub.s32 %s9, 1
      // Predicated region
      $region13: #{residual_block_forward.5} parent=11 // pred_check
        %p118 = pneg %p56
      $region14: #{residual_block_forward.5} parent=11 // pred_check_branch
        %120 = sbr.rel (%p118) target = $region16
      $region15: #{residual_block_forward.5} parent=11 // pred_region
        _
      $region16: #{residual_block_forward.5} parent=11 // pred_fallthru
        _
      // Predicated region
      $region17: #{residual_block_forward.5} parent=11 // pred_check
        %p121 = pneg %p77
      $region18: #{residual_block_forward.5} parent=11 // pred_check_branch
        %123 = sbr.rel (%p121) target = $region20
      $region19: #{residual_block_forward.5} parent=11 // pred_region
        _
      $region20: #{residual_block_forward.5} parent=11 // pred_fallthru
        _
    $region12: #{residual_block_forward.5} parent=5 // pred_fallthru
      _
    %p124 = scmp.lt.s32.totalorder %s9, 2
    // Predicated region
    $region21: #{residual_block_forward.5} parent=5 // pred_check
      %p125 = pneg %p124
    $region22: #{residual_block_forward.5} parent=5 // pred_check_branch
      %127 = sbr.rel (%p125) target = $region24
    $region23: #{residual_block_forward.5} parent=5 // pred_region
      // Predicated region
      $region25: #{residual_block_forward.5} parent=23 // pred_check
        %p128 = pneg %p29
      $region26: #{residual_block_forward.5} parent=23 // pred_check_branch
        %130 = sbr.rel (%p128) target = $region28
      $region27: #{residual_block_forward.5} parent=23 // pred_region
        %s131 = smul.u32 64, %s9
        %p132 = scmp.lt.s32.totalorder %s131, 127
        %s133 = scalar_select %p132, %s131, 127
        %s134 = smul.addr %s133, 8
        %s135 = scalar_lea.vmem %s0, %s134
        %s136 = smul.u32 64, %s9
      $region28: #{residual_block_forward.5} parent=23 // pred_fallthru
        _
    $region24: #{residual_block_forward.5} parent=5 // pred_fallthru
      _
    %p137 = scmp.le.s32.totalorder 1, %s9
    %p138 = scmp.lt.s32.totalorder %s9, 3
    %p139 = pnand %p137, %p138
    %p140 = pneg %p139
    // Predicated region
    $region29: #{residual_block_forward.5} parent=5 // pred_check
      _
    $region30: #{residual_block_forward.5} parent=5 // pred_check_branch
      %142 = sbr.rel (%p139) target = $region32
    $region31: #{residual_block_forward.5} parent=5 // pred_region
      %s143 = ssub.s32 %s9, 1
      %s144 = smul.u32 64, %s14
      %p145 = scmp.lt.s32.totalorder %s144, 127
      %s146 = scalar_select %p145, %s144, 127
      %s147 = smul.addr %s146, 8
      %s148 = scalar_lea.vmem %s0, %s147
      %p149 = pneg %p35
      %p150 = pneg %p32
      %p151 = pneg %p56
      %p152 = pneg %p53
      %p153 = pneg %p77
      %p154 = pneg %p74
      %p155 = pneg %p103
      %p156 = pneg %p100
      %s157 = smul.u32 64, %s14
      %p158 = scmp.lt.s32.totalorder %s157, 127
      %s159 = scalar_select %p158, %s157, 127
      %s160 = smul.addr %s159, 8
      %s161 = scalar_lea.vmem %s3, %s160
      %s162 = smul.u32 64, %s14
      %p163 = scmp.lt.s32.totalorder %s162, 127
      %s164 = scalar_select %p163, %s162, 127
      %s165 = smul.addr %s164, 8
      %s166 = scalar_lea.vmem %s0, %s165
      %s167 = smul.u32 64, %s14
      %s168 = smul.u32 64, %s14
      %p169 = scmp.lt.s32.totalorder %s168, 127
      %s170 = scalar_select %p169, %s168, 127
      %s171 = smul.addr %s170, 8
      %s172 = scalar_lea.vmem %s3, %s171
      %s173 = smul.u32 64, %s14
      %v174 = vld [vmem:[%s166] sm:$0xff]
      %v175 = vld [vmem:[%s166 + $0x8] sm:$0xff]
      %v176 = vld [vmem:[%s166 + $0x10] sm:$0xff]
      %v177 = vld [vmem:[%s166 + $0x18] sm:$0xff]
      %v178 = vld [vmem:[%s166 + $0x20] sm:$0xff]
      %v179 = vld [vmem:[%s166 + $0x28] sm:$0xff]
      %v180 = vld [vmem:[%s166 + $0x30] sm:$0xff]
      %v181 = vld [vmem:[%s166 + $0x38] sm:$0xff]
      %v182 = vld [vmem:[%s166 + $0x40] sm:$0xff]
      %v183 = vld [vmem:[%s166 + $0x48] sm:$0xff]
      %v184 = vld [vmem:[%s166 + $0x50] sm:$0xff]
      %v185 = vld [vmem:[%s166 + $0x58] sm:$0xff]
      %v186 = vld [vmem:[%s166 + $0x60] sm:$0xff]
      %v187 = vld [vmem:[%s166 + $0x68] sm:$0xff]
      %v188 = vld [vmem:[%s166 + $0x70] sm:$0xff]
      %v189 = vld [vmem:[%s166 + $0x78] sm:$0xff]
      %v190 = vld [vmem:[%s166 + $0x80] sm:$0xff]
      %v191 = vld [vmem:[%s166 + $0x88] sm:$0xff]
      %v192 = vld [vmem:[%s166 + $0x90] sm:$0xff]
      %v193 = vld [vmem:[%s166 + $0x98] sm:$0xff]
      %v194 = vld [vmem:[%s166 + $0xa0] sm:$0xff]
      %v195 = vld [vmem:[%s166 + $0xa8] sm:$0xff]
      %v196 = vld [vmem:[%s166 + $0xb0] sm:$0xff]
      %v197 = vld [vmem:[%s166 + $0xb8] sm:$0xff]
      %v198 = vld [vmem:[%s166 + $0xc0] sm:$0xff]
      %v199 = vld [vmem:[%s166 + $0xc8] sm:$0xff]
      %v200 = vld [vmem:[%s166 + $0xd0] sm:$0xff]
      %v201 = vld [vmem:[%s166 + $0xd8] sm:$0xff]
      %v202 = vld [vmem:[%s166 + $0xe0] sm:$0xff]
      %v203 = vld [vmem:[%s166 + $0xe8] sm:$0xff]
      %v204 = vld [vmem:[%s166 + $0xf0] sm:$0xff]
      %v205 = vld [vmem:[%s166 + $0xf8] sm:$0xff]
      %v206 = vld [vmem:[%s166 + $0x100] sm:$0xff]
      %v207 = vld [vmem:[%s166 + $0x108] sm:$0xff]
      %v208 = vld [vmem:[%s166 + $0x110] sm:$0xff]
      %v209 = vld [vmem:[%s166 + $0x118] sm:$0xff]
      %v210 = vld [vmem:[%s166 + $0x120] sm:$0xff]
      %v211 = vld [vmem:[%s166 + $0x128] sm:$0xff]
      %v212 = vld [vmem:[%s166 + $0x130] sm:$0xff]
      %v213 = vld [vmem:[%s166 + $0x138] sm:$0xff]
      %v214 = vld [vmem:[%s166 + $0x140] sm:$0xff]
      %v215 = vld [vmem:[%s166 + $0x148] sm:$0xff]
      %v216 = vld [vmem:[%s166 + $0x150] sm:$0xff]
      %v217 = vld [vmem:[%s166 + $0x158] sm:$0xff]
      %v218 = vld [vmem:[%s166 + $0x160] sm:$0xff]
      %v219 = vld [vmem:[%s166 + $0x168] sm:$0xff]
      %v220 = vld [vmem:[%s166 + $0x170] sm:$0xff]
      %v221 = vld [vmem:[%s166 + $0x178] sm:$0xff]
      %v222 = vld [vmem:[%s166 + $0x180] sm:$0xff]
      %v223 = vld [vmem:[%s166 + $0x188] sm:$0xff]
      %v224 = vld [vmem:[%s166 + $0x190] sm:$0xff]
      %v225 = vld [vmem:[%s166 + $0x198] sm:$0xff]
      %v226 = vld [vmem:[%s166 + $0x1a0] sm:$0xff]
      %v227 = vld [vmem:[%s166 + $0x1a8] sm:$0xff]
      %v228 = vld [vmem:[%s166 + $0x1b0] sm:$0xff]
      %v229 = vld [vmem:[%s166 + $0x1b8] sm:$0xff]
      %v230 = vld [vmem:[%s166 + $0x1c0] sm:$0xff]
      %v231 = vld [vmem:[%s166 + $0x1c8] sm:$0xff]
      %v232 = vld [vmem:[%s166 + $0x1d0] sm:$0xff]
      %v233 = vld [vmem:[%s166 + $0x1d8] sm:$0xff]
      %v234 = vld [vmem:[%s166 + $0x1e0] sm:$0xff]
      %v235 = vld [vmem:[%s166 + $0x1e8] sm:$0xff]
      %v236 = vld [vmem:[%s166 + $0x1f0] sm:$0xff]
      %v237 = vld [vmem:[%s166 + $0x1f8] sm:$0xff]
      %v238 = vld [vmem:[%s1] sm:$0x1]
      %v240 = vlaneseq
      %v241 = vshrl.u32 %v240, 7
      %v242 = vsub.s32 0, %v241
      %v243 = vrot.slane %v238, %v242
      %v245 = vmul.f32 %v174, %v243
      %v246 = vmul.f32 %v175, %v243
      %v247 = vmul.f32 %v176, %v243
      %v248 = vmul.f32 %v177, %v243
      %v249 = vmul.f32 %v178, %v243
      %v250 = vmul.f32 %v179, %v243
      %v251 = vmul.f32 %v180, %v243
      %v252 = vmul.f32 %v181, %v243
      %v253 = vmul.f32 %v182, %v243
      %v254 = vmul.f32 %v183, %v243
      %v255 = vmul.f32 %v184, %v243
      %v256 = vmul.f32 %v185, %v243
      %v257 = vmul.f32 %v186, %v243
      %v258 = vmul.f32 %v187, %v243
      %v259 = vmul.f32 %v188, %v243
      %v260 = vmul.f32 %v189, %v243
      %v261 = vmul.f32 %v190, %v243
      %v262 = vmul.f32 %v191, %v243
      %v263 = vmul.f32 %v192, %v243
      %v264 = vmul.f32 %v193, %v243
      %v265 = vmul.f32 %v194, %v243
      %v266 = vmul.f32 %v195, %v243
      %v267 = vmul.f32 %v196, %v243
      %v268 = vmul.f32 %v197, %v243
      %v269 = vmul.f32 %v198, %v243
      %v270 = vmul.f32 %v199, %v243
      %v271 = vmul.f32 %v200, %v243
      %v272 = vmul.f32 %v201, %v243
      %v273 = vmul.f32 %v202, %v243
      %v274 = vmul.f32 %v203, %v243
      %v275 = vmul.f32 %v204, %v243
      %v276 = vmul.f32 %v205, %v243
      %v277 = vmul.f32 %v206, %v243
      %v278 = vmul.f32 %v207, %v243
      %v279 = vmul.f32 %v208, %v243
      %v280 = vmul.f32 %v209, %v243
      %v281 = vmul.f32 %v210, %v243
      %v282 = vmul.f32 %v211, %v243
      %v283 = vmul.f32 %v212, %v243
      %v284 = vmul.f32 %v213, %v243
      %v285 = vmul.f32 %v214, %v243
      %v286 = vmul.f32 %v215, %v243
      %v287 = vmul.f32 %v216, %v243
      %v288 = vmul.f32 %v217, %v243
      %v289 = vmul.f32 %v218, %v243
      %v290 = vmul.f32 %v219, %v243
      %v291 = vmul.f32 %v220, %v243
      %v292 = vmul.f32 %v221, %v243
      %v293 = vmul.f32 %v222, %v243
      %v294 = vmul.f32 %v223, %v243
      %v295 = vmul.f32 %v224, %v243
      %v296 = vmul.f32 %v225, %v243
      %v297 = vmul.f32 %v226, %v243
      %v298 = vmul.f32 %v227, %v243
      %v299 = vmul.f32 %v228, %v243
      %v300 = vmul.f32 %v229, %v243
      %v301 = vmul.f32 %v230, %v243
      %v302 = vmul.f32 %v231, %v243
      %v303 = vmul.f32 %v232, %v243
      %v304 = vmul.f32 %v233, %v243
      %v305 = vmul.f32 %v234, %v243
      %v306 = vmul.f32 %v235, %v243
      %v307 = vmul.f32 %v236, %v243
      %v308 = vmul.f32 %v237, %v243
      %v309 = vld [vmem:[%s2] sm:$0x1]
      %v311 = vlaneseq
      %v312 = vshrl.u32 %v311, 7
      %v313 = vsub.s32 0, %v312
      %v314 = vrot.slane %v309, %v313
      %v316 = vadd.f32 %v245, %v314
      %v317 = vadd.f32 %v246, %v314
      %v318 = vadd.f32 %v247, %v314
      %v319 = vadd.f32 %v248, %v314
      %v320 = vadd.f32 %v249, %v314
      %v321 = vadd.f32 %v250, %v314
      %v322 = vadd.f32 %v251, %v314
      %v323 = vadd.f32 %v252, %v314
      %v324 = vadd.f32 %v253, %v314
      %v325 = vadd.f32 %v254, %v314
      %v326 = vadd.f32 %v255, %v314
      %v327 = vadd.f32 %v256, %v314
      %v328 = vadd.f32 %v257, %v314
      %v329 = vadd.f32 %v258, %v314
      %v330 = vadd.f32 %v259, %v314
      %v331 = vadd.f32 %v260, %v314
      %v332 = vadd.f32 %v261, %v314
      %v333 = vadd.f32 %v262, %v314
      %v334 = vadd.f32 %v263, %v314
      %v335 = vadd.f32 %v264, %v314
      %v336 = vadd.f32 %v265, %v314
      %v337 = vadd.f32 %v266, %v314
      %v338 = vadd.f32 %v267, %v314
      %v339 = vadd.f32 %v268, %v314
      %v340 = vadd.f32 %v269, %v314
      %v341 = vadd.f32 %v270, %v314
      %v342 = vadd.f32 %v271, %v314
      %v343 = vadd.f32 %v272, %v314
      %v344 = vadd.f32 %v273, %v314
      %v345 = vadd.f32 %v274, %v314
      %v346 = vadd.f32 %v275, %v314
      %v347 = vadd.f32 %v276, %v314
      %v348 = vadd.f32 %v277, %v314
      %v349 = vadd.f32 %v278, %v314
      %v350 = vadd.f32 %v279, %v314
      %v351 = vadd.f32 %v280, %v314
      %v352 = vadd.f32 %v281, %v314
      %v353 = vadd.f32 %v282, %v314
      %v354 = vadd.f32 %v283, %v314
      %v355 = vadd.f32 %v284, %v314
      %v356 = vadd.f32 %v285, %v314
      %v357 = vadd.f32 %v286, %v314
      %v358 = vadd.f32 %v287, %v314
      %v359 = vadd.f32 %v288, %v314
      %v360 = vadd.f32 %v289, %v314
      %v361 = vadd.f32 %v290, %v314
      %v362 = vadd.f32 %v291, %v314
      %v363 = vadd.f32 %v292, %v314
      %v364 = vadd.f32 %v293, %v314
      %v365 = vadd.f32 %v294, %v314
      %v366 = vadd.f32 %v295, %v314
      %v367 = vadd.f32 %v296, %v314
      %v368 = vadd.f32 %v297, %v314
      %v369 = vadd.f32 %v298, %v314
      %v370 = vadd.f32 %v299, %v314
      %v371 = vadd.f32 %v300, %v314
      %v372 = vadd.f32 %v301, %v314
      %v373 = vadd.f32 %v302, %v314
      %v374 = vadd.f32 %v303, %v314
      %v375 = vadd.f32 %v304, %v314
      %v376 = vadd.f32 %v305, %v314
      %v377 = vadd.f32 %v306, %v314
      %v378 = vadd.f32 %v307, %v314
      %v379 = vadd.f32 %v308, %v314
      %v380 = vmax.f32 %v316, 0.0
      %v381 = vmax.f32 %v317, 0.0
      %v382 = vmax.f32 %v318, 0.0
      %v383 = vmax.f32 %v319, 0.0
      %v384 = vmax.f32 %v320, 0.0
      %v385 = vmax.f32 %v321, 0.0
      %v386 = vmax.f32 %v322, 0.0
      %v387 = vmax.f32 %v323, 0.0
      %v388 = vmax.f32 %v324, 0.0
      %v389 = vmax.f32 %v325, 0.0
      %v390 = vmax.f32 %v326, 0.0
      %v391 = vmax.f32 %v327, 0.0
      %v392 = vmax.f32 %v328, 0.0
      %v393 = vmax.f32 %v329, 0.0
      %v394 = vmax.f32 %v330, 0.0
      %v395 = vmax.f32 %v331, 0.0
      %v396 = vmax.f32 %v332, 0.0
      %v397 = vmax.f32 %v333, 0.0
      %v398 = vmax.f32 %v334, 0.0
      %v399 = vmax.f32 %v335, 0.0
      %v400 = vmax.f32 %v336, 0.0
      %v401 = vmax.f32 %v337, 0.0
      %v402 = vmax.f32 %v338, 0.0
      %v403 = vmax.f32 %v339, 0.0
      %v404 = vmax.f32 %v340, 0.0
      %v405 = vmax.f32 %v341, 0.0
      %v406 = vmax.f32 %v342, 0.0
      %v407 = vmax.f32 %v343, 0.0
      %v408 = vmax.f32 %v344, 0.0
      %v409 = vmax.f32 %v345, 0.0
      %v410 = vmax.f32 %v346, 0.0
      %v411 = vmax.f32 %v347, 0.0
      %v412 = vmax.f32 %v348, 0.0
      %v413 = vmax.f32 %v349, 0.0
      %v414 = vmax.f32 %v350, 0.0
      %v415 = vmax.f32 %v351, 0.0
      %v416 = vmax.f32 %v352, 0.0
      %v417 = vmax.f32 %v353, 0.0
      %v418 = vmax.f32 %v354, 0.0
      %v419 = vmax.f32 %v355, 0.0
      %v420 = vmax.f32 %v356, 0.0
      %v421 = vmax.f32 %v357, 0.0
      %v422 = vmax.f32 %v358, 0.0
      %v423 = vmax.f32 %v359, 0.0
      %v424 = vmax.f32 %v360, 0.0
      %v425 = vmax.f32 %v361, 0.0
      %v426 = vmax.f32 %v362, 0.0
      %v427 = vmax.f32 %v363, 0.0
      %v428 = vmax.f32 %v364, 0.0
      %v429 = vmax.f32 %v365, 0.0
      %v430 = vmax.f32 %v366, 0.0
      %v431 = vmax.f32 %v367, 0.0
      %v432 = vmax.f32 %v368, 0.0
      %v433 = vmax.f32 %v369, 0.0
      %v434 = vmax.f32 %v370, 0.0
      %v435 = vmax.f32 %v371, 0.0
      %v436 = vmax.f32 %v372, 0.0
      %v437 = vmax.f32 %v373, 0.0
      %v438 = vmax.f32 %v374, 0.0
      %v439 = vmax.f32 %v375, 0.0
      %v440 = vmax.f32 %v376, 0.0
      %v441 = vmax.f32 %v377, 0.0
      %v442 = vmax.f32 %v378, 0.0
      %v443 = vmax.f32 %v379, 0.0
      %vm444 = vcmask 64512
      %445 = vst.msk [vmem:[%s172] sm:$0xff] %vm444, %v380
      %446 = vst.msk [vmem:[%s172 + $0x8] sm:$0xff] %vm444, %v381
      %447 = vst.msk [vmem:[%s172 + $0x10] sm:$0xff] %vm444, %v382
      %448 = vst.msk [vmem:[%s172 + $0x18] sm:$0xff] %vm444, %v383
      %449 = vst.msk [vmem:[%s172 + $0x20] sm:$0xff] %vm444, %v384
      %450 = vst.msk [vmem:[%s172 + $0x28] sm:$0xff] %vm444, %v385
      %451 = vst.msk [vmem:[%s172 + $0x30] sm:$0xff] %vm444, %v386
      %452 = vst.msk [vmem:[%s172 + $0x38] sm:$0xff] %vm444, %v387
      %453 = vst.msk [vmem:[%s172 + $0x40] sm:$0xff] %vm444, %v388
      %454 = vst.msk [vmem:[%s172 + $0x48] sm:$0xff] %vm444, %v389
      %455 = vst.msk [vmem:[%s172 + $0x50] sm:$0xff] %vm444, %v390
      %456 = vst.msk [vmem:[%s172 + $0x58] sm:$0xff] %vm444, %v391
      %457 = vst.msk [vmem:[%s172 + $0x60] sm:$0xff] %vm444, %v392
      %458 = vst.msk [vmem:[%s172 + $0x68] sm:$0xff] %vm444, %v393
      %459 = vst.msk [vmem:[%s172 + $0x70] sm:$0xff] %vm444, %v394
      %460 = vst.msk [vmem:[%s172 + $0x78] sm:$0xff] %vm444, %v395
      %461 = vst.msk [vmem:[%s172 + $0x80] sm:$0xff] %vm444, %v396
      %462 = vst.msk [vmem:[%s172 + $0x88] sm:$0xff] %vm444, %v397
      %463 = vst.msk [vmem:[%s172 + $0x90] sm:$0xff] %vm444, %v398
      %464 = vst.msk [vmem:[%s172 + $0x98] sm:$0xff] %vm444, %v399
      %465 = vst.msk [vmem:[%s172 + $0xa0] sm:$0xff] %vm444, %v400
      %466 = vst.msk [vmem:[%s172 + $0xa8] sm:$0xff] %vm444, %v401
      %467 = vst.msk [vmem:[%s172 + $0xb0] sm:$0xff] %vm444, %v402
      %468 = vst.msk [vmem:[%s172 + $0xb8] sm:$0xff] %vm444, %v403
      %469 = vst.msk [vmem:[%s172 + $0xc0] sm:$0xff] %vm444, %v404
      %470 = vst.msk [vmem:[%s172 + $0xc8] sm:$0xff] %vm444, %v405
      %471 = vst.msk [vmem:[%s172 + $0xd0] sm:$0xff] %vm444, %v406
      %472 = vst.msk [vmem:[%s172 + $0xd8] sm:$0xff] %vm444, %v407
      %473 = vst.msk [vmem:[%s172 + $0xe0] sm:$0xff] %vm444, %v408
      %474 = vst.msk [vmem:[%s172 + $0xe8] sm:$0xff] %vm444, %v409
      %475 = vst.msk [vmem:[%s172 + $0xf0] sm:$0xff] %vm444, %v410
      %476 = vst.msk [vmem:[%s172 + $0xf8] sm:$0xff] %vm444, %v411
      %477 = vst.msk [vmem:[%s172 + $0x100] sm:$0xff] %vm444, %v412
      %478 = vst.msk [vmem:[%s172 + $0x108] sm:$0xff] %vm444, %v413
      %479 = vst.msk [vmem:[%s172 + $0x110] sm:$0xff] %vm444, %v414
      %480 = vst.msk [vmem:[%s172 + $0x118] sm:$0xff] %vm444, %v415
      %481 = vst.msk [vmem:[%s172 + $0x120] sm:$0xff] %vm444, %v416
      %482 = vst.msk [vmem:[%s172 + $0x128] sm:$0xff] %vm444, %v417
      %483 = vst.msk [vmem:[%s172 + $0x130] sm:$0xff] %vm444, %v418
      %484 = vst.msk [vmem:[%s172 + $0x138] sm:$0xff] %vm444, %v419
      %485 = vst.msk [vmem:[%s172 + $0x140] sm:$0xff] %vm444, %v420
      %486 = vst.msk [vmem:[%s172 + $0x148] sm:$0xff] %vm444, %v421
      %487 = vst.msk [vmem:[%s172 + $0x150] sm:$0xff] %vm444, %v422
      %488 = vst.msk [vmem:[%s172 + $0x158] sm:$0xff] %vm444, %v423
      %489 = vst.msk [vmem:[%s172 + $0x160] sm:$0xff] %vm444, %v424
      %490 = vst.msk [vmem:[%s172 + $0x168] sm:$0xff] %vm444, %v425
      %491 = vst.msk [vmem:[%s172 + $0x170] sm:$0xff] %vm444, %v426
      %492 = vst.msk [vmem:[%s172 + $0x178] sm:$0xff] %vm444, %v427
      %493 = vst.msk [vmem:[%s172 + $0x180] sm:$0xff] %vm444, %v428
      %494 = vst.msk [vmem:[%s172 + $0x188] sm:$0xff] %vm444, %v429
      %495 = vst.msk [vmem:[%s172 + $0x190] sm:$0xff] %vm444, %v430
      %496 = vst.msk [vmem:[%s172 + $0x198] sm:$0xff] %vm444, %v431
      %497 = vst.msk [vmem:[%s172 + $0x1a0] sm:$0xff] %vm444, %v432
      %498 = vst.msk [vmem:[%s172 + $0x1a8] sm:$0xff] %vm444, %v433
      %499 = vst.msk [vmem:[%s172 + $0x1b0] sm:$0xff] %vm444, %v434
      %500 = vst.msk [vmem:[%s172 + $0x1b8] sm:$0xff] %vm444, %v435
      %501 = vst.msk [vmem:[%s172 + $0x1c0] sm:$0xff] %vm444, %v436
      %502 = vst.msk [vmem:[%s172 + $0x1c8] sm:$0xff] %vm444, %v437
      %503 = vst.msk [vmem:[%s172 + $0x1d0] sm:$0xff] %vm444, %v438
      %504 = vst.msk [vmem:[%s172 + $0x1d8] sm:$0xff] %vm444, %v439
      %505 = vst.msk [vmem:[%s172 + $0x1e0] sm:$0xff] %vm444, %v440
      %506 = vst.msk [vmem:[%s172 + $0x1e8] sm:$0xff] %vm444, %v441
      %507 = vst.msk [vmem:[%s172 + $0x1f0] sm:$0xff] %vm444, %v442
      %508 = vst.msk [vmem:[%s172 + $0x1f8] sm:$0xff] %vm444, %v443
      %s509 = smul.u32 64, %s14
      %p510 = scmp.lt.s32.totalorder %s509, 127
      %s511 = scalar_select %p510, %s509, 127
      %s512 = smul.addr %s511, 8
      %s513 = scalar_lea.vmem %s3, %s512
      // Predicated region
      $region33: #{residual_block_forward.5} parent=31 // pred_check
        %p514 = pneg %p100
      $region34: #{residual_block_forward.5} parent=31 // pred_check_branch
        %516 = sbr.rel (%p514) target = $region36
      $region35: #{residual_block_forward.5} parent=31 // pred_region
        %s517 = smul.u32 64, %s14
      $region36: #{residual_block_forward.5} parent=31 // pred_fallthru
        _
    $region32: #{residual_block_forward.5} parent=5 // pred_fallthru
      _
    %p518 = scmp.le.s32.totalorder 2, %s9
    // Predicated region
    $region37: #{residual_block_forward.5} parent=5 // pred_check
      %p519 = pneg %p518
    $region38: #{residual_block_forward.5} parent=5 // pred_check_branch
      %521 = sbr.rel (%p519) target = $region40
    $region39: #{residual_block_forward.5} parent=5 // pred_region
      %s522 = ssub.s32 %s9, 2
      // Predicated region
      $region41: #{residual_block_forward.5} parent=39 // pred_check
        %p523 = pneg %p106
      $region42: #{residual_block_forward.5} parent=39 // pred_check_branch
        %525 = sbr.rel (%p523) target = $region44
      $region43: #{residual_block_forward.5} parent=39 // pred_region
        %s526 = smul.u32 64, %s15
        %p527 = scmp.lt.s32.totalorder %s526, 127
        %s528 = scalar_select %p527, %s526, 127
        %s529 = smul.addr %s528, 8
        %s530 = scalar_lea.vmem %s3, %s529
      $region44: #{residual_block_forward.5} parent=39 // pred_fallthru
        _
    $region40: #{residual_block_forward.5} parent=5 // pred_fallthru
      _
  $region6: #{residual_block_forward.5} parent=0 // loop_footer
    %s13 = sadd.s32 1, %s9
  $region7: #{residual_block_forward.5} parent=0 // loop_footer_branch
    %8 = sbr.rel target = $region3
  $region8: #{residual_block_forward.5} parent=0 // loop_exit
    _

// kernel: residual_block_forward.3
$region0: #{residual_block_forward.3}
  #allocation0 [shape = 'u32[]', space=smem, size = 0x4, offset = 0x4, fixed_abs, tag = 'smem constant byte address 0x4 - core index']
  #allocation1 [shape = 'u32[144,128]{1,0:T(1,128)}', space=vmem, size = 0x12000, scoped, tag = 'internal scratch']
  %s0 = inlined_call_operand.vmem [shape: bf16[2048,4], index: 0, kind: input, shape index: {}, may-alias: {0,1}]
  %s1 = inlined_call_operand.vmem [shape: bf16[2048,4], index: 1, kind: input, shape index: {}, may-alias: {0,1}]
  %s2 = inlined_call_operand.vmem [shape: f32[1536,1], index: 2, kind: input, shape index: {}]
  %s3 = inlined_call_operand.vmem [shape: bf16[36,8], index: 3, kind: input, shape index: {}]
  %s4 = inlined_call_operand.vmem [shape: f32[1536,8], index: 4, kind: output, shape index: {0}]
  %s5 = inlined_call_operand.vmem [shape: f32[3,2,8], index: 5, kind: output, shape index: {1}]
  %6 = xla_tuple %s4, %s5
  %s7 = sld [smem:[#allocation0]]
  $region57: #{residual_block_forward.3} parent=0
    _
  %s9 = ssub.s32 1, %s7
  %s10 = scalar_select 0, %s9, %s7
  loop: start=0, step=1, limit=5
  $region2: #{residual_block_forward.3} parent=0 // loop_pre_header
    _
  $region3: #{residual_block_forward.3} parent=0 // loop_header
    %s12 = sphi 0, %s16
    %p13 = scmp.ge.s32.totalorder %s12, 5
    %s22 = sphi 0, %s24
    %s25 = sphi 0, %s22
    %s26 = sphi 0, %s25
    %s42 = sphi 0, %s26
    %s50 = sphi 0, %s52
    %s53 = sphi 0, %s50
    %s54 = sphi 0, %s53
    %s70 = sphi 0, %s54
    %s76 = sphi 0, %s78
    %s79 = sphi 0, %s76
    %s80 = sphi 0, %s79
    %s96 = sphi 0, %s80
    %s100 = sphi 0, %s100
    %s102 = sphi 0, %s100
    %s103 = sphi 0, %s102
    %s117 = sphi 0, %s103
    %s123 = sphi 0, %s125
    %s126 = sphi 0, %s123
    %s127 = sphi 0, %s126
    %s143 = sphi 0, %s127
    %s149 = sphi 0, %s151
    %s152 = sphi 0, %s149
    %s153 = sphi 0, %s152
    %s169 = sphi 0, %s153
  $region4: #{residual_block_forward.3} parent=0 // loop_header_branch
    %15 = sbr.rel (%p13) target = $region8
  $region5: #{residual_block_forward.3} parent=0 // loop_body
    %s17 = ssub.s32 %s12, 1
    %s18 = ssub.s32 %s12, 2
    %s19 = sadd.s32 %s12, 1
    %s20 = ssub.s32 %s12, %s19
    %p21 = scmp.eq.s32.totalorder %s20, 0
    %s23 = sadd.s32 %s22, 1
    %s24 = scalar_select %p21, %s22, %s23
    %p27 = pneg %p21
    %p28 = scmp.eq.s32.totalorder %s12, 2
    %p29 = por %p27, %p28
    %p30 = scmp.ne.s32.totalorder %s22, %s25
    %p31 = scmp.eq.s32.totalorder %s12, 0
    %p32 = por %p30, %p31
    %p33 = scmp.ne.s32.totalorder %s22, %s25
    %p34 = scmp.eq.s32.totalorder %s17, 2
    %p35 = por %p33, %p34
    %p36 = scmp.ne.s32.totalorder %s25, %s26
    %p37 = scmp.eq.s32.totalorder %s17, 0
    %p38 = por %p36, %p37
    %p39 = scmp.ne.s32.totalorder %s25, %s26
    %p40 = scmp.eq.s32.totalorder %s18, 2
    %p41 = por %p39, %p40
    %p43 = scmp.ne.s32.totalorder %s26, %s42
    %p44 = scmp.eq.s32.totalorder %s18, 0
    %p45 = por %p43, %p44
    %s46 = sadd.s32 %s12, 1
    %s47 = sadd.s32 %s19, 1
    %s48 = ssub.s32 %s46, %s47
    %p49 = scmp.eq.s32.totalorder %s48, 0
    %s51 = sadd.s32 %s50, 1
    %s52 = scalar_select %p49, %s50, %s51
    %p55 = pneg %p49
    %p56 = scmp.eq.s32.totalorder %s12, 2
    %p57 = por %p55, %p56
    %p58 = scmp.ne.s32.totalorder %s50, %s53
    %p59 = scmp.eq.s32.totalorder %s12, 0
    %p60 = por %p58, %p59
    %p61 = scmp.ne.s32.totalorder %s50, %s53
    %p62 = scmp.eq.s32.totalorder %s17, 2
    %p63 = por %p61, %p62
    %p64 = scmp.ne.s32.totalorder %s53, %s54
    %p65 = scmp.eq.s32.totalorder %s17, 0
    %p66 = por %p64, %p65
    %p67 = scmp.ne.s32.totalorder %s53, %s54
    %p68 = scmp.eq.s32.totalorder %s18, 2
    %p69 = por %p67, %p68
    %p71 = scmp.ne.s32.totalorder %s54, %s70
    %p72 = scmp.eq.s32.totalorder %s18, 0
    %p73 = por %p71, %p72
    %s74 = ssub.s32 %s12, %s19
    %p75 = scmp.eq.s32.totalorder %s74, 0
    %s77 = sadd.s32 %s76, 1
    %s78 = scalar_select %p75, %s76, %s77
    %p81 = pneg %p75
    %p82 = scmp.eq.s32.totalorder %s12, 2
    %p83 = por %p81, %p82
    %p84 = scmp.ne.s32.totalorder %s76, %s79
    %p85 = scmp.eq.s32.totalorder %s12, 0
    %p86 = por %p84, %p85
    %p87 = scmp.ne.s32.totalorder %s76, %s79
    %p88 = scmp.eq.s32.totalorder %s17, 2
    %p89 = por %p87, %p88
    %p90 = scmp.ne.s32.totalorder %s79, %s80
    %p91 = scmp.eq.s32.totalorder %s17, 0
    %p92 = por %p90, %p91
    %p93 = scmp.ne.s32.totalorder %s79, %s80
    %p94 = scmp.eq.s32.totalorder %s18, 2
    %p95 = por %p93, %p94
    %p97 = scmp.ne.s32.totalorder %s80, %s96
    %p98 = scmp.eq.s32.totalorder %s18, 0
    %p99 = por %p97, %p98
    %s101 = sadd.s32 %s100, 1
    %p104 = scmp.eq.s32.totalorder %s12, 2
    %p105 = scmp.ne.s32.totalorder %s100, %s102
    %p106 = scmp.eq.s32.totalorder %s12, 0
    %p107 = por %p105, %p106
    %p108 = scmp.ne.s32.totalorder %s100, %s102
    %p109 = scmp.eq.s32.totalorder %s17, 2
    %p110 = por %p108, %p109
    %p111 = scmp.ne.s32.totalorder %s102, %s103
    %p112 = scmp.eq.s32.totalorder %s17, 0
    %p113 = por %p111, %p112
    %p114 = scmp.ne.s32.totalorder %s102, %s103
    %p115 = scmp.eq.s32.totalorder %s18, 2
    %p116 = por %p114, %p115
    %p118 = scmp.ne.s32.totalorder %s103, %s117
    %p119 = scmp.eq.s32.totalorder %s18, 0
    %p120 = por %p118, %p119
    %s121 = ssub.s32 %s12, %s19
    %p122 = scmp.eq.s32.totalorder %s121, 0
    %s124 = sadd.s32 %s123, 1
    %s125 = scalar_select %p122, %s123, %s124
    %p128 = pneg %p122
    %p129 = scmp.eq.s32.totalorder %s12, 2
    %p130 = por %p128, %p129
    %p131 = scmp.ne.s32.totalorder %s123, %s126
    %p132 = scmp.eq.s32.totalorder %s12, 0
    %p133 = por %p131, %p132
    %p134 = scmp.ne.s32.totalorder %s123, %s126
    %p135 = scmp.eq.s32.totalorder %s17, 2
    %p136 = por %p134, %p135
    %p137 = scmp.ne.s32.totalorder %s126, %s127
    %p138 = scmp.eq.s32.totalorder %s17, 0
    %p139 = por %p137, %p138
    %p140 = scmp.ne.s32.totalorder %s126, %s127
    %p141 = scmp.eq.s32.totalorder %s18, 2
    %p142 = por %p140, %p141
    %p144 = scmp.ne.s32.totalorder %s127, %s143
    %p145 = scmp.eq.s32.totalorder %s18, 0
    %p146 = por %p144, %p145
    %s147 = ssub.s32 %s12, %s19
    %p148 = scmp.eq.s32.totalorder %s147, 0
    %s150 = sadd.s32 %s149, 1
    %s151 = scalar_select %p148, %s149, %s150
    %p154 = pneg %p148
    %p155 = scmp.eq.s32.totalorder %s12, 2
    %p156 = por %p154, %p155
    %p157 = scmp.ne.s32.totalorder %s149, %s152
    %p158 = scmp.eq.s32.totalorder %s12, 0
    %p159 = por %p157, %p158
    %p160 = scmp.ne.s32.totalorder %s149, %s152
    %p161 = scmp.eq.s32.totalorder %s17, 2
    %p162 = por %p160, %p161
    %p163 = scmp.ne.s32.totalorder %s152, %s153
    %p164 = scmp.eq.s32.totalorder %s17, 0
    %p165 = por %p163, %p164
    %p166 = scmp.ne.s32.totalorder %s152, %s153
    %p167 = scmp.eq.s32.totalorder %s18, 2
    %p168 = por %p166, %p167
    %p170 = scmp.ne.s32.totalorder %s153, %s169
    %p171 = scmp.eq.s32.totalorder %s18, 0
    %p172 = por %p170, %p171
    %p173 = scmp.le.s32.totalorder 1, %s12
    %p174 = scmp.lt.s32.totalorder %s12, 4
    %p175 = pnand %p173, %p174
    %p176 = pneg %p175
    // Predicated region
    $region9: #{residual_block_forward.3} parent=5 // pred_check
      _
    $region10: #{residual_block_forward.3} parent=5 // pred_check_branch
      %178 = sbr.rel (%p175) target = $region12
    $region11: #{residual_block_forward.3} parent=5 // pred_region
      %s179 = ssub.s32 %s12, 1
      // Predicated region
      $region13: #{residual_block_forward.3} parent=11 // pred_check
        %p180 = pneg %p113
      $region14: #{residual_block_forward.3} parent=11 // pred_check_branch
        %182 = sbr.rel (%p180) target = $region16
      $region15: #{residual_block_forward.3} parent=11 // pred_region
        _
      $region16: #{residual_block_forward.3} parent=11 // pred_fallthru
        _
    $region12: #{residual_block_forward.3} parent=5 // pred_fallthru
      _
    %p183 = scmp.lt.s32.totalorder %s12, 3
    // Predicated region
    $region17: #{residual_block_forward.3} parent=5 // pred_check
      %p184 = pneg %p183
    $region18: #{residual_block_forward.3} parent=5 // pred_check_branch
      %186 = sbr.rel (%p184) target = $region20
    $region19: #{residual_block_forward.3} parent=5 // pred_region
      // Predicated region
      $region21: #{residual_block_forward.3} parent=19 // pred_check
        %p187 = pneg %p32
      $region22: #{residual_block_forward.3} parent=19 // pred_check_branch
        %189 = sbr.rel (%p187) target = $region24
      $region23: #{residual_block_forward.3} parent=19 // pred_region
        %s190 = smul.u32 64, %s12
        %p191 = scmp.lt.s32.totalorder %s190, 255
        %s192 = scalar_select %p191, %s190, 255
        %s193 = smul.addr %s192, 4
        %s194 = scalar_lea.vmem %s0, %s193
        %s195 = smul.u32 64, %s12
      $region24: #{residual_block_forward.3} parent=19 // pred_fallthru
        _
      // Predicated region
      $region25: #{residual_block_forward.3} parent=19 // pred_check
        %p196 = pneg %p60
      $region26: #{residual_block_forward.3} parent=19 // pred_check_branch
        %198 = sbr.rel (%p196) target = $region28
      $region27: #{residual_block_forward.3} parent=19 // pred_region
        %s199 = sadd.s32 %s12, 1
        %s200 = smul.u32 64, %s199
        %p201 = scmp.lt.s32.totalorder %s200, 255
        %s202 = scalar_select %p201, %s200, 255
        %s203 = smul.addr %s202, 4
        %s204 = scalar_lea.vmem %s1, %s203
        %s205 = sadd.s32 %s12, 1
        %s206 = smul.u32 64, %s205
      $region28: #{residual_block_forward.3} parent=19 // pred_fallthru
        _
      // Predicated region
      $region29: #{residual_block_forward.3} parent=19 // pred_check
        %p207 = pneg %p86
      $region30: #{residual_block_forward.3} parent=19 // pred_check_branch
        %209 = sbr.rel (%p207) target = $region32
      $region31: #{residual_block_forward.3} parent=19 // pred_region
        %s210 = smul.u32 64, %s12
        %p211 = scmp.lt.s32.totalorder %s210, 191
        %s212 = scalar_select %p211, %s210, 191
        %s213 = smul.addr %s212, 8
        %s214 = scalar_lea.vmem %s2, %s213
        %s215 = smul.u32 64, %s12
      $region32: #{residual_block_forward.3} parent=19 // pred_fallthru
        _
    $region20: #{residual_block_forward.3} parent=5 // pred_fallthru
      _
    %p216 = scmp.le.s32.totalorder 1, %s12
    %p217 = scmp.lt.s32.totalorder %s12, 4
    %p218 = pnand %p216, %p217
    %p219 = pneg %p218
    // Predicated region
    $region33: #{residual_block_forward.3} parent=5 // pred_check
      _
    $region34: #{residual_block_forward.3} parent=5 // pred_check_branch
      %221 = sbr.rel (%p218) target = $region36
    $region35: #{residual_block_forward.3} parent=5 // pred_region
      %s222 = ssub.s32 %s12, 1
      %s223 = smul.u32 64, %s17
      %p224 = scmp.lt.s32.totalorder %s223, 255
      %s225 = scalar_select %p224, %s223, 255
      %s226 = smul.addr %s225, 4
      %s227 = scalar_lea.vmem %s0, %s226
      %p228 = pneg %p38
      %p229 = pneg %p35
      %s230 = sadd.s32 %s17, 1
      %s231 = smul.u32 64, %s230
      %p232 = scmp.lt.s32.totalorder %s231, 255
      %s233 = scalar_select %p232, %s231, 255
      %s234 = smul.addr %s233, 4
      %s235 = scalar_lea.vmem %s1, %s234
      %p236 = pneg %p66
      %p237 = pneg %p63
      %s238 = smul.u32 64, %s17
      %p239 = scmp.lt.s32.totalorder %s238, 191
      %s240 = scalar_select %p239, %s238, 191
      %s241 = smul.addr %s240, 8
      %s242 = scalar_lea.vmem %s2, %s241
      %p243 = pneg %p92
      %p244 = pneg %p89
      %p245 = pneg %p113
      %p246 = pneg %p110
      %p247 = pneg %p139
      %p248 = pneg %p136
      %s249 = smul.u32 64, %s17
      %p250 = scmp.lt.s32.totalorder %s249, 191
      %s251 = scalar_select %p250, %s249, 191
      %s252 = smul.addr %s251, 8
      %s253 = scalar_lea.vmem %s4, %s252
      %p254 = pneg %p165
      %p255 = pneg %p162
      %p256 = scmp.lt.s32.totalorder %s17, 2
      %s257 = scalar_select %p256, %s17, 2
      %s258 = smul.addr %s257, 2
      %s259 = scalar_lea.vmem %s5, %s258
      %s260 = smul.u32 64, %s17
      %p261 = scmp.lt.s32.totalorder %s260, 255
      %s262 = scalar_select %p261, %s260, 255
      %s263 = smul.addr %s262, 4
      %s264 = scalar_lea.vmem %s0, %s263
      %s265 = smul.u32 64, %s17
      %s266 = sadd.s32 %s17, 1
      %s267 = smul.u32 64, %s266
      %p268 = scmp.lt.s32.totalorder %s267, 255
      %s269 = scalar_select %p268, %s267, 255
      %s270 = smul.addr %s269, 4
      %s271 = scalar_lea.vmem %s1, %s270
      %s272 = sadd.s32 %s17, 1
      %s273 = smul.u32 64, %s272
      %s274 = smul.u32 64, %s17
      %p275 = scmp.lt.s32.totalorder %s274, 191
      %s276 = scalar_select %p275, %s274, 191
      %s277 = smul.addr %s276, 8
      %s278 = scalar_lea.vmem %s2, %s277
      %s279 = smul.u32 64, %s17
      %s280 = smul.u32 64, %s17
      %p281 = scmp.lt.s32.totalorder %s280, 191
      %s282 = scalar_select %p281, %s280, 191
      %s283 = smul.addr %s282, 8
      %s284 = scalar_lea.vmem %s4, %s283
      %s285 = smul.u32 64, %s17
      %p286 = scmp.lt.s32.totalorder %s17, 2
      %s287 = scalar_select %p286, %s17, 2
      %s288 = smul.addr %s287, 2
      %s289 = scalar_lea.vmem %s5, %s288
      %v291 = vld [vmem:[%s264] sm:$0xf]
      %v292 = vld [vmem:[%s264 + $0x4] sm:$0xf]
      %v293 = vld [vmem:[%s264 + $0x8] sm:$0xf]
      %v294 = vld [vmem:[%s264 + $0xc] sm:$0xf]
      %v295 = vld [vmem:[%s264 + $0x10] sm:$0xf]
      %v296 = vld [vmem:[%s264 + $0x14] sm:$0xf]
      %v297 = vld [vmem:[%s264 + $0x18] sm:$0xf]
      %v298 = vld [vmem:[%s264 + $0x1c] sm:$0xf]
      %v299 = vld [vmem:[%s264 + $0x20] sm:$0xf]
      %v300 = vld [vmem:[%s264 + $0x24] sm:$0xf]
      %v301 = vld [vmem:[%s264 + $0x28] sm:$0xf]
      %v302 = vld [vmem:[%s264 + $0x2c] sm:$0xf]
      %v303 = vld [vmem:[%s264 + $0x30] sm:$0xf]
      %v304 = vld [vmem:[%s264 + $0x34] sm:$0xf]
      %v305 = vld [vmem:[%s264 + $0x38] sm:$0xf]
      %v306 = vld [vmem:[%s264 + $0x3c] sm:$0xf]
      %v307 = vld [vmem:[%s264 + $0x40] sm:$0xf]
      %v308 = vld [vmem:[%s264 + $0x44] sm:$0xf]
      %v309 = vld [vmem:[%s264 + $0x48] sm:$0xf]
      %v310 = vld [vmem:[%s264 + $0x4c] sm:$0xf]
      %v311 = vld [vmem:[%s264 + $0x50] sm:$0xf]
      %v312 = vld [vmem:[%s264 + $0x54] sm:$0xf]
      %v313 = vld [vmem:[%s264 + $0x58] sm:$0xf]
      %v314 = vld [vmem:[%s264 + $0x5c] sm:$0xf]
      %v315 = vld [vmem:[%s264 + $0x60] sm:$0xf]
      %v316 = vld [vmem:[%s264 + $0x64] sm:$0xf]
      %v317 = vld [vmem:[%s264 + $0x68] sm:$0xf]
      %v318 = vld [vmem:[%s264 + $0x6c] sm:$0xf]
      %v319 = vld [vmem:[%s264 + $0x70] sm:$0xf]
      %v320 = vld [vmem:[%s264 + $0x74] sm:$0xf]
      %v321 = vld [vmem:[%s264 + $0x78] sm:$0xf]
      %v322 = vld [vmem:[%s264 + $0x7c] sm:$0xf]
      %v323 = vld [vmem:[%s264 + $0x80] sm:$0xf]
      %v324 = vld [vmem:[%s264 + $0x84] sm:$0xf]
      %v325 = vld [vmem:[%s264 + $0x88] sm:$0xf]
      %v326 = vld [vmem:[%s264 + $0x8c] sm:$0xf]
      %v327 = vld [vmem:[%s264 + $0x90] sm:$0xf]
      %v328 = vld [vmem:[%s264 + $0x94] sm:$0xf]
      %v329 = vld [vmem:[%s264 + $0x98] sm:$0xf]
      %v330 = vld [vmem:[%s264 + $0x9c] sm:$0xf]
      %v331 = vld [vmem:[%s264 + $0xa0] sm:$0xf]
      %v332 = vld [vmem:[%s264 + $0xa4] sm:$0xf]
      %v333 = vld [vmem:[%s264 + $0xa8] sm:$0xf]
      %v334 = vld [vmem:[%s264 + $0xac] sm:$0xf]
      %v335 = vld [vmem:[%s264 + $0xb0] sm:$0xf]
      %v336 = vld [vmem:[%s264 + $0xb4] sm:$0xf]
      %v337 = vld [vmem:[%s264 + $0xb8] sm:$0xf]
      %v338 = vld [vmem:[%s264 + $0xbc] sm:$0xf]
      %v339 = vld [vmem:[%s264 + $0xc0] sm:$0xf]
      %v340 = vld [vmem:[%s264 + $0xc4] sm:$0xf]
      %v341 = vld [vmem:[%s264 + $0xc8] sm:$0xf]
      %v342 = vld [vmem:[%s264 + $0xcc] sm:$0xf]
      %v343 = vld [vmem:[%s264 + $0xd0] sm:$0xf]
      %v344 = vld [vmem:[%s264 + $0xd4] sm:$0xf]
      %v345 = vld [vmem:[%s264 + $0xd8] sm:$0xf]
      %v346 = vld [vmem:[%s264 + $0xdc] sm:$0xf]
      %v347 = vld [vmem:[%s264 + $0xe0] sm:$0xf]
      %v348 = vld [vmem:[%s264 + $0xe4] sm:$0xf]
      %v349 = vld [vmem:[%s264 + $0xe8] sm:$0xf]
      %v350 = vld [vmem:[%s264 + $0xec] sm:$0xf]
      %v351 = vld [vmem:[%s264 + $0xf0] sm:$0xf]
      %v352 = vld [vmem:[%s264 + $0xf4] sm:$0xf]
      %v353 = vld [vmem:[%s264 + $0xf8] sm:$0xf]
      %v354 = vld [vmem:[%s264 + $0xfc] sm:$0xf]
      %v355 = vld [vmem:[%s271] sm:$0xf]
      %v356 = vld [vmem:[%s271 + $0x4] sm:$0xf]
      %v357 = vld [vmem:[%s271 + $0x8] sm:$0xf]
      %v358 = vld [vmem:[%s271 + $0xc] sm:$0xf]
      %v359 = vld [vmem:[%s271 + $0x10] sm:$0xf]
      %v360 = vld [vmem:[%s271 + $0x14] sm:$0xf]
      %v425 = vunpack.c.l.b16 %v291
      %v426 = vunpack.c.l.b16 %v292
      %v427 = vunpack.c.l.b16 %v293
      %v428 = vunpack.c.l.b16 %v294
      %v429 = vunpack.c.l.b16 %v295
      %v430 = vunpack.c.l.b16 %v296
      %v431 = vunpack.c.l.b16 %v297
      %v432 = vunpack.c.l.b16 %v298
      %v433 = vunpack.c.l.b16 %v299
      %v434 = vunpack.c.l.b16 %v300
      %v435 = vunpack.c.l.b16 %v301
      %v436 = vunpack.c.l.b16 %v302
      %v437 = vunpack.c.l.b16 %v303
      %v438 = vunpack.c.l.b16 %v304
      %v439 = vunpack.c.l.b16 %v305
      %v440 = vunpack.c.l.b16 %v306
      %v441 = vunpack.c.l.b16 %v307
      %v442 = vunpack.c.l.b16 %v308
      %v443 = vunpack.c.l.b16 %v309
      %v444 = vunpack.c.l.b16 %v310
      %v445 = vunpack.c.l.b16 %v311
      %v446 = vunpack.c.l.b16 %v312
      %v447 = vunpack.c.l.b16 %v313
      %v448 = vunpack.c.l.b16 %v314
      %v449 = vunpack.c.l.b16 %v315
      %v450 = vunpack.c.l.b16 %v316
      %v451 = vunpack.c.l.b16 %v317
      %v452 = vunpack.c.l.b16 %v318
      %v453 = vunpack.c.l.b16 %v319
      %v454 = vunpack.c.l.b16 %v320
      %v455 = vunpack.c.l.b16 %v321
      %v456 = vunpack.c.l.b16 %v322
      %v457 = vunpack.c.l.b16 %v323
      %v458 = vunpack.c.l.b16 %v324
      %v459 = vunpack.c.l.b16 %v325
      %v460 = vunpack.c.l.b16 %v326
      %v461 = vunpack.c.l.b16 %v327
      %v462 = vunpack.c.l.b16 %v328
      %v463 = vunpack.c.l.b16 %v329
      %v464 = vunpack.c.l.b16 %v330
      %v465 = vunpack.c.l.b16 %v331
      %v466 = vunpack.c.l.b16 %v332
      %v467 = vunpack.c.l.b16 %v333
      %v468 = vunpack.c.l.b16 %v334
      %v469 = vunpack.c.l.b16 %v335
      %v470 = vunpack.c.l.b16 %v336
      %v471 = vunpack.c.l.b16 %v337
      %v472 = vunpack.c.l.b16 %v338
      %v473 = vunpack.c.l.b16 %v339
      %v474 = vunpack.c.l.b16 %v340
      %v475 = vunpack.c.l.b16 %v341
      %v476 = vunpack.c.l.b16 %v342
      %v477 = vunpack.c.l.b16 %v343
      %v478 = vunpack.c.l.b16 %v344
      %v479 = vunpack.c.l.b16 %v345
      %v480 = vunpack.c.l.b16 %v346
      %v481 = vunpack.c.l.b16 %v347
      %v482 = vunpack.c.l.b16 %v348
      %v483 = vunpack.c.l.b16 %v349
      %v484 = vunpack.c.l.b16 %v350
      %v485 = vunpack.c.l.b16 %v351
      %v486 = vunpack.c.l.b16 %v352
      %v487 = vunpack.c.l.b16 %v353
      %v488 = vunpack.c.l.b16 %v354
      %v489 = vpack.c.b16 %v426, %v425
      %v490 = vpack.c.b16 %v428, %v427
      %v491 = vpack.c.b16 %v430, %v429
      %v492 = vpack.c.b16 %v432, %v431
      %v493 = vpack.c.b16 %v434, %v433
      %v494 = vpack.c.b16 %v436, %v435
      %v495 = vpack.c.b16 %v438, %v437
      %v496 = vpack.c.b16 %v440, %v439
      %v497 = vpack.c.b16 %v442, %v441
      %v498 = vpack.c.b16 %v444, %v443
      %v499 = vpack.c.b16 %v446, %v445
      %v500 = vpack.c.b16 %v448, %v447
      %v501 = vpack.c.b16 %v450, %v449
      %v502 = vpack.c.b16 %v452, %v451
      %v503 = vpack.c.b16 %v454, %v453
      %v504 = vpack.c.b16 %v456, %v455
      %v505 = vpack.c.b16 %v458, %v457
      %v506 = vpack.c.b16 %v460, %v459
      %v507 = vpack.c.b16 %v462, %v461
      %v508 = vpack.c.b16 %v464, %v463
      %v509 = vpack.c.b16 %v466, %v465
      %v510 = vpack.c.b16 %v468, %v467
      %v511 = vpack.c.b16 %v470, %v469
      %v512 = vpack.c.b16 %v472, %v471
      %v513 = vpack.c.b16 %v474, %v473
      %v514 = vpack.c.b16 %v476, %v475
      %v515 = vpack.c.b16 %v478, %v477
      %v516 = vpack.c.b16 %v480, %v479
      %v517 = vpack.c.b16 %v482, %v481
      %v518 = vpack.c.b16 %v484, %v483
      %v519 = vpack.c.b16 %v486, %v485
      %v520 = vpack.c.b16 %v488, %v487
      %v527 = vunpack.c.l.b16 %v355
      %v528 = vunpack.c.l.b16 %v356
      %v529 = vunpack.c.l.b16 %v357
      %v530 = vunpack.c.l.b16 %v358
      %v531 = vunpack.c.l.b16 %v359
      %v532 = vunpack.c.l.b16 %v360
      %v533 = vpack.c.b16 %v528, %v527
      %v534 = vpack.c.b16 %v530, %v529
      %v535 = vpack.c.b16 %v532, %v531
      %vm536 = vsmask.f32 7424
      %v538 = vshrl.u32 %v489, 16
      %v540 = vshll.u32 %v489, 16
      %v542 = vrot.slane %v540, 1
      %v543 = vor.u32 %v538, %v542
      %v545 = vshll.u32 %v490, 16
      %v547 = vrot.slane %v545, 1
      %v548 = vsel %vm536, %v543, %v547
      %v549 = vshrl.u32 %v490, 16
      %v551 = vor.u32 %v549, %v547
      %v553 = vshll.u32 %v491, 16
      %v555 = vrot.slane %v553, 1
      %v556 = vsel %vm536, %v551, %v555
      %v557 = vshrl.u32 %v491, 16
      %v559 = vor.u32 %v557, %v555
      %v561 = vshll.u32 %v492, 16
      %v563 = vrot.slane %v561, 1
      %v564 = vsel %vm536, %v559, %v563
      %v565 = vshrl.u32 %v492, 16
      %v567 = vor.u32 %v565, %v563
      %v569 = vshll.u32 %v493, 16
      %v571 = vrot.slane %v569, 1
      %v572 = vsel %vm536, %v567, %v571
      %v573 = vshrl.u32 %v493, 16
      %v575 = vor.u32 %v573, %v571
      %v577 = vshll.u32 %v494, 16
      %v579 = vrot.slane %v577, 1
      %v580 = vsel %vm536, %v575, %v579
      %v581 = vshrl.u32 %v494, 16
      %v583 = vor.u32 %v581, %v579
      %v585 = vshll.u32 %v495, 16
      %v587 = vrot.slane %v585, 1
      %v588 = vsel %vm536, %v583, %v587
      %v589 = vshrl.u32 %v495, 16
      %v591 = vor.u32 %v589, %v587
      %v593 = vshll.u32 %v496, 16
      %v595 = vrot.slane %v593, 1
      %v596 = vsel %vm536, %v591, %v595
      %v597 = vshrl.u32 %v496, 16
      %v599 = vor.u32 %v597, %v595
      %v601 = vshll.u32 %v497, 16
      %v603 = vrot.slane %v601, 1
      %v604 = vsel %vm536, %v599, %v603
      %v605 = vshrl.u32 %v497, 16
      %v607 = vor.u32 %v605, %v603
      %v609 = vshll.u32 %v498, 16
      %v611 = vrot.slane %v609, 1
      %v612 = vsel %vm536, %v607, %v611
      %v613 = vshrl.u32 %v498, 16
      %v615 = vor.u32 %v613, %v611
      %v617 = vshll.u32 %v499, 16
      %v619 = vrot.slane %v617, 1
      %v620 = vsel %vm536, %v615, %v619
      %v621 = vshrl.u32 %v499, 16
      %v623 = vor.u32 %v621, %v619
      %v625 = vshll.u32 %v500, 16
      %v627 = vrot.slane %v625, 1
      %v628 = vsel %vm536, %v623, %v627
      %v629 = vshrl.u32 %v500, 16
      %v631 = vor.u32 %v629, %v627
      %v633 = vshll.u32 %v501, 16
      %v635 = vrot.slane %v633, 1
      %v636 = vsel %vm536, %v631, %v635
      %v637 = vshrl.u32 %v501, 16
      %v639 = vor.u32 %v637, %v635
      %v641 = vshll.u32 %v502, 16
      %v643 = vrot.slane %v641, 1
      %v644 = vsel %vm536, %v639, %v643
      %v645 = vshrl.u32 %v502, 16
      %v647 = vor.u32 %v645, %v643
      %v649 = vshll.u32 %v503, 16
      %v651 = vrot.slane %v649, 1
      %v652 = vsel %vm536, %v647, %v651
      %v653 = vshrl.u32 %v503, 16
      %v655 = vor.u32 %v653, %v651
      %v657 = vshll.u32 %v504, 16
      %v659 = vrot.slane %v657, 1
      %v660 = vsel %vm536, %v655, %v659
      %v661 = vshrl.u32 %v504, 16
      %v663 = vor.u32 %v661, %v659
      %v665 = vshll.u32 %v505, 16
      %v667 = vrot.slane %v665, 1
      %v668 = vsel %vm536, %v663, %v667
      %v669 = vshrl.u32 %v505, 16
      %v671 = vor.u32 %v669, %v667
      %v673 = vshll.u32 %v506, 16
      %v675 = vrot.slane %v673, 1
      %v676 = vsel %vm536, %v671, %v675
      %v677 = vshrl.u32 %v506, 16
      %v679 = vor.u32 %v677, %v675
      %v681 = vshll.u32 %v507, 16
      %v683 = vrot.slane %v681, 1
      %v684 = vsel %vm536, %v679, %v683
      %v685 = vshrl.u32 %v507, 16
      %v687 = vor.u32 %v685, %v683
      %v689 = vshll.u32 %v508, 16
      %v691 = vrot.slane %v689, 1
      %v692 = vsel %vm536, %v687, %v691
      %v693 = vshrl.u32 %v508, 16
      %v695 = vor.u32 %v693, %v691
      %v697 = vshll.u32 %v509, 16
      %v699 = vrot.slane %v697, 1
      %v700 = vsel %vm536, %v695, %v699
      %v701 = vshrl.u32 %v509, 16
      %v703 = vor.u32 %v701, %v699
      %v705 = vshll.u32 %v510, 16
      %v707 = vrot.slane %v705, 1
      %v708 = vsel %vm536, %v703, %v707
      %v709 = vshrl.u32 %v510, 16
      %v711 = vor.u32 %v709, %v707
      %v713 = vshll.u32 %v511, 16
      %v715 = vrot.slane %v713, 1
      %v716 = vsel %vm536, %v711, %v715
      %v717 = vshrl.u32 %v511, 16
      %v719 = vor.u32 %v717, %v715
      %v721 = vshll.u32 %v512, 16
      %v723 = vrot.slane %v721, 1
      %v724 = vsel %vm536, %v719, %v723
      %v725 = vshrl.u32 %v512, 16
      %v727 = vor.u32 %v725, %v723
      %v729 = vshll.u32 %v513, 16
      %v731 = vrot.slane %v729, 1
      %v732 = vsel %vm536, %v727, %v731
      %v733 = vshrl.u32 %v513, 16
      %v735 = vor.u32 %v733, %v731
      %v737 = vshll.u32 %v514, 16
      %v739 = vrot.slane %v737, 1
      %v740 = vsel %vm536, %v735, %v739
      %v741 = vshrl.u32 %v514, 16
      %v743 = vor.u32 %v741, %v739
      %v745 = vshll.u32 %v515, 16
      %v747 = vrot.slane %v745, 1
      %v748 = vsel %vm536, %v743, %v747
      %v749 = vshrl.u32 %v515, 16
      %v751 = vor.u32 %v749, %v747
      %v753 = vshll.u32 %v516, 16
      %v755 = vrot.slane %v753, 1
      %v756 = vsel %vm536, %v751, %v755
      %v757 = vshrl.u32 %v516, 16
      %v759 = vor.u32 %v757, %v755
      %v761 = vshll.u32 %v517, 16
      %v763 = vrot.slane %v761, 1
      %v764 = vsel %vm536, %v759, %v763
      %v765 = vshrl.u32 %v517, 16
      %v767 = vor.u32 %v765, %v763
      %v769 = vshll.u32 %v518, 16
      %v771 = vrot.slane %v769, 1
      %v772 = vsel %vm536, %v767, %v771
      %v773 = vshrl.u32 %v518, 16
      %v775 = vor.u32 %v773, %v771
      %v777 = vshll.u32 %v519, 16
      %v779 = vrot.slane %v777, 1
      %v780 = vsel %vm536, %v775, %v779
      %v781 = vshrl.u32 %v519, 16
      %v783 = vor.u32 %v781, %v779
      %v785 = vshll.u32 %v520, 16
      %v787 = vrot.slane %v785, 1
      %v788 = vsel %vm536, %v783, %v787
      %v789 = vshrl.u32 %v520, 16
      %v791 = vor.u32 %v789, %v787
      %v793 = vshll.u32 %v533, 16
      %v795 = vrot.slane %v793, 1
      %v796 = vsel %vm536, %v791, %v795
      %v797 = vshrl.u32 %v533, 16
      %v799 = vor.u32 %v797, %v795
      %800 = vrot.lane.b32.xlu0 %v548, 4
      %v801 = vpop.permute.xlu0 %800
      %802 = vrot.lane.b32.xlu0 %v556, 4
      %v803 = vpop.permute.xlu0 %802
      %804 = vrot.lane.b32.xlu0 %v564, 4
      %v805 = vpop.permute.xlu0 %804
      %806 = vrot.lane.b32.xlu0 %v572, 4
      %v807 = vpop.permute.xlu0 %806
      %808 = vrot.lane.b32.xlu0 %v580, 4
      %v809 = vpop.permute.xlu0 %808
      %810 = vrot.lane.b32.xlu0 %v588, 4
      %v811 = vpop.permute.xlu0 %810
      %812 = vrot.lane.b32.xlu0 %v596, 4
      %v813 = vpop.permute.xlu0 %812
      %814 = vrot.lane.b32.xlu0 %v604, 4
      %v815 = vpop.permute.xlu0 %814
      %816 = vrot.lane.b32.xlu0 %v612, 4
      %v817 = vpop.permute.xlu0 %816
      %818 = vrot.lane.b32.xlu0 %v620, 4
      %v819 = vpop.permute.xlu0 %818
      %820 = vrot.lane.b32.xlu0 %v628, 4
      %v821 = vpop.permute.xlu0 %820
      %822 = vrot.lane.b32.xlu0 %v636, 4
      %v823 = vpop.permute.xlu0 %822
      %824 = vrot.lane.b32.xlu0 %v644, 4
      %v825 = vpop.permute.xlu0 %824
      %826 = vrot.lane.b32.xlu0 %v652, 4
      %v827 = vpop.permute.xlu0 %826
      %828 = vrot.lane.b32.xlu0 %v660, 4
      %v829 = vpop.permute.xlu0 %828
      %830 = vrot.lane.b32.xlu0 %v668, 4
      %v831 = vpop.permute.xlu0 %830
      %832 = vrot.lane.b32.xlu0 %v676, 4
      %v833 = vpop.permute.xlu0 %832
      %834 = vrot.lane.b32.xlu0 %v684, 4
      %v835 = vpop.permute.xlu0 %834
      %836 = vrot.lane.b32.xlu0 %v692, 4
      %v837 = vpop.permute.xlu0 %836
      %838 = vrot.lane.b32.xlu0 %v700, 4
      %v839 = vpop.permute.xlu0 %838
      %840 = vrot.lane.b32.xlu0 %v708, 4
      %v841 = vpop.permute.xlu0 %840
      %842 = vrot.lane.b32.xlu0 %v716, 4
      %v843 = vpop.permute.xlu0 %842
      %844 = vrot.lane.b32.xlu0 %v724, 4
      %v845 = vpop.permute.xlu0 %844
      %846 = vrot.lane.b32.xlu0 %v732, 4
      %v847 = vpop.permute.xlu0 %846
      %848 = vrot.lane.b32.xlu0 %v740, 4
      %v849 = vpop.permute.xlu0 %848
      %850 = vrot.lane.b32.xlu0 %v748, 4
      %v851 = vpop.permute.xlu0 %850
      %852 = vrot.lane.b32.xlu0 %v756, 4
      %v853 = vpop.permute.xlu0 %852
      %854 = vrot.lane.b32.xlu0 %v764, 4
      %v855 = vpop.permute.xlu0 %854
      %856 = vrot.lane.b32.xlu0 %v772, 4
      %v857 = vpop.permute.xlu0 %856
      %858 = vrot.lane.b32.xlu0 %v780, 4
      %v859 = vpop.permute.xlu0 %858
      %860 = vrot.lane.b32.xlu0 %v788, 4
      %v861 = vpop.permute.xlu0 %860
      %862 = vrot.lane.b32.xlu0 %v796, 4
      %v863 = vpop.permute.xlu0 %862
      %864 = vrot.lane.b32.xlu0 %v799, 4
      %v865 = vpop.permute.xlu0 %864
      %vm866 = vcmask 1046528
      %v867 = vrot.slane %v489, 1
      %v868 = vrot.slane %v490, 1
      %v869 = vsel %vm866, %v867, %v868
      %v870 = vrot.slane %v491, 1
      %v871 = vsel %vm866, %v868, %v870
      %v872 = vrot.slane %v492, 1
      %v873 = vsel %vm866, %v870, %v872
      %v874 = vrot.slane %v493, 1
      %v875 = vsel %vm866, %v872, %v874
      %v876 = vrot.slane %v494, 1
      %v877 = vsel %vm866, %v874, %v876
      %v878 = vrot.slane %v495, 1
      %v879 = vsel %vm866, %v876, %v878
      %v880 = vrot.slane %v496, 1
      %v881 = vsel %vm866, %v878, %v880
      %v882 = vrot.slane %v497, 1
      %v883 = vsel %vm866, %v880, %v882
      %v884 = vrot.slane %v498, 1
      %v885 = vsel %vm866, %v882, %v884
      %v886 = vrot.slane %v499, 1
      %v887 = vsel %vm866, %v884, %v886
      %v888 = vrot.slane %v500, 1
      %v889 = vsel %vm866, %v886, %v888
      %v890 = vrot.slane %v501, 1
      %v891 = vsel %vm866, %v888, %v890
      %v892 = vrot.slane %v502, 1
      %v893 = vsel %vm866, %v890, %v892
      %v894 = vrot.slane %v503, 1
      %v895 = vsel %vm866, %v892, %v894
      %v896 = vrot.slane %v504, 1
      %v897 = vsel %vm866, %v894, %v896
      %v898 = vrot.slane %v505, 1
      %v899 = vsel %vm866, %v896, %v898
      %v900 = vrot.slane %v506, 1
      %v901 = vsel %vm866, %v898, %v900
      %v902 = vrot.slane %v507, 1
      %v903 = vsel %vm866, %v900, %v902
      %v904 = vrot.slane %v508, 1
      %v905 = vsel %vm866, %v902, %v904
      %v906 = vrot.slane %v509, 1
      %v907 = vsel %vm866, %v904, %v906
      %v908 = vrot.slane %v510, 1
      %v909 = vsel %vm866, %v906, %v908
      %v910 = vrot.slane %v511, 1
      %v911 = vsel %vm866, %v908, %v910
      %v912 = vrot.slane %v512, 1
      %v913 = vsel %vm866, %v910, %v912
      %v914 = vrot.slane %v513, 1
      %v915 = vsel %vm866, %v912, %v914
      %v916 = vrot.slane %v514, 1
      %v917 = vsel %vm866, %v914, %v916
      %v918 = vrot.slane %v515, 1
      %v919 = vsel %vm866, %v916, %v918
      %v920 = vrot.slane %v516, 1
      %v921 = vsel %vm866, %v918, %v920
      %v922 = vrot.slane %v517, 1
      %v923 = vsel %vm866, %v920, %v922
      %v924 = vrot.slane %v518, 1
      %v925 = vsel %vm866, %v922, %v924
      %v926 = vrot.slane %v519, 1
      %v927 = vsel %vm866, %v924, %v926
      %v928 = vrot.slane %v520, 1
      %v929 = vsel %vm866, %v926, %v928
      %v930 = vrot.slane %v533, 1
      %v931 = vsel %vm866, %v928, %v930
      %932 = vrot.lane.b32.xlu0 %v869, 8
      %v933 = vpop.permute.xlu0 %932
      %934 = vrot.lane.b32.xlu0 %v871, 8
      %v935 = vpop.permute.xlu0 %934
      %936 = vrot.lane.b32.xlu0 %v873, 8
      %v937 = vpop.permute.xlu0 %936
      %938 = vrot.lane.b32.xlu0 %v875, 8
      %v939 = vpop.permute.xlu0 %938
      %940 = vrot.lane.b32.xlu0 %v877, 8
      %v941 = vpop.permute.xlu0 %940
      %942 = vrot.lane.b32.xlu0 %v879, 8
      %v943 = vpop.permute.xlu0 %942
      %944 = vrot.lane.b32.xlu0 %v881, 8
      %v945 = vpop.permute.xlu0 %944
      %946 = vrot.lane.b32.xlu0 %v883, 8
      %v947 = vpop.permute.xlu0 %946
      %948 = vrot.lane.b32.xlu0 %v885, 8
      %v949 = vpop.permute.xlu0 %948
      %950 = vrot.lane.b32.xlu0 %v887, 8
      %v951 = vpop.permute.xlu0 %950
      %952 = vrot.lane.b32.xlu0 %v889, 8
      %v953 = vpop.permute.xlu0 %952
      %954 = vrot.lane.b32.xlu0 %v891, 8
      %v955 = vpop.permute.xlu0 %954
      %956 = vrot.lane.b32.xlu0 %v893, 8
      %v957 = vpop.permute.xlu0 %956
      %958 = vrot.lane.b32.xlu0 %v895, 8
      %v959 = vpop.permute.xlu0 %958
      %960 = vrot.lane.b32.xlu0 %v897, 8
      %v961 = vpop.permute.xlu0 %960
      %962 = vrot.lane.b32.xlu0 %v899, 8
      %v963 = vpop.permute.xlu0 %962
      %964 = vrot.lane.b32.xlu0 %v901, 8
      %v965 = vpop.permute.xlu0 %964
      %966 = vrot.lane.b32.xlu0 %v903, 8
      %v967 = vpop.permute.xlu0 %966
      %968 = vrot.lane.b32.xlu0 %v905, 8
      %v969 = vpop.permute.xlu0 %968
      %970 = vrot.lane.b32.xlu0 %v907, 8
      %v971 = vpop.permute.xlu0 %970
      %972 = vrot.lane.b32.xlu0 %v909, 8
      %v973 = vpop.permute.xlu0 %972
      %974 = vrot.lane.b32.xlu0 %v911, 8
      %v975 = vpop.permute.xlu0 %974
      %976 = vrot.lane.b32.xlu0 %v913, 8
      %v977 = vpop.permute.xlu0 %976
      %978 = vrot.lane.b32.xlu0 %v915, 8
      %v979 = vpop.permute.xlu0 %978
      %980 = vrot.lane.b32.xlu0 %v917, 8
      %v981 = vpop.permute.xlu0 %980
      %982 = vrot.lane.b32.xlu0 %v919, 8
      %v983 = vpop.permute.xlu0 %982
      %984 = vrot.lane.b32.xlu0 %v921, 8
      %v985 = vpop.permute.xlu0 %984
      %986 = vrot.lane.b32.xlu0 %v923, 8
      %v987 = vpop.permute.xlu0 %986
      %988 = vrot.lane.b32.xlu0 %v925, 8
      %v989 = vpop.permute.xlu0 %988
      %990 = vrot.lane.b32.xlu0 %v927, 8
      %v991 = vpop.permute.xlu0 %990
      %992 = vrot.lane.b32.xlu0 %v929, 8
      %v993 = vpop.permute.xlu0 %992
      %994 = vrot.lane.b32.xlu0 %v931, 8
      %v995 = vpop.permute.xlu0 %994
      %996 = vrot.lane.b32.xlu0 %v930, 8
      %v997 = vpop.permute.xlu0 %996
      %v998 = vrot.slane %v534, 1
      %v999 = vsel %vm866, %v930, %v998
      %1000 = vrot.lane.b32.xlu0 %v871, 12
      %v1001 = vpop.permute.xlu0 %1000
      %1002 = vrot.lane.b32.xlu0 %v873, 12
      %v1003 = vpop.permute.xlu0 %1002
      %1004 = vrot.lane.b32.xlu0 %v875, 12
      %v1005 = vpop.permute.xlu0 %1004
      %1006 = vrot.lane.b32.xlu0 %v877, 12
      %v1007 = vpop.permute.xlu0 %1006
      %1008 = vrot.lane.b32.xlu0 %v879, 12
      %v1009 = vpop.permute.xlu0 %1008
      %1010 = vrot.lane.b32.xlu0 %v881, 12
      %v1011 = vpop.permute.xlu0 %1010
      %1012 = vrot.lane.b32.xlu0 %v883, 12
      %v1013 = vpop.permute.xlu0 %1012
      %1014 = vrot.lane.b32.xlu0 %v885, 12
      %v1015 = vpop.permute.xlu0 %1014
      %1016 = vrot.lane.b32.xlu0 %v887, 12
      %v1017 = vpop.permute.xlu0 %1016
      %1018 = vrot.lane.b32.xlu0 %v889, 12
      %v1019 = vpop.permute.xlu0 %1018
      %1020 = vrot.lane.b32.xlu0 %v891, 12
      %v1021 = vpop.permute.xlu0 %1020
      %1022 = vrot.lane.b32.xlu0 %v893, 12
      %v1023 = vpop.permute.xlu0 %1022
      %1024 = vrot.lane.b32.xlu0 %v895, 12
      %v1025 = vpop.permute.xlu0 %1024
      %1026 = vrot.lane.b32.xlu0 %v897, 12
      %v1027 = vpop.permute.xlu0 %1026
      %1028 = vrot.lane.b32.xlu0 %v899, 12
      %v1029 = vpop.permute.xlu0 %1028
      %1030 = vrot.lane.b32.xlu0 %v901, 12
      %v1031 = vpop.permute.xlu0 %1030
      %1032 = vrot.lane.b32.xlu0 %v903, 12
      %v1033 = vpop.permute.xlu0 %1032
      %1034 = vrot.lane.b32.xlu0 %v905, 12
      %v1035 = vpop.permute.xlu0 %1034
      %1036 = vrot.lane.b32.xlu0 %v907, 12
      %v1037 = vpop.permute.xlu0 %1036
      %1038 = vrot.lane.b32.xlu0 %v909, 12
      %v1039 = vpop.permute.xlu0 %1038
      %1040 = vrot.lane.b32.xlu0 %v911, 12
      %v1041 = vpop.permute.xlu0 %1040
      %1042 = vrot.lane.b32.xlu0 %v913, 12
      %v1043 = vpop.permute.xlu0 %1042
      %1044 = vrot.lane.b32.xlu0 %v915, 12
      %v1045 = vpop.permute.xlu0 %1044
      %1046 = vrot.lane.b32.xlu0 %v917, 12
      %v1047 = vpop.permute.xlu0 %1046
      %1048 = vrot.lane.b32.xlu0 %v919, 12
      %v1049 = vpop.permute.xlu0 %1048
      %1050 = vrot.lane.b32.xlu0 %v921, 12
      %v1051 = vpop.permute.xlu0 %1050
      %1052 = vrot.lane.b32.xlu0 %v923, 12
      %v1053 = vpop.permute.xlu0 %1052
      %1054 = vrot.lane.b32.xlu0 %v925, 12
      %v1055 = vpop.permute.xlu0 %1054
      %1056 = vrot.lane.b32.xlu0 %v927, 12
      %v1057 = vpop.permute.xlu0 %1056
      %1058 = vrot.lane.b32.xlu0 %v929, 12
      %v1059 = vpop.permute.xlu0 %1058
      %1060 = vrot.lane.b32.xlu0 %v931, 12
      %v1061 = vpop.permute.xlu0 %1060
      %1062 = vrot.lane.b32.xlu0 %v999, 12
      %v1063 = vpop.permute.xlu0 %1062
      %1064 = vrot.lane.b32.xlu0 %v998, 12
      %v1065 = vpop.permute.xlu0 %1064
      %vm1066 = vsmask.f32 6400
      %v1067 = vrot.slane %v549, 1
      %v1068 = vrot.slane %v545, 2
      %v1069 = vor.u32 %v1067, %v1068
      %v1070 = vrot.slane %v557, 1
      %v1071 = vrot.slane %v553, 2
      %v1072 = vor.u32 %v1070, %v1071
      %v1073 = vsel %vm1066, %v1069, %v1072
      %v1074 = vrot.slane %v565, 1
      %v1075 = vrot.slane %v561, 2
      %v1076 = vor.u32 %v1074, %v1075
      %v1077 = vsel %vm1066, %v1072, %v1076
      %v1078 = vrot.slane %v573, 1
      %v1079 = vrot.slane %v569, 2
      %v1080 = vor.u32 %v1078, %v1079
      %v1081 = vsel %vm1066, %v1076, %v1080
      %v1082 = vrot.slane %v581, 1
      %v1083 = vrot.slane %v577, 2
      %v1084 = vor.u32 %v1082, %v1083
      %v1085 = vsel %vm1066, %v1080, %v1084
      %v1086 = vrot.slane %v589, 1
      %v1087 = vrot.slane %v585, 2
      %v1088 = vor.u32 %v1086, %v1087
      %v1089 = vsel %vm1066, %v1084, %v1088
      %v1090 = vrot.slane %v597, 1
      %v1091 = vrot.slane %v593, 2
      %v1092 = vor.u32 %v1090, %v1091
      %v1093 = vsel %vm1066, %v1088, %v1092
      %v1094 = vrot.slane %v605, 1
      %v1095 = vrot.slane %v601, 2
      %v1096 = vor.u32 %v1094, %v1095
      %v1097 = vsel %vm1066, %v1092, %v1096
      %v1098 = vrot.slane %v613, 1
      %v1099 = vrot.slane %v609, 2
      %v1100 = vor.u32 %v1098, %v1099
      %v1101 = vsel %vm1066, %v1096, %v1100
      %v1102 = vrot.slane %v621, 1
      %v1103 = vrot.slane %v617, 2
      %v1104 = vor.u32 %v1102, %v1103
      %v1105 = vsel %vm1066, %v1100, %v1104
      %v1106 = vrot.slane %v629, 1
      %v1107 = vrot.slane %v625, 2
      %v1108 = vor.u32 %v1106, %v1107
      %v1109 = vsel %vm1066, %v1104, %v1108
      %v1110 = vrot.slane %v637, 1
      %v1111 = vrot.slane %v633, 2
      %v1112 = vor.u32 %v1110, %v1111
      %v1113 = vsel %vm1066, %v1108, %v1112
      %v1114 = vrot.slane %v645, 1
      %v1115 = vrot.slane %v641, 2
      %v1116 = vor.u32 %v1114, %v1115
      %v1117 = vsel %vm1066, %v1112, %v1116
      %v1118 = vrot.slane %v653, 1
      %v1119 = vrot.slane %v649, 2
      %v1120 = vor.u32 %v1118, %v1119
      %v1121 = vsel %vm1066, %v1116, %v1120
      %v1122 = vrot.slane %v661, 1
      %v1123 = vrot.slane %v657, 2
      %v1124 = vor.u32 %v1122, %v1123
      %v1125 = vsel %vm1066, %v1120, %v1124
      %v1126 = vrot.slane %v669, 1
      %v1127 = vrot.slane %v665, 2
      %v1128 = vor.u32 %v1126, %v1127
      %v1129 = vsel %vm1066, %v1124, %v1128
      %v1130 = vrot.slane %v677, 1
      %v1131 = vrot.slane %v673, 2
      %v1132 = vor.u32 %v1130, %v1131
      %v1133 = vsel %vm1066, %v1128, %v1132
      %v1134 = vrot.slane %v685, 1
      %v1135 = vrot.slane %v681, 2
      %v1136 = vor.u32 %v1134, %v1135
      %v1137 = vsel %vm1066, %v1132, %v1136
      %v1138 = vrot.slane %v693, 1
      %v1139 = vrot.slane %v689, 2
      %v1140 = vor.u32 %v1138, %v1139
      %v1141 = vsel %vm1066, %v1136, %v1140
      %v1142 = vrot.slane %v701, 1
      %v1143 = vrot.slane %v697, 2
      %v1144 = vor.u32 %v1142, %v1143
      %v1145 = vsel %vm1066, %v1140, %v1144
      %v1146 = vrot.slane %v709, 1
      %v1147 = vrot.slane %v705, 2
      %v1148 = vor.u32 %v1146, %v1147
      %v1149 = vsel %vm1066, %v1144, %v1148
      %v1150 = vrot.slane %v717, 1
      %v1151 = vrot.slane %v713, 2
      %v1152 = vor.u32 %v1150, %v1151
      %v1153 = vsel %vm1066, %v1148, %v1152
      %v1154 = vrot.slane %v725, 1
      %v1155 = vrot.slane %v721, 2
      %v1156 = vor.u32 %v1154, %v1155
      %v1157 = vsel %vm1066, %v1152, %v1156
      %v1158 = vrot.slane %v733, 1
      %v1159 = vrot.slane %v729, 2
      %v1160 = vor.u32 %v1158, %v1159
      %v1161 = vsel %vm1066, %v1156, %v1160
      %v1162 = vrot.slane %v741, 1
      %v1163 = vrot.slane %v737, 2
      %v1164 = vor.u32 %v1162, %v1163
      %v1165 = vsel %vm1066, %v1160, %v1164
      %v1166 = vrot.slane %v749, 1
      %v1167 = vrot.slane %v745, 2
      %v1168 = vor.u32 %v1166, %v1167
      %v1169 = vsel %vm1066, %v1164, %v1168
      %v1170 = vrot.slane %v757, 1
      %v1171 = vrot.slane %v753, 2
      %v1172 = vor.u32 %v1170, %v1171
      %v1173 = vsel %vm1066, %v1168, %v1172
      %v1174 = vrot.slane %v765, 1
      %v1175 = vrot.slane %v761, 2
      %v1176 = vor.u32 %v1174, %v1175
      %v1177 = vsel %vm1066, %v1172, %v1176
      %v1178 = vrot.slane %v773, 1
      %v1179 = vrot.slane %v769, 2
      %v1180 = vor.u32 %v1178, %v1179
      %v1181 = vsel %vm1066, %v1176, %v1180
      %v1182 = vrot.slane %v781, 1
      %v1183 = vrot.slane %v777, 2
      %v1184 = vor.u32 %v1182, %v1183
      %v1185 = vsel %vm1066, %v1180, %v1184
      %v1186 = vrot.slane %v789, 1
      %v1187 = vrot.slane %v785, 2
      %v1188 = vor.u32 %v1186, %v1187
      %v1189 = vsel %vm1066, %v1184, %v1188
      %v1190 = vrot.slane %v797, 1
      %v1191 = vrot.slane %v793, 2
      %v1192 = vor.u32 %v1190, %v1191
      %v1193 = vsel %vm1066, %v1188, %v1192
      %v1195 = vshrl.u32 %v534, 16
      %v1197 = vrot.slane %v1195, 1
      %v1198 = vshll.u32 %v534, 16
      %v1200 = vrot.slane %v1198, 2
      %v1201 = vor.u32 %v1197, %v1200
      %v1202 = vsel %vm1066, %v1192, %v1201
      %1203 = vrot.lane.b32.xlu0 %v1073, 16
      %v1204 = vpop.permute.xlu0 %1203
      %1205 = vrot.lane.b32.xlu0 %v1077, 16
      %v1206 = vpop.permute.xlu0 %1205
      %1207 = vrot.lane.b32.xlu0 %v1081, 16
      %v1208 = vpop.permute.xlu0 %1207
      %1209 = vrot.lane.b32.xlu0 %v1085, 16
      %v1210 = vpop.permute.xlu0 %1209
      %1211 = vrot.lane.b32.xlu0 %v1089, 16
      %v1212 = vpop.permute.xlu0 %1211
      %1213 = vrot.lane.b32.xlu0 %v1093, 16
      %v1214 = vpop.permute.xlu0 %1213
      %1215 = vrot.lane.b32.xlu0 %v1097, 16
      %v1216 = vpop.permute.xlu0 %1215
      %1217 = vrot.lane.b32.xlu0 %v1101, 16
      %v1218 = vpop.permute.xlu0 %1217
      %1219 = vrot.lane.b32.xlu0 %v1105, 16
      %v1220 = vpop.permute.xlu0 %1219
      %1221 = vrot.lane.b32.xlu0 %v1109, 16
      %v1222 = vpop.permute.xlu0 %1221
      %1223 = vrot.lane.b32.xlu0 %v1113, 16
      %v1224 = vpop.permute.xlu0 %1223
      %1225 = vrot.lane.b32.xlu0 %v1117, 16
      %v1226 = vpop.permute.xlu0 %1225
      %1227 = vrot.lane.b32.xlu0 %v1121, 16
      %v1228 = vpop.permute.xlu0 %1227
      %1229 = vrot.lane.b32.xlu0 %v1125, 16
      %v1230 = vpop.permute.xlu0 %1229
      %1231 = vrot.lane.b32.xlu0 %v1129, 16
      %v1232 = vpop.permute.xlu0 %1231
      %1233 = vrot.lane.b32.xlu0 %v1133, 16
      %v1234 = vpop.permute.xlu0 %1233
      %1235 = vrot.lane.b32.xlu0 %v1137, 16
      %v1236 = vpop.permute.xlu0 %1235
      %1237 = vrot.lane.b32.xlu0 %v1141, 16
      %v1238 = vpop.permute.xlu0 %1237
      %1239 = vrot.lane.b32.xlu0 %v1145, 16
      %v1240 = vpop.permute.xlu0 %1239
      %1241 = vrot.lane.b32.xlu0 %v1149, 16
      %v1242 = vpop.permute.xlu0 %1241
      %1243 = vrot.lane.b32.xlu0 %v1153, 16
      %v1244 = vpop.permute.xlu0 %1243
      %1245 = vrot.lane.b32.xlu0 %v1157, 16
      %v1246 = vpop.permute.xlu0 %1245
      %1247 = vrot.lane.b32.xlu0 %v1161, 16
      %v1248 = vpop.permute.xlu0 %1247
      %1249 = vrot.lane.b32.xlu0 %v1165, 16
      %v1250 = vpop.permute.xlu0 %1249
      %1251 = vrot.lane.b32.xlu0 %v1169, 16
      %v1252 = vpop.permute.xlu0 %1251
      %1253 = vrot.lane.b32.xlu0 %v1173, 16
      %v1254 = vpop.permute.xlu0 %1253
      %1255 = vrot.lane.b32.xlu0 %v1177, 16
      %v1256 = vpop.permute.xlu0 %1255
      %1257 = vrot.lane.b32.xlu0 %v1181, 16
      %v1258 = vpop.permute.xlu0 %1257
      %1259 = vrot.lane.b32.xlu0 %v1185, 16
      %v1260 = vpop.permute.xlu0 %1259
      %1261 = vrot.lane.b32.xlu0 %v1189, 16
      %v1262 = vpop.permute.xlu0 %1261
      %1263 = vrot.lane.b32.xlu0 %v1193, 16
      %v1264 = vpop.permute.xlu0 %1263
      %1265 = vrot.lane.b32.xlu0 %v1202, 16
      %v1266 = vpop.permute.xlu0 %1265
      %1267 = vrot.lane.b32.xlu0 %v1201, 16
      %v1268 = vpop.permute.xlu0 %1267
      %vm1269 = vcmask 1045504
      %v1270 = vrot.slane %v490, 2
      %v1271 = vrot.slane %v491, 2
      %v1272 = vsel %vm1269, %v1270, %v1271
      %v1273 = vrot.slane %v492, 2
      %v1274 = vsel %vm1269, %v1271, %v1273
      %v1275 = vrot.slane %v493, 2
      %v1276 = vsel %vm1269, %v1273, %v1275
      %v1277 = vrot.slane %v494, 2
      %v1278 = vsel %vm1269, %v1275, %v1277
      %v1279 = vrot.slane %v495, 2
      %v1280 = vsel %vm1269, %v1277, %v1279
      %v1281 = vrot.slane %v496, 2
      %v1282 = vsel %vm1269, %v1279, %v1281
      %v1283 = vrot.slane %v497, 2
      %v1284 = vsel %vm1269, %v1281, %v1283
      %v1285 = vrot.slane %v498, 2
      %v1286 = vsel %vm1269, %v1283, %v1285
      %v1287 = vrot.slane %v499, 2
      %v1288 = vsel %vm1269, %v1285, %v1287
      %v1289 = vrot.slane %v500, 2
      %v1290 = vsel %vm1269, %v1287, %v1289
      %v1291 = vrot.slane %v501, 2
      %v1292 = vsel %vm1269, %v1289, %v1291
      %v1293 = vrot.slane %v502, 2
      %v1294 = vsel %vm1269, %v1291, %v1293
      %v1295 = vrot.slane %v503, 2
      %v1296 = vsel %vm1269, %v1293, %v1295
      %v1297 = vrot.slane %v504, 2
      %v1298 = vsel %vm1269, %v1295, %v1297
      %v1299 = vrot.slane %v505, 2
      %v1300 = vsel %vm1269, %v1297, %v1299
      %v1301 = vrot.slane %v506, 2
      %v1302 = vsel %vm1269, %v1299, %v1301
      %v1303 = vrot.slane %v507, 2
      %v1304 = vsel %vm1269, %v1301, %v1303
      %v1305 = vrot.slane %v508, 2
      %v1306 = vsel %vm1269, %v1303, %v1305
      %v1307 = vrot.slane %v509, 2
      %v1308 = vsel %vm1269, %v1305, %v1307
      %v1309 = vrot.slane %v510, 2
      %v1310 = vsel %vm1269, %v1307, %v1309
      %v1311 = vrot.slane %v511, 2
      %v1312 = vsel %vm1269, %v1309, %v1311
      %v1313 = vrot.slane %v512, 2
      %v1314 = vsel %vm1269, %v1311, %v1313
      %v1315 = vrot.slane %v513, 2
      %v1316 = vsel %vm1269, %v1313, %v1315
      %v1317 = vrot.slane %v514, 2
      %v1318 = vsel %vm1269, %v1315, %v1317
      %v1319 = vrot.slane %v515, 2
      %v1320 = vsel %vm1269, %v1317, %v1319
      %v1321 = vrot.slane %v516, 2
      %v1322 = vsel %vm1269, %v1319, %v1321
      %v1323 = vrot.slane %v517, 2
      %v1324 = vsel %vm1269, %v1321, %v1323
      %v1325 = vrot.slane %v518, 2
      %v1326 = vsel %vm1269, %v1323, %v1325
      %v1327 = vrot.slane %v519, 2
      %v1328 = vsel %vm1269, %v1325, %v1327
      %v1329 = vrot.slane %v520, 2
      %v1330 = vsel %vm1269, %v1327, %v1329
      %v1331 = vrot.slane %v533, 2
      %v1332 = vsel %vm1269, %v1329, %v1331
      %v1333 = vrot.slane %v534, 2
      %v1334 = vsel %vm1269, %v1331, %v1333
      %1335 = vrot.lane.b32.xlu0 %v1272, 20
      %v1336 = vpop.permute.xlu0 %1335
      %1337 = vrot.lane.b32.xlu0 %v1274, 20
      %v1338 = vpop.permute.xlu0 %1337
      %1339 = vrot.lane.b32.xlu0 %v1276, 20
      %v1340 = vpop.permute.xlu0 %1339
      %1341 = vrot.lane.b32.xlu0 %v1278, 20
      %v1342 = vpop.permute.xlu0 %1341
      %1343 = vrot.lane.b32.xlu0 %v1280, 20
      %v1344 = vpop.permute.xlu0 %1343
      %1345 = vrot.lane.b32.xlu0 %v1282, 20
      %v1346 = vpop.permute.xlu0 %1345
      %1347 = vrot.lane.b32.xlu0 %v1284, 20
      %v1348 = vpop.permute.xlu0 %1347
      %1349 = vrot.lane.b32.xlu0 %v1286, 20
      %v1350 = vpop.permute.xlu0 %1349
      %1351 = vrot.lane.b32.xlu0 %v1288, 20
      %v1352 = vpop.permute.xlu0 %1351
      %1353 = vrot.lane.b32.xlu0 %v1290, 20
      %v1354 = vpop.permute.xlu0 %1353
      %1355 = vrot.lane.b32.xlu0 %v1292, 20
      %v1356 = vpop.permute.xlu0 %1355
      %1357 = vrot.lane.b32.xlu0 %v1294, 20
      %v1358 = vpop.permute.xlu0 %1357
      %1359 = vrot.lane.b32.xlu0 %v1296, 20
      %v1360 = vpop.permute.xlu0 %1359
      %1361 = vrot.lane.b32.xlu0 %v1298, 20
      %v1362 = vpop.permute.xlu0 %1361
      %1363 = vrot.lane.b32.xlu0 %v1300, 20
      %v1364 = vpop.permute.xlu0 %1363
      %1365 = vrot.lane.b32.xlu0 %v1302, 20
      %v1366 = vpop.permute.xlu0 %1365
      %1367 = vrot.lane.b32.xlu0 %v1304, 20
      %v1368 = vpop.permute.xlu0 %1367
      %1369 = vrot.lane.b32.xlu0 %v1306, 20
      %v1370 = vpop.permute.xlu0 %1369
      %1371 = vrot.lane.b32.xlu0 %v1308, 20
      %v1372 = vpop.permute.xlu0 %1371
      %1373 = vrot.lane.b32.xlu0 %v1310, 20
      %v1374 = vpop.permute.xlu0 %1373
      %1375 = vrot.lane.b32.xlu0 %v1312, 20
      %v1376 = vpop.permute.xlu0 %1375
      %1377 = vrot.lane.b32.xlu0 %v1314, 20
      %v1378 = vpop.permute.xlu0 %1377
      %1379 = vrot.lane.b32.xlu0 %v1316, 20
      %v1380 = vpop.permute.xlu0 %1379
      %1381 = vrot.lane.b32.xlu0 %v1318, 20
      %v1382 = vpop.permute.xlu0 %1381
      %1383 = vrot.lane.b32.xlu0 %v1320, 20
      %v1384 = vpop.permute.xlu0 %1383
      %1385 = vrot.lane.b32.xlu0 %v1322, 20
      %v1386 = vpop.permute.xlu0 %1385
      %1387 = vrot.lane.b32.xlu0 %v1324, 20
      %v1388 = vpop.permute.xlu0 %1387
      %1389 = vrot.lane.b32.xlu0 %v1326, 20
      %v1390 = vpop.permute.xlu0 %1389
      %1391 = vrot.lane.b32.xlu0 %v1328, 20
      %v1392 = vpop.permute.xlu0 %1391
      %1393 = vrot.lane.b32.xlu0 %v1330, 20
      %v1394 = vpop.permute.xlu0 %1393
      %1395 = vrot.lane.b32.xlu0 %v1332, 20
      %v1396 = vpop.permute.xlu0 %1395
      %1397 = vrot.lane.b32.xlu0 %v1334, 20
      %v1398 = vpop.permute.xlu0 %1397
      %1399 = vrot.lane.b32.xlu0 %v1333, 20
      %v1400 = vpop.permute.xlu0 %1399
      %v1401 = vrot.slane %v535, 2
      %v1402 = vsel %vm1269, %v1333, %v1401
      %1403 = vrot.lane.b32.xlu0 %v1274, 24
      %v1404 = vpop.permute.xlu0 %1403
      %1405 = vrot.lane.b32.xlu0 %v1276, 24
      %v1406 = vpop.permute.xlu0 %1405
      %1407 = vrot.lane.b32.xlu0 %v1278, 24
      %v1408 = vpop.permute.xlu0 %1407
      %1409 = vrot.lane.b32.xlu0 %v1280, 24
      %v1410 = vpop.permute.xlu0 %1409
      %1411 = vrot.lane.b32.xlu0 %v1282, 24
      %v1412 = vpop.permute.xlu0 %1411
      %1413 = vrot.lane.b32.xlu0 %v1284, 24
      %v1414 = vpop.permute.xlu0 %1413
      %1415 = vrot.lane.b32.xlu0 %v1286, 24
      %v1416 = vpop.permute.xlu0 %1415
      %1417 = vrot.lane.b32.xlu0 %v1288, 24
      %v1418 = vpop.permute.xlu0 %1417
      %1419 = vrot.lane.b32.xlu0 %v1290, 24
      %v1420 = vpop.permute.xlu0 %1419
      %1421 = vrot.lane.b32.xlu0 %v1292, 24
      %v1422 = vpop.permute.xlu0 %1421
      %1423 = vrot.lane.b32.xlu0 %v1294, 24
      %v1424 = vpop.permute.xlu0 %1423
      %1425 = vrot.lane.b32.xlu0 %v1296, 24
      %v1426 = vpop.permute.xlu0 %1425
      %1427 = vrot.lane.b32.xlu0 %v1298, 24
      %v1428 = vpop.permute.xlu0 %1427
      %1429 = vrot.lane.b32.xlu0 %v1300, 24
      %v1430 = vpop.permute.xlu0 %1429
      %1431 = vrot.lane.b32.xlu0 %v1302, 24
      %v1432 = vpop.permute.xlu0 %1431
      %1433 = vrot.lane.b32.xlu0 %v1304, 24
      %v1434 = vpop.permute.xlu0 %1433
      %1435 = vrot.lane.b32.xlu0 %v1306, 24
      %v1436 = vpop.permute.xlu0 %1435
      %1437 = vrot.lane.b32.xlu0 %v1308, 24
      %v1438 = vpop.permute.xlu0 %1437
      %1439 = vrot.lane.b32.xlu0 %v1310, 24
      %v1440 = vpop.permute.xlu0 %1439
      %1441 = vrot.lane.b32.xlu0 %v1312, 24
      %v1442 = vpop.permute.xlu0 %1441
      %1443 = vrot.lane.b32.xlu0 %v1314, 24
      %v1444 = vpop.permute.xlu0 %1443
      %1445 = vrot.lane.b32.xlu0 %v1316, 24
      %v1446 = vpop.permute.xlu0 %1445
      %1447 = vrot.lane.b32.xlu0 %v1318, 24
      %v1448 = vpop.permute.xlu0 %1447
      %1449 = vrot.lane.b32.xlu0 %v1320, 24
      %v1450 = vpop.permute.xlu0 %1449
      %1451 = vrot.lane.b32.xlu0 %v1322, 24
      %v1452 = vpop.permute.xlu0 %1451
      %1453 = vrot.lane.b32.xlu0 %v1324, 24
      %v1454 = vpop.permute.xlu0 %1453
      %1455 = vrot.lane.b32.xlu0 %v1326, 24
      %v1456 = vpop.permute.xlu0 %1455
      %1457 = vrot.lane.b32.xlu0 %v1328, 24
      %v1458 = vpop.permute.xlu0 %1457
      %1459 = vrot.lane.b32.xlu0 %v1330, 24
      %v1460 = vpop.permute.xlu0 %1459
      %1461 = vrot.lane.b32.xlu0 %v1332, 24
      %v1462 = vpop.permute.xlu0 %1461
      %1463 = vrot.lane.b32.xlu0 %v1334, 24
      %v1464 = vpop.permute.xlu0 %1463
      %1465 = vrot.lane.b32.xlu0 %v1402, 24
      %v1466 = vpop.permute.xlu0 %1465
      %1467 = vrot.lane.b32.xlu0 %v1401, 24
      %v1468 = vpop.permute.xlu0 %1467
      %vm1469 = vsmask.f32 5376
      %v1470 = vrot.slane %v557, 2
      %v1471 = vrot.slane %v553, 3
      %v1472 = vor.u32 %v1470, %v1471
      %v1473 = vrot.slane %v565, 2
      %v1474 = vrot.slane %v561, 3
      %v1475 = vor.u32 %v1473, %v1474
      %v1476 = vsel %vm1469, %v1472, %v1475
      %v1477 = vrot.slane %v573, 2
      %v1478 = vrot.slane %v569, 3
      %v1479 = vor.u32 %v1477, %v1478
      %v1480 = vsel %vm1469, %v1475, %v1479
      %v1481 = vrot.slane %v581, 2
      %v1482 = vrot.slane %v577, 3
      %v1483 = vor.u32 %v1481, %v1482
      %v1484 = vsel %vm1469, %v1479, %v1483
      %v1485 = vrot.slane %v589, 2
      %v1486 = vrot.slane %v585, 3
      %v1487 = vor.u32 %v1485, %v1486
      %v1488 = vsel %vm1469, %v1483, %v1487
      %v1489 = vrot.slane %v597, 2
      %v1490 = vrot.slane %v593, 3
      %v1491 = vor.u32 %v1489, %v1490
      %v1492 = vsel %vm1469, %v1487, %v1491
      %v1493 = vrot.slane %v605, 2
      %v1494 = vrot.slane %v601, 3
      %v1495 = vor.u32 %v1493, %v1494
      %v1496 = vsel %vm1469, %v1491, %v1495
      %v1497 = vrot.slane %v613, 2
      %v1498 = vrot.slane %v609, 3
      %v1499 = vor.u32 %v1497, %v1498
      %v1500 = vsel %vm1469, %v1495, %v1499
      %v1501 = vrot.slane %v621, 2
      %v1502 = vrot.slane %v617, 3
      %v1503 = vor.u32 %v1501, %v1502
      %v1504 = vsel %vm1469, %v1499, %v1503
      %v1505 = vrot.slane %v629, 2
      %v1506 = vrot.slane %v625, 3
      %v1507 = vor.u32 %v1505, %v1506
      %v1508 = vsel %vm1469, %v1503, %v1507
      %v1509 = vrot.slane %v637, 2
      %v1510 = vrot.slane %v633, 3
      %v1511 = vor.u32 %v1509, %v1510
      %v1512 = vsel %vm1469, %v1507, %v1511
      %v1513 = vrot.slane %v645, 2
      %v1514 = vrot.slane %v641, 3
      %v1515 = vor.u32 %v1513, %v1514
      %v1516 = vsel %vm1469, %v1511, %v1515
      %v1517 = vrot.slane %v653, 2
      %v1518 = vrot.slane %v649, 3
      %v1519 = vor.u32 %v1517, %v1518
      %v1520 = vsel %vm1469, %v1515, %v1519
      %v1521 = vrot.slane %v661, 2
      %v1522 = vrot.slane %v657, 3
      %v1523 = vor.u32 %v1521, %v1522
      %v1524 = vsel %vm1469, %v1519, %v1523
      %v1525 = vrot.slane %v669, 2
      %v1526 = vrot.slane %v665, 3
      %v1527 = vor.u32 %v1525, %v1526
      %v1528 = vsel %vm1469, %v1523, %v1527
      %v1529 = vrot.slane %v677, 2
      %v1530 = vrot.slane %v673, 3
      %v1531 = vor.u32 %v1529, %v1530
      %v1532 = vsel %vm1469, %v1527, %v1531
      %v1533 = vrot.slane %v685, 2
      %v1534 = vrot.slane %v681, 3
      %v1535 = vor.u32 %v1533, %v1534
      %v1536 = vsel %vm1469, %v1531, %v1535
      %v1537 = vrot.slane %v693, 2
      %v1538 = vrot.slane %v689, 3
      %v1539 = vor.u32 %v1537, %v1538
      %v1540 = vsel %vm1469, %v1535, %v1539
      %v1541 = vrot.slane %v701, 2
      %v1542 = vrot.slane %v697, 3
      %v1543 = vor.u32 %v1541, %v1542
      %v1544 = vsel %vm1469, %v1539, %v1543
      %v1545 = vrot.slane %v709, 2
      %v1546 = vrot.slane %v705, 3
      %v1547 = vor.u32 %v1545, %v1546
      %v1548 = vsel %vm1469, %v1543, %v1547
      %v1549 = vrot.slane %v717, 2
      %v1550 = vrot.slane %v713, 3
      %v1551 = vor.u32 %v1549, %v1550
      %v1552 = vsel %vm1469, %v1547, %v1551
      %v1553 = vrot.slane %v725, 2
      %v1554 = vrot.slane %v721, 3
      %v1555 = vor.u32 %v1553, %v1554
      %v1556 = vsel %vm1469, %v1551, %v1555
      %v1557 = vrot.slane %v733, 2
      %v1558 = vrot.slane %v729, 3
      %v1559 = vor.u32 %v1557, %v1558
      %v1560 = vsel %vm1469, %v1555, %v1559
      %v1561 = vrot.slane %v741, 2
      %v1562 = vrot.slane %v737, 3
      %v1563 = vor.u32 %v1561, %v1562
      %v1564 = vsel %vm1469, %v1559, %v1563
      %v1565 = vrot.slane %v749, 2
      %v1566 = vrot.slane %v745, 3
      %v1567 = vor.u32 %v1565, %v1566
      %v1568 = vsel %vm1469, %v1563, %v1567
      %v1569 = vrot.slane %v757, 2
      %v1570 = vrot.slane %v753, 3
      %v1571 = vor.u32 %v1569, %v1570
      %v1572 = vsel %vm1469, %v1567, %v1571
      %v1573 = vrot.slane %v765, 2
      %v1574 = vrot.slane %v761, 3
      %v1575 = vor.u32 %v1573, %v1574
      %v1576 = vsel %vm1469, %v1571, %v1575
      %v1577 = vrot.slane %v773, 2
      %v1578 = vrot.slane %v769, 3
      %v1579 = vor.u32 %v1577, %v1578
      %v1580 = vsel %vm1469, %v1575, %v1579
      %v1581 = vrot.slane %v781, 2
      %v1582 = vrot.slane %v777, 3
      %v1583 = vor.u32 %v1581, %v1582
      %v1584 = vsel %vm1469, %v1579, %v1583
      %v1585 = vrot.slane %v789, 2
      %v1586 = vrot.slane %v785, 3
      %v1587 = vor.u32 %v1585, %v1586
      %v1588 = vsel %vm1469, %v1583, %v1587
      %v1589 = vrot.slane %v797, 2
      %v1590 = vrot.slane %v793, 3
      %v1591 = vor.u32 %v1589, %v1590
      %v1592 = vsel %vm1469, %v1587, %v1591
      %v1593 = vrot.slane %v1195, 2
      %v1594 = vrot.slane %v1198, 3
      %v1595 = vor.u32 %v1593, %v1594
      %v1596 = vsel %vm1469, %v1591, %v1595
      %v1598 = vshrl.u32 %v535, 16
      %v1600 = vrot.slane %v1598, 2
      %v1601 = vshll.u32 %v535, 16
      %v1603 = vrot.slane %v1601, 3
      %v1604 = vor.u32 %v1600, %v1603
      %v1605 = vsel %vm1469, %v1595, %v1604
      %1606 = vrot.lane.b32.xlu0 %v1476, 28
      %v1607 = vpop.permute.xlu0 %1606
      %1608 = vrot.lane.b32.xlu0 %v1480, 28
      %v1609 = vpop.permute.xlu0 %1608
      %1610 = vrot.lane.b32.xlu0 %v1484, 28
      %v1611 = vpop.permute.xlu0 %1610
      %1612 = vrot.lane.b32.xlu0 %v1488, 28
      %v1613 = vpop.permute.xlu0 %1612
      %1614 = vrot.lane.b32.xlu0 %v1492, 28
      %v1615 = vpop.permute.xlu0 %1614
      %1616 = vrot.lane.b32.xlu0 %v1496, 28
      %v1617 = vpop.permute.xlu0 %1616
      %1618 = vrot.lane.b32.xlu0 %v1500, 28
      %v1619 = vpop.permute.xlu0 %1618
      %1620 = vrot.lane.b32.xlu0 %v1504, 28
      %v1621 = vpop.permute.xlu0 %1620
      %1622 = vrot.lane.b32.xlu0 %v1508, 28
      %v1623 = vpop.permute.xlu0 %1622
      %1624 = vrot.lane.b32.xlu0 %v1512, 28
      %v1625 = vpop.permute.xlu0 %1624
      %1626 = vrot.lane.b32.xlu0 %v1516, 28
      %v1627 = vpop.permute.xlu0 %1626
      %1628 = vrot.lane.b32.xlu0 %v1520, 28
      %v1629 = vpop.permute.xlu0 %1628
      %1630 = vrot.lane.b32.xlu0 %v1524, 28
      %v1631 = vpop.permute.xlu0 %1630
      %1632 = vrot.lane.b32.xlu0 %v1528, 28
      %v1633 = vpop.permute.xlu0 %1632
      %1634 = vrot.lane.b32.xlu0 %v1532, 28
      %v1635 = vpop.permute.xlu0 %1634
      %1636 = vrot.lane.b32.xlu0 %v1536, 28
      %v1637 = vpop.permute.xlu0 %1636
      %1638 = vrot.lane.b32.xlu0 %v1540, 28
      %v1639 = vpop.permute.xlu0 %1638
      %1640 = vrot.lane.b32.xlu0 %v1544, 28
      %v1641 = vpop.permute.xlu0 %1640
      %1642 = vrot.lane.b32.xlu0 %v1548, 28
      %v1643 = vpop.permute.xlu0 %1642
      %1644 = vrot.lane.b32.xlu0 %v1552, 28
      %v1645 = vpop.permute.xlu0 %1644
      %1646 = vrot.lane.b32.xlu0 %v1556, 28
      %v1647 = vpop.permute.xlu0 %1646
      %1648 = vrot.lane.b32.xlu0 %v1560, 28
      %v1649 = vpop.permute.xlu0 %1648
      %1650 = vrot.lane.b32.xlu0 %v1564, 28
      %v1651 = vpop.permute.xlu0 %1650
      %1652 = vrot.lane.b32.xlu0 %v1568, 28
      %v1653 = vpop.permute.xlu0 %1652
      %1654 = vrot.lane.b32.xlu0 %v1572, 28
      %v1655 = vpop.permute.xlu0 %1654
      %1656 = vrot.lane.b32.xlu0 %v1576, 28
      %v1657 = vpop.permute.xlu0 %1656
      %1658 = vrot.lane.b32.xlu0 %v1580, 28
      %v1659 = vpop.permute.xlu0 %1658
      %1660 = vrot.lane.b32.xlu0 %v1584, 28
      %v1661 = vpop.permute.xlu0 %1660
      %1662 = vrot.lane.b32.xlu0 %v1588, 28
      %v1663 = vpop.permute.xlu0 %1662
      %1664 = vrot.lane.b32.xlu0 %v1592, 28
      %v1665 = vpop.permute.xlu0 %1664
      %1666 = vrot.lane.b32.xlu0 %v1596, 28
      %v1667 = vpop.permute.xlu0 %1666
      %1668 = vrot.lane.b32.xlu0 %v1605, 28
      %v1669 = vpop.permute.xlu0 %1668
      %1670 = vrot.lane.b32.xlu0 %v1604, 28
      %v1671 = vpop.permute.xlu0 %1670
      %vm1672 = vcmask 1044480
      %v1673 = vrot.slane %v491, 3
      %v1674 = vrot.slane %v492, 3
      %v1675 = vsel %vm1672, %v1673, %v1674
      %v1676 = vrot.slane %v493, 3
      %v1677 = vsel %vm1672, %v1674, %v1676
      %v1678 = vrot.slane %v494, 3
      %v1679 = vsel %vm1672, %v1676, %v1678
      %v1680 = vrot.slane %v495, 3
      %v1681 = vsel %vm1672, %v1678, %v1680
      %v1682 = vrot.slane %v496, 3
      %v1683 = vsel %vm1672, %v1680, %v1682
      %v1684 = vrot.slane %v497, 3
      %v1685 = vsel %vm1672, %v1682, %v1684
      %v1686 = vrot.slane %v498, 3
      %v1687 = vsel %vm1672, %v1684, %v1686
      %v1688 = vrot.slane %v499, 3
      %v1689 = vsel %vm1672, %v1686, %v1688
      %v1690 = vrot.slane %v500, 3
      %v1691 = vsel %vm1672, %v1688, %v1690
      %v1692 = vrot.slane %v501, 3
      %v1693 = vsel %vm1672, %v1690, %v1692
      %v1694 = vrot.slane %v502, 3
      %v1695 = vsel %vm1672, %v1692, %v1694
      %v1696 = vrot.slane %v503, 3
      %v1697 = vsel %vm1672, %v1694, %v1696
      %v1698 = vrot.slane %v504, 3
      %v1699 = vsel %vm1672, %v1696, %v1698
      %v1700 = vrot.slane %v505, 3
      %v1701 = vsel %vm1672, %v1698, %v1700
      %v1702 = vrot.slane %v506, 3
      %v1703 = vsel %vm1672, %v1700, %v1702
      %v1704 = vrot.slane %v507, 3
      %v1705 = vsel %vm1672, %v1702, %v1704
      %v1706 = vrot.slane %v508, 3
      %v1707 = vsel %vm1672, %v1704, %v1706
      %v1708 = vrot.slane %v509, 3
      %v1709 = vsel %vm1672, %v1706, %v1708
      %v1710 = vrot.slane %v510, 3
      %v1711 = vsel %vm1672, %v1708, %v1710
      %v1712 = vrot.slane %v511, 3
      %v1713 = vsel %vm1672, %v1710, %v1712
      %v1714 = vrot.slane %v512, 3
      %v1715 = vsel %vm1672, %v1712, %v1714
      %v1716 = vrot.slane %v513, 3
      %v1717 = vsel %vm1672, %v1714, %v1716
      %v1718 = vrot.slane %v514, 3
      %v1719 = vsel %vm1672, %v1716, %v1718
      %v1720 = vrot.slane %v515, 3
      %v1721 = vsel %vm1672, %v1718, %v1720
      %v1722 = vrot.slane %v516, 3
      %v1723 = vsel %vm1672, %v1720, %v1722
      %v1724 = vrot.slane %v517, 3
      %v1725 = vsel %vm1672, %v1722, %v1724
      %v1726 = vrot.slane %v518, 3
      %v1727 = vsel %vm1672, %v1724, %v1726
      %v1728 = vrot.slane %v519, 3
      %v1729 = vsel %vm1672, %v1726, %v1728
      %v1730 = vrot.slane %v520, 3
      %v1731 = vsel %vm1672, %v1728, %v1730
      %v1732 = vrot.slane %v533, 3
      %v1733 = vsel %vm1672, %v1730, %v1732
      %v1734 = vrot.slane %v534, 3
      %v1735 = vsel %vm1672, %v1732, %v1734
      %v1736 = vrot.slane %v535, 3
      %v1737 = vsel %vm1672, %v1734, %v1736
      %1738 = vrot.lane.b32.xlu0 %v1675, 32
      %v1739 = vpop.permute.xlu0 %1738
      %1740 = vrot.lane.b32.xlu0 %v1677, 32
      %v1741 = vpop.permute.xlu0 %1740
      %1742 = vrot.lane.b32.xlu0 %v1679, 32
      %v1743 = vpop.permute.xlu0 %1742
      %1744 = vrot.lane.b32.xlu0 %v1681, 32
      %v1745 = vpop.permute.xlu0 %1744
      %1746 = vrot.lane.b32.xlu0 %v1683, 32
      %v1747 = vpop.permute.xlu0 %1746
      %1748 = vrot.lane.b32.xlu0 %v1685, 32
      %v1749 = vpop.permute.xlu0 %1748
      %1750 = vrot.lane.b32.xlu0 %v1687, 32
      %v1751 = vpop.permute.xlu0 %1750
      %1752 = vrot.lane.b32.xlu0 %v1689, 32
      %v1753 = vpop.permute.xlu0 %1752
      %1754 = vrot.lane.b32.xlu0 %v1691, 32
      %v1755 = vpop.permute.xlu0 %1754
      %1756 = vrot.lane.b32.xlu0 %v1693, 32
      %v1757 = vpop.permute.xlu0 %1756
      %1758 = vrot.lane.b32.xlu0 %v1695, 32
      %v1759 = vpop.permute.xlu0 %1758
      %1760 = vrot.lane.b32.xlu0 %v1697, 32
      %v1761 = vpop.permute.xlu0 %1760
      %1762 = vrot.lane.b32.xlu0 %v1699, 32
      %v1763 = vpop.permute.xlu0 %1762
      %1764 = vrot.lane.b32.xlu0 %v1701, 32
      %v1765 = vpop.permute.xlu0 %1764
      %1766 = vrot.lane.b32.xlu0 %v1703, 32
      %v1767 = vpop.permute.xlu0 %1766
      %1768 = vrot.lane.b32.xlu0 %v1705, 32
      %v1769 = vpop.permute.xlu0 %1768
      %1770 = vrot.lane.b32.xlu0 %v1707, 32
      %v1771 = vpop.permute.xlu0 %1770
      %1772 = vrot.lane.b32.xlu0 %v1709, 32
      %v1773 = vpop.permute.xlu0 %1772
      %1774 = vrot.lane.b32.xlu0 %v1711, 32
      %v1775 = vpop.permute.xlu0 %1774
      %1776 = vrot.lane.b32.xlu0 %v1713, 32
      %v1777 = vpop.permute.xlu0 %1776
      %1778 = vrot.lane.b32.xlu0 %v1715, 32
      %v1779 = vpop.permute.xlu0 %1778
      %1780 = vrot.lane.b32.xlu0 %v1717, 32
      %v1781 = vpop.permute.xlu0 %1780
      %1782 = vrot.lane.b32.xlu0 %v1719, 32
      %v1783 = vpop.permute.xlu0 %1782
      %1784 = vrot.lane.b32.xlu0 %v1721, 32
      %v1785 = vpop.permute.xlu0 %1784
      %1786 = vrot.lane.b32.xlu0 %v1723, 32
      %v1787 = vpop.permute.xlu0 %1786
      %1788 = vrot.lane.b32.xlu0 %v1725, 32
      %v1789 = vpop.permute.xlu0 %1788
      %1790 = vrot.lane.b32.xlu0 %v1727, 32
      %v1791 = vpop.permute.xlu0 %1790
      %1792 = vrot.lane.b32.xlu0 %v1729, 32
      %v1793 = vpop.permute.xlu0 %1792
      %1794 = vrot.lane.b32.xlu0 %v1731, 32
      %v1795 = vpop.permute.xlu0 %1794
      %1796 = vrot.lane.b32.xlu0 %v1733, 32
      %v1797 = vpop.permute.xlu0 %1796
      %1798 = vrot.lane.b32.xlu0 %v1735, 32
      %v1799 = vpop.permute.xlu0 %1798
      %1800 = vrot.lane.b32.xlu0 %v1737, 32
      %v1801 = vpop.permute.xlu0 %1800
      %1802 = vrot.lane.b32.xlu0 %v1736, 32
      %v1803 = vpop.permute.xlu0 %1802
      %vm1804 = vcmask 31744
      %v1806 = vsel %vm1804, %v489, %v801
      %v1808 = vsel %vm1804, %v490, %v803
      %v1810 = vsel %vm1804, %v491, %v805
      %v1812 = vsel %vm1804, %v492, %v807
      %v1814 = vsel %vm1804, %v493, %v809
      %v1816 = vsel %vm1804, %v494, %v811
      %v1818 = vsel %vm1804, %v495, %v813
      %v1820 = vsel %vm1804, %v496, %v815
      %v1822 = vsel %vm1804, %v497, %v817
      %v1824 = vsel %vm1804, %v498, %v819
      %v1826 = vsel %vm1804, %v499, %v821
      %v1828 = vsel %vm1804, %v500, %v823
      %v1830 = vsel %vm1804, %v501, %v825
      %v1832 = vsel %vm1804, %v502, %v827
      %v1834 = vsel %vm1804, %v503, %v829
      %v1836 = vsel %vm1804, %v504, %v831
      %v1838 = vsel %vm1804, %v505, %v833
      %v1840 = vsel %vm1804, %v506, %v835
      %v1842 = vsel %vm1804, %v507, %v837
      %v1844 = vsel %vm1804, %v508, %v839
      %v1846 = vsel %vm1804, %v509, %v841
      %v1848 = vsel %vm1804, %v510, %v843
      %v1850 = vsel %vm1804, %v511, %v845
      %v1852 = vsel %vm1804, %v512, %v847
      %v1854 = vsel %vm1804, %v513, %v849
      %v1856 = vsel %vm1804, %v514, %v851
      %v1858 = vsel %vm1804, %v515, %v853
      %v1860 = vsel %vm1804, %v516, %v855
      %v1862 = vsel %vm1804, %v517, %v857
      %v1864 = vsel %vm1804, %v518, %v859
      %v1866 = vsel %vm1804, %v519, %v861
      %v1868 = vsel %vm1804, %v520, %v863
      %v1870 = vsel %vm1804, %v533, %v865
      %vm1871 = vcmask 64512
      %v1873 = vsel %vm1871, %v1806, %v933
      %v1875 = vsel %vm1871, %v1808, %v935
      %v1877 = vsel %vm1871, %v1810, %v937
      %v1879 = vsel %vm1871, %v1812, %v939
      %v1881 = vsel %vm1871, %v1814, %v941
      %v1883 = vsel %vm1871, %v1816, %v943
      %v1885 = vsel %vm1871, %v1818, %v945
      %v1887 = vsel %vm1871, %v1820, %v947
      %v1889 = vsel %vm1871, %v1822, %v949
      %v1891 = vsel %vm1871, %v1824, %v951
      %v1893 = vsel %vm1871, %v1826, %v953
      %v1895 = vsel %vm1871, %v1828, %v955
      %v1897 = vsel %vm1871, %v1830, %v957
      %v1899 = vsel %vm1871, %v1832, %v959
      %v1901 = vsel %vm1871, %v1834, %v961
      %v1903 = vsel %vm1871, %v1836, %v963
      %v1905 = vsel %vm1871, %v1838, %v965
      %v1907 = vsel %vm1871, %v1840, %v967
      %v1909 = vsel %vm1871, %v1842, %v969
      %v1911 = vsel %vm1871, %v1844, %v971
      %v1913 = vsel %vm1871, %v1846, %v973
      %v1915 = vsel %vm1871, %v1848, %v975
      %v1917 = vsel %vm1871, %v1850, %v977
      %v1919 = vsel %vm1871, %v1852, %v979
      %v1921 = vsel %vm1871, %v1854, %v981
      %v1923 = vsel %vm1871, %v1856, %v983
      %v1925 = vsel %vm1871, %v1858, %v985
      %v1927 = vsel %vm1871, %v1860, %v987
      %v1929 = vsel %vm1871, %v1862, %v989
      %v1931 = vsel %vm1871, %v1864, %v991
      %v1933 = vsel %vm1871, %v1866, %v993
      %v1935 = vsel %vm1871, %v1868, %v995
      %v1937 = vsel %vm1871, %v1870, %v997
      %vm1938 = vcmask 97280
      %v1940 = vsel %vm1938, %v1873, %v1001
      %v1942 = vsel %vm1938, %v1875, %v1003
      %v1944 = vsel %vm1938, %v1877, %v1005
      %v1946 = vsel %vm1938, %v1879, %v1007
      %v1948 = vsel %vm1938, %v1881, %v1009
      %v1950 = vsel %vm1938, %v1883, %v1011
      %v1952 = vsel %vm1938, %v1885, %v1013
      %v1954 = vsel %vm1938, %v1887, %v1015
      %v1956 = vsel %vm1938, %v1889, %v1017
      %v1958 = vsel %vm1938, %v1891, %v1019
      %v1960 = vsel %vm1938, %v1893, %v1021
      %v1962 = vsel %vm1938, %v1895, %v1023
      %v1964 = vsel %vm1938, %v1897, %v1025
      %v1966 = vsel %vm1938, %v1899, %v1027
      %v1968 = vsel %vm1938, %v1901, %v1029
      %v1970 = vsel %vm1938, %v1903, %v1031
      %v1972 = vsel %vm1938, %v1905, %v1033
      %v1974 = vsel %vm1938, %v1907, %v1035
      %v1976 = vsel %vm1938, %v1909, %v1037
      %v1978 = vsel %vm1938, %v1911, %v1039
      %v1980 = vsel %vm1938, %v1913, %v1041
      %v1982 = vsel %vm1938, %v1915, %v1043
      %v1984 = vsel %vm1938, %v1917, %v1045
      %v1986 = vsel %vm1938, %v1919, %v1047
      %v1988 = vsel %vm1938, %v1921, %v1049
      %v1990 = vsel %vm1938, %v1923, %v1051
      %v1992 = vsel %vm1938, %v1925, %v1053
      %v1994 = vsel %vm1938, %v1927, %v1055
      %v1996 = vsel %vm1938, %v1929, %v1057
      %v1998 = vsel %vm1938, %v1931, %v1059
      %v2000 = vsel %vm1938, %v1933, %v1061
      %v2002 = vsel %vm1938, %v1935, %v1063
      %v2004 = vsel %vm1938, %v1937, %v1065
      %vm2005 = vcmask 130048
      %v2007 = vsel %vm2005, %v1940, %v1204
      %v2009 = vsel %vm2005, %v1942, %v1206
      %v2011 = vsel %vm2005, %v1944, %v1208
      %v2013 = vsel %vm2005, %v1946, %v1210
      %v2015 = vsel %vm2005, %v1948, %v1212
      %v2017 = vsel %vm2005, %v1950, %v1214
      %v2019 = vsel %vm2005, %v1952, %v1216
      %v2021 = vsel %vm2005, %v1954, %v1218
      %v2023 = vsel %vm2005, %v1956, %v1220
      %v2025 = vsel %vm2005, %v1958, %v1222
      %v2027 = vsel %vm2005, %v1960, %v1224
      %v2029 = vsel %vm2005, %v1962, %v1226
      %v2031 = vsel %vm2005, %v1964, %v1228
      %v2033 = vsel %vm2005, %v1966, %v1230
      %v2035 = vsel %vm2005, %v1968, %v1232
      %v2037 = vsel %vm2005, %v1970, %v1234
      %v2039 = vsel %vm2005, %v1972, %v1236
      %v2041 = vsel %vm2005, %v1974, %v1238
      %v2043 = vsel %vm2005, %v1976, %v1240
      %v2045 = vsel %vm2005, %v1978, %v1242
      %v2047 = vsel %vm2005, %v1980, %v1244
      %v2049 = vsel %vm2005, %v1982, %v1246
      %v2051 = vsel %vm2005, %v1984, %v1248
      %v2053 = vsel %vm2005, %v1986, %v1250
      %v2055 = vsel %vm2005, %v1988, %v1252
      %v2057 = vsel %vm2005, %v1990, %v1254
      %v2059 = vsel %vm2005, %v1992, %v1256
      %v2061 = vsel %vm2005, %v1994, %v1258
      %v2063 = vsel %vm2005, %v1996, %v1260
      %v2065 = vsel %vm2005, %v1998, %v1262
      %v2067 = vsel %vm2005, %v2000, %v1264
      %v2069 = vsel %vm2005, %v2002, %v1266
      %v2071 = vsel %vm2005, %v2004, %v1268
      %vm2072 = vcmask 162816
      %v2074 = vsel %vm2072, %v2007, %v1336
      %v2076 = vsel %vm2072, %v2009, %v1338
      %v2078 = vsel %vm2072, %v2011, %v1340
      %v2080 = vsel %vm2072, %v2013, %v1342
      %v2082 = vsel %vm2072, %v2015, %v1344
      %v2084 = vsel %vm2072, %v2017, %v1346
      %v2086 = vsel %vm2072, %v2019, %v1348
      %v2088 = vsel %vm2072, %v2021, %v1350
      %v2090 = vsel %vm2072, %v2023, %v1352
      %v2092 = vsel %vm2072, %v2025, %v1354
      %v2094 = vsel %vm2072, %v2027, %v1356
      %v2096 = vsel %vm2072, %v2029, %v1358
      %v2098 = vsel %vm2072, %v2031, %v1360
      %v2100 = vsel %vm2072, %v2033, %v1362
      %v2102 = vsel %vm2072, %v2035, %v1364
      %v2104 = vsel %vm2072, %v2037, %v1366
      %v2106 = vsel %vm2072, %v2039, %v1368
      %v2108 = vsel %vm2072, %v2041, %v1370
      %v2110 = vsel %vm2072, %v2043, %v1372
      %v2112 = vsel %vm2072, %v2045, %v1374
      %v2114 = vsel %vm2072, %v2047, %v1376
      %v2116 = vsel %vm2072, %v2049, %v1378
      %v2118 = vsel %vm2072, %v2051, %v1380
      %v2120 = vsel %vm2072, %v2053, %v1382
      %v2122 = vsel %vm2072, %v2055, %v1384
      %v2124 = vsel %vm2072, %v2057, %v1386
      %v2126 = vsel %vm2072, %v2059, %v1388
      %v2128 = vsel %vm2072, %v2061, %v1390
      %v2130 = vsel %vm2072, %v2063, %v1392
      %v2132 = vsel %vm2072, %v2065, %v1394
      %v2134 = vsel %vm2072, %v2067, %v1396
      %v2136 = vsel %vm2072, %v2069, %v1398
      %v2138 = vsel %vm2072, %v2071, %v1400
      %vm2139 = vcmask 195584
      %v2141 = vsel %vm2139, %v2074, %v1404
      %v2143 = vsel %vm2139, %v2076, %v1406
      %v2145 = vsel %vm2139, %v2078, %v1408
      %v2147 = vsel %vm2139, %v2080, %v1410
      %v2149 = vsel %vm2139, %v2082, %v1412
      %v2151 = vsel %vm2139, %v2084, %v1414
      %v2153 = vsel %vm2139, %v2086, %v1416
      %v2155 = vsel %vm2139, %v2088, %v1418
      %v2157 = vsel %vm2139, %v2090, %v1420
      %v2159 = vsel %vm2139, %v2092, %v1422
      %v2161 = vsel %vm2139, %v2094, %v1424
      %v2163 = vsel %vm2139, %v2096, %v1426
      %v2165 = vsel %vm2139, %v2098, %v1428
      %v2167 = vsel %vm2139, %v2100, %v1430
      %v2169 = vsel %vm2139, %v2102, %v1432
      %v2171 = vsel %vm2139, %v2104, %v1434
      %v2173 = vsel %vm2139, %v2106, %v1436
      %v2175 = vsel %vm2139, %v2108, %v1438
      %v2177 = vsel %vm2139, %v2110, %v1440
      %v2179 = vsel %vm2139, %v2112, %v1442
      %v2181 = vsel %vm2139, %v2114, %v1444
      %v2183 = vsel %vm2139, %v2116, %v1446
      %v2185 = vsel %vm2139, %v2118, %v1448
      %v2187 = vsel %vm2139, %v2120, %v1450
      %v2189 = vsel %vm2139, %v2122, %v1452
      %v2191 = vsel %vm2139, %v2124, %v1454
      %v2193 = vsel %vm2139, %v2126, %v1456
      %v2195 = vsel %vm2139, %v2128, %v1458
      %v2197 = vsel %vm2139, %v2130, %v1460
      %v2199 = vsel %vm2139, %v2132, %v1462
      %v2201 = vsel %vm2139, %v2134, %v1464
      %v2203 = vsel %vm2139, %v2136, %v1466
      %v2205 = vsel %vm2139, %v2138, %v1468
      %vm2206 = vcmask 228352
      %v2208 = vsel %vm2206, %v2141, %v1607
      %v2210 = vsel %vm2206, %v2143, %v1609
      %v2212 = vsel %vm2206, %v2145, %v1611
      %v2214 = vsel %vm2206, %v2147, %v1613
      %v2216 = vsel %vm2206, %v2149, %v1615
      %v2218 = vsel %vm2206, %v2151, %v1617
      %v2220 = vsel %vm2206, %v2153, %v1619
      %v2222 = vsel %vm2206, %v2155, %v1621
      %v2224 = vsel %vm2206, %v2157, %v1623
      %v2226 = vsel %vm2206, %v2159, %v1625
      %v2228 = vsel %vm2206, %v2161, %v1627
      %v2230 = vsel %vm2206, %v2163, %v1629
      %v2232 = vsel %vm2206, %v2165, %v1631
      %v2234 = vsel %vm2206, %v2167, %v1633
      %v2236 = vsel %vm2206, %v2169, %v1635
      %v2238 = vsel %vm2206, %v2171, %v1637
      %v2240 = vsel %vm2206, %v2173, %v1639
      %v2242 = vsel %vm2206, %v2175, %v1641
      %v2244 = vsel %vm2206, %v2177, %v1643
      %v2246 = vsel %vm2206, %v2179, %v1645
      %v2248 = vsel %vm2206, %v2181, %v1647
      %v2250 = vsel %vm2206, %v2183, %v1649
      %v2252 = vsel %vm2206, %v2185, %v1651
      %v2254 = vsel %vm2206, %v2187, %v1653
      %v2256 = vsel %vm2206, %v2189, %v1655
      %v2258 = vsel %vm2206, %v2191, %v1657
      %v2260 = vsel %vm2206, %v2193, %v1659
      %v2262 = vsel %vm2206, %v2195, %v1661
      %v2264 = vsel %vm2206, %v2197, %v1663
      %v2266 = vsel %vm2206, %v2199, %v1665
      %v2268 = vsel %vm2206, %v2201, %v1667
      %v2270 = vsel %vm2206, %v2203, %v1669
      %v2272 = vsel %vm2206, %v2205, %v1671
      %vm2273 = vcmask 261120
      %v2275 = vsel %vm2273, %v2208, %v1739
      %v2277 = vsel %vm2273, %v2210, %v1741
      %v2279 = vsel %vm2273, %v2212, %v1743
      %v2281 = vsel %vm2273, %v2214, %v1745
      %v2283 = vsel %vm2273, %v2216, %v1747
      %v2285 = vsel %vm2273, %v2218, %v1749
      %v2287 = vsel %vm2273, %v2220, %v1751
      %v2289 = vsel %vm2273, %v2222, %v1753
      %v2291 = vsel %vm2273, %v2224, %v1755
      %v2293 = vsel %vm2273, %v2226, %v1757
      %v2295 = vsel %vm2273, %v2228, %v1759
      %v2297 = vsel %vm2273, %v2230, %v1761
      %v2299 = vsel %vm2273, %v2232, %v1763
      %v2301 = vsel %vm2273, %v2234, %v1765
      %v2303 = vsel %vm2273, %v2236, %v1767
      %v2305 = vsel %vm2273, %v2238, %v1769
      %v2307 = vsel %vm2273, %v2240, %v1771
      %v2309 = vsel %vm2273, %v2242, %v1773
      %v2311 = vsel %vm2273, %v2244, %v1775
      %v2313 = vsel %vm2273, %v2246, %v1777
      %v2315 = vsel %vm2273, %v2248, %v1779
      %v2317 = vsel %vm2273, %v2250, %v1781
      %v2319 = vsel %vm2273, %v2252, %v1783
      %v2321 = vsel %vm2273, %v2254, %v1785
      %v2323 = vsel %vm2273, %v2256, %v1787
      %v2325 = vsel %vm2273, %v2258, %v1789
      %v2327 = vsel %vm2273, %v2260, %v1791
      %v2329 = vsel %vm2273, %v2262, %v1793
      %v2331 = vsel %vm2273, %v2264, %v1795
      %v2333 = vsel %vm2273, %v2266, %v1797
      %v2335 = vsel %vm2273, %v2268, %v1799
      %v2337 = vsel %vm2273, %v2270, %v1801
      %v2339 = vsel %vm2273, %v2272, %v1803
      %v2340 = vld [vmem:[%s3] sm:$0xf]
      %v2341 = vld [vmem:[%s3 + $0x4] sm:$0xf]
      %v2342 = vld [vmem:[%s3 + $0x8] sm:$0xf]
      %v2343 = vld [vmem:[%s3 + $0xc] sm:$0xf]
      %v2344 = vld [vmem:[%s3 + $0x10] sm:$0x3]
      %v2345 = vshrl.u32 %v2275, 16
      %v2347 = vrot.slane %v2345, 2
      %v2348 = vshll.u32 %v2275, 16
      %v2350 = vrot.slane %v2348, 3
      %v2351 = vor.u32 %v2347, %v2350
      %v2352 = vshrl.u32 %v2277, 16
      %v2354 = vrot.slane %v2352, 2
      %v2355 = vshll.u32 %v2277, 16
      %v2357 = vrot.slane %v2355, 3
      %v2358 = vor.u32 %v2354, %v2357
      %v2359 = vsel %vm1469, %v2351, %v2358
      %v2360 = vshrl.u32 %v2279, 16
      %v2362 = vrot.slane %v2360, 2
      %v2363 = vshll.u32 %v2279, 16
      %v2365 = vrot.slane %v2363, 3
      %v2366 = vor.u32 %v2362, %v2365
      %v2367 = vsel %vm1469, %v2358, %v2366
      %v2368 = vshrl.u32 %v2281, 16
      %v2370 = vrot.slane %v2368, 2
      %v2371 = vshll.u32 %v2281, 16
      %v2373 = vrot.slane %v2371, 3
      %v2374 = vor.u32 %v2370, %v2373
      %v2375 = vsel %vm1469, %v2366, %v2374
      %v2376 = vshrl.u32 %v2283, 16
      %v2378 = vrot.slane %v2376, 2
      %v2379 = vshll.u32 %v2283, 16
      %v2381 = vrot.slane %v2379, 3
      %v2382 = vor.u32 %v2378, %v2381
      %v2383 = vsel %vm1469, %v2374, %v2382
      %v2384 = vshrl.u32 %v2285, 16
      %v2386 = vrot.slane %v2384, 2
      %v2387 = vshll.u32 %v2285, 16
      %v2389 = vrot.slane %v2387, 3
      %v2390 = vor.u32 %v2386, %v2389
      %v2391 = vsel %vm1469, %v2382, %v2390
      %v2392 = vshrl.u32 %v2287, 16
      %v2394 = vrot.slane %v2392, 2
      %v2395 = vshll.u32 %v2287, 16
      %v2397 = vrot.slane %v2395, 3
      %v2398 = vor.u32 %v2394, %v2397
      %v2399 = vsel %vm1469, %v2390, %v2398
      %v2400 = vshrl.u32 %v2289, 16
      %v2402 = vrot.slane %v2400, 2
      %v2403 = vshll.u32 %v2289, 16
      %v2405 = vrot.slane %v2403, 3
      %v2406 = vor.u32 %v2402, %v2405
      %v2407 = vsel %vm1469, %v2398, %v2406
      %v2408 = vshrl.u32 %v2291, 16
      %v2410 = vrot.slane %v2408, 2
      %v2411 = vshll.u32 %v2291, 16
      %v2413 = vrot.slane %v2411, 3
      %v2414 = vor.u32 %v2410, %v2413
      %v2415 = vsel %vm1469, %v2406, %v2414
      %v2416 = vshrl.u32 %v2293, 16
      %v2418 = vrot.slane %v2416, 2
      %v2419 = vshll.u32 %v2293, 16
      %v2421 = vrot.slane %v2419, 3
      %v2422 = vor.u32 %v2418, %v2421
      %v2423 = vsel %vm1469, %v2414, %v2422
      %v2424 = vshrl.u32 %v2295, 16
      %v2426 = vrot.slane %v2424, 2
      %v2427 = vshll.u32 %v2295, 16
      %v2429 = vrot.slane %v2427, 3
      %v2430 = vor.u32 %v2426, %v2429
      %v2431 = vsel %vm1469, %v2422, %v2430
      %v2432 = vshrl.u32 %v2297, 16
      %v2434 = vrot.slane %v2432, 2
      %v2435 = vshll.u32 %v2297, 16
      %v2437 = vrot.slane %v2435, 3
      %v2438 = vor.u32 %v2434, %v2437
      %v2439 = vsel %vm1469, %v2430, %v2438
      %v2440 = vshrl.u32 %v2299, 16
      %v2442 = vrot.slane %v2440, 2
      %v2443 = vshll.u32 %v2299, 16
      %v2445 = vrot.slane %v2443, 3
      %v2446 = vor.u32 %v2442, %v2445
      %v2447 = vsel %vm1469, %v2438, %v2446
      %v2448 = vshrl.u32 %v2301, 16
      %v2450 = vrot.slane %v2448, 2
      %v2451 = vshll.u32 %v2301, 16
      %v2453 = vrot.slane %v2451, 3
      %v2454 = vor.u32 %v2450, %v2453
      %v2455 = vsel %vm1469, %v2446, %v2454
      %v2456 = vshrl.u32 %v2303, 16
      %v2458 = vrot.slane %v2456, 2
      %v2459 = vshll.u32 %v2303, 16
      %v2461 = vrot.slane %v2459, 3
      %v2462 = vor.u32 %v2458, %v2461
      %v2463 = vsel %vm1469, %v2454, %v2462
      %v2464 = vshrl.u32 %v2305, 16
      %v2466 = vrot.slane %v2464, 2
      %v2467 = vshll.u32 %v2305, 16
      %v2469 = vrot.slane %v2467, 3
      %v2470 = vor.u32 %v2466, %v2469
      %v2471 = vsel %vm1469, %v2462, %v2470
      %v2472 = vshrl.u32 %v2307, 16
      %v2474 = vrot.slane %v2472, 2
      %v2475 = vshll.u32 %v2307, 16
      %v2477 = vrot.slane %v2475, 3
      %v2478 = vor.u32 %v2474, %v2477
      %v2479 = vsel %vm1469, %v2470, %v2478
      %v2480 = vshrl.u32 %v2309, 16
      %v2482 = vrot.slane %v2480, 2
      %v2483 = vshll.u32 %v2309, 16
      %v2485 = vrot.slane %v2483, 3
      %v2486 = vor.u32 %v2482, %v2485
      %v2487 = vsel %vm1469, %v2478, %v2486
      %v2488 = vshrl.u32 %v2311, 16
      %v2490 = vrot.slane %v2488, 2
      %v2491 = vshll.u32 %v2311, 16
      %v2493 = vrot.slane %v2491, 3
      %v2494 = vor.u32 %v2490, %v2493
      %v2495 = vsel %vm1469, %v2486, %v2494
      %v2496 = vshrl.u32 %v2313, 16
      %v2498 = vrot.slane %v2496, 2
      %v2499 = vshll.u32 %v2313, 16
      %v2501 = vrot.slane %v2499, 3
      %v2502 = vor.u32 %v2498, %v2501
      %v2503 = vsel %vm1469, %v2494, %v2502
      %v2504 = vshrl.u32 %v2315, 16
      %v2506 = vrot.slane %v2504, 2
      %v2507 = vshll.u32 %v2315, 16
      %v2509 = vrot.slane %v2507, 3
      %v2510 = vor.u32 %v2506, %v2509
      %v2511 = vsel %vm1469, %v2502, %v2510
      %v2512 = vshrl.u32 %v2317, 16
      %v2514 = vrot.slane %v2512, 2
      %v2515 = vshll.u32 %v2317, 16
      %v2517 = vrot.slane %v2515, 3
      %v2518 = vor.u32 %v2514, %v2517
      %v2519 = vsel %vm1469, %v2510, %v2518
      %v2520 = vshrl.u32 %v2319, 16
      %v2522 = vrot.slane %v2520, 2
      %v2523 = vshll.u32 %v2319, 16
      %v2525 = vrot.slane %v2523, 3
      %v2526 = vor.u32 %v2522, %v2525
      %v2527 = vsel %vm1469, %v2518, %v2526
      %v2528 = vshrl.u32 %v2321, 16
      %v2530 = vrot.slane %v2528, 2
      %v2531 = vshll.u32 %v2321, 16
      %v2533 = vrot.slane %v2531, 3
      %v2534 = vor.u32 %v2530, %v2533
      %v2535 = vsel %vm1469, %v2526, %v2534
      %v2536 = vshrl.u32 %v2323, 16
      %v2538 = vrot.slane %v2536, 2
      %v2539 = vshll.u32 %v2323, 16
      %v2541 = vrot.slane %v2539, 3
      %v2542 = vor.u32 %v2538, %v2541
      %v2543 = vsel %vm1469, %v2534, %v2542
      %v2544 = vshrl.u32 %v2325, 16
      %v2546 = vrot.slane %v2544, 2
      %v2547 = vshll.u32 %v2325, 16
      %v2549 = vrot.slane %v2547, 3
      %v2550 = vor.u32 %v2546, %v2549
      %v2551 = vsel %vm1469, %v2542, %v2550
      %v2552 = vshrl.u32 %v2327, 16
      %v2554 = vrot.slane %v2552, 2
      %v2555 = vshll.u32 %v2327, 16
      %v2557 = vrot.slane %v2555, 3
      %v2558 = vor.u32 %v2554, %v2557
      %v2559 = vsel %vm1469, %v2550, %v2558
      %v2560 = vshrl.u32 %v2329, 16
      %v2562 = vrot.slane %v2560, 2
      %v2563 = vshll.u32 %v2329, 16
      %v2565 = vrot.slane %v2563, 3
      %v2566 = vor.u32 %v2562, %v2565
      %v2567 = vsel %vm1469, %v2558, %v2566
      %v2568 = vshrl.u32 %v2331, 16
      %v2570 = vrot.slane %v2568, 2
      %v2571 = vshll.u32 %v2331, 16
      %v2573 = vrot.slane %v2571, 3
      %v2574 = vor.u32 %v2570, %v2573
      %v2575 = vsel %vm1469, %v2566, %v2574
      %v2576 = vshrl.u32 %v2333, 16
      %v2578 = vrot.slane %v2576, 2
      %v2579 = vshll.u32 %v2333, 16
      %v2581 = vrot.slane %v2579, 3
      %v2582 = vor.u32 %v2578, %v2581
      %v2583 = vsel %vm1469, %v2574, %v2582
      %v2584 = vshrl.u32 %v2335, 16
      %v2586 = vrot.slane %v2584, 2
      %v2587 = vshll.u32 %v2335, 16
      %v2589 = vrot.slane %v2587, 3
      %v2590 = vor.u32 %v2586, %v2589
      %v2591 = vsel %vm1469, %v2582, %v2590
      %v2592 = vshrl.u32 %v2337, 16
      %v2594 = vrot.slane %v2592, 2
      %v2595 = vshll.u32 %v2337, 16
      %v2597 = vrot.slane %v2595, 3
      %v2598 = vor.u32 %v2594, %v2597
      %v2599 = vsel %vm1469, %v2590, %v2598
      %v2600 = vshrl.u32 %v2339, 16
      %v2602 = vrot.slane %v2600, 2
      %v2603 = vshll.u32 %v2339, 16
      %v2605 = vrot.slane %v2603, 3
      %v2606 = vor.u32 %v2602, %v2605
      %v2607 = vsel %vm1469, %v2598, %v2606
      %v2613 = vunpack.c.l.b16 %v2340
      %v2614 = vunpack.c.l.b16 %v2341
      %v2615 = vunpack.c.l.b16 %v2342
      %v2616 = vunpack.c.l.b16 %v2343
      %v2617 = vunpack.c.l.b16 %v2344
      %v2618 = vpack.c.b16 %v2614, %v2613
      %v2619 = vpack.c.b16 %v2616, %v2615
      %v2620 = vpack.c.b16 %v2617, %v2617
      %vm2623 = vcmask 293888
      %v2625 = vsel %vm2623, %v2359, 0
      %v2628 = vsel %vm2623, %v2367, 0
      %v2631 = vsel %vm2623, %v2375, 0
      %v2634 = vsel %vm2623, %v2383, 0
      %v2637 = vsel %vm2623, %v2391, 0
      %v2640 = vsel %vm2623, %v2399, 0
      %v2643 = vsel %vm2623, %v2407, 0
      %v2646 = vsel %vm2623, %v2415, 0
      %v2649 = vsel %vm2623, %v2423, 0
      %v2652 = vsel %vm2623, %v2431, 0
      %v2655 = vsel %vm2623, %v2439, 0
      %v2658 = vsel %vm2623, %v2447, 0
      %v2661 = vsel %vm2623, %v2455, 0
      %v2664 = vsel %vm2623, %v2463, 0
      %v2667 = vsel %vm2623, %v2471, 0
      %v2670 = vsel %vm2623, %v2479, 0
      %v2673 = vsel %vm2623, %v2487, 0
      %v2676 = vsel %vm2623, %v2495, 0
      %v2679 = vsel %vm2623, %v2503, 0
      %v2682 = vsel %vm2623, %v2511, 0
      %v2685 = vsel %vm2623, %v2519, 0
      %v2688 = vsel %vm2623, %v2527, 0
      %v2691 = vsel %vm2623, %v2535, 0
      %v2694 = vsel %vm2623, %v2543, 0
      %v2697 = vsel %vm2623, %v2551, 0
      %v2700 = vsel %vm2623, %v2559, 0
      %v2703 = vsel %vm2623, %v2567, 0
      %v2706 = vsel %vm2623, %v2575, 0
      %v2709 = vsel %vm2623, %v2583, 0
      %v2712 = vsel %vm2623, %v2591, 0
      %v2715 = vsel %vm2623, %v2599, 0
      %v2718 = vsel %vm2623, %v2607, 0
      %vm2720 = vcmask 1041408
      %v2722 = vsel %vm2720, %v2620, 0
      %2724 = vmatprep.subr.bf16.mxu0 0
      %2725 = vmatpush1.bf16.msra.mxu0 0
      %2726 = vmatprep.subr.bf16.mxu0 0
      %2727 = vmatpush1.bf16.msra.mxu0 0
      %2728 = vmatprep.subr.bf16.mxu0 0
      %2729 = vmatpush1.bf16.msra.mxu0 0
      %2730 = vmatprep.subr.bf16.mxu0 0
      %2731 = vmatpush1.bf16.msra.mxu0 0
      %2732 = vmatprep.subr.bf16.mxu0 0
      %2733 = vmatpush1.bf16.msra.mxu0 0
      %2734 = vmatprep.subr.bf16.mxu0 0
      %2735 = vmatpush1.bf16.msra.mxu0 %v2722
      %2736 = vmatprep.subr.bf16.mxu0 0
      %2737 = vmatpush1.bf16.msra.mxu0 %v2619
      %2738 = vmatprep.subr.bf16.mxu0 0
      %2739 = vmatpush1.bf16.msra.mxu0 %v2618
      %2740 = vmatprep.subr.bf16.mxu0 0
      %2741 = vmatpush2.bf16.msra.mxu0 0
      %2742 = vmatprep.subr.bf16.mxu0 0
      %2743 = vmatpush2.bf16.msra.mxu0 0
      %2744 = vmatprep.subr.bf16.mxu0 0
      %2745 = vmatpush2.bf16.msra.mxu0 0
      %2746 = vmatprep.subr.bf16.mxu0 0
      %2747 = vmatpush2.bf16.msra.mxu0 0
      %2748 = vmatprep.subr.bf16.mxu0 0
      %2749 = vmatpush2.bf16.msra.mxu0 0
      %2750 = vmatprep.subr.bf16.mxu0 0
      %2751 = vmatpush2.bf16.msra.mxu0 0
      %2752 = vmatprep.subr.bf16.mxu0 0
      %2753 = vmatpush2.bf16.msra.mxu0 0
      %2754 = vmatprep.subr.bf16.mxu0 0
      %2755 = vmatpush2.bf16.msra.mxu0 0
      %2756 = vmatprep.mubr.bf16.mxu0 0
      %2757 = vmatmul.mubr.bf16.gmra.mxu0 %v2625
      %v2758 = vpop.f32.mrf.mxu0
      %v2759 = vadd.f32 0.0, %v2758
      %v2760 = vpop.f32.mrf.mxu0
      %v2761 = vpop.f32.mrf.mxu0
      %v2762 = vadd.f32 0.0, %v2761
      %v2763 = vpop.f32.mrf.mxu0
      %2764 = vmatprep.mubr.bf16.mxu0 0
      %2765 = vmatmul.mubr.bf16.gmra.mxu0 %v2628
      %v2766 = vpop.f32.mrf.mxu0
      %v2767 = vadd.f32 0.0, %v2766
      %v2768 = vpop.f32.mrf.mxu0
      %v2769 = vpop.f32.mrf.mxu0
      %v2770 = vadd.f32 0.0, %v2769
      %v2771 = vpop.f32.mrf.mxu0
      %2772 = vmatprep.mubr.bf16.mxu0 0
      %2773 = vmatmul.mubr.bf16.gmra.mxu0 %v2631
      %v2774 = vpop.f32.mrf.mxu0
      %v2775 = vadd.f32 0.0, %v2774
      %v2776 = vpop.f32.mrf.mxu0
      %v2777 = vpop.f32.mrf.mxu0
      %v2778 = vadd.f32 0.0, %v2777
      %v2779 = vpop.f32.mrf.mxu0
      %2780 = vmatprep.mubr.bf16.mxu0 0
      %2781 = vmatmul.mubr.bf16.gmra.mxu0 %v2634
      %v2782 = vpop.f32.mrf.mxu0
      %v2783 = vadd.f32 0.0, %v2782
      %v2784 = vpop.f32.mrf.mxu0
      %v2785 = vpop.f32.mrf.mxu0
      %v2786 = vadd.f32 0.0, %v2785
      %v2787 = vpop.f32.mrf.mxu0
      %2788 = vmatprep.mubr.bf16.mxu0 0
      %2789 = vmatmul.mubr.bf16.gmra.mxu0 %v2637
      %v2790 = vpop.f32.mrf.mxu0
      %v2791 = vadd.f32 0.0, %v2790
      %v2792 = vpop.f32.mrf.mxu0
      %v2793 = vpop.f32.mrf.mxu0
      %v2794 = vadd.f32 0.0, %v2793
      %v2795 = vpop.f32.mrf.mxu0
      %2796 = vmatprep.mubr.bf16.mxu0 0
      %2797 = vmatmul.mubr.bf16.gmra.mxu0 %v2640
      %v2798 = vpop.f32.mrf.mxu0
      %v2799 = vadd.f32 0.0, %v2798
      %v2800 = vpop.f32.mrf.mxu0
      %v2801 = vpop.f32.mrf.mxu0
      %v2802 = vadd.f32 0.0, %v2801
      %v2803 = vpop.f32.mrf.mxu0
      %2804 = vmatprep.mubr.bf16.mxu0 0
      %2805 = vmatmul.mubr.bf16.gmra.mxu0 %v2643
      %v2806 = vpop.f32.mrf.mxu0
      %v2807 = vadd.f32 0.0, %v2806
      %v2808 = vpop.f32.mrf.mxu0
      %v2809 = vpop.f32.mrf.mxu0
      %v2810 = vadd.f32 0.0, %v2809
      %v2811 = vpop.f32.mrf.mxu0
      %2812 = vmatprep.mubr.bf16.mxu0 0
      %2813 = vmatmul.mubr.bf16.gmra.mxu0 %v2646
      %v2814 = vpop.f32.mrf.mxu0
      %v2815 = vadd.f32 0.0, %v2814
      %v2816 = vpop.f32.mrf.mxu0
      %v2817 = vpop.f32.mrf.mxu0
      %v2818 = vadd.f32 0.0, %v2817
      %v2819 = vpop.f32.mrf.mxu0
      %2820 = vmatprep.mubr.bf16.mxu0 0
      %2821 = vmatmul.mubr.bf16.gmra.mxu0 %v2649
      %v2822 = vpop.f32.mrf.mxu0
      %v2823 = vadd.f32 0.0, %v2822
      %v2824 = vpop.f32.mrf.mxu0
      %v2825 = vpop.f32.mrf.mxu0
      %v2826 = vadd.f32 0.0, %v2825
      %v2827 = vpop.f32.mrf.mxu0
      %2828 = vmatprep.mubr.bf16.mxu0 0
      %2829 = vmatmul.mubr.bf16.gmra.mxu0 %v2652
      %v2830 = vpop.f32.mrf.mxu0
      %v2831 = vadd.f32 0.0, %v2830
      %v2832 = vpop.f32.mrf.mxu0
      %v2833 = vpop.f32.mrf.mxu0
      %v2834 = vadd.f32 0.0, %v2833
      %v2835 = vpop.f32.mrf.mxu0
      %2836 = vmatprep.mubr.bf16.mxu0 0
      %2837 = vmatmul.mubr.bf16.gmra.mxu0 %v2655
      %v2838 = vpop.f32.mrf.mxu0
      %v2839 = vadd.f32 0.0, %v2838
      %v2840 = vpop.f32.mrf.mxu0
      %v2841 = vpop.f32.mrf.mxu0
      %v2842 = vadd.f32 0.0, %v2841
      %v2843 = vpop.f32.mrf.mxu0
      %2844 = vmatprep.mubr.bf16.mxu0 0
      %2845 = vmatmul.mubr.bf16.gmra.mxu0 %v2658
      %v2846 = vpop.f32.mrf.mxu0
      %v2847 = vadd.f32 0.0, %v2846
      %v2848 = vpop.f32.mrf.mxu0
      %v2849 = vpop.f32.mrf.mxu0
      %v2850 = vadd.f32 0.0, %v2849
      %v2851 = vpop.f32.mrf.mxu0
      %2852 = vmatprep.mubr.bf16.mxu0 0
      %2853 = vmatmul.mubr.bf16.gmra.mxu0 %v2661
      %v2854 = vpop.f32.mrf.mxu0
      %v2855 = vadd.f32 0.0, %v2854
      %v2856 = vpop.f32.mrf.mxu0
      %v2857 = vpop.f32.mrf.mxu0
      %v2858 = vadd.f32 0.0, %v2857
      %v2859 = vpop.f32.mrf.mxu0
      %2860 = vmatprep.mubr.bf16.mxu0 0
      %2861 = vmatmul.mubr.bf16.gmra.mxu0 %v2664
      %v2862 = vpop.f32.mrf.mxu0
      %v2863 = vadd.f32 0.0, %v2862
      %v2864 = vpop.f32.mrf.mxu0
      %v2865 = vpop.f32.mrf.mxu0
      %v2866 = vadd.f32 0.0, %v2865
      %v2867 = vpop.f32.mrf.mxu0
      %2868 = vmatprep.mubr.bf16.mxu0 0
      %2869 = vmatmul.mubr.bf16.gmra.mxu0 %v2667
      %v2870 = vpop.f32.mrf.mxu0
      %v2871 = vadd.f32 0.0, %v2870
      %v2872 = vpop.f32.mrf.mxu0
      %v2873 = vpop.f32.mrf.mxu0
      %v2874 = vadd.f32 0.0, %v2873
      %v2875 = vpop.f32.mrf.mxu0
      %2876 = vmatprep.mubr.bf16.mxu0 0
      %2877 = vmatmul.mubr.bf16.gmra.mxu0 %v2670
      %v2878 = vpop.f32.mrf.mxu0
      %v2879 = vadd.f32 0.0, %v2878
      %v2880 = vpop.f32.mrf.mxu0
      %v2881 = vpop.f32.mrf.mxu0
      %v2882 = vadd.f32 0.0, %v2881
      %v2883 = vpop.f32.mrf.mxu0
      %2884 = vmatprep.mubr.bf16.mxu0 0
      %2885 = vmatmul.mubr.bf16.gmra.mxu0 %v2673
      %v2886 = vpop.f32.mrf.mxu0
      %v2887 = vadd.f32 0.0, %v2886
      %v2888 = vpop.f32.mrf.mxu0
      %v2889 = vpop.f32.mrf.mxu0
      %v2890 = vadd.f32 0.0, %v2889
      %v2891 = vpop.f32.mrf.mxu0
      %2892 = vmatprep.mubr.bf16.mxu0 0
      %2893 = vmatmul.mubr.bf16.gmra.mxu0 %v2676
      %v2894 = vpop.f32.mrf.mxu0
      %v2895 = vadd.f32 0.0, %v2894
      %v2896 = vpop.f32.mrf.mxu0
      %v2897 = vpop.f32.mrf.mxu0
      %v2898 = vadd.f32 0.0, %v2897
      %v2899 = vpop.f32.mrf.mxu0
      %2900 = vmatprep.mubr.bf16.mxu0 0
      %2901 = vmatmul.mubr.bf16.gmra.mxu0 %v2679
      %v2902 = vpop.f32.mrf.mxu0
      %v2903 = vadd.f32 0.0, %v2902
      %v2904 = vpop.f32.mrf.mxu0
      %v2905 = vpop.f32.mrf.mxu0
      %v2906 = vadd.f32 0.0, %v2905
      %v2907 = vpop.f32.mrf.mxu0
      %2908 = vmatprep.mubr.bf16.mxu0 0
      %2909 = vmatmul.mubr.bf16.gmra.mxu0 %v2682
      %v2910 = vpop.f32.mrf.mxu0
      %v2911 = vadd.f32 0.0, %v2910
      %v2912 = vpop.f32.mrf.mxu0
      %v2913 = vpop.f32.mrf.mxu0
      %v2914 = vadd.f32 0.0, %v2913
      %v2915 = vpop.f32.mrf.mxu0
      %2916 = vmatprep.mubr.bf16.mxu0 0
      %2917 = vmatmul.mubr.bf16.gmra.mxu0 %v2685
      %v2918 = vpop.f32.mrf.mxu0
      %v2919 = vadd.f32 0.0, %v2918
      %v2920 = vpop.f32.mrf.mxu0
      %v2921 = vpop.f32.mrf.mxu0
      %v2922 = vadd.f32 0.0, %v2921
      %v2923 = vpop.f32.mrf.mxu0
      %2924 = vmatprep.mubr.bf16.mxu0 0
      %2925 = vmatmul.mubr.bf16.gmra.mxu0 %v2688
      %v2926 = vpop.f32.mrf.mxu0
      %v2927 = vadd.f32 0.0, %v2926
      %v2928 = vpop.f32.mrf.mxu0
      %v2929 = vpop.f32.mrf.mxu0
      %v2930 = vadd.f32 0.0, %v2929
      %v2931 = vpop.f32.mrf.mxu0
      %2932 = vmatprep.mubr.bf16.mxu0 0
      %2933 = vmatmul.mubr.bf16.gmra.mxu0 %v2691
      %v2934 = vpop.f32.mrf.mxu0
      %v2935 = vadd.f32 0.0, %v2934
      %v2936 = vpop.f32.mrf.mxu0
      %v2937 = vpop.f32.mrf.mxu0
      %v2938 = vadd.f32 0.0, %v2937
      %v2939 = vpop.f32.mrf.mxu0
      %2940 = vmatprep.mubr.bf16.mxu0 0
      %2941 = vmatmul.mubr.bf16.gmra.mxu0 %v2694
      %v2942 = vpop.f32.mrf.mxu0
      %v2943 = vadd.f32 0.0, %v2942
      %v2944 = vpop.f32.mrf.mxu0
      %v2945 = vpop.f32.mrf.mxu0
      %v2946 = vadd.f32 0.0, %v2945
      %v2947 = vpop.f32.mrf.mxu0
      %2948 = vmatprep.mubr.bf16.mxu0 0
      %2949 = vmatmul.mubr.bf16.gmra.mxu0 %v2697
      %v2950 = vpop.f32.mrf.mxu0
      %v2951 = vadd.f32 0.0, %v2950
      %v2952 = vpop.f32.mrf.mxu0
      %v2953 = vpop.f32.mrf.mxu0
      %v2954 = vadd.f32 0.0, %v2953
      %v2955 = vpop.f32.mrf.mxu0
      %2956 = vmatprep.mubr.bf16.mxu0 0
      %2957 = vmatmul.mubr.bf16.gmra.mxu0 %v2700
      %v2958 = vpop.f32.mrf.mxu0
      %v2959 = vadd.f32 0.0, %v2958
      %v2960 = vpop.f32.mrf.mxu0
      %v2961 = vpop.f32.mrf.mxu0
      %v2962 = vadd.f32 0.0, %v2961
      %v2963 = vpop.f32.mrf.mxu0
      %2964 = vmatprep.mubr.bf16.mxu0 0
      %2965 = vmatmul.mubr.bf16.gmra.mxu0 %v2703
      %v2966 = vpop.f32.mrf.mxu0
      %v2967 = vadd.f32 0.0, %v2966
      %v2968 = vpop.f32.mrf.mxu0
      %v2969 = vpop.f32.mrf.mxu0
      %v2970 = vadd.f32 0.0, %v2969
      %v2971 = vpop.f32.mrf.mxu0
      %2972 = vmatprep.mubr.bf16.mxu0 0
      %2973 = vmatmul.mubr.bf16.gmra.mxu0 %v2706
      %v2974 = vpop.f32.mrf.mxu0
      %v2975 = vadd.f32 0.0, %v2974
      %v2976 = vpop.f32.mrf.mxu0
      %v2977 = vpop.f32.mrf.mxu0
      %v2978 = vadd.f32 0.0, %v2977
      %v2979 = vpop.f32.mrf.mxu0
      %2980 = vmatprep.mubr.bf16.mxu0 0
      %2981 = vmatmul.mubr.bf16.gmra.mxu0 %v2709
      %v2982 = vpop.f32.mrf.mxu0
      %v2983 = vadd.f32 0.0, %v2982
      %v2984 = vpop.f32.mrf.mxu0
      %v2985 = vpop.f32.mrf.mxu0
      %v2986 = vadd.f32 0.0, %v2985
      %v2987 = vpop.f32.mrf.mxu0
      %2988 = vmatprep.mubr.bf16.mxu0 0
      %2989 = vmatmul.mubr.bf16.gmra.mxu0 %v2712
      %v2990 = vpop.f32.mrf.mxu0
      %v2991 = vadd.f32 0.0, %v2990
      %v2992 = vpop.f32.mrf.mxu0
      %v2993 = vpop.f32.mrf.mxu0
      %v2994 = vadd.f32 0.0, %v2993
      %v2995 = vpop.f32.mrf.mxu0
      %2996 = vmatprep.mubr.bf16.mxu0 0
      %2997 = vmatmul.mubr.bf16.gmra.mxu0 %v2715
      %v2998 = vpop.f32.mrf.mxu0
      %v2999 = vadd.f32 0.0, %v2998
      %v3000 = vpop.f32.mrf.mxu0
      %v3001 = vpop.f32.mrf.mxu0
      %v3002 = vadd.f32 0.0, %v3001
      %v3003 = vpop.f32.mrf.mxu0
      %3004 = vmatprep.mubr.bf16.mxu0 0
      %3005 = vmatmul.mubr.bf16.gmra.mxu0 %v2718
      %v3006 = vpop.f32.mrf.mxu0
      %v3007 = vadd.f32 0.0, %v3006
      %v3008 = vpop.f32.mrf.mxu0
      %v3009 = vpop.f32.mrf.mxu0
      %v3010 = vadd.f32 0.0, %v3009
      %v3011 = vpop.f32.mrf.mxu0
      %3012 = vdwg.mxu0
      %3013 = vst.msk [vmem:[%s284] sm:$0xff] %vm1871, %v2759
      %3014 = vst.msk [vmem:[%s284 + $0x8] sm:$0xff] %vm1871, %v2762
      %3015 = vst.msk [vmem:[%s284 + $0x10] sm:$0xff] %vm1871, %v2767
      %3016 = vst.msk [vmem:[%s284 + $0x18] sm:$0xff] %vm1871, %v2770
      %3017 = vst.msk [vmem:[%s284 + $0x20] sm:$0xff] %vm1871, %v2775
      %3018 = vst.msk [vmem:[%s284 + $0x28] sm:$0xff] %vm1871, %v2778
      %3019 = vst.msk [vmem:[%s284 + $0x30] sm:$0xff] %vm1871, %v2783
      %3020 = vst.msk [vmem:[%s284 + $0x38] sm:$0xff] %vm1871, %v2786
      %3021 = vst.msk [vmem:[%s284 + $0x40] sm:$0xff] %vm1871, %v2791
      %3022 = vst.msk [vmem:[%s284 + $0x48] sm:$0xff] %vm1871, %v2794
      %3023 = vst.msk [vmem:[%s284 + $0x50] sm:$0xff] %vm1871, %v2799
      %3024 = vst.msk [vmem:[%s284 + $0x58] sm:$0xff] %vm1871, %v2802
      %3025 = vst.msk [vmem:[%s284 + $0x60] sm:$0xff] %vm1871, %v2807
      %3026 = vst.msk [vmem:[%s284 + $0x68] sm:$0xff] %vm1871, %v2810
      %3027 = vst.msk [vmem:[%s284 + $0x70] sm:$0xff] %vm1871, %v2815
      %3028 = vst.msk [vmem:[%s284 + $0x78] sm:$0xff] %vm1871, %v2818
      %3029 = vst.msk [vmem:[%s284 + $0x80] sm:$0xff] %vm1871, %v2823
      %3030 = vst.msk [vmem:[%s284 + $0x88] sm:$0xff] %vm1871, %v2826
      %3031 = vst.msk [vmem:[%s284 + $0x90] sm:$0xff] %vm1871, %v2831
      %3032 = vst.msk [vmem:[%s284 + $0x98] sm:$0xff] %vm1871, %v2834
      %3033 = vst.msk [vmem:[%s284 + $0xa0] sm:$0xff] %vm1871, %v2839
      %3034 = vst.msk [vmem:[%s284 + $0xa8] sm:$0xff] %vm1871, %v2842
      %3035 = vst.msk [vmem:[%s284 + $0xb0] sm:$0xff] %vm1871, %v2847
      %3036 = vst.msk [vmem:[%s284 + $0xb8] sm:$0xff] %vm1871, %v2850
      %3037 = vst.msk [vmem:[%s284 + $0xc0] sm:$0xff] %vm1871, %v2855
      %3038 = vst.msk [vmem:[%s284 + $0xc8] sm:$0xff] %vm1871, %v2858
      %3039 = vst.msk [vmem:[%s284 + $0xd0] sm:$0xff] %vm1871, %v2863
      %3040 = vst.msk [vmem:[%s284 + $0xd8] sm:$0xff] %vm1871, %v2866
      %3041 = vst.msk [vmem:[%s284 + $0xe0] sm:$0xff] %vm1871, %v2871
      %3042 = vst.msk [vmem:[%s284 + $0xe8] sm:$0xff] %vm1871, %v2874
      %3043 = vst.msk [vmem:[%s284 + $0xf0] sm:$0xff] %vm1871, %v2879
      %3044 = vst.msk [vmem:[%s284 + $0xf8] sm:$0xff] %vm1871, %v2882
      %3045 = vst.msk [vmem:[%s284 + $0x100] sm:$0xff] %vm1871, %v2887
      %3046 = vst.msk [vmem:[%s284 + $0x108] sm:$0xff] %vm1871, %v2890
      %3047 = vst.msk [vmem:[%s284 + $0x110] sm:$0xff] %vm1871, %v2895
      %3048 = vst.msk [vmem:[%s284 + $0x118] sm:$0xff] %vm1871, %v2898
      %3049 = vst.msk [vmem:[%s284 + $0x120] sm:$0xff] %vm1871, %v2903
      %3050 = vst.msk [vmem:[%s284 + $0x128] sm:$0xff] %vm1871, %v2906
      %3051 = vst.msk [vmem:[%s284 + $0x130] sm:$0xff] %vm1871, %v2911
      %3052 = vst.msk [vmem:[%s284 + $0x138] sm:$0xff] %vm1871, %v2914
      %3053 = vst.msk [vmem:[%s284 + $0x140] sm:$0xff] %vm1871, %v2919
      %3054 = vst.msk [vmem:[%s284 + $0x148] sm:$0xff] %vm1871, %v2922
      %3055 = vst.msk [vmem:[%s284 + $0x150] sm:$0xff] %vm1871, %v2927
      %3056 = vst.msk [vmem:[%s284 + $0x158] sm:$0xff] %vm1871, %v2930
      %3057 = vst.msk [vmem:[%s284 + $0x160] sm:$0xff] %vm1871, %v2935
      %3058 = vst.msk [vmem:[%s284 + $0x168] sm:$0xff] %vm1871, %v2938
      %3059 = vst.msk [vmem:[%s284 + $0x170] sm:$0xff] %vm1871, %v2943
      %3060 = vst.msk [vmem:[%s284 + $0x178] sm:$0xff] %vm1871, %v2946
      %3061 = vst.msk [vmem:[%s284 + $0x180] sm:$0xff] %vm1871, %v2951
      %3062 = vst.msk [vmem:[%s284 + $0x188] sm:$0xff] %vm1871, %v2954
      %3063 = vst.msk [vmem:[%s284 + $0x190] sm:$0xff] %vm1871, %v2959
      %3064 = vst.msk [vmem:[%s284 + $0x198] sm:$0xff] %vm1871, %v2962
      %3065 = vst.msk [vmem:[%s284 + $0x1a0] sm:$0xff] %vm1871, %v2967
      %3066 = vst.msk [vmem:[%s284 + $0x1a8] sm:$0xff] %vm1871, %v2970
      %3067 = vst.msk [vmem:[%s284 + $0x1b0] sm:$0xff] %vm1871, %v2975
      %3068 = vst.msk [vmem:[%s284 + $0x1b8] sm:$0xff] %vm1871, %v2978
      %3069 = vst.msk [vmem:[%s284 + $0x1c0] sm:$0xff] %vm1871, %v2983
      %3070 = vst.msk [vmem:[%s284 + $0x1c8] sm:$0xff] %vm1871, %v2986
      %3071 = vst.msk [vmem:[%s284 + $0x1d0] sm:$0xff] %vm1871, %v2991
      %3072 = vst.msk [vmem:[%s284 + $0x1d8] sm:$0xff] %vm1871, %v2994
      %3073 = vst.msk [vmem:[%s284 + $0x1e0] sm:$0xff] %vm1871, %v2999
      %3074 = vst.msk [vmem:[%s284 + $0x1e8] sm:$0xff] %vm1871, %v3002
      %3075 = vst.msk [vmem:[%s284 + $0x1f0] sm:$0xff] %vm1871, %v3007
      %3076 = vst.msk [vmem:[%s284 + $0x1f8] sm:$0xff] %vm1871, %v3010
      %v3077 = vld [vmem:[%s278] sm:$0xff]
      %v3078 = vld [vmem:[%s278 + $0x8] sm:$0xff]
      %v3079 = vld [vmem:[%s278 + $0x10] sm:$0xff]
      %v3080 = vld [vmem:[%s278 + $0x18] sm:$0xff]
      %v3081 = vld [vmem:[%s278 + $0x20] sm:$0xff]
      %v3082 = vld [vmem:[%s278 + $0x28] sm:$0xff]
      %v3083 = vld [vmem:[%s278 + $0x30] sm:$0xff]
      %v3084 = vld [vmem:[%s278 + $0x38] sm:$0xff]
      %v3085 = vld [vmem:[%s278 + $0x40] sm:$0xff]
      %v3086 = vld [vmem:[%s278 + $0x48] sm:$0xff]
      %v3087 = vld [vmem:[%s278 + $0x50] sm:$0xff]
      %v3088 = vld [vmem:[%s278 + $0x58] sm:$0xff]
      %v3089 = vld [vmem:[%s278 + $0x60] sm:$0xff]
      %v3090 = vld [vmem:[%s278 + $0x68] sm:$0xff]
      %v3091 = vld [vmem:[%s278 + $0x70] sm:$0xff]
      %v3092 = vld [vmem:[%s278 + $0x78] sm:$0xff]
      %v3093 = vld [vmem:[%s278 + $0x80] sm:$0xff]
      %v3094 = vld [vmem:[%s278 + $0x88] sm:$0xff]
      %v3095 = vld [vmem:[%s278 + $0x90] sm:$0xff]
      %v3096 = vld [vmem:[%s278 + $0x98] sm:$0xff]
      %v3097 = vld [vmem:[%s278 + $0xa0] sm:$0xff]
      %v3098 = vld [vmem:[%s278 + $0xa8] sm:$0xff]
      %v3099 = vld [vmem:[%s278 + $0xb0] sm:$0xff]
      %v3100 = vld [vmem:[%s278 + $0xb8] sm:$0xff]
      %v3101 = vld [vmem:[%s278 + $0xc0] sm:$0xff]
      %v3102 = vld [vmem:[%s278 + $0xc8] sm:$0xff]
      %v3103 = vld [vmem:[%s278 + $0xd0] sm:$0xff]
      %v3104 = vld [vmem:[%s278 + $0xd8] sm:$0xff]
      %v3105 = vld [vmem:[%s278 + $0xe0] sm:$0xff]
      %v3106 = vld [vmem:[%s278 + $0xe8] sm:$0xff]
      %v3107 = vld [vmem:[%s278 + $0xf0] sm:$0xff]
      %v3108 = vld [vmem:[%s278 + $0xf8] sm:$0xff]
      %v3109 = vld [vmem:[%s278 + $0x100] sm:$0xff]
      %v3110 = vld [vmem:[%s278 + $0x108] sm:$0xff]
      %v3111 = vld [vmem:[%s278 + $0x110] sm:$0xff]
      %v3112 = vld [vmem:[%s278 + $0x118] sm:$0xff]
      %v3113 = vld [vmem:[%s278 + $0x120] sm:$0xff]
      %v3114 = vld [vmem:[%s278 + $0x128] sm:$0xff]
      %v3115 = vld [vmem:[%s278 + $0x130] sm:$0xff]
      %v3116 = vld [vmem:[%s278 + $0x138] sm:$0xff]
      %v3117 = vld [vmem:[%s278 + $0x140] sm:$0xff]
      %v3118 = vld [vmem:[%s278 + $0x148] sm:$0xff]
      %v3119 = vld [vmem:[%s278 + $0x150] sm:$0xff]
      %v3120 = vld [vmem:[%s278 + $0x158] sm:$0xff]
      %v3121 = vld [vmem:[%s278 + $0x160] sm:$0xff]
      %v3122 = vld [vmem:[%s278 + $0x168] sm:$0xff]
      %v3123 = vld [vmem:[%s278 + $0x170] sm:$0xff]
      %v3124 = vld [vmem:[%s278 + $0x178] sm:$0xff]
      %v3125 = vld [vmem:[%s278 + $0x180] sm:$0xff]
      %v3126 = vld [vmem:[%s278 + $0x188] sm:$0xff]
      %v3127 = vld [vmem:[%s278 + $0x190] sm:$0xff]
      %v3128 = vld [vmem:[%s278 + $0x198] sm:$0xff]
      %v3129 = vld [vmem:[%s278 + $0x1a0] sm:$0xff]
      %v3130 = vld [vmem:[%s278 + $0x1a8] sm:$0xff]
      %v3131 = vld [vmem:[%s278 + $0x1b0] sm:$0xff]
      %v3132 = vld [vmem:[%s278 + $0x1b8] sm:$0xff]
      %v3133 = vld [vmem:[%s278 + $0x1c0] sm:$0xff]
      %v3134 = vld [vmem:[%s278 + $0x1c8] sm:$0xff]
      %v3135 = vld [vmem:[%s278 + $0x1d0] sm:$0xff]
      %v3136 = vld [vmem:[%s278 + $0x1d8] sm:$0xff]
      %v3137 = vld [vmem:[%s278 + $0x1e0] sm:$0xff]
      %v3138 = vld [vmem:[%s278 + $0x1e8] sm:$0xff]
      %v3139 = vld [vmem:[%s278 + $0x1f0] sm:$0xff]
      %v3140 = vld [vmem:[%s278 + $0x1f8] sm:$0xff]
      %vm3141 = vcmp.gt.f32.partialorder %v3077, 0.5
      %vm3142 = vcmp.gt.f32.partialorder %v3078, 0.5
      %vm3143 = vcmp.gt.f32.partialorder %v3079, 0.5
      %vm3144 = vcmp.gt.f32.partialorder %v3080, 0.5
      %vm3145 = vcmp.gt.f32.partialorder %v3081, 0.5
      %vm3146 = vcmp.gt.f32.partialorder %v3082, 0.5
      %vm3147 = vcmp.gt.f32.partialorder %v3083, 0.5
      %vm3148 = vcmp.gt.f32.partialorder %v3084, 0.5
      %vm3149 = vcmp.gt.f32.partialorder %v3085, 0.5
      %vm3150 = vcmp.gt.f32.partialorder %v3086, 0.5
      %vm3151 = vcmp.gt.f32.partialorder %v3087, 0.5
      %vm3152 = vcmp.gt.f32.partialorder %v3088, 0.5
      %vm3153 = vcmp.gt.f32.partialorder %v3089, 0.5
      %vm3154 = vcmp.gt.f32.partialorder %v3090, 0.5
      %vm3155 = vcmp.gt.f32.partialorder %v3091, 0.5
      %vm3156 = vcmp.gt.f32.partialorder %v3092, 0.5
      %vm3157 = vcmp.gt.f32.partialorder %v3093, 0.5
      %vm3158 = vcmp.gt.f32.partialorder %v3094, 0.5
      %vm3159 = vcmp.gt.f32.partialorder %v3095, 0.5
      %vm3160 = vcmp.gt.f32.partialorder %v3096, 0.5
      %vm3161 = vcmp.gt.f32.partialorder %v3097, 0.5
      %vm3162 = vcmp.gt.f32.partialorder %v3098, 0.5
      %vm3163 = vcmp.gt.f32.partialorder %v3099, 0.5
      %vm3164 = vcmp.gt.f32.partialorder %v3100, 0.5
      %vm3165 = vcmp.gt.f32.partialorder %v3101, 0.5
      %vm3166 = vcmp.gt.f32.partialorder %v3102, 0.5
      %vm3167 = vcmp.gt.f32.partialorder %v3103, 0.5
      %vm3168 = vcmp.gt.f32.partialorder %v3104, 0.5
      %vm3169 = vcmp.gt.f32.partialorder %v3105, 0.5
      %vm3170 = vcmp.gt.f32.partialorder %v3106, 0.5
      %vm3171 = vcmp.gt.f32.partialorder %v3107, 0.5
      %vm3172 = vcmp.gt.f32.partialorder %v3108, 0.5
      %vm3173 = vcmp.gt.f32.partialorder %v3109, 0.5
      %vm3174 = vcmp.gt.f32.partialorder %v3110, 0.5
      %vm3175 = vcmp.gt.f32.partialorder %v3111, 0.5
      %vm3176 = vcmp.gt.f32.partialorder %v3112, 0.5
      %vm3177 = vcmp.gt.f32.partialorder %v3113, 0.5
      %vm3178 = vcmp.gt.f32.partialorder %v3114, 0.5
      %vm3179 = vcmp.gt.f32.partialorder %v3115, 0.5
      %vm3180 = vcmp.gt.f32.partialorder %v3116, 0.5
      %vm3181 = vcmp.gt.f32.partialorder %v3117, 0.5
      %vm3182 = vcmp.gt.f32.partialorder %v3118, 0.5
      %vm3183 = vcmp.gt.f32.partialorder %v3119, 0.5
      %vm3184 = vcmp.gt.f32.partialorder %v3120, 0.5
      %vm3185 = vcmp.gt.f32.partialorder %v3121, 0.5
      %vm3186 = vcmp.gt.f32.partialorder %v3122, 0.5
      %vm3187 = vcmp.gt.f32.partialorder %v3123, 0.5
      %vm3188 = vcmp.gt.f32.partialorder %v3124, 0.5
      %vm3189 = vcmp.gt.f32.partialorder %v3125, 0.5
      %vm3190 = vcmp.gt.f32.partialorder %v3126, 0.5
      %vm3191 = vcmp.gt.f32.partialorder %v3127, 0.5
      %vm3192 = vcmp.gt.f32.partialorder %v3128, 0.5
      %vm3193 = vcmp.gt.f32.partialorder %v3129, 0.5
      %vm3194 = vcmp.gt.f32.partialorder %v3130, 0.5
      %vm3195 = vcmp.gt.f32.partialorder %v3131, 0.5
      %vm3196 = vcmp.gt.f32.partialorder %v3132, 0.5
      %vm3197 = vcmp.gt.f32.partialorder %v3133, 0.5
      %vm3198 = vcmp.gt.f32.partialorder %v3134, 0.5
      %vm3199 = vcmp.gt.f32.partialorder %v3135, 0.5
      %vm3200 = vcmp.gt.f32.partialorder %v3136, 0.5
      %vm3201 = vcmp.gt.f32.partialorder %v3137, 0.5
      %vm3202 = vcmp.gt.f32.partialorder %v3138, 0.5
      %vm3203 = vcmp.gt.f32.partialorder %v3139, 0.5
      %vm3204 = vcmp.gt.f32.partialorder %v3140, 0.5
      %v3205 = vsel %vm3141, 1, 0
      %v3206 = vsel %vm3142, 1, 0
      %v3207 = vsel %vm3143, 1, 0
      %v3208 = vsel %vm3144, 1, 0
      %v3209 = vsel %vm3145, 1, 0
      %v3210 = vsel %vm3146, 1, 0
      %v3211 = vsel %vm3147, 1, 0
      %v3212 = vsel %vm3148, 1, 0
      %v3213 = vsel %vm3149, 1, 0
      %v3214 = vsel %vm3150, 1, 0
      %v3215 = vsel %vm3151, 1, 0
      %v3216 = vsel %vm3152, 1, 0
      %v3217 = vsel %vm3153, 1, 0
      %v3218 = vsel %vm3154, 1, 0
      %v3219 = vsel %vm3155, 1, 0
      %v3220 = vsel %vm3156, 1, 0
      %v3221 = vsel %vm3157, 1, 0
      %v3222 = vsel %vm3158, 1, 0
      %v3223 = vsel %vm3159, 1, 0
      %v3224 = vsel %vm3160, 1, 0
      %v3225 = vsel %vm3161, 1, 0
      %v3226 = vsel %vm3162, 1, 0
      %v3227 = vsel %vm3163, 1, 0
      %v3228 = vsel %vm3164, 1, 0
      %v3229 = vsel %vm3165, 1, 0
      %v3230 = vsel %vm3166, 1, 0
      %v3231 = vsel %vm3167, 1, 0
      %v3232 = vsel %vm3168, 1, 0
      %v3233 = vsel %vm3169, 1, 0
      %v3234 = vsel %vm3170, 1, 0
      %v3235 = vsel %vm3171, 1, 0
      %v3236 = vsel %vm3172, 1, 0
      %v3237 = vsel %vm3173, 1, 0
      %v3238 = vsel %vm3174, 1, 0
      %v3239 = vsel %vm3175, 1, 0
      %v3240 = vsel %vm3176, 1, 0
      %v3241 = vsel %vm3177, 1, 0
      %v3242 = vsel %vm3178, 1, 0
      %v3243 = vsel %vm3179, 1, 0
      %v3244 = vsel %vm3180, 1, 0
      %v3245 = vsel %vm3181, 1, 0
      %v3246 = vsel %vm3182, 1, 0
      %v3247 = vsel %vm3183, 1, 0
      %v3248 = vsel %vm3184, 1, 0
      %v3249 = vsel %vm3185, 1, 0
      %v3250 = vsel %vm3186, 1, 0
      %v3251 = vsel %vm3187, 1, 0
      %v3252 = vsel %vm3188, 1, 0
      %v3253 = vsel %vm3189, 1, 0
      %v3254 = vsel %vm3190, 1, 0
      %v3255 = vsel %vm3191, 1, 0
      %v3256 = vsel %vm3192, 1, 0
      %v3257 = vsel %vm3193, 1, 0
      %v3258 = vsel %vm3194, 1, 0
      %v3259 = vsel %vm3195, 1, 0
      %v3260 = vsel %vm3196, 1, 0
      %v3261 = vsel %vm3197, 1, 0
      %v3262 = vsel %vm3198, 1, 0
      %v3263 = vsel %vm3199, 1, 0
      %v3264 = vsel %vm3200, 1, 0
      %v3265 = vsel %vm3201, 1, 0
      %v3266 = vsel %vm3202, 1, 0
      %v3267 = vsel %vm3203, 1, 0
      %v3268 = vsel %vm3204, 1, 0
      %3269 = vset.pattern.permute.xlu0 0
      %3270 = vperm.xlu0 %3269, %v3205
      %v3271 = vpop.permute.xlu0 %3270
      %3272 = vset.pattern.permute.xlu0 0
      %3273 = vperm.xlu0 %3272, %v3206
      %v3274 = vpop.permute.xlu0 %3273
      %3275 = vset.pattern.permute.xlu0 0
      %3276 = vperm.xlu0 %3275, %v3207
      %v3277 = vpop.permute.xlu0 %3276
      %3278 = vset.pattern.permute.xlu0 0
      %3279 = vperm.xlu0 %3278, %v3208
      %v3280 = vpop.permute.xlu0 %3279
      %3281 = vset.pattern.permute.xlu0 0
      %3282 = vperm.xlu0 %3281, %v3209
      %v3283 = vpop.permute.xlu0 %3282
      %3284 = vset.pattern.permute.xlu0 0
      %3285 = vperm.xlu0 %3284, %v3210
      %v3286 = vpop.permute.xlu0 %3285
      %3287 = vset.pattern.permute.xlu0 0
      %3288 = vperm.xlu0 %3287, %v3211
      %v3289 = vpop.permute.xlu0 %3288
      %3290 = vset.pattern.permute.xlu0 0
      %3291 = vperm.xlu0 %3290, %v3212
      %v3292 = vpop.permute.xlu0 %3291
      %3293 = vset.pattern.permute.xlu0 0
      %3294 = vperm.xlu0 %3293, %v3213
      %v3295 = vpop.permute.xlu0 %3294
      %3296 = vset.pattern.permute.xlu0 0
      %3297 = vperm.xlu0 %3296, %v3214
      %v3298 = vpop.permute.xlu0 %3297
      %3299 = vset.pattern.permute.xlu0 0
      %3300 = vperm.xlu0 %3299, %v3215
      %v3301 = vpop.permute.xlu0 %3300
      %3302 = vset.pattern.permute.xlu0 0
      %3303 = vperm.xlu0 %3302, %v3216
      %v3304 = vpop.permute.xlu0 %3303
      %3305 = vset.pattern.permute.xlu0 0
      %3306 = vperm.xlu0 %3305, %v3217
      %v3307 = vpop.permute.xlu0 %3306
      %3308 = vset.pattern.permute.xlu0 0
      %3309 = vperm.xlu0 %3308, %v3218
      %v3310 = vpop.permute.xlu0 %3309
      %3311 = vset.pattern.permute.xlu0 0
      %3312 = vperm.xlu0 %3311, %v3219
      %v3313 = vpop.permute.xlu0 %3312
      %3314 = vset.pattern.permute.xlu0 0
      %3315 = vperm.xlu0 %3314, %v3220
      %v3316 = vpop.permute.xlu0 %3315
      %3317 = vset.pattern.permute.xlu0 0
      %3318 = vperm.xlu0 %3317, %v3221
      %v3319 = vpop.permute.xlu0 %3318
      %3320 = vset.pattern.permute.xlu0 0
      %3321 = vperm.xlu0 %3320, %v3222
      %v3322 = vpop.permute.xlu0 %3321
      %3323 = vset.pattern.permute.xlu0 0
      %3324 = vperm.xlu0 %3323, %v3223
      %v3325 = vpop.permute.xlu0 %3324
      %3326 = vset.pattern.permute.xlu0 0
      %3327 = vperm.xlu0 %3326, %v3224
      %v3328 = vpop.permute.xlu0 %3327
      %3329 = vset.pattern.permute.xlu0 0
      %3330 = vperm.xlu0 %3329, %v3225
      %v3331 = vpop.permute.xlu0 %3330
      %3332 = vset.pattern.permute.xlu0 0
      %3333 = vperm.xlu0 %3332, %v3226
      %v3334 = vpop.permute.xlu0 %3333
      %3335 = vset.pattern.permute.xlu0 0
      %3336 = vperm.xlu0 %3335, %v3227
      %v3337 = vpop.permute.xlu0 %3336
      %3338 = vset.pattern.permute.xlu0 0
      %3339 = vperm.xlu0 %3338, %v3228
      %v3340 = vpop.permute.xlu0 %3339
      %3341 = vset.pattern.permute.xlu0 0
      %3342 = vperm.xlu0 %3341, %v3229
      %v3343 = vpop.permute.xlu0 %3342
      %3344 = vset.pattern.permute.xlu0 0
      %3345 = vperm.xlu0 %3344, %v3230
      %v3346 = vpop.permute.xlu0 %3345
      %3347 = vset.pattern.permute.xlu0 0
      %3348 = vperm.xlu0 %3347, %v3231
      %v3349 = vpop.permute.xlu0 %3348
      %3350 = vset.pattern.permute.xlu0 0
      %3351 = vperm.xlu0 %3350, %v3232
      %v3352 = vpop.permute.xlu0 %3351
      %3353 = vset.pattern.permute.xlu0 0
      %3354 = vperm.xlu0 %3353, %v3233
      %v3355 = vpop.permute.xlu0 %3354
      %3356 = vset.pattern.permute.xlu0 0
      %3357 = vperm.xlu0 %3356, %v3234
      %v3358 = vpop.permute.xlu0 %3357
      %3359 = vset.pattern.permute.xlu0 0
      %3360 = vperm.xlu0 %3359, %v3235
      %v3361 = vpop.permute.xlu0 %3360
      %3362 = vset.pattern.permute.xlu0 0
      %3363 = vperm.xlu0 %3362, %v3236
      %v3364 = vpop.permute.xlu0 %3363
      %3365 = vset.pattern.permute.xlu0 0
      %3366 = vperm.xlu0 %3365, %v3237
      %v3367 = vpop.permute.xlu0 %3366
      %3368 = vset.pattern.permute.xlu0 0
      %3369 = vperm.xlu0 %3368, %v3238
      %v3370 = vpop.permute.xlu0 %3369
      %3371 = vset.pattern.permute.xlu0 0
      %3372 = vperm.xlu0 %3371, %v3239
      %v3373 = vpop.permute.xlu0 %3372
      %3374 = vset.pattern.permute.xlu0 0
      %3375 = vperm.xlu0 %3374, %v3240
      %v3376 = vpop.permute.xlu0 %3375
      %3377 = vset.pattern.permute.xlu0 0
      %3378 = vperm.xlu0 %3377, %v3241
      %v3379 = vpop.permute.xlu0 %3378
      %3380 = vset.pattern.permute.xlu0 0
      %3381 = vperm.xlu0 %3380, %v3242
      %v3382 = vpop.permute.xlu0 %3381
      %3383 = vset.pattern.permute.xlu0 0
      %3384 = vperm.xlu0 %3383, %v3243
      %v3385 = vpop.permute.xlu0 %3384
      %3386 = vset.pattern.permute.xlu0 0
      %3387 = vperm.xlu0 %3386, %v3244
      %v3388 = vpop.permute.xlu0 %3387
      %3389 = vset.pattern.permute.xlu0 0
      %3390 = vperm.xlu0 %3389, %v3245
      %v3391 = vpop.permute.xlu0 %3390
      %3392 = vset.pattern.permute.xlu0 0
      %3393 = vperm.xlu0 %3392, %v3246
      %v3394 = vpop.permute.xlu0 %3393
      %3395 = vset.pattern.permute.xlu0 0
      %3396 = vperm.xlu0 %3395, %v3247
      %v3397 = vpop.permute.xlu0 %3396
      %3398 = vset.pattern.permute.xlu0 0
      %3399 = vperm.xlu0 %3398, %v3248
      %v3400 = vpop.permute.xlu0 %3399
      %3401 = vset.pattern.permute.xlu0 0
      %3402 = vperm.xlu0 %3401, %v3249
      %v3403 = vpop.permute.xlu0 %3402
      %3404 = vset.pattern.permute.xlu0 0
      %3405 = vperm.xlu0 %3404, %v3250
      %v3406 = vpop.permute.xlu0 %3405
      %3407 = vset.pattern.permute.xlu0 0
      %3408 = vperm.xlu0 %3407, %v3251
      %v3409 = vpop.permute.xlu0 %3408
      %3410 = vset.pattern.permute.xlu0 0
      %3411 = vperm.xlu0 %3410, %v3252
      %v3412 = vpop.permute.xlu0 %3411
      %3413 = vset.pattern.permute.xlu0 0
      %3414 = vperm.xlu0 %3413, %v3253
      %v3415 = vpop.permute.xlu0 %3414
      %3416 = vset.pattern.permute.xlu0 0
      %3417 = vperm.xlu0 %3416, %v3254
      %v3418 = vpop.permute.xlu0 %3417
      %3419 = vset.pattern.permute.xlu0 0
      %3420 = vperm.xlu0 %3419, %v3255
      %v3421 = vpop.permute.xlu0 %3420
      %3422 = vset.pattern.permute.xlu0 0
      %3423 = vperm.xlu0 %3422, %v3256
      %v3424 = vpop.permute.xlu0 %3423
      %3425 = vset.pattern.permute.xlu0 0
      %3426 = vperm.xlu0 %3425, %v3257
      %v3427 = vpop.permute.xlu0 %3426
      %3428 = vset.pattern.permute.xlu0 0
      %3429 = vperm.xlu0 %3428, %v3258
      %v3430 = vpop.permute.xlu0 %3429
      %3431 = vset.pattern.permute.xlu0 0
      %3432 = vperm.xlu0 %3431, %v3259
      %v3433 = vpop.permute.xlu0 %3432
      %3434 = vset.pattern.permute.xlu0 0
      %3435 = vperm.xlu0 %3434, %v3260
      %v3436 = vpop.permute.xlu0 %3435
      %3437 = vset.pattern.permute.xlu0 0
      %3438 = vperm.xlu0 %3437, %v3261
      %v3439 = vpop.permute.xlu0 %3438
      %3440 = vset.pattern.permute.xlu0 0
      %3441 = vperm.xlu0 %3440, %v3262
      %v3442 = vpop.permute.xlu0 %3441
      %3443 = vset.pattern.permute.xlu0 0
      %3444 = vperm.xlu0 %3443, %v3263
      %v3445 = vpop.permute.xlu0 %3444
      %3446 = vset.pattern.permute.xlu0 0
      %3447 = vperm.xlu0 %3446, %v3264
      %v3448 = vpop.permute.xlu0 %3447
      %3449 = vset.pattern.permute.xlu0 0
      %3450 = vperm.xlu0 %3449, %v3265
      %v3451 = vpop.permute.xlu0 %3450
      %3452 = vset.pattern.permute.xlu0 0
      %3453 = vperm.xlu0 %3452, %v3266
      %v3454 = vpop.permute.xlu0 %3453
      %3455 = vset.pattern.permute.xlu0 0
      %3456 = vperm.xlu0 %3455, %v3267
      %v3457 = vpop.permute.xlu0 %3456
      %3458 = vset.pattern.permute.xlu0 0
      %3459 = vperm.xlu0 %3458, %v3268
      %v3460 = vpop.permute.xlu0 %3459
      %vm3461 = vcmp.eq.s32.totalorder %v3271, 1
      %vm3462 = vcmp.eq.s32.totalorder %v3274, 1
      %vm3463 = vcmp.eq.s32.totalorder %v3277, 1
      %vm3464 = vcmp.eq.s32.totalorder %v3280, 1
      %vm3465 = vcmp.eq.s32.totalorder %v3283, 1
      %vm3466 = vcmp.eq.s32.totalorder %v3286, 1
      %vm3467 = vcmp.eq.s32.totalorder %v3289, 1
      %vm3468 = vcmp.eq.s32.totalorder %v3292, 1
      %vm3469 = vcmp.eq.s32.totalorder %v3295, 1
      %vm3470 = vcmp.eq.s32.totalorder %v3298, 1
      %vm3471 = vcmp.eq.s32.totalorder %v3301, 1
      %vm3472 = vcmp.eq.s32.totalorder %v3304, 1
      %vm3473 = vcmp.eq.s32.totalorder %v3307, 1
      %vm3474 = vcmp.eq.s32.totalorder %v3310, 1
      %vm3475 = vcmp.eq.s32.totalorder %v3313, 1
      %vm3476 = vcmp.eq.s32.totalorder %v3316, 1
      %vm3477 = vcmp.eq.s32.totalorder %v3319, 1
      %vm3478 = vcmp.eq.s32.totalorder %v3322, 1
      %vm3479 = vcmp.eq.s32.totalorder %v3325, 1
      %vm3480 = vcmp.eq.s32.totalorder %v3328, 1
      %vm3481 = vcmp.eq.s32.totalorder %v3331, 1
      %vm3482 = vcmp.eq.s32.totalorder %v3334, 1
      %vm3483 = vcmp.eq.s32.totalorder %v3337, 1
      %vm3484 = vcmp.eq.s32.totalorder %v3340, 1
      %vm3485 = vcmp.eq.s32.totalorder %v3343, 1
      %vm3486 = vcmp.eq.s32.totalorder %v3346, 1
      %vm3487 = vcmp.eq.s32.totalorder %v3349, 1
      %vm3488 = vcmp.eq.s32.totalorder %v3352, 1
      %vm3489 = vcmp.eq.s32.totalorder %v3355, 1
      %vm3490 = vcmp.eq.s32.totalorder %v3358, 1
      %vm3491 = vcmp.eq.s32.totalorder %v3361, 1
      %vm3492 = vcmp.eq.s32.totalorder %v3364, 1
      %vm3493 = vcmp.eq.s32.totalorder %v3367, 1
      %vm3494 = vcmp.eq.s32.totalorder %v3370, 1
      %vm3495 = vcmp.eq.s32.totalorder %v3373, 1
      %vm3496 = vcmp.eq.s32.totalorder %v3376, 1
      %vm3497 = vcmp.eq.s32.totalorder %v3379, 1
      %vm3498 = vcmp.eq.s32.totalorder %v3382, 1
      %vm3499 = vcmp.eq.s32.totalorder %v3385, 1
      %vm3500 = vcmp.eq.s32.totalorder %v3388, 1
      %vm3501 = vcmp.eq.s32.totalorder %v3391, 1
      %vm3502 = vcmp.eq.s32.totalorder %v3394, 1
      %vm3503 = vcmp.eq.s32.totalorder %v3397, 1
      %vm3504 = vcmp.eq.s32.totalorder %v3400, 1
      %vm3505 = vcmp.eq.s32.totalorder %v3403, 1
      %vm3506 = vcmp.eq.s32.totalorder %v3406, 1
      %vm3507 = vcmp.eq.s32.totalorder %v3409, 1
      %vm3508 = vcmp.eq.s32.totalorder %v3412, 1
      %vm3509 = vcmp.eq.s32.totalorder %v3415, 1
      %vm3510 = vcmp.eq.s32.totalorder %v3418, 1
      %vm3511 = vcmp.eq.s32.totalorder %v3421, 1
      %vm3512 = vcmp.eq.s32.totalorder %v3424, 1
      %vm3513 = vcmp.eq.s32.totalorder %v3427, 1
      %vm3514 = vcmp.eq.s32.totalorder %v3430, 1
      %vm3515 = vcmp.eq.s32.totalorder %v3433, 1
      %vm3516 = vcmp.eq.s32.totalorder %v3436, 1
      %vm3517 = vcmp.eq.s32.totalorder %v3439, 1
      %vm3518 = vcmp.eq.s32.totalorder %v3442, 1
      %vm3519 = vcmp.eq.s32.totalorder %v3445, 1
      %vm3520 = vcmp.eq.s32.totalorder %v3448, 1
      %vm3521 = vcmp.eq.s32.totalorder %v3451, 1
      %vm3522 = vcmp.eq.s32.totalorder %v3454, 1
      %vm3523 = vcmp.eq.s32.totalorder %v3457, 1
      %vm3524 = vcmp.eq.s32.totalorder %v3460, 1
      %v3525 = vsel %vm3461, %v2759, 0.0
      %v3526 = vsel %vm3462, %v2762, 0.0
      %v3527 = vsel %vm3463, %v2767, 0.0
      %v3528 = vsel %vm3464, %v2770, 0.0
      %v3529 = vsel %vm3465, %v2775, 0.0
      %v3530 = vsel %vm3466, %v2778, 0.0
      %v3531 = vsel %vm3467, %v2783, 0.0
      %v3532 = vsel %vm3468, %v2786, 0.0
      %v3533 = vsel %vm3469, %v2791, 0.0
      %v3534 = vsel %vm3470, %v2794, 0.0
      %v3535 = vsel %vm3471, %v2799, 0.0
      %v3536 = vsel %vm3472, %v2802, 0.0
      %v3537 = vsel %vm3473, %v2807, 0.0
      %v3538 = vsel %vm3474, %v2810, 0.0
      %v3539 = vsel %vm3475, %v2815, 0.0
      %v3540 = vsel %vm3476, %v2818, 0.0
      %v3541 = vsel %vm3477, %v2823, 0.0
      %v3542 = vsel %vm3478, %v2826, 0.0
      %v3543 = vsel %vm3479, %v2831, 0.0
      %v3544 = vsel %vm3480, %v2834, 0.0
      %v3545 = vsel %vm3481, %v2839, 0.0
      %v3546 = vsel %vm3482, %v2842, 0.0
      %v3547 = vsel %vm3483, %v2847, 0.0
      %v3548 = vsel %vm3484, %v2850, 0.0
      %v3549 = vsel %vm3485, %v2855, 0.0
      %v3550 = vsel %vm3486, %v2858, 0.0
      %v3551 = vsel %vm3487, %v2863, 0.0
      %v3552 = vsel %vm3488, %v2866, 0.0
      %v3553 = vsel %vm3489, %v2871, 0.0
      %v3554 = vsel %vm3490, %v2874, 0.0
      %v3555 = vsel %vm3491, %v2879, 0.0
      %v3556 = vsel %vm3492, %v2882, 0.0
      %v3557 = vsel %vm3493, %v2887, 0.0
      %v3558 = vsel %vm3494, %v2890, 0.0
      %v3559 = vsel %vm3495, %v2895, 0.0
      %v3560 = vsel %vm3496, %v2898, 0.0
      %v3561 = vsel %vm3497, %v2903, 0.0
      %v3562 = vsel %vm3498, %v2906, 0.0
      %v3563 = vsel %vm3499, %v2911, 0.0
      %v3564 = vsel %vm3500, %v2914, 0.0
      %v3565 = vsel %vm3501, %v2919, 0.0
      %v3566 = vsel %vm3502, %v2922, 0.0
      %v3567 = vsel %vm3503, %v2927, 0.0
      %v3568 = vsel %vm3504, %v2930, 0.0
      %v3569 = vsel %vm3505, %v2935, 0.0
      %v3570 = vsel %vm3506, %v2938, 0.0
      %v3571 = vsel %vm3507, %v2943, 0.0
      %v3572 = vsel %vm3508, %v2946, 0.0
      %v3573 = vsel %vm3509, %v2951, 0.0
      %v3574 = vsel %vm3510, %v2954, 0.0
      %v3575 = vsel %vm3511, %v2959, 0.0
      %v3576 = vsel %vm3512, %v2962, 0.0
      %v3577 = vsel %vm3513, %v2967, 0.0
      %v3578 = vsel %vm3514, %v2970, 0.0
      %v3579 = vsel %vm3515, %v2975, 0.0
      %v3580 = vsel %vm3516, %v2978, 0.0
      %v3581 = vsel %vm3517, %v2983, 0.0
      %v3582 = vsel %vm3518, %v2986, 0.0
      %v3583 = vsel %vm3519, %v2991, 0.0
      %v3584 = vsel %vm3520, %v2994, 0.0
      %v3585 = vsel %vm3521, %v2999, 0.0
      %v3586 = vsel %vm3522, %v3002, 0.0
      %v3587 = vsel %vm3523, %v3007, 0.0
      %v3588 = vsel %vm3524, %v3010, 0.0
      %v3589 = vsel %vm1871, %v3525, 0.0
      %v3590 = vsel %vm1871, %v3526, 0.0
      %v3591 = vadd.f32 %v3589, %v3590
      %v3592 = vsel %vm1871, %v3527, 0.0
      %v3593 = vadd.f32 %v3591, %v3592
      %v3594 = vsel %vm1871, %v3528, 0.0
      %v3595 = vadd.f32 %v3593, %v3594
      %v3596 = vsel %vm1871, %v3529, 0.0
      %v3597 = vadd.f32 %v3595, %v3596
      %v3598 = vsel %vm1871, %v3530, 0.0
      %v3599 = vadd.f32 %v3597, %v3598
      %v3600 = vsel %vm1871, %v3531, 0.0
      %v3601 = vadd.f32 %v3599, %v3600
      %v3602 = vsel %vm1871, %v3532, 0.0
      %v3603 = vadd.f32 %v3601, %v3602
      %v3604 = vsel %vm1871, %v3533, 0.0
      %v3605 = vadd.f32 %v3603, %v3604
      %v3606 = vsel %vm1871, %v3534, 0.0
      %v3607 = vadd.f32 %v3605, %v3606
      %v3608 = vsel %vm1871, %v3535, 0.0
      %v3609 = vadd.f32 %v3607, %v3608
      %v3610 = vsel %vm1871, %v3536, 0.0
      %v3611 = vadd.f32 %v3609, %v3610
      %v3612 = vsel %vm1871, %v3537, 0.0
      %v3613 = vadd.f32 %v3611, %v3612
      %v3614 = vsel %vm1871, %v3538, 0.0
      %v3615 = vadd.f32 %v3613, %v3614
      %v3616 = vsel %vm1871, %v3539, 0.0
      %v3617 = vadd.f32 %v3615, %v3616
      %v3618 = vsel %vm1871, %v3540, 0.0
      %v3619 = vadd.f32 %v3617, %v3618
      %v3620 = vsel %vm1871, %v3541, 0.0
      %v3621 = vadd.f32 %v3619, %v3620
      %v3622 = vsel %vm1871, %v3542, 0.0
      %v3623 = vadd.f32 %v3621, %v3622
      %v3624 = vsel %vm1871, %v3543, 0.0
      %v3625 = vadd.f32 %v3623, %v3624
      %v3626 = vsel %vm1871, %v3544, 0.0
      %v3627 = vadd.f32 %v3625, %v3626
      %v3628 = vsel %vm1871, %v3545, 0.0
      %v3629 = vadd.f32 %v3627, %v3628
      %v3630 = vsel %vm1871, %v3546, 0.0
      %v3631 = vadd.f32 %v3629, %v3630
      %v3632 = vsel %vm1871, %v3547, 0.0
      %v3633 = vadd.f32 %v3631, %v3632
      %v3634 = vsel %vm1871, %v3548, 0.0
      %v3635 = vadd.f32 %v3633, %v3634
      %v3636 = vsel %vm1871, %v3549, 0.0
      %v3637 = vadd.f32 %v3635, %v3636
      %v3638 = vsel %vm1871, %v3550, 0.0
      %v3639 = vadd.f32 %v3637, %v3638
      %v3640 = vsel %vm1871, %v3551, 0.0
      %v3641 = vadd.f32 %v3639, %v3640
      %v3642 = vsel %vm1871, %v3552, 0.0
      %v3643 = vadd.f32 %v3641, %v3642
      %v3644 = vsel %vm1871, %v3553, 0.0
      %v3645 = vadd.f32 %v3643, %v3644
      %v3646 = vsel %vm1871, %v3554, 0.0
      %v3647 = vadd.f32 %v3645, %v3646
      %v3648 = vsel %vm1871, %v3555, 0.0
      %v3649 = vadd.f32 %v3647, %v3648
      %v3650 = vsel %vm1871, %v3556, 0.0
      %v3651 = vadd.f32 %v3649, %v3650
      %v3652 = vsel %vm1871, %v3557, 0.0
      %v3653 = vadd.f32 %v3651, %v3652
      %v3654 = vsel %vm1871, %v3558, 0.0
      %v3655 = vadd.f32 %v3653, %v3654
      %v3656 = vsel %vm1871, %v3559, 0.0
      %v3657 = vadd.f32 %v3655, %v3656
      %v3658 = vsel %vm1871, %v3560, 0.0
      %v3659 = vadd.f32 %v3657, %v3658
      %v3660 = vsel %vm1871, %v3561, 0.0
      %v3661 = vadd.f32 %v3659, %v3660
      %v3662 = vsel %vm1871, %v3562, 0.0
      %v3663 = vadd.f32 %v3661, %v3662
      %v3664 = vsel %vm1871, %v3563, 0.0
      %v3665 = vadd.f32 %v3663, %v3664
      %v3666 = vsel %vm1871, %v3564, 0.0
      %v3667 = vadd.f32 %v3665, %v3666
      %v3668 = vsel %vm1871, %v3565, 0.0
      %v3669 = vadd.f32 %v3667, %v3668
      %v3670 = vsel %vm1871, %v3566, 0.0
      %v3671 = vadd.f32 %v3669, %v3670
      %v3672 = vsel %vm1871, %v3567, 0.0
      %v3673 = vadd.f32 %v3671, %v3672
      %v3674 = vsel %vm1871, %v3568, 0.0
      %v3675 = vadd.f32 %v3673, %v3674
      %v3676 = vsel %vm1871, %v3569, 0.0
      %v3677 = vadd.f32 %v3675, %v3676
      %v3678 = vsel %vm1871, %v3570, 0.0
      %v3679 = vadd.f32 %v3677, %v3678
      %v3680 = vsel %vm1871, %v3571, 0.0
      %v3681 = vadd.f32 %v3679, %v3680
      %v3682 = vsel %vm1871, %v3572, 0.0
      %v3683 = vadd.f32 %v3681, %v3682
      %v3684 = vsel %vm1871, %v3573, 0.0
      %v3685 = vadd.f32 %v3683, %v3684
      %v3686 = vsel %vm1871, %v3574, 0.0
      %v3687 = vadd.f32 %v3685, %v3686
      %v3688 = vsel %vm1871, %v3575, 0.0
      %v3689 = vadd.f32 %v3687, %v3688
      %v3690 = vsel %vm1871, %v3576, 0.0
      %v3691 = vadd.f32 %v3689, %v3690
      %v3692 = vsel %vm1871, %v3577, 0.0
      %v3693 = vadd.f32 %v3691, %v3692
      %v3694 = vsel %vm1871, %v3578, 0.0
      %v3695 = vadd.f32 %v3693, %v3694
      %v3696 = vsel %vm1871, %v3579, 0.0
      %v3697 = vadd.f32 %v3695, %v3696
      %v3698 = vsel %vm1871, %v3580, 0.0
      %v3699 = vadd.f32 %v3697, %v3698
      %v3700 = vsel %vm1871, %v3581, 0.0
      %v3701 = vadd.f32 %v3699, %v3700
      %v3702 = vsel %vm1871, %v3582, 0.0
      %v3703 = vadd.f32 %v3701, %v3702
      %v3704 = vsel %vm1871, %v3583, 0.0
      %v3705 = vadd.f32 %v3703, %v3704
      %v3706 = vsel %vm1871, %v3584, 0.0
      %v3707 = vadd.f32 %v3705, %v3706
      %v3708 = vsel %vm1871, %v3585, 0.0
      %v3709 = vadd.f32 %v3707, %v3708
      %v3710 = vsel %vm1871, %v3586, 0.0
      %v3711 = vadd.f32 %v3709, %v3710
      %v3712 = vsel %vm1871, %v3587, 0.0
      %v3713 = vadd.f32 %v3711, %v3712
      %v3714 = vsel %vm1871, %v3588, 0.0
      %v3715 = vadd.f32 %v3713, %v3714
      %v3716 = vrot.slane %v3715, 4
      %v3717 = vadd.f32 %v3715, %v3716
      %v3718 = vrot.slane %v3717, 2
      %v3719 = vadd.f32 %v3717, %v3718
      %v3720 = vrot.slane %v3719, 1
      %v3721 = vadd.f32 %v3719, %v3720
      %v3722 = vmul.f32 %v2759, %v2759
      %v3723 = vmul.f32 %v2762, %v2762
      %v3724 = vmul.f32 %v2767, %v2767
      %v3725 = vmul.f32 %v2770, %v2770
      %v3726 = vmul.f32 %v2775, %v2775
      %v3727 = vmul.f32 %v2778, %v2778
      %v3728 = vmul.f32 %v2783, %v2783
      %v3729 = vmul.f32 %v2786, %v2786
      %v3730 = vmul.f32 %v2791, %v2791
      %v3731 = vmul.f32 %v2794, %v2794
      %v3732 = vmul.f32 %v2799, %v2799
      %v3733 = vmul.f32 %v2802, %v2802
      %v3734 = vmul.f32 %v2807, %v2807
      %v3735 = vmul.f32 %v2810, %v2810
      %v3736 = vmul.f32 %v2815, %v2815
      %v3737 = vmul.f32 %v2818, %v2818
      %v3738 = vmul.f32 %v2823, %v2823
      %v3739 = vmul.f32 %v2826, %v2826
      %v3740 = vmul.f32 %v2831, %v2831
      %v3741 = vmul.f32 %v2834, %v2834
      %v3742 = vmul.f32 %v2839, %v2839
      %v3743 = vmul.f32 %v2842, %v2842
      %v3744 = vmul.f32 %v2847, %v2847
      %v3745 = vmul.f32 %v2850, %v2850
      %v3746 = vmul.f32 %v2855, %v2855
      %v3747 = vmul.f32 %v2858, %v2858
      %v3748 = vmul.f32 %v2863, %v2863
      %v3749 = vmul.f32 %v2866, %v2866
      %v3750 = vmul.f32 %v2871, %v2871
      %v3751 = vmul.f32 %v2874, %v2874
      %v3752 = vmul.f32 %v2879, %v2879
      %v3753 = vmul.f32 %v2882, %v2882
      %v3754 = vmul.f32 %v2887, %v2887
      %v3755 = vmul.f32 %v2890, %v2890
      %v3756 = vmul.f32 %v2895, %v2895
      %v3757 = vmul.f32 %v2898, %v2898
      %v3758 = vmul.f32 %v2903, %v2903
      %v3759 = vmul.f32 %v2906, %v2906
      %v3760 = vmul.f32 %v2911, %v2911
      %v3761 = vmul.f32 %v2914, %v2914
      %v3762 = vmul.f32 %v2919, %v2919
      %v3763 = vmul.f32 %v2922, %v2922
      %v3764 = vmul.f32 %v2927, %v2927
      %v3765 = vmul.f32 %v2930, %v2930
      %v3766 = vmul.f32 %v2935, %v2935
      %v3767 = vmul.f32 %v2938, %v2938
      %v3768 = vmul.f32 %v2943, %v2943
      %v3769 = vmul.f32 %v2946, %v2946
      %v3770 = vmul.f32 %v2951, %v2951
      %v3771 = vmul.f32 %v2954, %v2954
      %v3772 = vmul.f32 %v2959, %v2959
      %v3773 = vmul.f32 %v2962, %v2962
      %v3774 = vmul.f32 %v2967, %v2967
      %v3775 = vmul.f32 %v2970, %v2970
      %v3776 = vmul.f32 %v2975, %v2975
      %v3777 = vmul.f32 %v2978, %v2978
      %v3778 = vmul.f32 %v2983, %v2983
      %v3779 = vmul.f32 %v2986, %v2986
      %v3780 = vmul.f32 %v2991, %v2991
      %v3781 = vmul.f32 %v2994, %v2994
      %v3782 = vmul.f32 %v2999, %v2999
      %v3783 = vmul.f32 %v3002, %v3002
      %v3784 = vmul.f32 %v3007, %v3007
      %v3785 = vmul.f32 %v3010, %v3010
      %v3786 = vsel %vm3461, %v3722, 0.0
      %v3787 = vsel %vm3462, %v3723, 0.0
      %v3788 = vsel %vm3463, %v3724, 0.0
      %v3789 = vsel %vm3464, %v3725, 0.0
      %v3790 = vsel %vm3465, %v3726, 0.0
      %v3791 = vsel %vm3466, %v3727, 0.0
      %v3792 = vsel %vm3467, %v3728, 0.0
      %v3793 = vsel %vm3468, %v3729, 0.0
      %v3794 = vsel %vm3469, %v3730, 0.0
      %v3795 = vsel %vm3470, %v3731, 0.0
      %v3796 = vsel %vm3471, %v3732, 0.0
      %v3797 = vsel %vm3472, %v3733, 0.0
      %v3798 = vsel %vm3473, %v3734, 0.0
      %v3799 = vsel %vm3474, %v3735, 0.0
      %v3800 = vsel %vm3475, %v3736, 0.0
      %v3801 = vsel %vm3476, %v3737, 0.0
      %v3802 = vsel %vm3477, %v3738, 0.0
      %v3803 = vsel %vm3478, %v3739, 0.0
      %v3804 = vsel %vm3479, %v3740, 0.0
      %v3805 = vsel %vm3480, %v3741, 0.0
      %v3806 = vsel %vm3481, %v3742, 0.0
      %v3807 = vsel %vm3482, %v3743, 0.0
      %v3808 = vsel %vm3483, %v3744, 0.0
      %v3809 = vsel %vm3484, %v3745, 0.0
      %v3810 = vsel %vm3485, %v3746, 0.0
      %v3811 = vsel %vm3486, %v3747, 0.0
      %v3812 = vsel %vm3487, %v3748, 0.0
      %v3813 = vsel %vm3488, %v3749, 0.0
      %v3814 = vsel %vm3489, %v3750, 0.0
      %v3815 = vsel %vm3490, %v3751, 0.0
      %v3816 = vsel %vm3491, %v3752, 0.0
      %v3817 = vsel %vm3492, %v3753, 0.0
      %v3818 = vsel %vm3493, %v3754, 0.0
      %v3819 = vsel %vm3494, %v3755, 0.0
      %v3820 = vsel %vm3495, %v3756, 0.0
      %v3821 = vsel %vm3496, %v3757, 0.0
      %v3822 = vsel %vm3497, %v3758, 0.0
      %v3823 = vsel %vm3498, %v3759, 0.0
      %v3824 = vsel %vm3499, %v3760, 0.0
      %v3825 = vsel %vm3500, %v3761, 0.0
      %v3826 = vsel %vm3501, %v3762, 0.0
      %v3827 = vsel %vm3502, %v3763, 0.0
      %v3828 = vsel %vm3503, %v3764, 0.0
      %v3829 = vsel %vm3504, %v3765, 0.0
      %v3830 = vsel %vm3505, %v3766, 0.0
      %v3831 = vsel %vm3506, %v3767, 0.0
      %v3832 = vsel %vm3507, %v3768, 0.0
      %v3833 = vsel %vm3508, %v3769, 0.0
      %v3834 = vsel %vm3509, %v3770, 0.0
      %v3835 = vsel %vm3510, %v3771, 0.0
      %v3836 = vsel %vm3511, %v3772, 0.0
      %v3837 = vsel %vm3512, %v3773, 0.0
      %v3838 = vsel %vm3513, %v3774, 0.0
      %v3839 = vsel %vm3514, %v3775, 0.0
      %v3840 = vsel %vm3515, %v3776, 0.0
      %v3841 = vsel %vm3516, %v3777, 0.0
      %v3842 = vsel %vm3517, %v3778, 0.0
      %v3843 = vsel %vm3518, %v3779, 0.0
      %v3844 = vsel %vm3519, %v3780, 0.0
      %v3845 = vsel %vm3520, %v3781, 0.0
      %v3846 = vsel %vm3521, %v3782, 0.0
      %v3847 = vsel %vm3522, %v3783, 0.0
      %v3848 = vsel %vm3523, %v3784, 0.0
      %v3849 = vsel %vm3524, %v3785, 0.0
      %v3850 = vsel %vm1871, %v3786, 0.0
      %v3851 = vsel %vm1871, %v3787, 0.0
      %v3852 = vadd.f32 %v3850, %v3851
      %v3853 = vsel %vm1871, %v3788, 0.0
      %v3854 = vadd.f32 %v3852, %v3853
      %v3855 = vsel %vm1871, %v3789, 0.0
      %v3856 = vadd.f32 %v3854, %v3855
      %v3857 = vsel %vm1871, %v3790, 0.0
      %v3858 = vadd.f32 %v3856, %v3857
      %v3859 = vsel %vm1871, %v3791, 0.0
      %v3860 = vadd.f32 %v3858, %v3859
      %v3861 = vsel %vm1871, %v3792, 0.0
      %v3862 = vadd.f32 %v3860, %v3861
      %v3863 = vsel %vm1871, %v3793, 0.0
      %v3864 = vadd.f32 %v3862, %v3863
      %v3865 = vsel %vm1871, %v3794, 0.0
      %v3866 = vadd.f32 %v3864, %v3865
      %v3867 = vsel %vm1871, %v3795, 0.0
      %v3868 = vadd.f32 %v3866, %v3867
      %v3869 = vsel %vm1871, %v3796, 0.0
      %v3870 = vadd.f32 %v3868, %v3869
      %v3871 = vsel %vm1871, %v3797, 0.0
      %v3872 = vadd.f32 %v3870, %v3871
      %v3873 = vsel %vm1871, %v3798, 0.0
      %v3874 = vadd.f32 %v3872, %v3873
      %v3875 = vsel %vm1871, %v3799, 0.0
      %v3876 = vadd.f32 %v3874, %v3875
      %v3877 = vsel %vm1871, %v3800, 0.0
      %v3878 = vadd.f32 %v3876, %v3877
      %v3879 = vsel %vm1871, %v3801, 0.0
      %v3880 = vadd.f32 %v3878, %v3879
      %v3881 = vsel %vm1871, %v3802, 0.0
      %v3882 = vadd.f32 %v3880, %v3881
      %v3883 = vsel %vm1871, %v3803, 0.0
      %v3884 = vadd.f32 %v3882, %v3883
      %v3885 = vsel %vm1871, %v3804, 0.0
      %v3886 = vadd.f32 %v3884, %v3885
      %v3887 = vsel %vm1871, %v3805, 0.0
      %v3888 = vadd.f32 %v3886, %v3887
      %v3889 = vsel %vm1871, %v3806, 0.0
      %v3890 = vadd.f32 %v3888, %v3889
      %v3891 = vsel %vm1871, %v3807, 0.0
      %v3892 = vadd.f32 %v3890, %v3891
      %v3893 = vsel %vm1871, %v3808, 0.0
      %v3894 = vadd.f32 %v3892, %v3893
      %v3895 = vsel %vm1871, %v3809, 0.0
      %v3896 = vadd.f32 %v3894, %v3895
      %v3897 = vsel %vm1871, %v3810, 0.0
      %v3898 = vadd.f32 %v3896, %v3897
      %v3899 = vsel %vm1871, %v3811, 0.0
      %v3900 = vadd.f32 %v3898, %v3899
      %v3901 = vsel %vm1871, %v3812, 0.0
      %v3902 = vadd.f32 %v3900, %v3901
      %v3903 = vsel %vm1871, %v3813, 0.0
      %v3904 = vadd.f32 %v3902, %v3903
      %v3905 = vsel %vm1871, %v3814, 0.0
      %v3906 = vadd.f32 %v3904, %v3905
      %v3907 = vsel %vm1871, %v3815, 0.0
      %v3908 = vadd.f32 %v3906, %v3907
      %v3909 = vsel %vm1871, %v3816, 0.0
      %v3910 = vadd.f32 %v3908, %v3909
      %v3911 = vsel %vm1871, %v3817, 0.0
      %v3912 = vadd.f32 %v3910, %v3911
      %v3913 = vsel %vm1871, %v3818, 0.0
      %v3914 = vadd.f32 %v3912, %v3913
      %v3915 = vsel %vm1871, %v3819, 0.0
      %v3916 = vadd.f32 %v3914, %v3915
      %v3917 = vsel %vm1871, %v3820, 0.0
      %v3918 = vadd.f32 %v3916, %v3917
      %v3919 = vsel %vm1871, %v3821, 0.0
      %v3920 = vadd.f32 %v3918, %v3919
      %v3921 = vsel %vm1871, %v3822, 0.0
      %v3922 = vadd.f32 %v3920, %v3921
      %v3923 = vsel %vm1871, %v3823, 0.0
      %v3924 = vadd.f32 %v3922, %v3923
      %v3925 = vsel %vm1871, %v3824, 0.0
      %v3926 = vadd.f32 %v3924, %v3925
      %v3927 = vsel %vm1871, %v3825, 0.0
      %v3928 = vadd.f32 %v3926, %v3927
      %v3929 = vsel %vm1871, %v3826, 0.0
      %v3930 = vadd.f32 %v3928, %v3929
      %v3931 = vsel %vm1871, %v3827, 0.0
      %v3932 = vadd.f32 %v3930, %v3931
      %v3933 = vsel %vm1871, %v3828, 0.0
      %v3934 = vadd.f32 %v3932, %v3933
      %v3935 = vsel %vm1871, %v3829, 0.0
      %v3936 = vadd.f32 %v3934, %v3935
      %v3937 = vsel %vm1871, %v3830, 0.0
      %v3938 = vadd.f32 %v3936, %v3937
      %v3939 = vsel %vm1871, %v3831, 0.0
      %v3940 = vadd.f32 %v3938, %v3939
      %v3941 = vsel %vm1871, %v3832, 0.0
      %v3942 = vadd.f32 %v3940, %v3941
      %v3943 = vsel %vm1871, %v3833, 0.0
      %v3944 = vadd.f32 %v3942, %v3943
      %v3945 = vsel %vm1871, %v3834, 0.0
      %v3946 = vadd.f32 %v3944, %v3945
      %v3947 = vsel %vm1871, %v3835, 0.0
      %v3948 = vadd.f32 %v3946, %v3947
      %v3949 = vsel %vm1871, %v3836, 0.0
      %v3950 = vadd.f32 %v3948, %v3949
      %v3951 = vsel %vm1871, %v3837, 0.0
      %v3952 = vadd.f32 %v3950, %v3951
      %v3953 = vsel %vm1871, %v3838, 0.0
      %v3954 = vadd.f32 %v3952, %v3953
      %v3955 = vsel %vm1871, %v3839, 0.0
      %v3956 = vadd.f32 %v3954, %v3955
      %v3957 = vsel %vm1871, %v3840, 0.0
      %v3958 = vadd.f32 %v3956, %v3957
      %v3959 = vsel %vm1871, %v3841, 0.0
      %v3960 = vadd.f32 %v3958, %v3959
      %v3961 = vsel %vm1871, %v3842, 0.0
      %v3962 = vadd.f32 %v3960, %v3961
      %v3963 = vsel %vm1871, %v3843, 0.0
      %v3964 = vadd.f32 %v3962, %v3963
      %v3965 = vsel %vm1871, %v3844, 0.0
      %v3966 = vadd.f32 %v3964, %v3965
      %v3967 = vsel %vm1871, %v3845, 0.0
      %v3968 = vadd.f32 %v3966, %v3967
      %v3969 = vsel %vm1871, %v3846, 0.0
      %v3970 = vadd.f32 %v3968, %v3969
      %v3971 = vsel %vm1871, %v3847, 0.0
      %v3972 = vadd.f32 %v3970, %v3971
      %v3973 = vsel %vm1871, %v3848, 0.0
      %v3974 = vadd.f32 %v3972, %v3973
      %v3975 = vsel %vm1871, %v3849, 0.0
      %v3976 = vadd.f32 %v3974, %v3975
      %v3977 = vrot.slane %v3976, 4
      %v3978 = vadd.f32 %v3976, %v3977
      %v3979 = vrot.slane %v3978, 2
      %v3980 = vadd.f32 %v3978, %v3979
      %v3981 = vrot.slane %v3980, 1
      %v3982 = vadd.f32 %v3980, %v3981
      %vm3983 = vcmask 1040384
      %v3984 = vsel %vm3983, %v3721, %v3982
      %vm3985 = vcmask 58368
      %3986 = vst.msk [vmem:[%s289] sm:$0x3] %vm3985, %v3984
      %s3987 = smul.u32 64, %s17
      %p3988 = scmp.lt.s32.totalorder %s3987, 191
      %s3989 = scalar_select %p3988, %s3987, 191
      %s3990 = smul.addr %s3989, 8
      %s3991 = scalar_lea.vmem %s4, %s3990
      %p3992 = scmp.lt.s32.totalorder %s17, 2
      %s3993 = scalar_select %p3992, %s17, 2
      %s3994 = smul.addr %s3993, 2
      %s3995 = scalar_lea.vmem %s5, %s3994
      // Predicated region
      $region37: #{residual_block_forward.3} parent=35 // pred_check
        %p3996 = pneg %p136
      $region38: #{residual_block_forward.3} parent=35 // pred_check_branch
        %3998 = sbr.rel (%p3996) target = $region40
      $region39: #{residual_block_forward.3} parent=35 // pred_region
        %s3999 = smul.u32 64, %s17
      $region40: #{residual_block_forward.3} parent=35 // pred_fallthru
        _
      // Predicated region
      $region41: #{residual_block_forward.3} parent=35 // pred_check
        %p4000 = pneg %p162
      $region42: #{residual_block_forward.3} parent=35 // pred_check_branch
        %4002 = sbr.rel (%p4000) target = $region44
      $region43: #{residual_block_forward.3} parent=35 // pred_region
        _
      $region44: #{residual_block_forward.3} parent=35 // pred_fallthru
        _
    $region36: #{residual_block_forward.3} parent=5 // pred_fallthru
      _
    %p4003 = scmp.le.s32.totalorder 2, %s12
    // Predicated region
    $region45: #{residual_block_forward.3} parent=5 // pred_check
      %p4004 = pneg %p4003
    $region46: #{residual_block_forward.3} parent=5 // pred_check_branch
      %4006 = sbr.rel (%p4004) target = $region48
    $region47: #{residual_block_forward.3} parent=5 // pred_region
      %s4007 = ssub.s32 %s12, 2
      // Predicated region
      $region49: #{residual_block_forward.3} parent=47 // pred_check
        %p4008 = pneg %p142
      $region50: #{residual_block_forward.3} parent=47 // pred_check_branch
        %4010 = sbr.rel (%p4008) target = $region52
      $region51: #{residual_block_forward.3} parent=47 // pred_region
        %s4011 = smul.u32 64, %s18
        %p4012 = scmp.lt.s32.totalorder %s4011, 191
        %s4013 = scalar_select %p4012, %s4011, 191
        %s4014 = smul.addr %s4013, 8
        %s4015 = scalar_lea.vmem %s4, %s4014
      $region52: #{residual_block_forward.3} parent=47 // pred_fallthru
        _
      // Predicated region
      $region53: #{residual_block_forward.3} parent=47 // pred_check
        %p4016 = pneg %p168
      $region54: #{residual_block_forward.3} parent=47 // pred_check_branch
        %4018 = sbr.rel (%p4016) target = $region56
      $region55: #{residual_block_forward.3} parent=47 // pred_region
        %p4019 = scmp.lt.s32.totalorder %s18, 2
        %s4020 = scalar_select %p4019, %s18, 2
        %s4021 = smul.addr %s4020, 2
        %s4022 = scalar_lea.vmem %s5, %s4021
      $region56: #{residual_block_forward.3} parent=47 // pred_fallthru
        _
    $region48: #{residual_block_forward.3} parent=5 // pred_fallthru
      _
  $region6: #{residual_block_forward.3} parent=0 // loop_footer
    %s16 = sadd.s32 1, %s12
  $region7: #{residual_block_forward.3} parent=0 // loop_footer_branch
    %11 = sbr.rel target = $region3
  $region8: #{residual_block_forward.3} parent=0 // loop_exit
    _

// kernel: residual_block_forward.4
$region0: #{residual_block_forward.4}
  #allocation0 [shape = 'u32[]', space=smem, size = 0x4, offset = 0x4, fixed_abs, tag = 'smem constant byte address 0x4 - core index']
  #allocation1 [shape = 'u32[144,128]{1,0:T(1,128)}', space=vmem, size = 0x12000, scoped, tag = 'internal scratch']
  %s0 = inlined_call_operand.vmem [shape: f32[1536,8], index: 0, kind: input, shape index: {}, may-alias: {0,1}]
  %s1 = inlined_call_operand.vmem [shape: f32[1536,8], index: 1, kind: input, shape index: {}, may-alias: {0,1}]
  %s2 = inlined_call_operand.vmem [shape: f32[1536,1], index: 2, kind: input, shape index: {}, may-alias: {2,3}]
  %s3 = inlined_call_operand.vmem [shape: f32[1536,1], index: 3, kind: input, shape index: {}, may-alias: {2,3}]
  %s4 = inlined_call_operand.vmem [shape: bf16[1024,4], index: 4, kind: input, shape index: {}]
  %s5 = inlined_call_operand.vmem [shape: bf16[4,8], index: 5, kind: input, shape index: {}]
  %s6 = inlined_call_operand.vmem [shape: bf16[72,8], index: 6, kind: input, shape index: {}]
  %s7 = inlined_call_operand.vmem [shape: f32[1,8], index: 7, kind: input, shape index: {}]
  %s8 = inlined_call_operand.vmem [shape: f32[1,8], index: 8, kind: input, shape index: {}]
  %s9 = inlined_call_operand.vmem [shape: f32[1024,8], index: 9, kind: output, shape index: {0}]
  %s10 = inlined_call_operand.vmem [shape: f32[2,2,8], index: 10, kind: output, shape index: {1}]
  %11 = xla_tuple %s9, %s10
  %s12 = sld [smem:[#allocation0]]
  $region77: #{residual_block_forward.4} parent=0
    _
  %s14 = ssub.s32 1, %s12
  %s15 = scalar_select 0, %s14, %s12
  loop: start=0, step=1, limit=4
  $region2: #{residual_block_forward.4} parent=0 // loop_pre_header
    _
  $region3: #{residual_block_forward.4} parent=0 // loop_header
    %s17 = sphi 0, %s21
    %p18 = scmp.ge.s32.totalorder %s17, 4
    %s27 = sphi 0, %s29
    %s30 = sphi 0, %s27
    %s31 = sphi 0, %s30
    %s47 = sphi 0, %s31
    %s55 = sphi 0, %s57
    %s58 = sphi 0, %s55
    %s59 = sphi 0, %s58
    %s75 = sphi 0, %s59
    %s81 = sphi 0, %s83
    %s84 = sphi 0, %s81
    %s85 = sphi 0, %s84
    %s101 = sphi 0, %s85
    %s109 = sphi 0, %s111
    %s112 = sphi 0, %s109
    %s113 = sphi 0, %s112
    %s129 = sphi 0, %s113
    %s135 = sphi 0, %s137
    %s138 = sphi 0, %s135
    %s139 = sphi 0, %s138
    %s155 = sphi 0, %s139
    %s159 = sphi 0, %s159
    %s161 = sphi 0, %s159
    %s162 = sphi 0, %s161
    %s176 = sphi 0, %s162
    %s180 = sphi 0, %s180
    %s182 = sphi 0, %s180
    %s183 = sphi 0, %s182
    %s197 = sphi 0, %s183
    %s201 = sphi 0, %s201
    %s203 = sphi 0, %s201
    %s204 = sphi 0, %s203
    %s218 = sphi 0, %s204
    %s222 = sphi 0, %s222
    %s224 = sphi 0, %s222
    %s225 = sphi 0, %s224
    %s239 = sphi 0, %s225
    %s245 = sphi 0, %s247
    %s248 = sphi 0, %s245
    %s249 = sphi 0, %s248
    %s265 = sphi 0, %s249
    %s271 = sphi 0, %s273
    %s274 = sphi 0, %s271
    %s275 = sphi 0, %s274
    %s291 = sphi 0, %s275
  $region4: #{residual_block_forward.4} parent=0 // loop_header_branch
    %20 = sbr.rel (%p18) target = $region8
  $region5: #{residual_block_forward.4} parent=0 // loop_body
    %s22 = ssub.s32 %s17, 1
    %s23 = ssub.s32 %s17, 2
    %s24 = sadd.s32 %s17, 1
    %s25 = ssub.s32 %s17, %s24
    %p26 = scmp.eq.s32.totalorder %s25, 0
    %s28 = sadd.s32 %s27, 1
    %s29 = scalar_select %p26, %s27, %s28
    %p32 = pneg %p26
    %p33 = scmp.eq.s32.totalorder %s17, 1
    %p34 = por %p32, %p33
    %p35 = scmp.ne.s32.totalorder %s27, %s30
    %p36 = scmp.eq.s32.totalorder %s17, 0
    %p37 = por %p35, %p36
    %p38 = scmp.ne.s32.totalorder %s27, %s30
    %p39 = scmp.eq.s32.totalorder %s22, 1
    %p40 = por %p38, %p39
    %p41 = scmp.ne.s32.totalorder %s30, %s31
    %p42 = scmp.eq.s32.totalorder %s22, 0
    %p43 = por %p41, %p42
    %p44 = scmp.ne.s32.totalorder %s30, %s31
    %p45 = scmp.eq.s32.totalorder %s23, 1
    %p46 = por %p44, %p45
    %p48 = scmp.ne.s32.totalorder %s31, %s47
    %p49 = scmp.eq.s32.totalorder %s23, 0
    %p50 = por %p48, %p49
    %s51 = sadd.s32 %s17, 1
    %s52 = sadd.s32 %s24, 1
    %s53 = ssub.s32 %s51, %s52
    %p54 = scmp.eq.s32.totalorder %s53, 0
    %s56 = sadd.s32 %s55, 1
    %s57 = scalar_select %p54, %s55, %s56
    %p60 = pneg %p54
    %p61 = scmp.eq.s32.totalorder %s17, 1
    %p62 = por %p60, %p61
    %p63 = scmp.ne.s32.totalorder %s55, %s58
    %p64 = scmp.eq.s32.totalorder %s17, 0
    %p65 = por %p63, %p64
    %p66 = scmp.ne.s32.totalorder %s55, %s58
    %p67 = scmp.eq.s32.totalorder %s22, 1
    %p68 = por %p66, %p67
    %p69 = scmp.ne.s32.totalorder %s58, %s59
    %p70 = scmp.eq.s32.totalorder %s22, 0
    %p71 = por %p69, %p70
    %p72 = scmp.ne.s32.totalorder %s58, %s59
    %p73 = scmp.eq.s32.totalorder %s23, 1
    %p74 = por %p72, %p73
    %p76 = scmp.ne.s32.totalorder %s59, %s75
    %p77 = scmp.eq.s32.totalorder %s23, 0
    %p78 = por %p76, %p77
    %s79 = ssub.s32 %s17, %s24
    %p80 = scmp.eq.s32.totalorder %s79, 0
    %s82 = sadd.s32 %s81, 1
    %s83 = scalar_select %p80, %s81, %s82
    %p86 = pneg %p80
    %p87 = scmp.eq.s32.totalorder %s17, 1
    %p88 = por %p86, %p87
    %p89 = scmp.ne.s32.totalorder %s81, %s84
    %p90 = scmp.eq.s32.totalorder %s17, 0
    %p91 = por %p89, %p90
    %p92 = scmp.ne.s32.totalorder %s81, %s84
    %p93 = scmp.eq.s32.totalorder %s22, 1
    %p94 = por %p92, %p93
    %p95 = scmp.ne.s32.totalorder %s84, %s85
    %p96 = scmp.eq.s32.totalorder %s22, 0
    %p97 = por %p95, %p96
    %p98 = scmp.ne.s32.totalorder %s84, %s85
    %p99 = scmp.eq.s32.totalorder %s23, 1
    %p100 = por %p98, %p99
    %p102 = scmp.ne.s32.totalorder %s85, %s101
    %p103 = scmp.eq.s32.totalorder %s23, 0
    %p104 = por %p102, %p103
    %s105 = sadd.s32 %s17, 1
    %s106 = sadd.s32 %s24, 1
    %s107 = ssub.s32 %s105, %s106
    %p108 = scmp.eq.s32.totalorder %s107, 0
    %s110 = sadd.s32 %s109, 1
    %s111 = scalar_select %p108, %s109, %s110
    %p114 = pneg %p108
    %p115 = scmp.eq.s32.totalorder %s17, 1
    %p116 = por %p114, %p115
    %p117 = scmp.ne.s32.totalorder %s109, %s112
    %p118 = scmp.eq.s32.totalorder %s17, 0
    %p119 = por %p117, %p118
    %p120 = scmp.ne.s32.totalorder %s109, %s112
    %p121 = scmp.eq.s32.totalorder %s22, 1
    %p122 = por %p120, %p121
    %p123 = scmp.ne.s32.totalorder %s112, %s113
    %p124 = scmp.eq.s32.totalorder %s22, 0
    %p125 = por %p123, %p124
    %p126 = scmp.ne.s32.totalorder %s112, %s113
    %p127 = scmp.eq.s32.totalorder %s23, 1
    %p128 = por %p126, %p127
    %p130 = scmp.ne.s32.totalorder %s113, %s129
    %p131 = scmp.eq.s32.totalorder %s23, 0
    %p132 = por %p130, %p131
    %s133 = ssub.s32 %s17, %s24
    %p134 = scmp.eq.s32.totalorder %s133, 0
    %s136 = sadd.s32 %s135, 1
    %s137 = scalar_select %p134, %s135, %s136
    %p140 = pneg %p134
    %p141 = scmp.eq.s32.totalorder %s17, 1
    %p142 = por %p140, %p141
    %p143 = scmp.ne.s32.totalorder %s135, %s138
    %p144 = scmp.eq.s32.totalorder %s17, 0
    %p145 = por %p143, %p144
    %p146 = scmp.ne.s32.totalorder %s135, %s138
    %p147 = scmp.eq.s32.totalorder %s22, 1
    %p148 = por %p146, %p147
    %p149 = scmp.ne.s32.totalorder %s138, %s139
    %p150 = scmp.eq.s32.totalorder %s22, 0
    %p151 = por %p149, %p150
    %p152 = scmp.ne.s32.totalorder %s138, %s139
    %p153 = scmp.eq.s32.totalorder %s23, 1
    %p154 = por %p152, %p153
    %p156 = scmp.ne.s32.totalorder %s139, %s155
    %p157 = scmp.eq.s32.totalorder %s23, 0
    %p158 = por %p156, %p157
    %s160 = sadd.s32 %s159, 1
    %p163 = scmp.eq.s32.totalorder %s17, 1
    %p164 = scmp.ne.s32.totalorder %s159, %s161
    %p165 = scmp.eq.s32.totalorder %s17, 0
    %p166 = por %p164, %p165
    %p167 = scmp.ne.s32.totalorder %s159, %s161
    %p168 = scmp.eq.s32.totalorder %s22, 1
    %p169 = por %p167, %p168
    %p170 = scmp.ne.s32.totalorder %s161, %s162
    %p171 = scmp.eq.s32.totalorder %s22, 0
    %p172 = por %p170, %p171
    %p173 = scmp.ne.s32.totalorder %s161, %s162
    %p174 = scmp.eq.s32.totalorder %s23, 1
    %p175 = por %p173, %p174
    %p177 = scmp.ne.s32.totalorder %s162, %s176
    %p178 = scmp.eq.s32.totalorder %s23, 0
    %p179 = por %p177, %p178
    %s181 = sadd.s32 %s180, 1
    %p184 = scmp.eq.s32.totalorder %s17, 1
    %p185 = scmp.ne.s32.totalorder %s180, %s182
    %p186 = scmp.eq.s32.totalorder %s17, 0
    %p187 = por %p185, %p186
    %p188 = scmp.ne.s32.totalorder %s180, %s182
    %p189 = scmp.eq.s32.totalorder %s22, 1
    %p190 = por %p188, %p189
    %p191 = scmp.ne.s32.totalorder %s182, %s183
    %p192 = scmp.eq.s32.totalorder %s22, 0
    %p193 = por %p191, %p192
    %p194 = scmp.ne.s32.totalorder %s182, %s183
    %p195 = scmp.eq.s32.totalorder %s23, 1
    %p196 = por %p194, %p195
    %p198 = scmp.ne.s32.totalorder %s183, %s197
    %p199 = scmp.eq.s32.totalorder %s23, 0
    %p200 = por %p198, %p199
    %s202 = sadd.s32 %s201, 1
    %p205 = scmp.eq.s32.totalorder %s17, 1
    %p206 = scmp.ne.s32.totalorder %s201, %s203
    %p207 = scmp.eq.s32.totalorder %s17, 0
    %p208 = por %p206, %p207
    %p209 = scmp.ne.s32.totalorder %s201, %s203
    %p210 = scmp.eq.s32.totalorder %s22, 1
    %p211 = por %p209, %p210
    %p212 = scmp.ne.s32.totalorder %s203, %s204
    %p213 = scmp.eq.s32.totalorder %s22, 0
    %p214 = por %p212, %p213
    %p215 = scmp.ne.s32.totalorder %s203, %s204
    %p216 = scmp.eq.s32.totalorder %s23, 1
    %p217 = por %p215, %p216
    %p219 = scmp.ne.s32.totalorder %s204, %s218
    %p220 = scmp.eq.s32.totalorder %s23, 0
    %p221 = por %p219, %p220
    %s223 = sadd.s32 %s222, 1
    %p226 = scmp.eq.s32.totalorder %s17, 1
    %p227 = scmp.ne.s32.totalorder %s222, %s224
    %p228 = scmp.eq.s32.totalorder %s17, 0
    %p229 = por %p227, %p228
    %p230 = scmp.ne.s32.totalorder %s222, %s224
    %p231 = scmp.eq.s32.totalorder %s22, 1
    %p232 = por %p230, %p231
    %p233 = scmp.ne.s32.totalorder %s224, %s225
    %p234 = scmp.eq.s32.totalorder %s22, 0
    %p235 = por %p233, %p234
    %p236 = scmp.ne.s32.totalorder %s224, %s225
    %p237 = scmp.eq.s32.totalorder %s23, 1
    %p238 = por %p236, %p237
    %p240 = scmp.ne.s32.totalorder %s225, %s239
    %p241 = scmp.eq.s32.totalorder %s23, 0
    %p242 = por %p240, %p241
    %s243 = ssub.s32 %s17, %s24
    %p244 = scmp.eq.s32.totalorder %s243, 0
    %s246 = sadd.s32 %s245, 1
    %s247 = scalar_select %p244, %s245, %s246
    %p250 = pneg %p244
    %p251 = scmp.eq.s32.totalorder %s17, 1
    %p252 = por %p250, %p251
    %p253 = scmp.ne.s32.totalorder %s245, %s248
    %p254 = scmp.eq.s32.totalorder %s17, 0
    %p255 = por %p253, %p254
    %p256 = scmp.ne.s32.totalorder %s245, %s248
    %p257 = scmp.eq.s32.totalorder %s22, 1
    %p258 = por %p256, %p257
    %p259 = scmp.ne.s32.totalorder %s248, %s249
    %p260 = scmp.eq.s32.totalorder %s22, 0
    %p261 = por %p259, %p260
    %p262 = scmp.ne.s32.totalorder %s248, %s249
    %p263 = scmp.eq.s32.totalorder %s23, 1
    %p264 = por %p262, %p263
    %p266 = scmp.ne.s32.totalorder %s249, %s265
    %p267 = scmp.eq.s32.totalorder %s23, 0
    %p268 = por %p266, %p267
    %s269 = ssub.s32 %s17, %s24
    %p270 = scmp.eq.s32.totalorder %s269, 0
    %s272 = sadd.s32 %s271, 1
    %s273 = scalar_select %p270, %s271, %s272
    %p276 = pneg %p270
    %p277 = scmp.eq.s32.totalorder %s17, 1
    %p278 = por %p276, %p277
    %p279 = scmp.ne.s32.totalorder %s271, %s274
    %p280 = scmp.eq.s32.totalorder %s17, 0
    %p281 = por %p279, %p280
    %p282 = scmp.ne.s32.totalorder %s271, %s274
    %p283 = scmp.eq.s32.totalorder %s22, 1
    %p284 = por %p282, %p283
    %p285 = scmp.ne.s32.totalorder %s274, %s275
    %p286 = scmp.eq.s32.totalorder %s22, 0
    %p287 = por %p285, %p286
    %p288 = scmp.ne.s32.totalorder %s274, %s275
    %p289 = scmp.eq.s32.totalorder %s23, 1
    %p290 = por %p288, %p289
    %p292 = scmp.ne.s32.totalorder %s275, %s291
    %p293 = scmp.eq.s32.totalorder %s23, 0
    %p294 = por %p292, %p293
    %p295 = scmp.le.s32.totalorder 1, %s17
    %p296 = scmp.lt.s32.totalorder %s17, 3
    %p297 = pnand %p295, %p296
    %p298 = pneg %p297
    // Predicated region
    $region9: #{residual_block_forward.4} parent=5 // pred_check
      _
    $region10: #{residual_block_forward.4} parent=5 // pred_check_branch
      %300 = sbr.rel (%p297) target = $region12
    $region11: #{residual_block_forward.4} parent=5 // pred_region
      %s301 = ssub.s32 %s17, 1
      // Predicated region
      $region13: #{residual_block_forward.4} parent=11 // pred_check
        %p302 = pneg %p172
      $region14: #{residual_block_forward.4} parent=11 // pred_check_branch
        %304 = sbr.rel (%p302) target = $region16
      $region15: #{residual_block_forward.4} parent=11 // pred_region
        _
      $region16: #{residual_block_forward.4} parent=11 // pred_fallthru
        _
      // Predicated region
      $region17: #{residual_block_forward.4} parent=11 // pred_check
        %p305 = pneg %p193
      $region18: #{residual_block_forward.4} parent=11 // pred_check_branch
        %307 = sbr.rel (%p305) target = $region20
      $region19: #{residual_block_forward.4} parent=11 // pred_region
        _
      $region20: #{residual_block_forward.4} parent=11 // pred_fallthru
        _
      // Predicated region
      $region21: #{residual_block_forward.4} parent=11 // pred_check
        %p308 = pneg %p214
      $region22: #{residual_block_forward.4} parent=11 // pred_check_branch
        %310 = sbr.rel (%p308) target = $region24
      $region23: #{residual_block_forward.4} parent=11 // pred_region
        _
      $region24: #{residual_block_forward.4} parent=11 // pred_fallthru
        _
      // Predicated region
      $region25: #{residual_block_forward.4} parent=11 // pred_check
        %p311 = pneg %p235
      $region26: #{residual_block_forward.4} parent=11 // pred_check_branch
        %313 = sbr.rel (%p311) target = $region28
      $region27: #{residual_block_forward.4} parent=11 // pred_region
        _
      $region28: #{residual_block_forward.4} parent=11 // pred_fallthru
        _
    $region12: #{residual_block_forward.4} parent=5 // pred_fallthru
      _
    %p314 = scmp.lt.s32.totalorder %s17, 2
    // Predicated region
    $region29: #{residual_block_forward.4} parent=5 // pred_check
      %p315 = pneg %p314
    $region30: #{residual_block_forward.4} parent=5 // pred_check_branch
      %317 = sbr.rel (%p315) target = $region32
    $region31: #{residual_block_forward.4} parent=5 // pred_region
      // Predicated region
      $region33: #{residual_block_forward.4} parent=31 // pred_check
        %p318 = pneg %p37
      $region34: #{residual_block_forward.4} parent=31 // pred_check_branch
        %320 = sbr.rel (%p318) target = $region36
      $region35: #{residual_block_forward.4} parent=31 // pred_region
        %s321 = smul.u32 64, %s17
        %p322 = scmp.lt.s32.totalorder %s321, 191
        %s323 = scalar_select %p322, %s321, 191
        %s324 = smul.addr %s323, 8
        %s325 = scalar_lea.vmem %s0, %s324
        %s326 = smul.u32 64, %s17
      $region36: #{residual_block_forward.4} parent=31 // pred_fallthru
        _
      // Predicated region
      $region37: #{residual_block_forward.4} parent=31 // pred_check
        %p327 = pneg %p65
      $region38: #{residual_block_forward.4} parent=31 // pred_check_branch
        %329 = sbr.rel (%p327) target = $region40
      $region39: #{residual_block_forward.4} parent=31 // pred_region
        %s330 = sadd.s32 %s17, 1
        %s331 = smul.u32 64, %s330
        %p332 = scmp.lt.s32.totalorder %s331, 191
        %s333 = scalar_select %p332, %s331, 191
        %s334 = smul.addr %s333, 8
        %s335 = scalar_lea.vmem %s1, %s334
        %s336 = sadd.s32 %s17, 1
        %s337 = smul.u32 64, %s336
      $region40: #{residual_block_forward.4} parent=31 // pred_fallthru
        _
      // Predicated region
      $region41: #{residual_block_forward.4} parent=31 // pred_check
        %p338 = pneg %p91
      $region42: #{residual_block_forward.4} parent=31 // pred_check_branch
        %340 = sbr.rel (%p338) target = $region44
      $region43: #{residual_block_forward.4} parent=31 // pred_region
        %s341 = smul.u32 64, %s17
        %p342 = scmp.lt.s32.totalorder %s341, 191
        %s343 = scalar_select %p342, %s341, 191
        %s344 = smul.addr %s343, 8
        %s345 = scalar_lea.vmem %s2, %s344
        %s346 = smul.u32 64, %s17
      $region44: #{residual_block_forward.4} parent=31 // pred_fallthru
        _
      // Predicated region
      $region45: #{residual_block_forward.4} parent=31 // pred_check
        %p347 = pneg %p119
      $region46: #{residual_block_forward.4} parent=31 // pred_check_branch
        %349 = sbr.rel (%p347) target = $region48
      $region47: #{residual_block_forward.4} parent=31 // pred_region
        %s350 = sadd.s32 %s17, 1
        %s351 = smul.u32 64, %s350
        %p352 = scmp.lt.s32.totalorder %s351, 191
        %s353 = scalar_select %p352, %s351, 191
        %s354 = smul.addr %s353, 8
        %s355 = scalar_lea.vmem %s3, %s354
        %s356 = sadd.s32 %s17, 1
        %s357 = smul.u32 64, %s356
      $region48: #{residual_block_forward.4} parent=31 // pred_fallthru
        _
      // Predicated region
      $region49: #{residual_block_forward.4} parent=31 // pred_check
        %p358 = pneg %p145
      $region50: #{residual_block_forward.4} parent=31 // pred_check_branch
        %360 = sbr.rel (%p358) target = $region52
      $region51: #{residual_block_forward.4} parent=31 // pred_region
        %s361 = smul.u32 64, %s17
        %p362 = scmp.lt.s32.totalorder %s361, 127
        %s363 = scalar_select %p362, %s361, 127
        %s364 = smul.addr %s363, 4
        %s365 = scalar_lea.vmem %s4, %s364
        %s366 = smul.u32 64, %s17
      $region52: #{residual_block_forward.4} parent=31 // pred_fallthru
        _
    $region32: #{residual_block_forward.4} parent=5 // pred_fallthru
      _
    %p367 = scmp.le.s32.totalorder 1, %s17
    %p368 = scmp.lt.s32.totalorder %s17, 3
    %p369 = pnand %p367, %p368
    %p370 = pneg %p369
    // Predicated region
    $region53: #{residual_block_forward.4} parent=5 // pred_check
      _
    $region54: #{residual_block_forward.4} parent=5 // pred_check_branch
      %372 = sbr.rel (%p369) target = $region56
    $region55: #{residual_block_forward.4} parent=5 // pred_region
      %s373 = ssub.s32 %s17, 1
      %s374 = smul.u32 64, %s22
      %p375 = scmp.lt.s32.totalorder %s374, 191
      %s376 = scalar_select %p375, %s374, 191
      %s377 = smul.addr %s376, 8
      %s378 = scalar_lea.vmem %s0, %s377
      %p379 = pneg %p43
      %p380 = pneg %p40
      %s381 = sadd.s32 %s22, 1
      %s382 = smul.u32 64, %s381
      %p383 = scmp.lt.s32.totalorder %s382, 191
      %s384 = scalar_select %p383, %s382, 191
      %s385 = smul.addr %s384, 8
      %s386 = scalar_lea.vmem %s1, %s385
      %p387 = pneg %p71
      %p388 = pneg %p68
      %s389 = smul.u32 64, %s22
      %p390 = scmp.lt.s32.totalorder %s389, 191
      %s391 = scalar_select %p390, %s389, 191
      %s392 = smul.addr %s391, 8
      %s393 = scalar_lea.vmem %s2, %s392
      %p394 = pneg %p97
      %p395 = pneg %p94
      %s396 = sadd.s32 %s22, 1
      %s397 = smul.u32 64, %s396
      %p398 = scmp.lt.s32.totalorder %s397, 191
      %s399 = scalar_select %p398, %s397, 191
      %s400 = smul.addr %s399, 8
      %s401 = scalar_lea.vmem %s3, %s400
      %p402 = pneg %p125
      %p403 = pneg %p122
      %s404 = smul.u32 64, %s22
      %p405 = scmp.lt.s32.totalorder %s404, 127
      %s406 = scalar_select %p405, %s404, 127
      %s407 = smul.addr %s406, 4
      %s408 = scalar_lea.vmem %s4, %s407
      %p409 = pneg %p151
      %p410 = pneg %p148
      %p411 = pneg %p172
      %p412 = pneg %p169
      %p413 = pneg %p193
      %p414 = pneg %p190
      %p415 = pneg %p214
      %p416 = pneg %p211
      %p417 = pneg %p235
      %p418 = pneg %p232
      %p419 = pneg %p261
      %p420 = pneg %p258
      %s421 = smul.u32 64, %s22
      %p422 = scmp.lt.s32.totalorder %s421, 127
      %s423 = scalar_select %p422, %s421, 127
      %s424 = smul.addr %s423, 8
      %s425 = scalar_lea.vmem %s9, %s424
      %p426 = pneg %p287
      %p427 = pneg %p284
      %p428 = scmp.lt.s32.totalorder %s22, 1
      %s429 = scalar_select %p428, %s22, 1
      %s430 = smul.addr %s429, 2
      %s431 = scalar_lea.vmem %s10, %s430
      %s432 = smul.u32 64, %s22
      %p433 = scmp.lt.s32.totalorder %s432, 191
      %s434 = scalar_select %p433, %s432, 191
      %s435 = smul.addr %s434, 8
      %s436 = scalar_lea.vmem %s0, %s435
      %s437 = smul.u32 64, %s22
      %s438 = sadd.s32 %s22, 1
      %s439 = smul.u32 64, %s438
      %p440 = scmp.lt.s32.totalorder %s439, 191
      %s441 = scalar_select %p440, %s439, 191
      %s442 = smul.addr %s441, 8
      %s443 = scalar_lea.vmem %s1, %s442
      %s444 = sadd.s32 %s22, 1
      %s445 = smul.u32 64, %s444
      %s446 = smul.u32 64, %s22
      %p447 = scmp.lt.s32.totalorder %s446, 191
      %s448 = scalar_select %p447, %s446, 191
      %s449 = smul.addr %s448, 8
      %s450 = scalar_lea.vmem %s2, %s449
      %s451 = smul.u32 64, %s22
      %s452 = sadd.s32 %s22, 1
      %s453 = smul.u32 64, %s452
      %p454 = scmp.lt.s32.totalorder %s453, 191
      %s455 = scalar_select %p454, %s453, 191
      %s456 = smul.addr %s455, 8
      %s457 = scalar_lea.vmem %s3, %s456
      %s458 = sadd.s32 %s22, 1
      %s459 = smul.u32 64, %s458
      %s460 = smul.u32 64, %s22
      %p461 = scmp.lt.s32.totalorder %s460, 127
      %s462 = scalar_select %p461, %s460, 127
      %s463 = smul.addr %s462, 4
      %s464 = scalar_lea.vmem %s4, %s463
      %s465 = smul.u32 64, %s22
      %s466 = smul.u32 64, %s22
      %p467 = scmp.lt.s32.totalorder %s466, 127
      %s468 = scalar_select %p467, %s466, 127
      %s469 = smul.addr %s468, 8
      %s470 = scalar_lea.vmem %s9, %s469
      %s471 = smul.u32 64, %s22
      %p472 = scmp.lt.s32.totalorder %s22, 1
      %s473 = scalar_select %p472, %s22, 1
      %s474 = smul.addr %s473, 2
      %s475 = scalar_lea.vmem %s10, %s474
      %v477 = vld [vmem:[%s436] sm:$0xff]
      %v478 = vld [vmem:[%s436 + $0x8] sm:$0xff]
      %v479 = vld [vmem:[%s436 + $0x10] sm:$0xff]
      %v480 = vld [vmem:[%s436 + $0x18] sm:$0xff]
      %v481 = vld [vmem:[%s436 + $0x20] sm:$0xff]
      %v482 = vld [vmem:[%s436 + $0x28] sm:$0xff]
      %v483 = vld [vmem:[%s436 + $0x30] sm:$0xff]
      %v484 = vld [vmem:[%s436 + $0x38] sm:$0xff]
      %v485 = vld [vmem:[%s436 + $0x40] sm:$0xff]
      %v486 = vld [vmem:[%s436 + $0x48] sm:$0xff]
      %v487 = vld [vmem:[%s436 + $0x50] sm:$0xff]
      %v488 = vld [vmem:[%s436 + $0x58] sm:$0xff]
      %v489 = vld [vmem:[%s436 + $0x60] sm:$0xff]
      %v490 = vld [vmem:[%s436 + $0x68] sm:$0xff]
      %v491 = vld [vmem:[%s436 + $0x70] sm:$0xff]
      %v492 = vld [vmem:[%s436 + $0x78] sm:$0xff]
      %v493 = vld [vmem:[%s436 + $0x80] sm:$0xff]
      %v494 = vld [vmem:[%s436 + $0x88] sm:$0xff]
      %v495 = vld [vmem:[%s436 + $0x90] sm:$0xff]
      %v496 = vld [vmem:[%s436 + $0x98] sm:$0xff]
      %v497 = vld [vmem:[%s436 + $0xa0] sm:$0xff]
      %v498 = vld [vmem:[%s436 + $0xa8] sm:$0xff]
      %v499 = vld [vmem:[%s436 + $0xb0] sm:$0xff]
      %v500 = vld [vmem:[%s436 + $0xb8] sm:$0xff]
      %v501 = vld [vmem:[%s436 + $0xc0] sm:$0xff]
      %v502 = vld [vmem:[%s436 + $0xc8] sm:$0xff]
      %v503 = vld [vmem:[%s436 + $0xd0] sm:$0xff]
      %v504 = vld [vmem:[%s436 + $0xd8] sm:$0xff]
      %v505 = vld [vmem:[%s436 + $0xe0] sm:$0xff]
      %v506 = vld [vmem:[%s436 + $0xe8] sm:$0xff]
      %v507 = vld [vmem:[%s436 + $0xf0] sm:$0xff]
      %v508 = vld [vmem:[%s436 + $0xf8] sm:$0xff]
      %v509 = vld [vmem:[%s436 + $0x100] sm:$0xff]
      %v510 = vld [vmem:[%s436 + $0x108] sm:$0xff]
      %v511 = vld [vmem:[%s436 + $0x110] sm:$0xff]
      %v512 = vld [vmem:[%s436 + $0x118] sm:$0xff]
      %v513 = vld [vmem:[%s436 + $0x120] sm:$0xff]
      %v514 = vld [vmem:[%s436 + $0x128] sm:$0xff]
      %v515 = vld [vmem:[%s436 + $0x130] sm:$0xff]
      %v516 = vld [vmem:[%s436 + $0x138] sm:$0xff]
      %v517 = vld [vmem:[%s436 + $0x140] sm:$0xff]
      %v518 = vld [vmem:[%s436 + $0x148] sm:$0xff]
      %v519 = vld [vmem:[%s436 + $0x150] sm:$0xff]
      %v520 = vld [vmem:[%s436 + $0x158] sm:$0xff]
      %v521 = vld [vmem:[%s436 + $0x160] sm:$0xff]
      %v522 = vld [vmem:[%s436 + $0x168] sm:$0xff]
      %v523 = vld [vmem:[%s436 + $0x170] sm:$0xff]
      %v524 = vld [vmem:[%s436 + $0x178] sm:$0xff]
      %v525 = vld [vmem:[%s436 + $0x180] sm:$0xff]
      %v526 = vld [vmem:[%s436 + $0x188] sm:$0xff]
      %v527 = vld [vmem:[%s436 + $0x190] sm:$0xff]
      %v528 = vld [vmem:[%s436 + $0x198] sm:$0xff]
      %v529 = vld [vmem:[%s436 + $0x1a0] sm:$0xff]
      %v530 = vld [vmem:[%s436 + $0x1a8] sm:$0xff]
      %v531 = vld [vmem:[%s436 + $0x1b0] sm:$0xff]
      %v532 = vld [vmem:[%s436 + $0x1b8] sm:$0xff]
      %v533 = vld [vmem:[%s436 + $0x1c0] sm:$0xff]
      %v534 = vld [vmem:[%s436 + $0x1c8] sm:$0xff]
      %v535 = vld [vmem:[%s436 + $0x1d0] sm:$0xff]
      %v536 = vld [vmem:[%s436 + $0x1d8] sm:$0xff]
      %v537 = vld [vmem:[%s436 + $0x1e0] sm:$0xff]
      %v538 = vld [vmem:[%s436 + $0x1e8] sm:$0xff]
      %v539 = vld [vmem:[%s436 + $0x1f0] sm:$0xff]
      %v540 = vld [vmem:[%s436 + $0x1f8] sm:$0xff]
      %v541 = vld [vmem:[%s443] sm:$0xff]
      %v542 = vld [vmem:[%s443 + $0x8] sm:$0xff]
      %v543 = vld [vmem:[%s443 + $0x10] sm:$0xff]
      %v544 = vld [vmem:[%s443 + $0x18] sm:$0xff]
      %v545 = vld [vmem:[%s443 + $0x20] sm:$0xff]
      %v546 = vld [vmem:[%s443 + $0x28] sm:$0xff]
      %v547 = vld [vmem:[%s450] sm:$0xff]
      %v548 = vld [vmem:[%s450 + $0x8] sm:$0xff]
      %v549 = vld [vmem:[%s450 + $0x10] sm:$0xff]
      %v550 = vld [vmem:[%s450 + $0x18] sm:$0xff]
      %v551 = vld [vmem:[%s450 + $0x20] sm:$0xff]
      %v552 = vld [vmem:[%s450 + $0x28] sm:$0xff]
      %v553 = vld [vmem:[%s450 + $0x30] sm:$0xff]
      %v554 = vld [vmem:[%s450 + $0x38] sm:$0xff]
      %v555 = vld [vmem:[%s450 + $0x40] sm:$0xff]
      %v556 = vld [vmem:[%s450 + $0x48] sm:$0xff]
      %v557 = vld [vmem:[%s450 + $0x50] sm:$0xff]
      %v558 = vld [vmem:[%s450 + $0x58] sm:$0xff]
      %v559 = vld [vmem:[%s450 + $0x60] sm:$0xff]
      %v560 = vld [vmem:[%s450 + $0x68] sm:$0xff]
      %v561 = vld [vmem:[%s450 + $0x70] sm:$0xff]
      %v562 = vld [vmem:[%s450 + $0x78] sm:$0xff]
      %v563 = vld [vmem:[%s450 + $0x80] sm:$0xff]
      %v564 = vld [vmem:[%s450 + $0x88] sm:$0xff]
      %v565 = vld [vmem:[%s450 + $0x90] sm:$0xff]
      %v566 = vld [vmem:[%s450 + $0x98] sm:$0xff]
      %v567 = vld [vmem:[%s450 + $0xa0] sm:$0xff]
      %v568 = vld [vmem:[%s450 + $0xa8] sm:$0xff]
      %v569 = vld [vmem:[%s450 + $0xb0] sm:$0xff]
      %v570 = vld [vmem:[%s450 + $0xb8] sm:$0xff]
      %v571 = vld [vmem:[%s450 + $0xc0] sm:$0xff]
      %v572 = vld [vmem:[%s450 + $0xc8] sm:$0xff]
      %v573 = vld [vmem:[%s450 + $0xd0] sm:$0xff]
      %v574 = vld [vmem:[%s450 + $0xd8] sm:$0xff]
      %v575 = vld [vmem:[%s450 + $0xe0] sm:$0xff]
      %v576 = vld [vmem:[%s450 + $0xe8] sm:$0xff]
      %v577 = vld [vmem:[%s450 + $0xf0] sm:$0xff]
      %v578 = vld [vmem:[%s450 + $0xf8] sm:$0xff]
      %v579 = vld [vmem:[%s450 + $0x100] sm:$0xff]
      %v580 = vld [vmem:[%s450 + $0x108] sm:$0xff]
      %v581 = vld [vmem:[%s450 + $0x110] sm:$0xff]
      %v582 = vld [vmem:[%s450 + $0x118] sm:$0xff]
      %v583 = vld [vmem:[%s450 + $0x120] sm:$0xff]
      %v584 = vld [vmem:[%s450 + $0x128] sm:$0xff]
      %v585 = vld [vmem:[%s450 + $0x130] sm:$0xff]
      %v586 = vld [vmem:[%s450 + $0x138] sm:$0xff]
      %v587 = vld [vmem:[%s450 + $0x140] sm:$0xff]
      %v588 = vld [vmem:[%s450 + $0x148] sm:$0xff]
      %v589 = vld [vmem:[%s450 + $0x150] sm:$0xff]
      %v590 = vld [vmem:[%s450 + $0x158] sm:$0xff]
      %v591 = vld [vmem:[%s450 + $0x160] sm:$0xff]
      %v592 = vld [vmem:[%s450 + $0x168] sm:$0xff]
      %v593 = vld [vmem:[%s450 + $0x170] sm:$0xff]
      %v594 = vld [vmem:[%s450 + $0x178] sm:$0xff]
      %v595 = vld [vmem:[%s450 + $0x180] sm:$0xff]
      %v596 = vld [vmem:[%s450 + $0x188] sm:$0xff]
      %v597 = vld [vmem:[%s450 + $0x190] sm:$0xff]
      %v598 = vld [vmem:[%s450 + $0x198] sm:$0xff]
      %v599 = vld [vmem:[%s450 + $0x1a0] sm:$0xff]
      %v600 = vld [vmem:[%s450 + $0x1a8] sm:$0xff]
      %v601 = vld [vmem:[%s450 + $0x1b0] sm:$0xff]
      %v602 = vld [vmem:[%s450 + $0x1b8] sm:$0xff]
      %v603 = vld [vmem:[%s450 + $0x1c0] sm:$0xff]
      %v604 = vld [vmem:[%s450 + $0x1c8] sm:$0xff]
      %v605 = vld [vmem:[%s450 + $0x1d0] sm:$0xff]
      %v606 = vld [vmem:[%s450 + $0x1d8] sm:$0xff]
      %v607 = vld [vmem:[%s450 + $0x1e0] sm:$0xff]
      %v608 = vld [vmem:[%s450 + $0x1e8] sm:$0xff]
      %v609 = vld [vmem:[%s450 + $0x1f0] sm:$0xff]
      %v610 = vld [vmem:[%s450 + $0x1f8] sm:$0xff]
      %v611 = vld [vmem:[%s457] sm:$0xff]
      %v612 = vld [vmem:[%s457 + $0x8] sm:$0xff]
      %v613 = vld [vmem:[%s457 + $0x10] sm:$0xff]
      %v614 = vld [vmem:[%s457 + $0x18] sm:$0xff]
      %v615 = vld [vmem:[%s457 + $0x20] sm:$0xff]
      %v616 = vld [vmem:[%s457 + $0x28] sm:$0xff]
      %v617 = vld [vmem:[%s7] sm:$0x1]
      %v619 = vlaneseq
      %v620 = vshrl.u32 %v619, 7
      %v621 = vsub.s32 0, %v620
      %v622 = vrot.slane %v617, %v621
      %v624 = vmul.f32 %v477, %v622
      %v625 = vmul.f32 %v478, %v622
      %v626 = vmul.f32 %v479, %v622
      %v627 = vmul.f32 %v480, %v622
      %v628 = vmul.f32 %v481, %v622
      %v629 = vmul.f32 %v482, %v622
      %v630 = vmul.f32 %v483, %v622
      %v631 = vmul.f32 %v484, %v622
      %v632 = vmul.f32 %v485, %v622
      %v633 = vmul.f32 %v486, %v622
      %v634 = vmul.f32 %v487, %v622
      %v635 = vmul.f32 %v488, %v622
      %v636 = vmul.f32 %v489, %v622
      %v637 = vmul.f32 %v490, %v622
      %v638 = vmul.f32 %v491, %v622
      %v639 = vmul.f32 %v492, %v622
      %v640 = vmul.f32 %v493, %v622
      %v641 = vmul.f32 %v494, %v622
      %v642 = vmul.f32 %v495, %v622
      %v643 = vmul.f32 %v496, %v622
      %v644 = vmul.f32 %v497, %v622
      %v645 = vmul.f32 %v498, %v622
      %v646 = vmul.f32 %v499, %v622
      %v647 = vmul.f32 %v500, %v622
      %v648 = vmul.f32 %v501, %v622
      %v649 = vmul.f32 %v502, %v622
      %v650 = vmul.f32 %v503, %v622
      %v651 = vmul.f32 %v504, %v622
      %v652 = vmul.f32 %v505, %v622
      %v653 = vmul.f32 %v506, %v622
      %v654 = vmul.f32 %v507, %v622
      %v655 = vmul.f32 %v508, %v622
      %v656 = vmul.f32 %v509, %v622
      %v657 = vmul.f32 %v510, %v622
      %v658 = vmul.f32 %v511, %v622
      %v659 = vmul.f32 %v512, %v622
      %v660 = vmul.f32 %v513, %v622
      %v661 = vmul.f32 %v514, %v622
      %v662 = vmul.f32 %v515, %v622
      %v663 = vmul.f32 %v516, %v622
      %v664 = vmul.f32 %v517, %v622
      %v665 = vmul.f32 %v518, %v622
      %v666 = vmul.f32 %v519, %v622
      %v667 = vmul.f32 %v520, %v622
      %v668 = vmul.f32 %v521, %v622
      %v669 = vmul.f32 %v522, %v622
      %v670 = vmul.f32 %v523, %v622
      %v671 = vmul.f32 %v524, %v622
      %v672 = vmul.f32 %v525, %v622
      %v673 = vmul.f32 %v526, %v622
      %v674 = vmul.f32 %v527, %v622
      %v675 = vmul.f32 %v528, %v622
      %v676 = vmul.f32 %v529, %v622
      %v677 = vmul.f32 %v530, %v622
      %v678 = vmul.f32 %v531, %v622
      %v679 = vmul.f32 %v532, %v622
      %v680 = vmul.f32 %v533, %v622
      %v681 = vmul.f32 %v534, %v622
      %v682 = vmul.f32 %v535, %v622
      %v683 = vmul.f32 %v536, %v622
      %v684 = vmul.f32 %v537, %v622
      %v685 = vmul.f32 %v538, %v622
      %v686 = vmul.f32 %v539, %v622
      %v687 = vmul.f32 %v540, %v622
      %v688 = vmul.f32 %v541, %v622
      %v689 = vmul.f32 %v542, %v622
      %v690 = vmul.f32 %v543, %v622
      %v691 = vmul.f32 %v544, %v622
      %v692 = vmul.f32 %v545, %v622
      %v693 = vmul.f32 %v546, %v622
      %v694 = vld [vmem:[%s8] sm:$0x1]
      %v696 = vlaneseq
      %v697 = vshrl.u32 %v696, 7
      %v698 = vsub.s32 0, %v697
      %v699 = vrot.slane %v694, %v698
      %v701 = vadd.f32 %v624, %v699
      %v702 = vadd.f32 %v625, %v699
      %v703 = vadd.f32 %v626, %v699
      %v704 = vadd.f32 %v627, %v699
      %v705 = vadd.f32 %v628, %v699
      %v706 = vadd.f32 %v629, %v699
      %v707 = vadd.f32 %v630, %v699
      %v708 = vadd.f32 %v631, %v699
      %v709 = vadd.f32 %v632, %v699
      %v710 = vadd.f32 %v633, %v699
      %v711 = vadd.f32 %v634, %v699
      %v712 = vadd.f32 %v635, %v699
      %v713 = vadd.f32 %v636, %v699
      %v714 = vadd.f32 %v637, %v699
      %v715 = vadd.f32 %v638, %v699
      %v716 = vadd.f32 %v639, %v699
      %v717 = vadd.f32 %v640, %v699
      %v718 = vadd.f32 %v641, %v699
      %v719 = vadd.f32 %v642, %v699
      %v720 = vadd.f32 %v643, %v699
      %v721 = vadd.f32 %v644, %v699
      %v722 = vadd.f32 %v645, %v699
      %v723 = vadd.f32 %v646, %v699
      %v724 = vadd.f32 %v647, %v699
      %v725 = vadd.f32 %v648, %v699
      %v726 = vadd.f32 %v649, %v699
      %v727 = vadd.f32 %v650, %v699
      %v728 = vadd.f32 %v651, %v699
      %v729 = vadd.f32 %v652, %v699
      %v730 = vadd.f32 %v653, %v699
      %v731 = vadd.f32 %v654, %v699
      %v732 = vadd.f32 %v655, %v699
      %v733 = vadd.f32 %v656, %v699
      %v734 = vadd.f32 %v657, %v699
      %v735 = vadd.f32 %v658, %v699
      %v736 = vadd.f32 %v659, %v699
      %v737 = vadd.f32 %v660, %v699
      %v738 = vadd.f32 %v661, %v699
      %v739 = vadd.f32 %v662, %v699
      %v740 = vadd.f32 %v663, %v699
      %v741 = vadd.f32 %v664, %v699
      %v742 = vadd.f32 %v665, %v699
      %v743 = vadd.f32 %v666, %v699
      %v744 = vadd.f32 %v667, %v699
      %v745 = vadd.f32 %v668, %v699
      %v746 = vadd.f32 %v669, %v699
      %v747 = vadd.f32 %v670, %v699
      %v748 = vadd.f32 %v671, %v699
      %v749 = vadd.f32 %v672, %v699
      %v750 = vadd.f32 %v673, %v699
      %v751 = vadd.f32 %v674, %v699
      %v752 = vadd.f32 %v675, %v699
      %v753 = vadd.f32 %v676, %v699
      %v754 = vadd.f32 %v677, %v699
      %v755 = vadd.f32 %v678, %v699
      %v756 = vadd.f32 %v679, %v699
      %v757 = vadd.f32 %v680, %v699
      %v758 = vadd.f32 %v681, %v699
      %v759 = vadd.f32 %v682, %v699
      %v760 = vadd.f32 %v683, %v699
      %v761 = vadd.f32 %v684, %v699
      %v762 = vadd.f32 %v685, %v699
      %v763 = vadd.f32 %v686, %v699
      %v764 = vadd.f32 %v687, %v699
      %v765 = vadd.f32 %v688, %v699
      %v766 = vadd.f32 %v689, %v699
      %v767 = vadd.f32 %v690, %v699
      %v768 = vadd.f32 %v691, %v699
      %v769 = vadd.f32 %v692, %v699
      %v770 = vadd.f32 %v693, %v699
      %v771 = vmax.f32 %v701, 0.0
      %v772 = vmax.f32 %v702, 0.0
      %v773 = vmax.f32 %v703, 0.0
      %v774 = vmax.f32 %v704, 0.0
      %v775 = vmax.f32 %v705, 0.0
      %v776 = vmax.f32 %v706, 0.0
      %v777 = vmax.f32 %v707, 0.0
      %v778 = vmax.f32 %v708, 0.0
      %v779 = vmax.f32 %v709, 0.0
      %v780 = vmax.f32 %v710, 0.0
      %v781 = vmax.f32 %v711, 0.0
      %v782 = vmax.f32 %v712, 0.0
      %v783 = vmax.f32 %v713, 0.0
      %v784 = vmax.f32 %v714, 0.0
      %v785 = vmax.f32 %v715, 0.0
      %v786 = vmax.f32 %v716, 0.0
      %v787 = vmax.f32 %v717, 0.0
      %v788 = vmax.f32 %v718, 0.0
      %v789 = vmax.f32 %v719, 0.0
      %v790 = vmax.f32 %v720, 0.0
      %v791 = vmax.f32 %v721, 0.0
      %v792 = vmax.f32 %v722, 0.0
      %v793 = vmax.f32 %v723, 0.0
      %v794 = vmax.f32 %v724, 0.0
      %v795 = vmax.f32 %v725, 0.0
      %v796 = vmax.f32 %v726, 0.0
      %v797 = vmax.f32 %v727, 0.0
      %v798 = vmax.f32 %v728, 0.0
      %v799 = vmax.f32 %v729, 0.0
      %v800 = vmax.f32 %v730, 0.0
      %v801 = vmax.f32 %v731, 0.0
      %v802 = vmax.f32 %v732, 0.0
      %v803 = vmax.f32 %v733, 0.0
      %v804 = vmax.f32 %v734, 0.0
      %v805 = vmax.f32 %v735, 0.0
      %v806 = vmax.f32 %v736, 0.0
      %v807 = vmax.f32 %v737, 0.0
      %v808 = vmax.f32 %v738, 0.0
      %v809 = vmax.f32 %v739, 0.0
      %v810 = vmax.f32 %v740, 0.0
      %v811 = vmax.f32 %v741, 0.0
      %v812 = vmax.f32 %v742, 0.0
      %v813 = vmax.f32 %v743, 0.0
      %v814 = vmax.f32 %v744, 0.0
      %v815 = vmax.f32 %v745, 0.0
      %v816 = vmax.f32 %v746, 0.0
      %v817 = vmax.f32 %v747, 0.0
      %v818 = vmax.f32 %v748, 0.0
      %v819 = vmax.f32 %v749, 0.0
      %v820 = vmax.f32 %v750, 0.0
      %v821 = vmax.f32 %v751, 0.0
      %v822 = vmax.f32 %v752, 0.0
      %v823 = vmax.f32 %v753, 0.0
      %v824 = vmax.f32 %v754, 0.0
      %v825 = vmax.f32 %v755, 0.0
      %v826 = vmax.f32 %v756, 0.0
      %v827 = vmax.f32 %v757, 0.0
      %v828 = vmax.f32 %v758, 0.0
      %v829 = vmax.f32 %v759, 0.0
      %v830 = vmax.f32 %v760, 0.0
      %v831 = vmax.f32 %v761, 0.0
      %v832 = vmax.f32 %v762, 0.0
      %v833 = vmax.f32 %v763, 0.0
      %v834 = vmax.f32 %v764, 0.0
      %v835 = vmax.f32 %v765, 0.0
      %v836 = vmax.f32 %v766, 0.0
      %v837 = vmax.f32 %v767, 0.0
      %v838 = vmax.f32 %v768, 0.0
      %v839 = vmax.f32 %v769, 0.0
      %v840 = vmax.f32 %v770, 0.0
      %vm841 = vcmp.gt.f32.partialorder %v547, 0.5
      %vm842 = vcmp.gt.f32.partialorder %v548, 0.5
      %vm843 = vcmp.gt.f32.partialorder %v549, 0.5
      %vm844 = vcmp.gt.f32.partialorder %v550, 0.5
      %vm845 = vcmp.gt.f32.partialorder %v551, 0.5
      %vm846 = vcmp.gt.f32.partialorder %v552, 0.5
      %vm847 = vcmp.gt.f32.partialorder %v553, 0.5
      %vm848 = vcmp.gt.f32.partialorder %v554, 0.5
      %vm849 = vcmp.gt.f32.partialorder %v555, 0.5
      %vm850 = vcmp.gt.f32.partialorder %v556, 0.5
      %vm851 = vcmp.gt.f32.partialorder %v557, 0.5
      %vm852 = vcmp.gt.f32.partialorder %v558, 0.5
      %vm853 = vcmp.gt.f32.partialorder %v559, 0.5
      %vm854 = vcmp.gt.f32.partialorder %v560, 0.5
      %vm855 = vcmp.gt.f32.partialorder %v561, 0.5
      %vm856 = vcmp.gt.f32.partialorder %v562, 0.5
      %vm857 = vcmp.gt.f32.partialorder %v563, 0.5
      %vm858 = vcmp.gt.f32.partialorder %v564, 0.5
      %vm859 = vcmp.gt.f32.partialorder %v565, 0.5
      %vm860 = vcmp.gt.f32.partialorder %v566, 0.5
      %vm861 = vcmp.gt.f32.partialorder %v567, 0.5
      %vm862 = vcmp.gt.f32.partialorder %v568, 0.5
      %vm863 = vcmp.gt.f32.partialorder %v569, 0.5
      %vm864 = vcmp.gt.f32.partialorder %v570, 0.5
      %vm865 = vcmp.gt.f32.partialorder %v571, 0.5
      %vm866 = vcmp.gt.f32.partialorder %v572, 0.5
      %vm867 = vcmp.gt.f32.partialorder %v573, 0.5
      %vm868 = vcmp.gt.f32.partialorder %v574, 0.5
      %vm869 = vcmp.gt.f32.partialorder %v575, 0.5
      %vm870 = vcmp.gt.f32.partialorder %v576, 0.5
      %vm871 = vcmp.gt.f32.partialorder %v577, 0.5
      %vm872 = vcmp.gt.f32.partialorder %v578, 0.5
      %vm873 = vcmp.gt.f32.partialorder %v579, 0.5
      %vm874 = vcmp.gt.f32.partialorder %v580, 0.5
      %vm875 = vcmp.gt.f32.partialorder %v581, 0.5
      %vm876 = vcmp.gt.f32.partialorder %v582, 0.5
      %vm877 = vcmp.gt.f32.partialorder %v583, 0.5
      %vm878 = vcmp.gt.f32.partialorder %v584, 0.5
      %vm879 = vcmp.gt.f32.partialorder %v585, 0.5
      %vm880 = vcmp.gt.f32.partialorder %v586, 0.5
      %vm881 = vcmp.gt.f32.partialorder %v587, 0.5
      %vm882 = vcmp.gt.f32.partialorder %v588, 0.5
      %vm883 = vcmp.gt.f32.partialorder %v589, 0.5
      %vm884 = vcmp.gt.f32.partialorder %v590, 0.5
      %vm885 = vcmp.gt.f32.partialorder %v591, 0.5
      %vm886 = vcmp.gt.f32.partialorder %v592, 0.5
      %vm887 = vcmp.gt.f32.partialorder %v593, 0.5
      %vm888 = vcmp.gt.f32.partialorder %v594, 0.5
      %vm889 = vcmp.gt.f32.partialorder %v595, 0.5
      %vm890 = vcmp.gt.f32.partialorder %v596, 0.5
      %vm891 = vcmp.gt.f32.partialorder %v597, 0.5
      %vm892 = vcmp.gt.f32.partialorder %v598, 0.5
      %vm893 = vcmp.gt.f32.partialorder %v599, 0.5
      %vm894 = vcmp.gt.f32.partialorder %v600, 0.5
      %vm895 = vcmp.gt.f32.partialorder %v601, 0.5
      %vm896 = vcmp.gt.f32.partialorder %v602, 0.5
      %vm897 = vcmp.gt.f32.partialorder %v603, 0.5
      %vm898 = vcmp.gt.f32.partialorder %v604, 0.5
      %vm899 = vcmp.gt.f32.partialorder %v605, 0.5
      %vm900 = vcmp.gt.f32.partialorder %v606, 0.5
      %vm901 = vcmp.gt.f32.partialorder %v607, 0.5
      %vm902 = vcmp.gt.f32.partialorder %v608, 0.5
      %vm903 = vcmp.gt.f32.partialorder %v609, 0.5
      %vm904 = vcmp.gt.f32.partialorder %v610, 0.5
      %vm905 = vcmp.gt.f32.partialorder %v611, 0.5
      %vm906 = vcmp.gt.f32.partialorder %v612, 0.5
      %vm907 = vcmp.gt.f32.partialorder %v613, 0.5
      %vm908 = vcmp.gt.f32.partialorder %v614, 0.5
      %vm909 = vcmp.gt.f32.partialorder %v615, 0.5
      %vm910 = vcmp.gt.f32.partialorder %v616, 0.5
      %v911 = vsel %vm841, 1, 0
      %v912 = vsel %vm842, 1, 0
      %v913 = vsel %vm843, 1, 0
      %v914 = vsel %vm844, 1, 0
      %v915 = vsel %vm845, 1, 0
      %v916 = vsel %vm846, 1, 0
      %v917 = vsel %vm847, 1, 0
      %v918 = vsel %vm848, 1, 0
      %v919 = vsel %vm849, 1, 0
      %v920 = vsel %vm850, 1, 0
      %v921 = vsel %vm851, 1, 0
      %v922 = vsel %vm852, 1, 0
      %v923 = vsel %vm853, 1, 0
      %v924 = vsel %vm854, 1, 0
      %v925 = vsel %vm855, 1, 0
      %v926 = vsel %vm856, 1, 0
      %v927 = vsel %vm857, 1, 0
      %v928 = vsel %vm858, 1, 0
      %v929 = vsel %vm859, 1, 0
      %v930 = vsel %vm860, 1, 0
      %v931 = vsel %vm861, 1, 0
      %v932 = vsel %vm862, 1, 0
      %v933 = vsel %vm863, 1, 0
      %v934 = vsel %vm864, 1, 0
      %v935 = vsel %vm865, 1, 0
      %v936 = vsel %vm866, 1, 0
      %v937 = vsel %vm867, 1, 0
      %v938 = vsel %vm868, 1, 0
      %v939 = vsel %vm869, 1, 0
      %v940 = vsel %vm870, 1, 0
      %v941 = vsel %vm871, 1, 0
      %v942 = vsel %vm872, 1, 0
      %v943 = vsel %vm873, 1, 0
      %v944 = vsel %vm874, 1, 0
      %v945 = vsel %vm875, 1, 0
      %v946 = vsel %vm876, 1, 0
      %v947 = vsel %vm877, 1, 0
      %v948 = vsel %vm878, 1, 0
      %v949 = vsel %vm879, 1, 0
      %v950 = vsel %vm880, 1, 0
      %v951 = vsel %vm881, 1, 0
      %v952 = vsel %vm882, 1, 0
      %v953 = vsel %vm883, 1, 0
      %v954 = vsel %vm884, 1, 0
      %v955 = vsel %vm885, 1, 0
      %v956 = vsel %vm886, 1, 0
      %v957 = vsel %vm887, 1, 0
      %v958 = vsel %vm888, 1, 0
      %v959 = vsel %vm889, 1, 0
      %v960 = vsel %vm890, 1, 0
      %v961 = vsel %vm891, 1, 0
      %v962 = vsel %vm892, 1, 0
      %v963 = vsel %vm893, 1, 0
      %v964 = vsel %vm894, 1, 0
      %v965 = vsel %vm895, 1, 0
      %v966 = vsel %vm896, 1, 0
      %v967 = vsel %vm897, 1, 0
      %v968 = vsel %vm898, 1, 0
      %v969 = vsel %vm899, 1, 0
      %v970 = vsel %vm900, 1, 0
      %v971 = vsel %vm901, 1, 0
      %v972 = vsel %vm902, 1, 0
      %v973 = vsel %vm903, 1, 0
      %v974 = vsel %vm904, 1, 0
      %v975 = vsel %vm905, 1, 0
      %v976 = vsel %vm906, 1, 0
      %v977 = vsel %vm907, 1, 0
      %v978 = vsel %vm908, 1, 0
      %v979 = vsel %vm909, 1, 0
      %v980 = vsel %vm910, 1, 0
      %981 = vset.pattern.permute.xlu0 0
      %982 = vperm.xlu0 %981, %v911
      %v983 = vpop.permute.xlu0 %982
      %984 = vset.pattern.permute.xlu0 0
      %985 = vperm.xlu0 %984, %v912
      %v986 = vpop.permute.xlu0 %985
      %987 = vset.pattern.permute.xlu0 0
      %988 = vperm.xlu0 %987, %v913
      %v989 = vpop.permute.xlu0 %988
      %990 = vset.pattern.permute.xlu0 0
      %991 = vperm.xlu0 %990, %v914
      %v992 = vpop.permute.xlu0 %991
      %993 = vset.pattern.permute.xlu0 0
      %994 = vperm.xlu0 %993, %v915
      %v995 = vpop.permute.xlu0 %994
      %996 = vset.pattern.permute.xlu0 0
      %997 = vperm.xlu0 %996, %v916
      %v998 = vpop.permute.xlu0 %997
      %999 = vset.pattern.permute.xlu0 0
      %1000 = vperm.xlu0 %999, %v917
      %v1001 = vpop.permute.xlu0 %1000
      %1002 = vset.pattern.permute.xlu0 0
      %1003 = vperm.xlu0 %1002, %v918
      %v1004 = vpop.permute.xlu0 %1003
      %1005 = vset.pattern.permute.xlu0 0
      %1006 = vperm.xlu0 %1005, %v919
      %v1007 = vpop.permute.xlu0 %1006
      %1008 = vset.pattern.permute.xlu0 0
      %1009 = vperm.xlu0 %1008, %v920
      %v1010 = vpop.permute.xlu0 %1009
      %1011 = vset.pattern.permute.xlu0 0
      %1012 = vperm.xlu0 %1011, %v921
      %v1013 = vpop.permute.xlu0 %1012
      %1014 = vset.pattern.permute.xlu0 0
      %1015 = vperm.xlu0 %1014, %v922
      %v1016 = vpop.permute.xlu0 %1015
      %1017 = vset.pattern.permute.xlu0 0
      %1018 = vperm.xlu0 %1017, %v923
      %v1019 = vpop.permute.xlu0 %1018
      %1020 = vset.pattern.permute.xlu0 0
      %1021 = vperm.xlu0 %1020, %v924
      %v1022 = vpop.permute.xlu0 %1021
      %1023 = vset.pattern.permute.xlu0 0
      %1024 = vperm.xlu0 %1023, %v925
      %v1025 = vpop.permute.xlu0 %1024
      %1026 = vset.pattern.permute.xlu0 0
      %1027 = vperm.xlu0 %1026, %v926
      %v1028 = vpop.permute.xlu0 %1027
      %1029 = vset.pattern.permute.xlu0 0
      %1030 = vperm.xlu0 %1029, %v927
      %v1031 = vpop.permute.xlu0 %1030
      %1032 = vset.pattern.permute.xlu0 0
      %1033 = vperm.xlu0 %1032, %v928
      %v1034 = vpop.permute.xlu0 %1033
      %1035 = vset.pattern.permute.xlu0 0
      %1036 = vperm.xlu0 %1035, %v929
      %v1037 = vpop.permute.xlu0 %1036
      %1038 = vset.pattern.permute.xlu0 0
      %1039 = vperm.xlu0 %1038, %v930
      %v1040 = vpop.permute.xlu0 %1039
      %1041 = vset.pattern.permute.xlu0 0
      %1042 = vperm.xlu0 %1041, %v931
      %v1043 = vpop.permute.xlu0 %1042
      %1044 = vset.pattern.permute.xlu0 0
      %1045 = vperm.xlu0 %1044, %v932
      %v1046 = vpop.permute.xlu0 %1045
      %1047 = vset.pattern.permute.xlu0 0
      %1048 = vperm.xlu0 %1047, %v933
      %v1049 = vpop.permute.xlu0 %1048
      %1050 = vset.pattern.permute.xlu0 0
      %1051 = vperm.xlu0 %1050, %v934
      %v1052 = vpop.permute.xlu0 %1051
      %1053 = vset.pattern.permute.xlu0 0
      %1054 = vperm.xlu0 %1053, %v935
      %v1055 = vpop.permute.xlu0 %1054
      %1056 = vset.pattern.permute.xlu0 0
      %1057 = vperm.xlu0 %1056, %v936
      %v1058 = vpop.permute.xlu0 %1057
      %1059 = vset.pattern.permute.xlu0 0
      %1060 = vperm.xlu0 %1059, %v937
      %v1061 = vpop.permute.xlu0 %1060
      %1062 = vset.pattern.permute.xlu0 0
      %1063 = vperm.xlu0 %1062, %v938
      %v1064 = vpop.permute.xlu0 %1063
      %1065 = vset.pattern.permute.xlu0 0
      %1066 = vperm.xlu0 %1065, %v939
      %v1067 = vpop.permute.xlu0 %1066
      %1068 = vset.pattern.permute.xlu0 0
      %1069 = vperm.xlu0 %1068, %v940
      %v1070 = vpop.permute.xlu0 %1069
      %1071 = vset.pattern.permute.xlu0 0
      %1072 = vperm.xlu0 %1071, %v941
      %v1073 = vpop.permute.xlu0 %1072
      %1074 = vset.pattern.permute.xlu0 0
      %1075 = vperm.xlu0 %1074, %v942
      %v1076 = vpop.permute.xlu0 %1075
      %1077 = vset.pattern.permute.xlu0 0
      %1078 = vperm.xlu0 %1077, %v943
      %v1079 = vpop.permute.xlu0 %1078
      %1080 = vset.pattern.permute.xlu0 0
      %1081 = vperm.xlu0 %1080, %v944
      %v1082 = vpop.permute.xlu0 %1081
      %1083 = vset.pattern.permute.xlu0 0
      %1084 = vperm.xlu0 %1083, %v945
      %v1085 = vpop.permute.xlu0 %1084
      %1086 = vset.pattern.permute.xlu0 0
      %1087 = vperm.xlu0 %1086, %v946
      %v1088 = vpop.permute.xlu0 %1087
      %1089 = vset.pattern.permute.xlu0 0
      %1090 = vperm.xlu0 %1089, %v947
      %v1091 = vpop.permute.xlu0 %1090
      %1092 = vset.pattern.permute.xlu0 0
      %1093 = vperm.xlu0 %1092, %v948
      %v1094 = vpop.permute.xlu0 %1093
      %1095 = vset.pattern.permute.xlu0 0
      %1096 = vperm.xlu0 %1095, %v949
      %v1097 = vpop.permute.xlu0 %1096
      %1098 = vset.pattern.permute.xlu0 0
      %1099 = vperm.xlu0 %1098, %v950
      %v1100 = vpop.permute.xlu0 %1099
      %1101 = vset.pattern.permute.xlu0 0
      %1102 = vperm.xlu0 %1101, %v951
      %v1103 = vpop.permute.xlu0 %1102
      %1104 = vset.pattern.permute.xlu0 0
      %1105 = vperm.xlu0 %1104, %v952
      %v1106 = vpop.permute.xlu0 %1105
      %1107 = vset.pattern.permute.xlu0 0
      %1108 = vperm.xlu0 %1107, %v953
      %v1109 = vpop.permute.xlu0 %1108
      %1110 = vset.pattern.permute.xlu0 0
      %1111 = vperm.xlu0 %1110, %v954
      %v1112 = vpop.permute.xlu0 %1111
      %1113 = vset.pattern.permute.xlu0 0
      %1114 = vperm.xlu0 %1113, %v955
      %v1115 = vpop.permute.xlu0 %1114
      %1116 = vset.pattern.permute.xlu0 0
      %1117 = vperm.xlu0 %1116, %v956
      %v1118 = vpop.permute.xlu0 %1117
      %1119 = vset.pattern.permute.xlu0 0
      %1120 = vperm.xlu0 %1119, %v957
      %v1121 = vpop.permute.xlu0 %1120
      %1122 = vset.pattern.permute.xlu0 0
      %1123 = vperm.xlu0 %1122, %v958
      %v1124 = vpop.permute.xlu0 %1123
      %1125 = vset.pattern.permute.xlu0 0
      %1126 = vperm.xlu0 %1125, %v959
      %v1127 = vpop.permute.xlu0 %1126
      %1128 = vset.pattern.permute.xlu0 0
      %1129 = vperm.xlu0 %1128, %v960
      %v1130 = vpop.permute.xlu0 %1129
      %1131 = vset.pattern.permute.xlu0 0
      %1132 = vperm.xlu0 %1131, %v961
      %v1133 = vpop.permute.xlu0 %1132
      %1134 = vset.pattern.permute.xlu0 0
      %1135 = vperm.xlu0 %1134, %v962
      %v1136 = vpop.permute.xlu0 %1135
      %1137 = vset.pattern.permute.xlu0 0
      %1138 = vperm.xlu0 %1137, %v963
      %v1139 = vpop.permute.xlu0 %1138
      %1140 = vset.pattern.permute.xlu0 0
      %1141 = vperm.xlu0 %1140, %v964
      %v1142 = vpop.permute.xlu0 %1141
      %1143 = vset.pattern.permute.xlu0 0
      %1144 = vperm.xlu0 %1143, %v965
      %v1145 = vpop.permute.xlu0 %1144
      %1146 = vset.pattern.permute.xlu0 0
      %1147 = vperm.xlu0 %1146, %v966
      %v1148 = vpop.permute.xlu0 %1147
      %1149 = vset.pattern.permute.xlu0 0
      %1150 = vperm.xlu0 %1149, %v967
      %v1151 = vpop.permute.xlu0 %1150
      %1152 = vset.pattern.permute.xlu0 0
      %1153 = vperm.xlu0 %1152, %v968
      %v1154 = vpop.permute.xlu0 %1153
      %1155 = vset.pattern.permute.xlu0 0
      %1156 = vperm.xlu0 %1155, %v969
      %v1157 = vpop.permute.xlu0 %1156
      %1158 = vset.pattern.permute.xlu0 0
      %1159 = vperm.xlu0 %1158, %v970
      %v1160 = vpop.permute.xlu0 %1159
      %1161 = vset.pattern.permute.xlu0 0
      %1162 = vperm.xlu0 %1161, %v971
      %v1163 = vpop.permute.xlu0 %1162
      %1164 = vset.pattern.permute.xlu0 0
      %1165 = vperm.xlu0 %1164, %v972
      %v1166 = vpop.permute.xlu0 %1165
      %1167 = vset.pattern.permute.xlu0 0
      %1168 = vperm.xlu0 %1167, %v973
      %v1169 = vpop.permute.xlu0 %1168
      %1170 = vset.pattern.permute.xlu0 0
      %1171 = vperm.xlu0 %1170, %v974
      %v1172 = vpop.permute.xlu0 %1171
      %1173 = vset.pattern.permute.xlu0 0
      %1174 = vperm.xlu0 %1173, %v975
      %v1175 = vpop.permute.xlu0 %1174
      %1176 = vset.pattern.permute.xlu0 0
      %1177 = vperm.xlu0 %1176, %v976
      %v1178 = vpop.permute.xlu0 %1177
      %1179 = vset.pattern.permute.xlu0 0
      %1180 = vperm.xlu0 %1179, %v977
      %v1181 = vpop.permute.xlu0 %1180
      %1182 = vset.pattern.permute.xlu0 0
      %1183 = vperm.xlu0 %1182, %v978
      %v1184 = vpop.permute.xlu0 %1183
      %1185 = vset.pattern.permute.xlu0 0
      %1186 = vperm.xlu0 %1185, %v979
      %v1187 = vpop.permute.xlu0 %1186
      %1188 = vset.pattern.permute.xlu0 0
      %1189 = vperm.xlu0 %1188, %v980
      %v1190 = vpop.permute.xlu0 %1189
      %vm1191 = vcmp.eq.s32.totalorder %v983, 1
      %vm1192 = vcmp.eq.s32.totalorder %v986, 1
      %vm1193 = vcmp.eq.s32.totalorder %v989, 1
      %vm1194 = vcmp.eq.s32.totalorder %v992, 1
      %vm1195 = vcmp.eq.s32.totalorder %v995, 1
      %vm1196 = vcmp.eq.s32.totalorder %v998, 1
      %vm1197 = vcmp.eq.s32.totalorder %v1001, 1
      %vm1198 = vcmp.eq.s32.totalorder %v1004, 1
      %vm1199 = vcmp.eq.s32.totalorder %v1007, 1
      %vm1200 = vcmp.eq.s32.totalorder %v1010, 1
      %vm1201 = vcmp.eq.s32.totalorder %v1013, 1
      %vm1202 = vcmp.eq.s32.totalorder %v1016, 1
      %vm1203 = vcmp.eq.s32.totalorder %v1019, 1
      %vm1204 = vcmp.eq.s32.totalorder %v1022, 1
      %vm1205 = vcmp.eq.s32.totalorder %v1025, 1
      %vm1206 = vcmp.eq.s32.totalorder %v1028, 1
      %vm1207 = vcmp.eq.s32.totalorder %v1031, 1
      %vm1208 = vcmp.eq.s32.totalorder %v1034, 1
      %vm1209 = vcmp.eq.s32.totalorder %v1037, 1
      %vm1210 = vcmp.eq.s32.totalorder %v1040, 1
      %vm1211 = vcmp.eq.s32.totalorder %v1043, 1
      %vm1212 = vcmp.eq.s32.totalorder %v1046, 1
      %vm1213 = vcmp.eq.s32.totalorder %v1049, 1
      %vm1214 = vcmp.eq.s32.totalorder %v1052, 1
      %vm1215 = vcmp.eq.s32.totalorder %v1055, 1
      %vm1216 = vcmp.eq.s32.totalorder %v1058, 1
      %vm1217 = vcmp.eq.s32.totalorder %v1061, 1
      %vm1218 = vcmp.eq.s32.totalorder %v1064, 1
      %vm1219 = vcmp.eq.s32.totalorder %v1067, 1
      %vm1220 = vcmp.eq.s32.totalorder %v1070, 1
      %vm1221 = vcmp.eq.s32.totalorder %v1073, 1
      %vm1222 = vcmp.eq.s32.totalorder %v1076, 1
      %vm1223 = vcmp.eq.s32.totalorder %v1079, 1
      %vm1224 = vcmp.eq.s32.totalorder %v1082, 1
      %vm1225 = vcmp.eq.s32.totalorder %v1085, 1
      %vm1226 = vcmp.eq.s32.totalorder %v1088, 1
      %vm1227 = vcmp.eq.s32.totalorder %v1091, 1
      %vm1228 = vcmp.eq.s32.totalorder %v1094, 1
      %vm1229 = vcmp.eq.s32.totalorder %v1097, 1
      %vm1230 = vcmp.eq.s32.totalorder %v1100, 1
      %vm1231 = vcmp.eq.s32.totalorder %v1103, 1
      %vm1232 = vcmp.eq.s32.totalorder %v1106, 1
      %vm1233 = vcmp.eq.s32.totalorder %v1109, 1
      %vm1234 = vcmp.eq.s32.totalorder %v1112, 1
      %vm1235 = vcmp.eq.s32.totalorder %v1115, 1
      %vm1236 = vcmp.eq.s32.totalorder %v1118, 1
      %vm1237 = vcmp.eq.s32.totalorder %v1121, 1
      %vm1238 = vcmp.eq.s32.totalorder %v1124, 1
      %vm1239 = vcmp.eq.s32.totalorder %v1127, 1
      %vm1240 = vcmp.eq.s32.totalorder %v1130, 1
      %vm1241 = vcmp.eq.s32.totalorder %v1133, 1
      %vm1242 = vcmp.eq.s32.totalorder %v1136, 1
      %vm1243 = vcmp.eq.s32.totalorder %v1139, 1
      %vm1244 = vcmp.eq.s32.totalorder %v1142, 1
      %vm1245 = vcmp.eq.s32.totalorder %v1145, 1
      %vm1246 = vcmp.eq.s32.totalorder %v1148, 1
      %vm1247 = vcmp.eq.s32.totalorder %v1151, 1
      %vm1248 = vcmp.eq.s32.totalorder %v1154, 1
      %vm1249 = vcmp.eq.s32.totalorder %v1157, 1
      %vm1250 = vcmp.eq.s32.totalorder %v1160, 1
      %vm1251 = vcmp.eq.s32.totalorder %v1163, 1
      %vm1252 = vcmp.eq.s32.totalorder %v1166, 1
      %vm1253 = vcmp.eq.s32.totalorder %v1169, 1
      %vm1254 = vcmp.eq.s32.totalorder %v1172, 1
      %vm1255 = vcmp.eq.s32.totalorder %v1175, 1
      %vm1256 = vcmp.eq.s32.totalorder %v1178, 1
      %vm1257 = vcmp.eq.s32.totalorder %v1181, 1
      %vm1258 = vcmp.eq.s32.totalorder %v1184, 1
      %vm1259 = vcmp.eq.s32.totalorder %v1187, 1
      %vm1260 = vcmp.eq.s32.totalorder %v1190, 1
      %v1261 = vsel %vm1191, %v771, 0.0
      %v1262 = vsel %vm1192, %v772, 0.0
      %v1263 = vsel %vm1193, %v773, 0.0
      %v1264 = vsel %vm1194, %v774, 0.0
      %v1265 = vsel %vm1195, %v775, 0.0
      %v1266 = vsel %vm1196, %v776, 0.0
      %v1267 = vsel %vm1197, %v777, 0.0
      %v1268 = vsel %vm1198, %v778, 0.0
      %v1269 = vsel %vm1199, %v779, 0.0
      %v1270 = vsel %vm1200, %v780, 0.0
      %v1271 = vsel %vm1201, %v781, 0.0
      %v1272 = vsel %vm1202, %v782, 0.0
      %v1273 = vsel %vm1203, %v783, 0.0
      %v1274 = vsel %vm1204, %v784, 0.0
      %v1275 = vsel %vm1205, %v785, 0.0
      %v1276 = vsel %vm1206, %v786, 0.0
      %v1277 = vsel %vm1207, %v787, 0.0
      %v1278 = vsel %vm1208, %v788, 0.0
      %v1279 = vsel %vm1209, %v789, 0.0
      %v1280 = vsel %vm1210, %v790, 0.0
      %v1281 = vsel %vm1211, %v791, 0.0
      %v1282 = vsel %vm1212, %v792, 0.0
      %v1283 = vsel %vm1213, %v793, 0.0
      %v1284 = vsel %vm1214, %v794, 0.0
      %v1285 = vsel %vm1215, %v795, 0.0
      %v1286 = vsel %vm1216, %v796, 0.0
      %v1287 = vsel %vm1217, %v797, 0.0
      %v1288 = vsel %vm1218, %v798, 0.0
      %v1289 = vsel %vm1219, %v799, 0.0
      %v1290 = vsel %vm1220, %v800, 0.0
      %v1291 = vsel %vm1221, %v801, 0.0
      %v1292 = vsel %vm1222, %v802, 0.0
      %v1293 = vsel %vm1223, %v803, 0.0
      %v1294 = vsel %vm1224, %v804, 0.0
      %v1295 = vsel %vm1225, %v805, 0.0
      %v1296 = vsel %vm1226, %v806, 0.0
      %v1297 = vsel %vm1227, %v807, 0.0
      %v1298 = vsel %vm1228, %v808, 0.0
      %v1299 = vsel %vm1229, %v809, 0.0
      %v1300 = vsel %vm1230, %v810, 0.0
      %v1301 = vsel %vm1231, %v811, 0.0
      %v1302 = vsel %vm1232, %v812, 0.0
      %v1303 = vsel %vm1233, %v813, 0.0
      %v1304 = vsel %vm1234, %v814, 0.0
      %v1305 = vsel %vm1235, %v815, 0.0
      %v1306 = vsel %vm1236, %v816, 0.0
      %v1307 = vsel %vm1237, %v817, 0.0
      %v1308 = vsel %vm1238, %v818, 0.0
      %v1309 = vsel %vm1239, %v819, 0.0
      %v1310 = vsel %vm1240, %v820, 0.0
      %v1311 = vsel %vm1241, %v821, 0.0
      %v1312 = vsel %vm1242, %v822, 0.0
      %v1313 = vsel %vm1243, %v823, 0.0
      %v1314 = vsel %vm1244, %v824, 0.0
      %v1315 = vsel %vm1245, %v825, 0.0
      %v1316 = vsel %vm1246, %v826, 0.0
      %v1317 = vsel %vm1247, %v827, 0.0
      %v1318 = vsel %vm1248, %v828, 0.0
      %v1319 = vsel %vm1249, %v829, 0.0
      %v1320 = vsel %vm1250, %v830, 0.0
      %v1321 = vsel %vm1251, %v831, 0.0
      %v1322 = vsel %vm1252, %v832, 0.0
      %v1323 = vsel %vm1253, %v833, 0.0
      %v1324 = vsel %vm1254, %v834, 0.0
      %v1325 = vsel %vm1255, %v835, 0.0
      %v1326 = vsel %vm1256, %v836, 0.0
      %v1327 = vsel %vm1257, %v837, 0.0
      %v1328 = vsel %vm1258, %v838, 0.0
      %v1329 = vsel %vm1259, %v839, 0.0
      %v1330 = vsel %vm1260, %v840, 0.0
      %v1331 = vpack.c.bf16 %v1262, %v1261
      %v1332 = vpack.c.bf16 %v1264, %v1263
      %v1333 = vpack.c.bf16 %v1266, %v1265
      %v1334 = vpack.c.bf16 %v1268, %v1267
      %v1335 = vpack.c.bf16 %v1270, %v1269
      %v1336 = vpack.c.bf16 %v1272, %v1271
      %v1337 = vpack.c.bf16 %v1274, %v1273
      %v1338 = vpack.c.bf16 %v1276, %v1275
      %v1339 = vpack.c.bf16 %v1278, %v1277
      %v1340 = vpack.c.bf16 %v1280, %v1279
      %v1341 = vpack.c.bf16 %v1282, %v1281
      %v1342 = vpack.c.bf16 %v1284, %v1283
      %v1343 = vpack.c.bf16 %v1286, %v1285
      %v1344 = vpack.c.bf16 %v1288, %v1287
      %v1345 = vpack.c.bf16 %v1290, %v1289
      %v1346 = vpack.c.bf16 %v1292, %v1291
      %v1347 = vpack.c.bf16 %v1294, %v1293
      %v1348 = vpack.c.bf16 %v1296, %v1295
      %v1349 = vpack.c.bf16 %v1298, %v1297
      %v1350 = vpack.c.bf16 %v1300, %v1299
      %v1351 = vpack.c.bf16 %v1302, %v1301
      %v1352 = vpack.c.bf16 %v1304, %v1303
      %v1353 = vpack.c.bf16 %v1306, %v1305
      %v1354 = vpack.c.bf16 %v1308, %v1307
      %v1355 = vpack.c.bf16 %v1310, %v1309
      %v1356 = vpack.c.bf16 %v1312, %v1311
      %v1357 = vpack.c.bf16 %v1314, %v1313
      %v1358 = vpack.c.bf16 %v1316, %v1315
      %v1359 = vpack.c.bf16 %v1318, %v1317
      %v1360 = vpack.c.bf16 %v1320, %v1319
      %v1361 = vpack.c.bf16 %v1322, %v1321
      %v1362 = vpack.c.bf16 %v1324, %v1323
      %v1363 = vpack.c.bf16 %v1326, %v1325
      %v1364 = vpack.c.bf16 %v1328, %v1327
      %v1365 = vpack.c.bf16 %v1330, %v1329
      %vm1366 = vsmask.f32 7424
      %v1368 = vshrl.u32 %v1331, 16
      %v1370 = vshll.u32 %v1331, 16
      %v1372 = vrot.slane %v1370, 1
      %v1373 = vor.u32 %v1368, %v1372
      %v1375 = vshll.u32 %v1332, 16
      %v1377 = vrot.slane %v1375, 1
      %v1378 = vsel %vm1366, %v1373, %v1377
      %v1379 = vshrl.u32 %v1332, 16
      %v1381 = vor.u32 %v1379, %v1377
      %v1383 = vshll.u32 %v1333, 16
      %v1385 = vrot.slane %v1383, 1
      %v1386 = vsel %vm1366, %v1381, %v1385
      %v1387 = vshrl.u32 %v1333, 16
      %v1389 = vor.u32 %v1387, %v1385
      %v1391 = vshll.u32 %v1334, 16
      %v1393 = vrot.slane %v1391, 1
      %v1394 = vsel %vm1366, %v1389, %v1393
      %v1395 = vshrl.u32 %v1334, 16
      %v1397 = vor.u32 %v1395, %v1393
      %v1399 = vshll.u32 %v1335, 16
      %v1401 = vrot.slane %v1399, 1
      %v1402 = vsel %vm1366, %v1397, %v1401
      %v1403 = vshrl.u32 %v1335, 16
      %v1405 = vor.u32 %v1403, %v1401
      %v1407 = vshll.u32 %v1336, 16
      %v1409 = vrot.slane %v1407, 1
      %v1410 = vsel %vm1366, %v1405, %v1409
      %v1411 = vshrl.u32 %v1336, 16
      %v1413 = vor.u32 %v1411, %v1409
      %v1415 = vshll.u32 %v1337, 16
      %v1417 = vrot.slane %v1415, 1
      %v1418 = vsel %vm1366, %v1413, %v1417
      %v1419 = vshrl.u32 %v1337, 16
      %v1421 = vor.u32 %v1419, %v1417
      %v1423 = vshll.u32 %v1338, 16
      %v1425 = vrot.slane %v1423, 1
      %v1426 = vsel %vm1366, %v1421, %v1425
      %v1427 = vshrl.u32 %v1338, 16
      %v1429 = vor.u32 %v1427, %v1425
      %v1431 = vshll.u32 %v1339, 16
      %v1433 = vrot.slane %v1431, 1
      %v1434 = vsel %vm1366, %v1429, %v1433
      %v1435 = vshrl.u32 %v1339, 16
      %v1437 = vor.u32 %v1435, %v1433
      %v1439 = vshll.u32 %v1340, 16
      %v1441 = vrot.slane %v1439, 1
      %v1442 = vsel %vm1366, %v1437, %v1441
      %v1443 = vshrl.u32 %v1340, 16
      %v1445 = vor.u32 %v1443, %v1441
      %v1447 = vshll.u32 %v1341, 16
      %v1449 = vrot.slane %v1447, 1
      %v1450 = vsel %vm1366, %v1445, %v1449
      %v1451 = vshrl.u32 %v1341, 16
      %v1453 = vor.u32 %v1451, %v1449
      %v1455 = vshll.u32 %v1342, 16
      %v1457 = vrot.slane %v1455, 1
      %v1458 = vsel %vm1366, %v1453, %v1457
      %v1459 = vshrl.u32 %v1342, 16
      %v1461 = vor.u32 %v1459, %v1457
      %v1463 = vshll.u32 %v1343, 16
      %v1465 = vrot.slane %v1463, 1
      %v1466 = vsel %vm1366, %v1461, %v1465
      %v1467 = vshrl.u32 %v1343, 16
      %v1469 = vor.u32 %v1467, %v1465
      %v1471 = vshll.u32 %v1344, 16
      %v1473 = vrot.slane %v1471, 1
      %v1474 = vsel %vm1366, %v1469, %v1473
      %v1475 = vshrl.u32 %v1344, 16
      %v1477 = vor.u32 %v1475, %v1473
      %v1479 = vshll.u32 %v1345, 16
      %v1481 = vrot.slane %v1479, 1
      %v1482 = vsel %vm1366, %v1477, %v1481
      %v1483 = vshrl.u32 %v1345, 16
      %v1485 = vor.u32 %v1483, %v1481
      %v1487 = vshll.u32 %v1346, 16
      %v1489 = vrot.slane %v1487, 1
      %v1490 = vsel %vm1366, %v1485, %v1489
      %v1491 = vshrl.u32 %v1346, 16
      %v1493 = vor.u32 %v1491, %v1489
      %v1495 = vshll.u32 %v1347, 16
      %v1497 = vrot.slane %v1495, 1
      %v1498 = vsel %vm1366, %v1493, %v1497
      %v1499 = vshrl.u32 %v1347, 16
      %v1501 = vor.u32 %v1499, %v1497
      %v1503 = vshll.u32 %v1348, 16
      %v1505 = vrot.slane %v1503, 1
      %v1506 = vsel %vm1366, %v1501, %v1505
      %v1507 = vshrl.u32 %v1348, 16
      %v1509 = vor.u32 %v1507, %v1505
      %v1511 = vshll.u32 %v1349, 16
      %v1513 = vrot.slane %v1511, 1
      %v1514 = vsel %vm1366, %v1509, %v1513
      %v1515 = vshrl.u32 %v1349, 16
      %v1517 = vor.u32 %v1515, %v1513
      %v1519 = vshll.u32 %v1350, 16
      %v1521 = vrot.slane %v1519, 1
      %v1522 = vsel %vm1366, %v1517, %v1521
      %v1523 = vshrl.u32 %v1350, 16
      %v1525 = vor.u32 %v1523, %v1521
      %v1527 = vshll.u32 %v1351, 16
      %v1529 = vrot.slane %v1527, 1
      %v1530 = vsel %vm1366, %v1525, %v1529
      %v1531 = vshrl.u32 %v1351, 16
      %v1533 = vor.u32 %v1531, %v1529
      %v1535 = vshll.u32 %v1352, 16
      %v1537 = vrot.slane %v1535, 1
      %v1538 = vsel %vm1366, %v1533, %v1537
      %v1539 = vshrl.u32 %v1352, 16
      %v1541 = vor.u32 %v1539, %v1537
      %v1543 = vshll.u32 %v1353, 16
      %v1545 = vrot.slane %v1543, 1
      %v1546 = vsel %vm1366, %v1541, %v1545
      %v1547 = vshrl.u32 %v1353, 16
      %v1549 = vor.u32 %v1547, %v1545
      %v1551 = vshll.u32 %v1354, 16
      %v1553 = vrot.slane %v1551, 1
      %v1554 = vsel %vm1366, %v1549, %v1553
      %v1555 = vshrl.u32 %v1354, 16
      %v1557 = vor.u32 %v1555, %v1553
      %v1559 = vshll.u32 %v1355, 16
      %v1561 = vrot.slane %v1559, 1
      %v1562 = vsel %vm1366, %v1557, %v1561
      %v1563 = vshrl.u32 %v1355, 16
      %v1565 = vor.u32 %v1563, %v1561
      %v1567 = vshll.u32 %v1356, 16
      %v1569 = vrot.slane %v1567, 1
      %v1570 = vsel %vm1366, %v1565, %v1569
      %v1571 = vshrl.u32 %v1356, 16
      %v1573 = vor.u32 %v1571, %v1569
      %v1575 = vshll.u32 %v1357, 16
      %v1577 = vrot.slane %v1575, 1
      %v1578 = vsel %vm1366, %v1573, %v1577
      %v1579 = vshrl.u32 %v1357, 16
      %v1581 = vor.u32 %v1579, %v1577
      %v1583 = vshll.u32 %v1358, 16
      %v1585 = vrot.slane %v1583, 1
      %v1586 = vsel %vm1366, %v1581, %v1585
      %v1587 = vshrl.u32 %v1358, 16
      %v1589 = vor.u32 %v1587, %v1585
      %v1591 = vshll.u32 %v1359, 16
      %v1593 = vrot.slane %v1591, 1
      %v1594 = vsel %vm1366, %v1589, %v1593
      %v1595 = vshrl.u32 %v1359, 16
      %v1597 = vor.u32 %v1595, %v1593
      %v1599 = vshll.u32 %v1360, 16
      %v1601 = vrot.slane %v1599, 1
      %v1602 = vsel %vm1366, %v1597, %v1601
      %v1603 = vshrl.u32 %v1360, 16
      %v1605 = vor.u32 %v1603, %v1601
      %v1607 = vshll.u32 %v1361, 16
      %v1609 = vrot.slane %v1607, 1
      %v1610 = vsel %vm1366, %v1605, %v1609
      %v1611 = vshrl.u32 %v1361, 16
      %v1613 = vor.u32 %v1611, %v1609
      %v1615 = vshll.u32 %v1362, 16
      %v1617 = vrot.slane %v1615, 1
      %v1618 = vsel %vm1366, %v1613, %v1617
      %v1619 = vshrl.u32 %v1362, 16
      %v1621 = vor.u32 %v1619, %v1617
      %v1623 = vshll.u32 %v1363, 16
      %v1625 = vrot.slane %v1623, 1
      %v1626 = vsel %vm1366, %v1621, %v1625
      %v1627 = vshrl.u32 %v1363, 16
      %v1629 = vor.u32 %v1627, %v1625
      %1630 = vrot.lane.b32.xlu0 %v1378, 8
      %v1631 = vpop.permute.xlu0 %1630
      %1632 = vrot.lane.b32.xlu0 %v1386, 8
      %v1633 = vpop.permute.xlu0 %1632
      %1634 = vrot.lane.b32.xlu0 %v1394, 8
      %v1635 = vpop.permute.xlu0 %1634
      %1636 = vrot.lane.b32.xlu0 %v1402, 8
      %v1637 = vpop.permute.xlu0 %1636
      %1638 = vrot.lane.b32.xlu0 %v1410, 8
      %v1639 = vpop.permute.xlu0 %1638
      %1640 = vrot.lane.b32.xlu0 %v1418, 8
      %v1641 = vpop.permute.xlu0 %1640
      %1642 = vrot.lane.b32.xlu0 %v1426, 8
      %v1643 = vpop.permute.xlu0 %1642
      %1644 = vrot.lane.b32.xlu0 %v1434, 8
      %v1645 = vpop.permute.xlu0 %1644
      %1646 = vrot.lane.b32.xlu0 %v1442, 8
      %v1647 = vpop.permute.xlu0 %1646
      %1648 = vrot.lane.b32.xlu0 %v1450, 8
      %v1649 = vpop.permute.xlu0 %1648
      %1650 = vrot.lane.b32.xlu0 %v1458, 8
      %v1651 = vpop.permute.xlu0 %1650
      %1652 = vrot.lane.b32.xlu0 %v1466, 8
      %v1653 = vpop.permute.xlu0 %1652
      %1654 = vrot.lane.b32.xlu0 %v1474, 8
      %v1655 = vpop.permute.xlu0 %1654
      %1656 = vrot.lane.b32.xlu0 %v1482, 8
      %v1657 = vpop.permute.xlu0 %1656
      %1658 = vrot.lane.b32.xlu0 %v1490, 8
      %v1659 = vpop.permute.xlu0 %1658
      %1660 = vrot.lane.b32.xlu0 %v1498, 8
      %v1661 = vpop.permute.xlu0 %1660
      %1662 = vrot.lane.b32.xlu0 %v1506, 8
      %v1663 = vpop.permute.xlu0 %1662
      %1664 = vrot.lane.b32.xlu0 %v1514, 8
      %v1665 = vpop.permute.xlu0 %1664
      %1666 = vrot.lane.b32.xlu0 %v1522, 8
      %v1667 = vpop.permute.xlu0 %1666
      %1668 = vrot.lane.b32.xlu0 %v1530, 8
      %v1669 = vpop.permute.xlu0 %1668
      %1670 = vrot.lane.b32.xlu0 %v1538, 8
      %v1671 = vpop.permute.xlu0 %1670
      %1672 = vrot.lane.b32.xlu0 %v1546, 8
      %v1673 = vpop.permute.xlu0 %1672
      %1674 = vrot.lane.b32.xlu0 %v1554, 8
      %v1675 = vpop.permute.xlu0 %1674
      %1676 = vrot.lane.b32.xlu0 %v1562, 8
      %v1677 = vpop.permute.xlu0 %1676
      %1678 = vrot.lane.b32.xlu0 %v1570, 8
      %v1679 = vpop.permute.xlu0 %1678
      %1680 = vrot.lane.b32.xlu0 %v1578, 8
      %v1681 = vpop.permute.xlu0 %1680
      %1682 = vrot.lane.b32.xlu0 %v1586, 8
      %v1683 = vpop.permute.xlu0 %1682
      %1684 = vrot.lane.b32.xlu0 %v1594, 8
      %v1685 = vpop.permute.xlu0 %1684
      %1686 = vrot.lane.b32.xlu0 %v1602, 8
      %v1687 = vpop.permute.xlu0 %1686
      %1688 = vrot.lane.b32.xlu0 %v1610, 8
      %v1689 = vpop.permute.xlu0 %1688
      %1690 = vrot.lane.b32.xlu0 %v1618, 8
      %v1691 = vpop.permute.xlu0 %1690
      %1692 = vrot.lane.b32.xlu0 %v1626, 8
      %v1693 = vpop.permute.xlu0 %1692
      %1694 = vrot.lane.b32.xlu0 %v1629, 8
      %v1695 = vpop.permute.xlu0 %1694
      %vm1729 = vcmask 1046528
      %v1730 = vrot.slane %v1331, 1
      %v1731 = vrot.slane %v1332, 1
      %v1732 = vsel %vm1729, %v1730, %v1731
      %v1733 = vrot.slane %v1333, 1
      %v1734 = vsel %vm1729, %v1731, %v1733
      %v1735 = vrot.slane %v1334, 1
      %v1736 = vsel %vm1729, %v1733, %v1735
      %v1737 = vrot.slane %v1335, 1
      %v1738 = vsel %vm1729, %v1735, %v1737
      %v1739 = vrot.slane %v1336, 1
      %v1740 = vsel %vm1729, %v1737, %v1739
      %v1741 = vrot.slane %v1337, 1
      %v1742 = vsel %vm1729, %v1739, %v1741
      %v1743 = vrot.slane %v1338, 1
      %v1744 = vsel %vm1729, %v1741, %v1743
      %v1745 = vrot.slane %v1339, 1
      %v1746 = vsel %vm1729, %v1743, %v1745
      %v1747 = vrot.slane %v1340, 1
      %v1748 = vsel %vm1729, %v1745, %v1747
      %v1749 = vrot.slane %v1341, 1
      %v1750 = vsel %vm1729, %v1747, %v1749
      %v1751 = vrot.slane %v1342, 1
      %v1752 = vsel %vm1729, %v1749, %v1751
      %v1753 = vrot.slane %v1343, 1
      %v1754 = vsel %vm1729, %v1751, %v1753
      %v1755 = vrot.slane %v1344, 1
      %v1756 = vsel %vm1729, %v1753, %v1755
      %v1757 = vrot.slane %v1345, 1
      %v1758 = vsel %vm1729, %v1755, %v1757
      %v1759 = vrot.slane %v1346, 1
      %v1760 = vsel %vm1729, %v1757, %v1759
      %v1761 = vrot.slane %v1347, 1
      %v1762 = vsel %vm1729, %v1759, %v1761
      %v1763 = vrot.slane %v1348, 1
      %v1764 = vsel %vm1729, %v1761, %v1763
      %v1765 = vrot.slane %v1349, 1
      %v1766 = vsel %vm1729, %v1763, %v1765
      %v1767 = vrot.slane %v1350, 1
      %v1768 = vsel %vm1729, %v1765, %v1767
      %v1769 = vrot.slane %v1351, 1
      %v1770 = vsel %vm1729, %v1767, %v1769
      %v1771 = vrot.slane %v1352, 1
      %v1772 = vsel %vm1729, %v1769, %v1771
      %v1773 = vrot.slane %v1353, 1
      %v1774 = vsel %vm1729, %v1771, %v1773
      %v1775 = vrot.slane %v1354, 1
      %v1776 = vsel %vm1729, %v1773, %v1775
      %v1777 = vrot.slane %v1355, 1
      %v1778 = vsel %vm1729, %v1775, %v1777
      %v1779 = vrot.slane %v1356, 1
      %v1780 = vsel %vm1729, %v1777, %v1779
      %v1781 = vrot.slane %v1357, 1
      %v1782 = vsel %vm1729, %v1779, %v1781
      %v1783 = vrot.slane %v1358, 1
      %v1784 = vsel %vm1729, %v1781, %v1783
      %v1785 = vrot.slane %v1359, 1
      %v1786 = vsel %vm1729, %v1783, %v1785
      %v1787 = vrot.slane %v1360, 1
      %v1788 = vsel %vm1729, %v1785, %v1787
      %v1789 = vrot.slane %v1361, 1
      %v1790 = vsel %vm1729, %v1787, %v1789
      %v1791 = vrot.slane %v1362, 1
      %v1792 = vsel %vm1729, %v1789, %v1791
      %v1793 = vrot.slane %v1363, 1
      %v1794 = vsel %vm1729, %v1791, %v1793
      %1795 = vrot.lane.b32.xlu0 %v1732, 16
      %v1796 = vpop.permute.xlu0 %1795
      %1797 = vrot.lane.b32.xlu0 %v1734, 16
      %v1798 = vpop.permute.xlu0 %1797
      %1799 = vrot.lane.b32.xlu0 %v1736, 16
      %v1800 = vpop.permute.xlu0 %1799
      %1801 = vrot.lane.b32.xlu0 %v1738, 16
      %v1802 = vpop.permute.xlu0 %1801
      %1803 = vrot.lane.b32.xlu0 %v1740, 16
      %v1804 = vpop.permute.xlu0 %1803
      %1805 = vrot.lane.b32.xlu0 %v1742, 16
      %v1806 = vpop.permute.xlu0 %1805
      %1807 = vrot.lane.b32.xlu0 %v1744, 16
      %v1808 = vpop.permute.xlu0 %1807
      %1809 = vrot.lane.b32.xlu0 %v1746, 16
      %v1810 = vpop.permute.xlu0 %1809
      %1811 = vrot.lane.b32.xlu0 %v1748, 16
      %v1812 = vpop.permute.xlu0 %1811
      %1813 = vrot.lane.b32.xlu0 %v1750, 16
      %v1814 = vpop.permute.xlu0 %1813
      %1815 = vrot.lane.b32.xlu0 %v1752, 16
      %v1816 = vpop.permute.xlu0 %1815
      %1817 = vrot.lane.b32.xlu0 %v1754, 16
      %v1818 = vpop.permute.xlu0 %1817
      %1819 = vrot.lane.b32.xlu0 %v1756, 16
      %v1820 = vpop.permute.xlu0 %1819
      %1821 = vrot.lane.b32.xlu0 %v1758, 16
      %v1822 = vpop.permute.xlu0 %1821
      %1823 = vrot.lane.b32.xlu0 %v1760, 16
      %v1824 = vpop.permute.xlu0 %1823
      %1825 = vrot.lane.b32.xlu0 %v1762, 16
      %v1826 = vpop.permute.xlu0 %1825
      %1827 = vrot.lane.b32.xlu0 %v1764, 16
      %v1828 = vpop.permute.xlu0 %1827
      %1829 = vrot.lane.b32.xlu0 %v1766, 16
      %v1830 = vpop.permute.xlu0 %1829
      %1831 = vrot.lane.b32.xlu0 %v1768, 16
      %v1832 = vpop.permute.xlu0 %1831
      %1833 = vrot.lane.b32.xlu0 %v1770, 16
      %v1834 = vpop.permute.xlu0 %1833
      %1835 = vrot.lane.b32.xlu0 %v1772, 16
      %v1836 = vpop.permute.xlu0 %1835
      %1837 = vrot.lane.b32.xlu0 %v1774, 16
      %v1838 = vpop.permute.xlu0 %1837
      %1839 = vrot.lane.b32.xlu0 %v1776, 16
      %v1840 = vpop.permute.xlu0 %1839
      %1841 = vrot.lane.b32.xlu0 %v1778, 16
      %v1842 = vpop.permute.xlu0 %1841
      %1843 = vrot.lane.b32.xlu0 %v1780, 16
      %v1844 = vpop.permute.xlu0 %1843
      %1845 = vrot.lane.b32.xlu0 %v1782, 16
      %v1846 = vpop.permute.xlu0 %1845
      %1847 = vrot.lane.b32.xlu0 %v1784, 16
      %v1848 = vpop.permute.xlu0 %1847
      %1849 = vrot.lane.b32.xlu0 %v1786, 16
      %v1850 = vpop.permute.xlu0 %1849
      %1851 = vrot.lane.b32.xlu0 %v1788, 16
      %v1852 = vpop.permute.xlu0 %1851
      %1853 = vrot.lane.b32.xlu0 %v1790, 16
      %v1854 = vpop.permute.xlu0 %1853
      %1855 = vrot.lane.b32.xlu0 %v1792, 16
      %v1856 = vpop.permute.xlu0 %1855
      %1857 = vrot.lane.b32.xlu0 %v1794, 16
      %v1858 = vpop.permute.xlu0 %1857
      %1859 = vrot.lane.b32.xlu0 %v1793, 16
      %v1860 = vpop.permute.xlu0 %1859
      %v1862 = vrot.slane %v1364, 1
      %v1863 = vsel %vm1729, %v1793, %v1862
      %1864 = vrot.lane.b32.xlu0 %v1734, 24
      %v1865 = vpop.permute.xlu0 %1864
      %1866 = vrot.lane.b32.xlu0 %v1736, 24
      %v1867 = vpop.permute.xlu0 %1866
      %1868 = vrot.lane.b32.xlu0 %v1738, 24
      %v1869 = vpop.permute.xlu0 %1868
      %1870 = vrot.lane.b32.xlu0 %v1740, 24
      %v1871 = vpop.permute.xlu0 %1870
      %1872 = vrot.lane.b32.xlu0 %v1742, 24
      %v1873 = vpop.permute.xlu0 %1872
      %1874 = vrot.lane.b32.xlu0 %v1744, 24
      %v1875 = vpop.permute.xlu0 %1874
      %1876 = vrot.lane.b32.xlu0 %v1746, 24
      %v1877 = vpop.permute.xlu0 %1876
      %1878 = vrot.lane.b32.xlu0 %v1748, 24
      %v1879 = vpop.permute.xlu0 %1878
      %1880 = vrot.lane.b32.xlu0 %v1750, 24
      %v1881 = vpop.permute.xlu0 %1880
      %1882 = vrot.lane.b32.xlu0 %v1752, 24
      %v1883 = vpop.permute.xlu0 %1882
      %1884 = vrot.lane.b32.xlu0 %v1754, 24
      %v1885 = vpop.permute.xlu0 %1884
      %1886 = vrot.lane.b32.xlu0 %v1756, 24
      %v1887 = vpop.permute.xlu0 %1886
      %1888 = vrot.lane.b32.xlu0 %v1758, 24
      %v1889 = vpop.permute.xlu0 %1888
      %1890 = vrot.lane.b32.xlu0 %v1760, 24
      %v1891 = vpop.permute.xlu0 %1890
      %1892 = vrot.lane.b32.xlu0 %v1762, 24
      %v1893 = vpop.permute.xlu0 %1892
      %1894 = vrot.lane.b32.xlu0 %v1764, 24
      %v1895 = vpop.permute.xlu0 %1894
      %1896 = vrot.lane.b32.xlu0 %v1766, 24
      %v1897 = vpop.permute.xlu0 %1896
      %1898 = vrot.lane.b32.xlu0 %v1768, 24
      %v1899 = vpop.permute.xlu0 %1898
      %1900 = vrot.lane.b32.xlu0 %v1770, 24
      %v1901 = vpop.permute.xlu0 %1900
      %1902 = vrot.lane.b32.xlu0 %v1772, 24
      %v1903 = vpop.permute.xlu0 %1902
      %1904 = vrot.lane.b32.xlu0 %v1774, 24
      %v1905 = vpop.permute.xlu0 %1904
      %1906 = vrot.lane.b32.xlu0 %v1776, 24
      %v1907 = vpop.permute.xlu0 %1906
      %1908 = vrot.lane.b32.xlu0 %v1778, 24
      %v1909 = vpop.permute.xlu0 %1908
      %1910 = vrot.lane.b32.xlu0 %v1780, 24
      %v1911 = vpop.permute.xlu0 %1910
      %1912 = vrot.lane.b32.xlu0 %v1782, 24
      %v1913 = vpop.permute.xlu0 %1912
      %1914 = vrot.lane.b32.xlu0 %v1784, 24
      %v1915 = vpop.permute.xlu0 %1914
      %1916 = vrot.lane.b32.xlu0 %v1786, 24
      %v1917 = vpop.permute.xlu0 %1916
      %1918 = vrot.lane.b32.xlu0 %v1788, 24
      %v1919 = vpop.permute.xlu0 %1918
      %1920 = vrot.lane.b32.xlu0 %v1790, 24
      %v1921 = vpop.permute.xlu0 %1920
      %1922 = vrot.lane.b32.xlu0 %v1792, 24
      %v1923 = vpop.permute.xlu0 %1922
      %1924 = vrot.lane.b32.xlu0 %v1794, 24
      %v1925 = vpop.permute.xlu0 %1924
      %1926 = vrot.lane.b32.xlu0 %v1863, 24
      %v1927 = vpop.permute.xlu0 %1926
      %1928 = vrot.lane.b32.xlu0 %v1862, 24
      %v1929 = vpop.permute.xlu0 %1928
      %vm1930 = vsmask.f32 6400
      %v1931 = vrot.slane %v1379, 1
      %v1932 = vrot.slane %v1375, 2
      %v1933 = vor.u32 %v1931, %v1932
      %v1934 = vrot.slane %v1387, 1
      %v1935 = vrot.slane %v1383, 2
      %v1936 = vor.u32 %v1934, %v1935
      %v1937 = vsel %vm1930, %v1933, %v1936
      %v1938 = vrot.slane %v1395, 1
      %v1939 = vrot.slane %v1391, 2
      %v1940 = vor.u32 %v1938, %v1939
      %v1941 = vsel %vm1930, %v1936, %v1940
      %v1942 = vrot.slane %v1403, 1
      %v1943 = vrot.slane %v1399, 2
      %v1944 = vor.u32 %v1942, %v1943
      %v1945 = vsel %vm1930, %v1940, %v1944
      %v1946 = vrot.slane %v1411, 1
      %v1947 = vrot.slane %v1407, 2
      %v1948 = vor.u32 %v1946, %v1947
      %v1949 = vsel %vm1930, %v1944, %v1948
      %v1950 = vrot.slane %v1419, 1
      %v1951 = vrot.slane %v1415, 2
      %v1952 = vor.u32 %v1950, %v1951
      %v1953 = vsel %vm1930, %v1948, %v1952
      %v1954 = vrot.slane %v1427, 1
      %v1955 = vrot.slane %v1423, 2
      %v1956 = vor.u32 %v1954, %v1955
      %v1957 = vsel %vm1930, %v1952, %v1956
      %v1958 = vrot.slane %v1435, 1
      %v1959 = vrot.slane %v1431, 2
      %v1960 = vor.u32 %v1958, %v1959
      %v1961 = vsel %vm1930, %v1956, %v1960
      %v1962 = vrot.slane %v1443, 1
      %v1963 = vrot.slane %v1439, 2
      %v1964 = vor.u32 %v1962, %v1963
      %v1965 = vsel %vm1930, %v1960, %v1964
      %v1966 = vrot.slane %v1451, 1
      %v1967 = vrot.slane %v1447, 2
      %v1968 = vor.u32 %v1966, %v1967
      %v1969 = vsel %vm1930, %v1964, %v1968
      %v1970 = vrot.slane %v1459, 1
      %v1971 = vrot.slane %v1455, 2
      %v1972 = vor.u32 %v1970, %v1971
      %v1973 = vsel %vm1930, %v1968, %v1972
      %v1974 = vrot.slane %v1467, 1
      %v1975 = vrot.slane %v1463, 2
      %v1976 = vor.u32 %v1974, %v1975
      %v1977 = vsel %vm1930, %v1972, %v1976
      %v1978 = vrot.slane %v1475, 1
      %v1979 = vrot.slane %v1471, 2
      %v1980 = vor.u32 %v1978, %v1979
      %v1981 = vsel %vm1930, %v1976, %v1980
      %v1982 = vrot.slane %v1483, 1
      %v1983 = vrot.slane %v1479, 2
      %v1984 = vor.u32 %v1982, %v1983
      %v1985 = vsel %vm1930, %v1980, %v1984
      %v1986 = vrot.slane %v1491, 1
      %v1987 = vrot.slane %v1487, 2
      %v1988 = vor.u32 %v1986, %v1987
      %v1989 = vsel %vm1930, %v1984, %v1988
      %v1990 = vrot.slane %v1499, 1
      %v1991 = vrot.slane %v1495, 2
      %v1992 = vor.u32 %v1990, %v1991
      %v1993 = vsel %vm1930, %v1988, %v1992
      %v1994 = vrot.slane %v1507, 1
      %v1995 = vrot.slane %v1503, 2
      %v1996 = vor.u32 %v1994, %v1995
      %v1997 = vsel %vm1930, %v1992, %v1996
      %v1998 = vrot.slane %v1515, 1
      %v1999 = vrot.slane %v1511, 2
      %v2000 = vor.u32 %v1998, %v1999
      %v2001 = vsel %vm1930, %v1996, %v2000
      %v2002 = vrot.slane %v1523, 1
      %v2003 = vrot.slane %v1519, 2
      %v2004 = vor.u32 %v2002, %v2003
      %v2005 = vsel %vm1930, %v2000, %v2004
      %v2006 = vrot.slane %v1531, 1
      %v2007 = vrot.slane %v1527, 2
      %v2008 = vor.u32 %v2006, %v2007
      %v2009 = vsel %vm1930, %v2004, %v2008
      %v2010 = vrot.slane %v1539, 1
      %v2011 = vrot.slane %v1535, 2
      %v2012 = vor.u32 %v2010, %v2011
      %v2013 = vsel %vm1930, %v2008, %v2012
      %v2014 = vrot.slane %v1547, 1
      %v2015 = vrot.slane %v1543, 2
      %v2016 = vor.u32 %v2014, %v2015
      %v2017 = vsel %vm1930, %v2012, %v2016
      %v2018 = vrot.slane %v1555, 1
      %v2019 = vrot.slane %v1551, 2
      %v2020 = vor.u32 %v2018, %v2019
      %v2021 = vsel %vm1930, %v2016, %v2020
      %v2022 = vrot.slane %v1563, 1
      %v2023 = vrot.slane %v1559, 2
      %v2024 = vor.u32 %v2022, %v2023
      %v2025 = vsel %vm1930, %v2020, %v2024
      %v2026 = vrot.slane %v1571, 1
      %v2027 = vrot.slane %v1567, 2
      %v2028 = vor.u32 %v2026, %v2027
      %v2029 = vsel %vm1930, %v2024, %v2028
      %v2030 = vrot.slane %v1579, 1
      %v2031 = vrot.slane %v1575, 2
      %v2032 = vor.u32 %v2030, %v2031
      %v2033 = vsel %vm1930, %v2028, %v2032
      %v2034 = vrot.slane %v1587, 1
      %v2035 = vrot.slane %v1583, 2
      %v2036 = vor.u32 %v2034, %v2035
      %v2037 = vsel %vm1930, %v2032, %v2036
      %v2038 = vrot.slane %v1595, 1
      %v2039 = vrot.slane %v1591, 2
      %v2040 = vor.u32 %v2038, %v2039
      %v2041 = vsel %vm1930, %v2036, %v2040
      %v2042 = vrot.slane %v1603, 1
      %v2043 = vrot.slane %v1599, 2
      %v2044 = vor.u32 %v2042, %v2043
      %v2045 = vsel %vm1930, %v2040, %v2044
      %v2046 = vrot.slane %v1611, 1
      %v2047 = vrot.slane %v1607, 2
      %v2048 = vor.u32 %v2046, %v2047
      %v2049 = vsel %vm1930, %v2044, %v2048
      %v2050 = vrot.slane %v1619, 1
      %v2051 = vrot.slane %v1615, 2
      %v2052 = vor.u32 %v2050, %v2051
      %v2053 = vsel %vm1930, %v2048, %v2052
      %v2054 = vrot.slane %v1627, 1
      %v2055 = vrot.slane %v1623, 2
      %v2056 = vor.u32 %v2054, %v2055
      %v2057 = vsel %vm1930, %v2052, %v2056
      %v2059 = vshrl.u32 %v1364, 16
      %v2061 = vrot.slane %v2059, 1
      %v2062 = vshll.u32 %v1364, 16
      %v2064 = vrot.slane %v2062, 2
      %v2065 = vor.u32 %v2061, %v2064
      %v2066 = vsel %vm1930, %v2056, %v2065
      %2067 = vrot.lane.b32.xlu0 %v1937, 32
      %v2068 = vpop.permute.xlu0 %2067
      %2069 = vrot.lane.b32.xlu0 %v1941, 32
      %v2070 = vpop.permute.xlu0 %2069
      %2071 = vrot.lane.b32.xlu0 %v1945, 32
      %v2072 = vpop.permute.xlu0 %2071
      %2073 = vrot.lane.b32.xlu0 %v1949, 32
      %v2074 = vpop.permute.xlu0 %2073
      %2075 = vrot.lane.b32.xlu0 %v1953, 32
      %v2076 = vpop.permute.xlu0 %2075
      %2077 = vrot.lane.b32.xlu0 %v1957, 32
      %v2078 = vpop.permute.xlu0 %2077
      %2079 = vrot.lane.b32.xlu0 %v1961, 32
      %v2080 = vpop.permute.xlu0 %2079
      %2081 = vrot.lane.b32.xlu0 %v1965, 32
      %v2082 = vpop.permute.xlu0 %2081
      %2083 = vrot.lane.b32.xlu0 %v1969, 32
      %v2084 = vpop.permute.xlu0 %2083
      %2085 = vrot.lane.b32.xlu0 %v1973, 32
      %v2086 = vpop.permute.xlu0 %2085
      %2087 = vrot.lane.b32.xlu0 %v1977, 32
      %v2088 = vpop.permute.xlu0 %2087
      %2089 = vrot.lane.b32.xlu0 %v1981, 32
      %v2090 = vpop.permute.xlu0 %2089
      %2091 = vrot.lane.b32.xlu0 %v1985, 32
      %v2092 = vpop.permute.xlu0 %2091
      %2093 = vrot.lane.b32.xlu0 %v1989, 32
      %v2094 = vpop.permute.xlu0 %2093
      %2095 = vrot.lane.b32.xlu0 %v1993, 32
      %v2096 = vpop.permute.xlu0 %2095
      %2097 = vrot.lane.b32.xlu0 %v1997, 32
      %v2098 = vpop.permute.xlu0 %2097
      %2099 = vrot.lane.b32.xlu0 %v2001, 32
      %v2100 = vpop.permute.xlu0 %2099
      %2101 = vrot.lane.b32.xlu0 %v2005, 32
      %v2102 = vpop.permute.xlu0 %2101
      %2103 = vrot.lane.b32.xlu0 %v2009, 32
      %v2104 = vpop.permute.xlu0 %2103
      %2105 = vrot.lane.b32.xlu0 %v2013, 32
      %v2106 = vpop.permute.xlu0 %2105
      %2107 = vrot.lane.b32.xlu0 %v2017, 32
      %v2108 = vpop.permute.xlu0 %2107
      %2109 = vrot.lane.b32.xlu0 %v2021, 32
      %v2110 = vpop.permute.xlu0 %2109
      %2111 = vrot.lane.b32.xlu0 %v2025, 32
      %v2112 = vpop.permute.xlu0 %2111
      %2113 = vrot.lane.b32.xlu0 %v2029, 32
      %v2114 = vpop.permute.xlu0 %2113
      %2115 = vrot.lane.b32.xlu0 %v2033, 32
      %v2116 = vpop.permute.xlu0 %2115
      %2117 = vrot.lane.b32.xlu0 %v2037, 32
      %v2118 = vpop.permute.xlu0 %2117
      %2119 = vrot.lane.b32.xlu0 %v2041, 32
      %v2120 = vpop.permute.xlu0 %2119
      %2121 = vrot.lane.b32.xlu0 %v2045, 32
      %v2122 = vpop.permute.xlu0 %2121
      %2123 = vrot.lane.b32.xlu0 %v2049, 32
      %v2124 = vpop.permute.xlu0 %2123
      %2125 = vrot.lane.b32.xlu0 %v2053, 32
      %v2126 = vpop.permute.xlu0 %2125
      %2127 = vrot.lane.b32.xlu0 %v2057, 32
      %v2128 = vpop.permute.xlu0 %2127
      %2129 = vrot.lane.b32.xlu0 %v2066, 32
      %v2130 = vpop.permute.xlu0 %2129
      %2131 = vrot.lane.b32.xlu0 %v2065, 32
      %v2132 = vpop.permute.xlu0 %2131
      %vm2133 = vcmask 1045504
      %v2134 = vrot.slane %v1332, 2
      %v2135 = vrot.slane %v1333, 2
      %v2136 = vsel %vm2133, %v2134, %v2135
      %v2137 = vrot.slane %v1334, 2
      %v2138 = vsel %vm2133, %v2135, %v2137
      %v2139 = vrot.slane %v1335, 2
      %v2140 = vsel %vm2133, %v2137, %v2139
      %v2141 = vrot.slane %v1336, 2
      %v2142 = vsel %vm2133, %v2139, %v2141
      %v2143 = vrot.slane %v1337, 2
      %v2144 = vsel %vm2133, %v2141, %v2143
      %v2145 = vrot.slane %v1338, 2
      %v2146 = vsel %vm2133, %v2143, %v2145
      %v2147 = vrot.slane %v1339, 2
      %v2148 = vsel %vm2133, %v2145, %v2147
      %v2149 = vrot.slane %v1340, 2
      %v2150 = vsel %vm2133, %v2147, %v2149
      %v2151 = vrot.slane %v1341, 2
      %v2152 = vsel %vm2133, %v2149, %v2151
      %v2153 = vrot.slane %v1342, 2
      %v2154 = vsel %vm2133, %v2151, %v2153
      %v2155 = vrot.slane %v1343, 2
      %v2156 = vsel %vm2133, %v2153, %v2155
      %v2157 = vrot.slane %v1344, 2
      %v2158 = vsel %vm2133, %v2155, %v2157
      %v2159 = vrot.slane %v1345, 2
      %v2160 = vsel %vm2133, %v2157, %v2159
      %v2161 = vrot.slane %v1346, 2
      %v2162 = vsel %vm2133, %v2159, %v2161
      %v2163 = vrot.slane %v1347, 2
      %v2164 = vsel %vm2133, %v2161, %v2163
      %v2165 = vrot.slane %v1348, 2
      %v2166 = vsel %vm2133, %v2163, %v2165
      %v2167 = vrot.slane %v1349, 2
      %v2168 = vsel %vm2133, %v2165, %v2167
      %v2169 = vrot.slane %v1350, 2
      %v2170 = vsel %vm2133, %v2167, %v2169
      %v2171 = vrot.slane %v1351, 2
      %v2172 = vsel %vm2133, %v2169, %v2171
      %v2173 = vrot.slane %v1352, 2
      %v2174 = vsel %vm2133, %v2171, %v2173
      %v2175 = vrot.slane %v1353, 2
      %v2176 = vsel %vm2133, %v2173, %v2175
      %v2177 = vrot.slane %v1354, 2
      %v2178 = vsel %vm2133, %v2175, %v2177
      %v2179 = vrot.slane %v1355, 2
      %v2180 = vsel %vm2133, %v2177, %v2179
      %v2181 = vrot.slane %v1356, 2
      %v2182 = vsel %vm2133, %v2179, %v2181
      %v2183 = vrot.slane %v1357, 2
      %v2184 = vsel %vm2133, %v2181, %v2183
      %v2185 = vrot.slane %v1358, 2
      %v2186 = vsel %vm2133, %v2183, %v2185
      %v2187 = vrot.slane %v1359, 2
      %v2188 = vsel %vm2133, %v2185, %v2187
      %v2189 = vrot.slane %v1360, 2
      %v2190 = vsel %vm2133, %v2187, %v2189
      %v2191 = vrot.slane %v1361, 2
      %v2192 = vsel %vm2133, %v2189, %v2191
      %v2193 = vrot.slane %v1362, 2
      %v2194 = vsel %vm2133, %v2191, %v2193
      %v2195 = vrot.slane %v1363, 2
      %v2196 = vsel %vm2133, %v2193, %v2195
      %v2197 = vrot.slane %v1364, 2
      %v2198 = vsel %vm2133, %v2195, %v2197
      %2199 = vrot.lane.b32.xlu0 %v2136, 40
      %v2200 = vpop.permute.xlu0 %2199
      %2201 = vrot.lane.b32.xlu0 %v2138, 40
      %v2202 = vpop.permute.xlu0 %2201
      %2203 = vrot.lane.b32.xlu0 %v2140, 40
      %v2204 = vpop.permute.xlu0 %2203
      %2205 = vrot.lane.b32.xlu0 %v2142, 40
      %v2206 = vpop.permute.xlu0 %2205
      %2207 = vrot.lane.b32.xlu0 %v2144, 40
      %v2208 = vpop.permute.xlu0 %2207
      %2209 = vrot.lane.b32.xlu0 %v2146, 40
      %v2210 = vpop.permute.xlu0 %2209
      %2211 = vrot.lane.b32.xlu0 %v2148, 40
      %v2212 = vpop.permute.xlu0 %2211
      %2213 = vrot.lane.b32.xlu0 %v2150, 40
      %v2214 = vpop.permute.xlu0 %2213
      %2215 = vrot.lane.b32.xlu0 %v2152, 40
      %v2216 = vpop.permute.xlu0 %2215
      %2217 = vrot.lane.b32.xlu0 %v2154, 40
      %v2218 = vpop.permute.xlu0 %2217
      %2219 = vrot.lane.b32.xlu0 %v2156, 40
      %v2220 = vpop.permute.xlu0 %2219
      %2221 = vrot.lane.b32.xlu0 %v2158, 40
      %v2222 = vpop.permute.xlu0 %2221
      %2223 = vrot.lane.b32.xlu0 %v2160, 40
      %v2224 = vpop.permute.xlu0 %2223
      %2225 = vrot.lane.b32.xlu0 %v2162, 40
      %v2226 = vpop.permute.xlu0 %2225
      %2227 = vrot.lane.b32.xlu0 %v2164, 40
      %v2228 = vpop.permute.xlu0 %2227
      %2229 = vrot.lane.b32.xlu0 %v2166, 40
      %v2230 = vpop.permute.xlu0 %2229
      %2231 = vrot.lane.b32.xlu0 %v2168, 40
      %v2232 = vpop.permute.xlu0 %2231
      %2233 = vrot.lane.b32.xlu0 %v2170, 40
      %v2234 = vpop.permute.xlu0 %2233
      %2235 = vrot.lane.b32.xlu0 %v2172, 40
      %v2236 = vpop.permute.xlu0 %2235
      %2237 = vrot.lane.b32.xlu0 %v2174, 40
      %v2238 = vpop.permute.xlu0 %2237
      %2239 = vrot.lane.b32.xlu0 %v2176, 40
      %v2240 = vpop.permute.xlu0 %2239
      %2241 = vrot.lane.b32.xlu0 %v2178, 40
      %v2242 = vpop.permute.xlu0 %2241
      %2243 = vrot.lane.b32.xlu0 %v2180, 40
      %v2244 = vpop.permute.xlu0 %2243
      %2245 = vrot.lane.b32.xlu0 %v2182, 40
      %v2246 = vpop.permute.xlu0 %2245
      %2247 = vrot.lane.b32.xlu0 %v2184, 40
      %v2248 = vpop.permute.xlu0 %2247
      %2249 = vrot.lane.b32.xlu0 %v2186, 40
      %v2250 = vpop.permute.xlu0 %2249
      %2251 = vrot.lane.b32.xlu0 %v2188, 40
      %v2252 = vpop.permute.xlu0 %2251
      %2253 = vrot.lane.b32.xlu0 %v2190, 40
      %v2254 = vpop.permute.xlu0 %2253
      %2255 = vrot.lane.b32.xlu0 %v2192, 40
      %v2256 = vpop.permute.xlu0 %2255
      %2257 = vrot.lane.b32.xlu0 %v2194, 40
      %v2258 = vpop.permute.xlu0 %2257
      %2259 = vrot.lane.b32.xlu0 %v2196, 40
      %v2260 = vpop.permute.xlu0 %2259
      %2261 = vrot.lane.b32.xlu0 %v2198, 40
      %v2262 = vpop.permute.xlu0 %2261
      %2263 = vrot.lane.b32.xlu0 %v2197, 40
      %v2264 = vpop.permute.xlu0 %2263
      %v2266 = vrot.slane %v1365, 2
      %v2267 = vsel %vm2133, %v2197, %v2266
      %2268 = vrot.lane.b32.xlu0 %v2138, 48
      %v2269 = vpop.permute.xlu0 %2268
      %2270 = vrot.lane.b32.xlu0 %v2140, 48
      %v2271 = vpop.permute.xlu0 %2270
      %2272 = vrot.lane.b32.xlu0 %v2142, 48
      %v2273 = vpop.permute.xlu0 %2272
      %2274 = vrot.lane.b32.xlu0 %v2144, 48
      %v2275 = vpop.permute.xlu0 %2274
      %2276 = vrot.lane.b32.xlu0 %v2146, 48
      %v2277 = vpop.permute.xlu0 %2276
      %2278 = vrot.lane.b32.xlu0 %v2148, 48
      %v2279 = vpop.permute.xlu0 %2278
      %2280 = vrot.lane.b32.xlu0 %v2150, 48
      %v2281 = vpop.permute.xlu0 %2280
      %2282 = vrot.lane.b32.xlu0 %v2152, 48
      %v2283 = vpop.permute.xlu0 %2282
      %2284 = vrot.lane.b32.xlu0 %v2154, 48
      %v2285 = vpop.permute.xlu0 %2284
      %2286 = vrot.lane.b32.xlu0 %v2156, 48
      %v2287 = vpop.permute.xlu0 %2286
      %2288 = vrot.lane.b32.xlu0 %v2158, 48
      %v2289 = vpop.permute.xlu0 %2288
      %2290 = vrot.lane.b32.xlu0 %v2160, 48
      %v2291 = vpop.permute.xlu0 %2290
      %2292 = vrot.lane.b32.xlu0 %v2162, 48
      %v2293 = vpop.permute.xlu0 %2292
      %2294 = vrot.lane.b32.xlu0 %v2164, 48
      %v2295 = vpop.permute.xlu0 %2294
      %2296 = vrot.lane.b32.xlu0 %v2166, 48
      %v2297 = vpop.permute.xlu0 %2296
      %2298 = vrot.lane.b32.xlu0 %v2168, 48
      %v2299 = vpop.permute.xlu0 %2298
      %2300 = vrot.lane.b32.xlu0 %v2170, 48
      %v2301 = vpop.permute.xlu0 %2300
      %2302 = vrot.lane.b32.xlu0 %v2172, 48
      %v2303 = vpop.permute.xlu0 %2302
      %2304 = vrot.lane.b32.xlu0 %v2174, 48
      %v2305 = vpop.permute.xlu0 %2304
      %2306 = vrot.lane.b32.xlu0 %v2176, 48
      %v2307 = vpop.permute.xlu0 %2306
      %2308 = vrot.lane.b32.xlu0 %v2178, 48
      %v2309 = vpop.permute.xlu0 %2308
      %2310 = vrot.lane.b32.xlu0 %v2180, 48
      %v2311 = vpop.permute.xlu0 %2310
      %2312 = vrot.lane.b32.xlu0 %v2182, 48
      %v2313 = vpop.permute.xlu0 %2312
      %2314 = vrot.lane.b32.xlu0 %v2184, 48
      %v2315 = vpop.permute.xlu0 %2314
      %2316 = vrot.lane.b32.xlu0 %v2186, 48
      %v2317 = vpop.permute.xlu0 %2316
      %2318 = vrot.lane.b32.xlu0 %v2188, 48
      %v2319 = vpop.permute.xlu0 %2318
      %2320 = vrot.lane.b32.xlu0 %v2190, 48
      %v2321 = vpop.permute.xlu0 %2320
      %2322 = vrot.lane.b32.xlu0 %v2192, 48
      %v2323 = vpop.permute.xlu0 %2322
      %2324 = vrot.lane.b32.xlu0 %v2194, 48
      %v2325 = vpop.permute.xlu0 %2324
      %2326 = vrot.lane.b32.xlu0 %v2196, 48
      %v2327 = vpop.permute.xlu0 %2326
      %2328 = vrot.lane.b32.xlu0 %v2198, 48
      %v2329 = vpop.permute.xlu0 %2328
      %2330 = vrot.lane.b32.xlu0 %v2267, 48
      %v2331 = vpop.permute.xlu0 %2330
      %2332 = vrot.lane.b32.xlu0 %v2266, 48
      %v2333 = vpop.permute.xlu0 %2332
      %vm2334 = vsmask.f32 5376
      %v2335 = vrot.slane %v1387, 2
      %v2336 = vrot.slane %v1383, 3
      %v2337 = vor.u32 %v2335, %v2336
      %v2338 = vrot.slane %v1395, 2
      %v2339 = vrot.slane %v1391, 3
      %v2340 = vor.u32 %v2338, %v2339
      %v2341 = vsel %vm2334, %v2337, %v2340
      %v2342 = vrot.slane %v1403, 2
      %v2343 = vrot.slane %v1399, 3
      %v2344 = vor.u32 %v2342, %v2343
      %v2345 = vsel %vm2334, %v2340, %v2344
      %v2346 = vrot.slane %v1411, 2
      %v2347 = vrot.slane %v1407, 3
      %v2348 = vor.u32 %v2346, %v2347
      %v2349 = vsel %vm2334, %v2344, %v2348
      %v2350 = vrot.slane %v1419, 2
      %v2351 = vrot.slane %v1415, 3
      %v2352 = vor.u32 %v2350, %v2351
      %v2353 = vsel %vm2334, %v2348, %v2352
      %v2354 = vrot.slane %v1427, 2
      %v2355 = vrot.slane %v1423, 3
      %v2356 = vor.u32 %v2354, %v2355
      %v2357 = vsel %vm2334, %v2352, %v2356
      %v2358 = vrot.slane %v1435, 2
      %v2359 = vrot.slane %v1431, 3
      %v2360 = vor.u32 %v2358, %v2359
      %v2361 = vsel %vm2334, %v2356, %v2360
      %v2362 = vrot.slane %v1443, 2
      %v2363 = vrot.slane %v1439, 3
      %v2364 = vor.u32 %v2362, %v2363
      %v2365 = vsel %vm2334, %v2360, %v2364
      %v2366 = vrot.slane %v1451, 2
      %v2367 = vrot.slane %v1447, 3
      %v2368 = vor.u32 %v2366, %v2367
      %v2369 = vsel %vm2334, %v2364, %v2368
      %v2370 = vrot.slane %v1459, 2
      %v2371 = vrot.slane %v1455, 3
      %v2372 = vor.u32 %v2370, %v2371
      %v2373 = vsel %vm2334, %v2368, %v2372
      %v2374 = vrot.slane %v1467, 2
      %v2375 = vrot.slane %v1463, 3
      %v2376 = vor.u32 %v2374, %v2375
      %v2377 = vsel %vm2334, %v2372, %v2376
      %v2378 = vrot.slane %v1475, 2
      %v2379 = vrot.slane %v1471, 3
      %v2380 = vor.u32 %v2378, %v2379
      %v2381 = vsel %vm2334, %v2376, %v2380
      %v2382 = vrot.slane %v1483, 2
      %v2383 = vrot.slane %v1479, 3
      %v2384 = vor.u32 %v2382, %v2383
      %v2385 = vsel %vm2334, %v2380, %v2384
      %v2386 = vrot.slane %v1491, 2
      %v2387 = vrot.slane %v1487, 3
      %v2388 = vor.u32 %v2386, %v2387
      %v2389 = vsel %vm2334, %v2384, %v2388
      %v2390 = vrot.slane %v1499, 2
      %v2391 = vrot.slane %v1495, 3
      %v2392 = vor.u32 %v2390, %v2391
      %v2393 = vsel %vm2334, %v2388, %v2392
      %v2394 = vrot.slane %v1507, 2
      %v2395 = vrot.slane %v1503, 3
      %v2396 = vor.u32 %v2394, %v2395
      %v2397 = vsel %vm2334, %v2392, %v2396
      %v2398 = vrot.slane %v1515, 2
      %v2399 = vrot.slane %v1511, 3
      %v2400 = vor.u32 %v2398, %v2399
      %v2401 = vsel %vm2334, %v2396, %v2400
      %v2402 = vrot.slane %v1523, 2
      %v2403 = vrot.slane %v1519, 3
      %v2404 = vor.u32 %v2402, %v2403
      %v2405 = vsel %vm2334, %v2400, %v2404
      %v2406 = vrot.slane %v1531, 2
      %v2407 = vrot.slane %v1527, 3
      %v2408 = vor.u32 %v2406, %v2407
      %v2409 = vsel %vm2334, %v2404, %v2408
      %v2410 = vrot.slane %v1539, 2
      %v2411 = vrot.slane %v1535, 3
      %v2412 = vor.u32 %v2410, %v2411
      %v2413 = vsel %vm2334, %v2408, %v2412
      %v2414 = vrot.slane %v1547, 2
      %v2415 = vrot.slane %v1543, 3
      %v2416 = vor.u32 %v2414, %v2415
      %v2417 = vsel %vm2334, %v2412, %v2416
      %v2418 = vrot.slane %v1555, 2
      %v2419 = vrot.slane %v1551, 3
      %v2420 = vor.u32 %v2418, %v2419
      %v2421 = vsel %vm2334, %v2416, %v2420
      %v2422 = vrot.slane %v1563, 2
      %v2423 = vrot.slane %v1559, 3
      %v2424 = vor.u32 %v2422, %v2423
      %v2425 = vsel %vm2334, %v2420, %v2424
      %v2426 = vrot.slane %v1571, 2
      %v2427 = vrot.slane %v1567, 3
      %v2428 = vor.u32 %v2426, %v2427
      %v2429 = vsel %vm2334, %v2424, %v2428
      %v2430 = vrot.slane %v1579, 2
      %v2431 = vrot.slane %v1575, 3
      %v2432 = vor.u32 %v2430, %v2431
      %v2433 = vsel %vm2334, %v2428, %v2432
      %v2434 = vrot.slane %v1587, 2
      %v2435 = vrot.slane %v1583, 3
      %v2436 = vor.u32 %v2434, %v2435
      %v2437 = vsel %vm2334, %v2432, %v2436
      %v2438 = vrot.slane %v1595, 2
      %v2439 = vrot.slane %v1591, 3
      %v2440 = vor.u32 %v2438, %v2439
      %v2441 = vsel %vm2334, %v2436, %v2440
      %v2442 = vrot.slane %v1603, 2
      %v2443 = vrot.slane %v1599, 3
      %v2444 = vor.u32 %v2442, %v2443
      %v2445 = vsel %vm2334, %v2440, %v2444
      %v2446 = vrot.slane %v1611, 2
      %v2447 = vrot.slane %v1607, 3
      %v2448 = vor.u32 %v2446, %v2447
      %v2449 = vsel %vm2334, %v2444, %v2448
      %v2450 = vrot.slane %v1619, 2
      %v2451 = vrot.slane %v1615, 3
      %v2452 = vor.u32 %v2450, %v2451
      %v2453 = vsel %vm2334, %v2448, %v2452
      %v2454 = vrot.slane %v1627, 2
      %v2455 = vrot.slane %v1623, 3
      %v2456 = vor.u32 %v2454, %v2455
      %v2457 = vsel %vm2334, %v2452, %v2456
      %v2458 = vrot.slane %v2059, 2
      %v2459 = vrot.slane %v2062, 3
      %v2460 = vor.u32 %v2458, %v2459
      %v2461 = vsel %vm2334, %v2456, %v2460
      %v2463 = vshrl.u32 %v1365, 16
      %v2465 = vrot.slane %v2463, 2
      %v2466 = vshll.u32 %v1365, 16
      %v2468 = vrot.slane %v2466, 3
      %v2469 = vor.u32 %v2465, %v2468
      %v2470 = vsel %vm2334, %v2460, %v2469
      %2471 = vrot.lane.b32.xlu0 %v2341, 56
      %v2472 = vpop.permute.xlu0 %2471
      %2473 = vrot.lane.b32.xlu0 %v2345, 56
      %v2474 = vpop.permute.xlu0 %2473
      %2475 = vrot.lane.b32.xlu0 %v2349, 56
      %v2476 = vpop.permute.xlu0 %2475
      %2477 = vrot.lane.b32.xlu0 %v2353, 56
      %v2478 = vpop.permute.xlu0 %2477
      %2479 = vrot.lane.b32.xlu0 %v2357, 56
      %v2480 = vpop.permute.xlu0 %2479
      %2481 = vrot.lane.b32.xlu0 %v2361, 56
      %v2482 = vpop.permute.xlu0 %2481
      %2483 = vrot.lane.b32.xlu0 %v2365, 56
      %v2484 = vpop.permute.xlu0 %2483
      %2485 = vrot.lane.b32.xlu0 %v2369, 56
      %v2486 = vpop.permute.xlu0 %2485
      %2487 = vrot.lane.b32.xlu0 %v2373, 56
      %v2488 = vpop.permute.xlu0 %2487
      %2489 = vrot.lane.b32.xlu0 %v2377, 56
      %v2490 = vpop.permute.xlu0 %2489
      %2491 = vrot.lane.b32.xlu0 %v2381, 56
      %v2492 = vpop.permute.xlu0 %2491
      %2493 = vrot.lane.b32.xlu0 %v2385, 56
      %v2494 = vpop.permute.xlu0 %2493
      %2495 = vrot.lane.b32.xlu0 %v2389, 56
      %v2496 = vpop.permute.xlu0 %2495
      %2497 = vrot.lane.b32.xlu0 %v2393, 56
      %v2498 = vpop.permute.xlu0 %2497
      %2499 = vrot.lane.b32.xlu0 %v2397, 56
      %v2500 = vpop.permute.xlu0 %2499
      %2501 = vrot.lane.b32.xlu0 %v2401, 56
      %v2502 = vpop.permute.xlu0 %2501
      %2503 = vrot.lane.b32.xlu0 %v2405, 56
      %v2504 = vpop.permute.xlu0 %2503
      %2505 = vrot.lane.b32.xlu0 %v2409, 56
      %v2506 = vpop.permute.xlu0 %2505
      %2507 = vrot.lane.b32.xlu0 %v2413, 56
      %v2508 = vpop.permute.xlu0 %2507
      %2509 = vrot.lane.b32.xlu0 %v2417, 56
      %v2510 = vpop.permute.xlu0 %2509
      %2511 = vrot.lane.b32.xlu0 %v2421, 56
      %v2512 = vpop.permute.xlu0 %2511
      %2513 = vrot.lane.b32.xlu0 %v2425, 56
      %v2514 = vpop.permute.xlu0 %2513
      %2515 = vrot.lane.b32.xlu0 %v2429, 56
      %v2516 = vpop.permute.xlu0 %2515
      %2517 = vrot.lane.b32.xlu0 %v2433, 56
      %v2518 = vpop.permute.xlu0 %2517
      %2519 = vrot.lane.b32.xlu0 %v2437, 56
      %v2520 = vpop.permute.xlu0 %2519
      %2521 = vrot.lane.b32.xlu0 %v2441, 56
      %v2522 = vpop.permute.xlu0 %2521
      %2523 = vrot.lane.b32.xlu0 %v2445, 56
      %v2524 = vpop.permute.xlu0 %2523
      %2525 = vrot.lane.b32.xlu0 %v2449, 56
      %v2526 = vpop.permute.xlu0 %2525
      %2527 = vrot.lane.b32.xlu0 %v2453, 56
      %v2528 = vpop.permute.xlu0 %2527
      %2529 = vrot.lane.b32.xlu0 %v2457, 56
      %v2530 = vpop.permute.xlu0 %2529
      %2531 = vrot.lane.b32.xlu0 %v2461, 56
      %v2532 = vpop.permute.xlu0 %2531
      %2533 = vrot.lane.b32.xlu0 %v2470, 56
      %v2534 = vpop.permute.xlu0 %2533
      %2535 = vrot.lane.b32.xlu0 %v2469, 56
      %v2536 = vpop.permute.xlu0 %2535
      %vm2537 = vcmask 1044480
      %v2538 = vrot.slane %v1333, 3
      %v2539 = vrot.slane %v1334, 3
      %v2540 = vsel %vm2537, %v2538, %v2539
      %v2541 = vrot.slane %v1335, 3
      %v2542 = vsel %vm2537, %v2539, %v2541
      %v2543 = vrot.slane %v1336, 3
      %v2544 = vsel %vm2537, %v2541, %v2543
      %v2545 = vrot.slane %v1337, 3
      %v2546 = vsel %vm2537, %v2543, %v2545
      %v2547 = vrot.slane %v1338, 3
      %v2548 = vsel %vm2537, %v2545, %v2547
      %v2549 = vrot.slane %v1339, 3
      %v2550 = vsel %vm2537, %v2547, %v2549
      %v2551 = vrot.slane %v1340, 3
      %v2552 = vsel %vm2537, %v2549, %v2551
      %v2553 = vrot.slane %v1341, 3
      %v2554 = vsel %vm2537, %v2551, %v2553
      %v2555 = vrot.slane %v1342, 3
      %v2556 = vsel %vm2537, %v2553, %v2555
      %v2557 = vrot.slane %v1343, 3
      %v2558 = vsel %vm2537, %v2555, %v2557
      %v2559 = vrot.slane %v1344, 3
      %v2560 = vsel %vm2537, %v2557, %v2559
      %v2561 = vrot.slane %v1345, 3
      %v2562 = vsel %vm2537, %v2559, %v2561
      %v2563 = vrot.slane %v1346, 3
      %v2564 = vsel %vm2537, %v2561, %v2563
      %v2565 = vrot.slane %v1347, 3
      %v2566 = vsel %vm2537, %v2563, %v2565
      %v2567 = vrot.slane %v1348, 3
      %v2568 = vsel %vm2537, %v2565, %v2567
      %v2569 = vrot.slane %v1349, 3
      %v2570 = vsel %vm2537, %v2567, %v2569
      %v2571 = vrot.slane %v1350, 3
      %v2572 = vsel %vm2537, %v2569, %v2571
      %v2573 = vrot.slane %v1351, 3
      %v2574 = vsel %vm2537, %v2571, %v2573
      %v2575 = vrot.slane %v1352, 3
      %v2576 = vsel %vm2537, %v2573, %v2575
      %v2577 = vrot.slane %v1353, 3
      %v2578 = vsel %vm2537, %v2575, %v2577
      %v2579 = vrot.slane %v1354, 3
      %v2580 = vsel %vm2537, %v2577, %v2579
      %v2581 = vrot.slane %v1355, 3
      %v2582 = vsel %vm2537, %v2579, %v2581
      %v2583 = vrot.slane %v1356, 3
      %v2584 = vsel %vm2537, %v2581, %v2583
      %v2585 = vrot.slane %v1357, 3
      %v2586 = vsel %vm2537, %v2583, %v2585
      %v2587 = vrot.slane %v1358, 3
      %v2588 = vsel %vm2537, %v2585, %v2587
      %v2589 = vrot.slane %v1359, 3
      %v2590 = vsel %vm2537, %v2587, %v2589
      %v2591 = vrot.slane %v1360, 3
      %v2592 = vsel %vm2537, %v2589, %v2591
      %v2593 = vrot.slane %v1361, 3
      %v2594 = vsel %vm2537, %v2591, %v2593
      %v2595 = vrot.slane %v1362, 3
      %v2596 = vsel %vm2537, %v2593, %v2595
      %v2597 = vrot.slane %v1363, 3
      %v2598 = vsel %vm2537, %v2595, %v2597
      %v2599 = vrot.slane %v1364, 3
      %v2600 = vsel %vm2537, %v2597, %v2599
      %v2601 = vrot.slane %v1365, 3
      %v2602 = vsel %vm2537, %v2599, %v2601
      %2603 = vrot.lane.b32.xlu0 %v2540, 64
      %v2604 = vpop.permute.xlu0 %2603
      %2605 = vrot.lane.b32.xlu0 %v2542, 64
      %v2606 = vpop.permute.xlu0 %2605
      %2607 = vrot.lane.b32.xlu0 %v2544, 64
      %v2608 = vpop.permute.xlu0 %2607
      %2609 = vrot.lane.b32.xlu0 %v2546, 64
      %v2610 = vpop.permute.xlu0 %2609
      %2611 = vrot.lane.b32.xlu0 %v2548, 64
      %v2612 = vpop.permute.xlu0 %2611
      %2613 = vrot.lane.b32.xlu0 %v2550, 64
      %v2614 = vpop.permute.xlu0 %2613
      %2615 = vrot.lane.b32.xlu0 %v2552, 64
      %v2616 = vpop.permute.xlu0 %2615
      %2617 = vrot.lane.b32.xlu0 %v2554, 64
      %v2618 = vpop.permute.xlu0 %2617
      %2619 = vrot.lane.b32.xlu0 %v2556, 64
      %v2620 = vpop.permute.xlu0 %2619
      %2621 = vrot.lane.b32.xlu0 %v2558, 64
      %v2622 = vpop.permute.xlu0 %2621
      %2623 = vrot.lane.b32.xlu0 %v2560, 64
      %v2624 = vpop.permute.xlu0 %2623
      %2625 = vrot.lane.b32.xlu0 %v2562, 64
      %v2626 = vpop.permute.xlu0 %2625
      %2627 = vrot.lane.b32.xlu0 %v2564, 64
      %v2628 = vpop.permute.xlu0 %2627
      %2629 = vrot.lane.b32.xlu0 %v2566, 64
      %v2630 = vpop.permute.xlu0 %2629
      %2631 = vrot.lane.b32.xlu0 %v2568, 64
      %v2632 = vpop.permute.xlu0 %2631
      %2633 = vrot.lane.b32.xlu0 %v2570, 64
      %v2634 = vpop.permute.xlu0 %2633
      %2635 = vrot.lane.b32.xlu0 %v2572, 64
      %v2636 = vpop.permute.xlu0 %2635
      %2637 = vrot.lane.b32.xlu0 %v2574, 64
      %v2638 = vpop.permute.xlu0 %2637
      %2639 = vrot.lane.b32.xlu0 %v2576, 64
      %v2640 = vpop.permute.xlu0 %2639
      %2641 = vrot.lane.b32.xlu0 %v2578, 64
      %v2642 = vpop.permute.xlu0 %2641
      %2643 = vrot.lane.b32.xlu0 %v2580, 64
      %v2644 = vpop.permute.xlu0 %2643
      %2645 = vrot.lane.b32.xlu0 %v2582, 64
      %v2646 = vpop.permute.xlu0 %2645
      %2647 = vrot.lane.b32.xlu0 %v2584, 64
      %v2648 = vpop.permute.xlu0 %2647
      %2649 = vrot.lane.b32.xlu0 %v2586, 64
      %v2650 = vpop.permute.xlu0 %2649
      %2651 = vrot.lane.b32.xlu0 %v2588, 64
      %v2652 = vpop.permute.xlu0 %2651
      %2653 = vrot.lane.b32.xlu0 %v2590, 64
      %v2654 = vpop.permute.xlu0 %2653
      %2655 = vrot.lane.b32.xlu0 %v2592, 64
      %v2656 = vpop.permute.xlu0 %2655
      %2657 = vrot.lane.b32.xlu0 %v2594, 64
      %v2658 = vpop.permute.xlu0 %2657
      %2659 = vrot.lane.b32.xlu0 %v2596, 64
      %v2660 = vpop.permute.xlu0 %2659
      %2661 = vrot.lane.b32.xlu0 %v2598, 64
      %v2662 = vpop.permute.xlu0 %2661
      %2663 = vrot.lane.b32.xlu0 %v2600, 64
      %v2664 = vpop.permute.xlu0 %2663
      %2665 = vrot.lane.b32.xlu0 %v2602, 64
      %v2666 = vpop.permute.xlu0 %2665
      %2667 = vrot.lane.b32.xlu0 %v2601, 64
      %v2668 = vpop.permute.xlu0 %2667
      %vm2669 = vcmask 64512
      %v2671 = vsel %vm2669, %v1331, %v1631
      %v2673 = vsel %vm2669, %v1332, %v1633
      %v2675 = vsel %vm2669, %v1333, %v1635
      %v2677 = vsel %vm2669, %v1334, %v1637
      %v2679 = vsel %vm2669, %v1335, %v1639
      %v2681 = vsel %vm2669, %v1336, %v1641
      %v2683 = vsel %vm2669, %v1337, %v1643
      %v2685 = vsel %vm2669, %v1338, %v1645
      %v2687 = vsel %vm2669, %v1339, %v1647
      %v2689 = vsel %vm2669, %v1340, %v1649
      %v2691 = vsel %vm2669, %v1341, %v1651
      %v2693 = vsel %vm2669, %v1342, %v1653
      %v2695 = vsel %vm2669, %v1343, %v1655
      %v2697 = vsel %vm2669, %v1344, %v1657
      %v2699 = vsel %vm2669, %v1345, %v1659
      %v2701 = vsel %vm2669, %v1346, %v1661
      %v2703 = vsel %vm2669, %v1347, %v1663
      %v2705 = vsel %vm2669, %v1348, %v1665
      %v2707 = vsel %vm2669, %v1349, %v1667
      %v2709 = vsel %vm2669, %v1350, %v1669
      %v2711 = vsel %vm2669, %v1351, %v1671
      %v2713 = vsel %vm2669, %v1352, %v1673
      %v2715 = vsel %vm2669, %v1353, %v1675
      %v2717 = vsel %vm2669, %v1354, %v1677
      %v2719 = vsel %vm2669, %v1355, %v1679
      %v2721 = vsel %vm2669, %v1356, %v1681
      %v2723 = vsel %vm2669, %v1357, %v1683
      %v2725 = vsel %vm2669, %v1358, %v1685
      %v2727 = vsel %vm2669, %v1359, %v1687
      %v2729 = vsel %vm2669, %v1360, %v1689
      %v2731 = vsel %vm2669, %v1361, %v1691
      %v2733 = vsel %vm2669, %v1362, %v1693
      %v2735 = vsel %vm2669, %v1363, %v1695
      %vm2736 = vcmask 130048
      %v2738 = vsel %vm2736, %v2671, %v1796
      %v2740 = vsel %vm2736, %v2673, %v1798
      %v2742 = vsel %vm2736, %v2675, %v1800
      %v2744 = vsel %vm2736, %v2677, %v1802
      %v2746 = vsel %vm2736, %v2679, %v1804
      %v2748 = vsel %vm2736, %v2681, %v1806
      %v2750 = vsel %vm2736, %v2683, %v1808
      %v2752 = vsel %vm2736, %v2685, %v1810
      %v2754 = vsel %vm2736, %v2687, %v1812
      %v2756 = vsel %vm2736, %v2689, %v1814
      %v2758 = vsel %vm2736, %v2691, %v1816
      %v2760 = vsel %vm2736, %v2693, %v1818
      %v2762 = vsel %vm2736, %v2695, %v1820
      %v2764 = vsel %vm2736, %v2697, %v1822
      %v2766 = vsel %vm2736, %v2699, %v1824
      %v2768 = vsel %vm2736, %v2701, %v1826
      %v2770 = vsel %vm2736, %v2703, %v1828
      %v2772 = vsel %vm2736, %v2705, %v1830
      %v2774 = vsel %vm2736, %v2707, %v1832
      %v2776 = vsel %vm2736, %v2709, %v1834
      %v2778 = vsel %vm2736, %v2711, %v1836
      %v2780 = vsel %vm2736, %v2713, %v1838
      %v2782 = vsel %vm2736, %v2715, %v1840
      %v2784 = vsel %vm2736, %v2717, %v1842
      %v2786 = vsel %vm2736, %v2719, %v1844
      %v2788 = vsel %vm2736, %v2721, %v1846
      %v2790 = vsel %vm2736, %v2723, %v1848
      %v2792 = vsel %vm2736, %v2725, %v1850
      %v2794 = vsel %vm2736, %v2727, %v1852
      %v2796 = vsel %vm2736, %v2729, %v1854
      %v2798 = vsel %vm2736, %v2731, %v1856
      %v2800 = vsel %vm2736, %v2733, %v1858
      %v2802 = vsel %vm2736, %v2735, %v1860
      %vm2803 = vcmask 195584
      %v2805 = vsel %vm2803, %v2738, %v1865
      %v2807 = vsel %vm2803, %v2740, %v1867
      %v2809 = vsel %vm2803, %v2742, %v1869
      %v2811 = vsel %vm2803, %v2744, %v1871
      %v2813 = vsel %vm2803, %v2746, %v1873
      %v2815 = vsel %vm2803, %v2748, %v1875
      %v2817 = vsel %vm2803, %v2750, %v1877
      %v2819 = vsel %vm2803, %v2752, %v1879
      %v2821 = vsel %vm2803, %v2754, %v1881
      %v2823 = vsel %vm2803, %v2756, %v1883
      %v2825 = vsel %vm2803, %v2758, %v1885
      %v2827 = vsel %vm2803, %v2760, %v1887
      %v2829 = vsel %vm2803, %v2762, %v1889
      %v2831 = vsel %vm2803, %v2764, %v1891
      %v2833 = vsel %vm2803, %v2766, %v1893
      %v2835 = vsel %vm2803, %v2768, %v1895
      %v2837 = vsel %vm2803, %v2770, %v1897
      %v2839 = vsel %vm2803, %v2772, %v1899
      %v2841 = vsel %vm2803, %v2774, %v1901
      %v2843 = vsel %vm2803, %v2776, %v1903
      %v2845 = vsel %vm2803, %v2778, %v1905
      %v2847 = vsel %vm2803, %v2780, %v1907
      %v2849 = vsel %vm2803, %v2782, %v1909
      %v2851 = vsel %vm2803, %v2784, %v1911
      %v2853 = vsel %vm2803, %v2786, %v1913
      %v2855 = vsel %vm2803, %v2788, %v1915
      %v2857 = vsel %vm2803, %v2790, %v1917
      %v2859 = vsel %vm2803, %v2792, %v1919
      %v2861 = vsel %vm2803, %v2794, %v1921
      %v2863 = vsel %vm2803, %v2796, %v1923
      %v2865 = vsel %vm2803, %v2798, %v1925
      %v2867 = vsel %vm2803, %v2800, %v1927
      %v2869 = vsel %vm2803, %v2802, %v1929
      %vm2870 = vcmask 261120
      %v2872 = vsel %vm2870, %v2805, %v2068
      %v2874 = vsel %vm2870, %v2807, %v2070
      %v2876 = vsel %vm2870, %v2809, %v2072
      %v2878 = vsel %vm2870, %v2811, %v2074
      %v2880 = vsel %vm2870, %v2813, %v2076
      %v2882 = vsel %vm2870, %v2815, %v2078
      %v2884 = vsel %vm2870, %v2817, %v2080
      %v2886 = vsel %vm2870, %v2819, %v2082
      %v2888 = vsel %vm2870, %v2821, %v2084
      %v2890 = vsel %vm2870, %v2823, %v2086
      %v2892 = vsel %vm2870, %v2825, %v2088
      %v2894 = vsel %vm2870, %v2827, %v2090
      %v2896 = vsel %vm2870, %v2829, %v2092
      %v2898 = vsel %vm2870, %v2831, %v2094
      %v2900 = vsel %vm2870, %v2833, %v2096
      %v2902 = vsel %vm2870, %v2835, %v2098
      %v2904 = vsel %vm2870, %v2837, %v2100
      %v2906 = vsel %vm2870, %v2839, %v2102
      %v2908 = vsel %vm2870, %v2841, %v2104
      %v2910 = vsel %vm2870, %v2843, %v2106
      %v2912 = vsel %vm2870, %v2845, %v2108
      %v2914 = vsel %vm2870, %v2847, %v2110
      %v2916 = vsel %vm2870, %v2849, %v2112
      %v2918 = vsel %vm2870, %v2851, %v2114
      %v2920 = vsel %vm2870, %v2853, %v2116
      %v2922 = vsel %vm2870, %v2855, %v2118
      %v2924 = vsel %vm2870, %v2857, %v2120
      %v2926 = vsel %vm2870, %v2859, %v2122
      %v2928 = vsel %vm2870, %v2861, %v2124
      %v2930 = vsel %vm2870, %v2863, %v2126
      %v2932 = vsel %vm2870, %v2865, %v2128
      %v2934 = vsel %vm2870, %v2867, %v2130
      %v2936 = vsel %vm2870, %v2869, %v2132
      %vm2937 = vcmask 326656
      %v2939 = vsel %vm2937, %v2872, %v2200
      %v2941 = vsel %vm2937, %v2874, %v2202
      %v2943 = vsel %vm2937, %v2876, %v2204
      %v2945 = vsel %vm2937, %v2878, %v2206
      %v2947 = vsel %vm2937, %v2880, %v2208
      %v2949 = vsel %vm2937, %v2882, %v2210
      %v2951 = vsel %vm2937, %v2884, %v2212
      %v2953 = vsel %vm2937, %v2886, %v2214
      %v2955 = vsel %vm2937, %v2888, %v2216
      %v2957 = vsel %vm2937, %v2890, %v2218
      %v2959 = vsel %vm2937, %v2892, %v2220
      %v2961 = vsel %vm2937, %v2894, %v2222
      %v2963 = vsel %vm2937, %v2896, %v2224
      %v2965 = vsel %vm2937, %v2898, %v2226
      %v2967 = vsel %vm2937, %v2900, %v2228
      %v2969 = vsel %vm2937, %v2902, %v2230
      %v2971 = vsel %vm2937, %v2904, %v2232
      %v2973 = vsel %vm2937, %v2906, %v2234
      %v2975 = vsel %vm2937, %v2908, %v2236
      %v2977 = vsel %vm2937, %v2910, %v2238
      %v2979 = vsel %vm2937, %v2912, %v2240
      %v2981 = vsel %vm2937, %v2914, %v2242
      %v2983 = vsel %vm2937, %v2916, %v2244
      %v2985 = vsel %vm2937, %v2918, %v2246
      %v2987 = vsel %vm2937, %v2920, %v2248
      %v2989 = vsel %vm2937, %v2922, %v2250
      %v2991 = vsel %vm2937, %v2924, %v2252
      %v2993 = vsel %vm2937, %v2926, %v2254
      %v2995 = vsel %vm2937, %v2928, %v2256
      %v2997 = vsel %vm2937, %v2930, %v2258
      %v2999 = vsel %vm2937, %v2932, %v2260
      %v3001 = vsel %vm2937, %v2934, %v2262
      %v3003 = vsel %vm2937, %v2936, %v2264
      %vm3004 = vcmask 392192
      %v3006 = vsel %vm3004, %v2939, %v2269
      %v3008 = vsel %vm3004, %v2941, %v2271
      %v3010 = vsel %vm3004, %v2943, %v2273
      %v3012 = vsel %vm3004, %v2945, %v2275
      %v3014 = vsel %vm3004, %v2947, %v2277
      %v3016 = vsel %vm3004, %v2949, %v2279
      %v3018 = vsel %vm3004, %v2951, %v2281
      %v3020 = vsel %vm3004, %v2953, %v2283
      %v3022 = vsel %vm3004, %v2955, %v2285
      %v3024 = vsel %vm3004, %v2957, %v2287
      %v3026 = vsel %vm3004, %v2959, %v2289
      %v3028 = vsel %vm3004, %v2961, %v2291
      %v3030 = vsel %vm3004, %v2963, %v2293
      %v3032 = vsel %vm3004, %v2965, %v2295
      %v3034 = vsel %vm3004, %v2967, %v2297
      %v3036 = vsel %vm3004, %v2969, %v2299
      %v3038 = vsel %vm3004, %v2971, %v2301
      %v3040 = vsel %vm3004, %v2973, %v2303
      %v3042 = vsel %vm3004, %v2975, %v2305
      %v3044 = vsel %vm3004, %v2977, %v2307
      %v3046 = vsel %vm3004, %v2979, %v2309
      %v3048 = vsel %vm3004, %v2981, %v2311
      %v3050 = vsel %vm3004, %v2983, %v2313
      %v3052 = vsel %vm3004, %v2985, %v2315
      %v3054 = vsel %vm3004, %v2987, %v2317
      %v3056 = vsel %vm3004, %v2989, %v2319
      %v3058 = vsel %vm3004, %v2991, %v2321
      %v3060 = vsel %vm3004, %v2993, %v2323
      %v3062 = vsel %vm3004, %v2995, %v2325
      %v3064 = vsel %vm3004, %v2997, %v2327
      %v3066 = vsel %vm3004, %v2999, %v2329
      %v3068 = vsel %vm3004, %v3001, %v2331
      %v3070 = vsel %vm3004, %v3003, %v2333
      %vm3071 = vcmask 457728
      %v3073 = vsel %vm3071, %v3006, %v2472
      %v3075 = vsel %vm3071, %v3008, %v2474
      %v3077 = vsel %vm3071, %v3010, %v2476
      %v3079 = vsel %vm3071, %v3012, %v2478
      %v3081 = vsel %vm3071, %v3014, %v2480
      %v3083 = vsel %vm3071, %v3016, %v2482
      %v3085 = vsel %vm3071, %v3018, %v2484
      %v3087 = vsel %vm3071, %v3020, %v2486
      %v3089 = vsel %vm3071, %v3022, %v2488
      %v3091 = vsel %vm3071, %v3024, %v2490
      %v3093 = vsel %vm3071, %v3026, %v2492
      %v3095 = vsel %vm3071, %v3028, %v2494
      %v3097 = vsel %vm3071, %v3030, %v2496
      %v3099 = vsel %vm3071, %v3032, %v2498
      %v3101 = vsel %vm3071, %v3034, %v2500
      %v3103 = vsel %vm3071, %v3036, %v2502
      %v3105 = vsel %vm3071, %v3038, %v2504
      %v3107 = vsel %vm3071, %v3040, %v2506
      %v3109 = vsel %vm3071, %v3042, %v2508
      %v3111 = vsel %vm3071, %v3044, %v2510
      %v3113 = vsel %vm3071, %v3046, %v2512
      %v3115 = vsel %vm3071, %v3048, %v2514
      %v3117 = vsel %vm3071, %v3050, %v2516
      %v3119 = vsel %vm3071, %v3052, %v2518
      %v3121 = vsel %vm3071, %v3054, %v2520
      %v3123 = vsel %vm3071, %v3056, %v2522
      %v3125 = vsel %vm3071, %v3058, %v2524
      %v3127 = vsel %vm3071, %v3060, %v2526
      %v3129 = vsel %vm3071, %v3062, %v2528
      %v3131 = vsel %vm3071, %v3064, %v2530
      %v3133 = vsel %vm3071, %v3066, %v2532
      %v3135 = vsel %vm3071, %v3068, %v2534
      %v3137 = vsel %vm3071, %v3070, %v2536
      %vm3138 = vcmask 523264
      %v3140 = vsel %vm3138, %v3073, %v2604
      %v3142 = vsel %vm3138, %v3075, %v2606
      %v3144 = vsel %vm3138, %v3077, %v2608
      %v3146 = vsel %vm3138, %v3079, %v2610
      %v3148 = vsel %vm3138, %v3081, %v2612
      %v3150 = vsel %vm3138, %v3083, %v2614
      %v3152 = vsel %vm3138, %v3085, %v2616
      %v3154 = vsel %vm3138, %v3087, %v2618
      %v3156 = vsel %vm3138, %v3089, %v2620
      %v3158 = vsel %vm3138, %v3091, %v2622
      %v3160 = vsel %vm3138, %v3093, %v2624
      %v3162 = vsel %vm3138, %v3095, %v2626
      %v3164 = vsel %vm3138, %v3097, %v2628
      %v3166 = vsel %vm3138, %v3099, %v2630
      %v3168 = vsel %vm3138, %v3101, %v2632
      %v3170 = vsel %vm3138, %v3103, %v2634
      %v3172 = vsel %vm3138, %v3105, %v2636
      %v3174 = vsel %vm3138, %v3107, %v2638
      %v3176 = vsel %vm3138, %v3109, %v2640
      %v3178 = vsel %vm3138, %v3111, %v2642
      %v3180 = vsel %vm3138, %v3113, %v2644
      %v3182 = vsel %vm3138, %v3115, %v2646
      %v3184 = vsel %vm3138, %v3117, %v2648
      %v3186 = vsel %vm3138, %v3119, %v2650
      %v3188 = vsel %vm3138, %v3121, %v2652
      %v3190 = vsel %vm3138, %v3123, %v2654
      %v3192 = vsel %vm3138, %v3125, %v2656
      %v3194 = vsel %vm3138, %v3127, %v2658
      %v3196 = vsel %vm3138, %v3129, %v2660
      %v3198 = vsel %vm3138, %v3131, %v2662
      %v3200 = vsel %vm3138, %v3133, %v2664
      %v3202 = vsel %vm3138, %v3135, %v2666
      %v3204 = vsel %vm3138, %v3137, %v2668
      %v3205 = vld [vmem:[%s6] sm:$0xf]
      %v3206 = vld [vmem:[%s6 + $0x4] sm:$0xf]
      %v3207 = vld [vmem:[%s6 + $0x8] sm:$0xf]
      %v3208 = vld [vmem:[%s6 + $0xc] sm:$0xf]
      %v3209 = vld [vmem:[%s6 + $0x10] sm:$0xf]
      %v3210 = vld [vmem:[%s6 + $0x14] sm:$0xf]
      %v3211 = vld [vmem:[%s6 + $0x18] sm:$0xf]
      %v3212 = vld [vmem:[%s6 + $0x1c] sm:$0xf]
      %v3213 = vld [vmem:[%s6 + $0x20] sm:$0xf]
      %v3214 = vld [vmem:[%s464] sm:$0xf]
      %v3215 = vld [vmem:[%s464 + $0x4] sm:$0xf]
      %v3216 = vld [vmem:[%s464 + $0x8] sm:$0xf]
      %v3217 = vld [vmem:[%s464 + $0xc] sm:$0xf]
      %v3218 = vld [vmem:[%s464 + $0x10] sm:$0xf]
      %v3219 = vld [vmem:[%s464 + $0x14] sm:$0xf]
      %v3220 = vld [vmem:[%s464 + $0x18] sm:$0xf]
      %v3221 = vld [vmem:[%s464 + $0x1c] sm:$0xf]
      %v3222 = vld [vmem:[%s464 + $0x20] sm:$0xf]
      %v3223 = vld [vmem:[%s464 + $0x24] sm:$0xf]
      %v3224 = vld [vmem:[%s464 + $0x28] sm:$0xf]
      %v3225 = vld [vmem:[%s464 + $0x2c] sm:$0xf]
      %v3226 = vld [vmem:[%s464 + $0x30] sm:$0xf]
      %v3227 = vld [vmem:[%s464 + $0x34] sm:$0xf]
      %v3228 = vld [vmem:[%s464 + $0x38] sm:$0xf]
      %v3229 = vld [vmem:[%s464 + $0x3c] sm:$0xf]
      %v3230 = vld [vmem:[%s464 + $0x40] sm:$0xf]
      %v3231 = vld [vmem:[%s464 + $0x44] sm:$0xf]
      %v3232 = vld [vmem:[%s464 + $0x48] sm:$0xf]
      %v3233 = vld [vmem:[%s464 + $0x4c] sm:$0xf]
      %v3234 = vld [vmem:[%s464 + $0x50] sm:$0xf]
      %v3235 = vld [vmem:[%s464 + $0x54] sm:$0xf]
      %v3236 = vld [vmem:[%s464 + $0x58] sm:$0xf]
      %v3237 = vld [vmem:[%s464 + $0x5c] sm:$0xf]
      %v3238 = vld [vmem:[%s464 + $0x60] sm:$0xf]
      %v3239 = vld [vmem:[%s464 + $0x64] sm:$0xf]
      %v3240 = vld [vmem:[%s464 + $0x68] sm:$0xf]
      %v3241 = vld [vmem:[%s464 + $0x6c] sm:$0xf]
      %v3242 = vld [vmem:[%s464 + $0x70] sm:$0xf]
      %v3243 = vld [vmem:[%s464 + $0x74] sm:$0xf]
      %v3244 = vld [vmem:[%s464 + $0x78] sm:$0xf]
      %v3245 = vld [vmem:[%s464 + $0x7c] sm:$0xf]
      %v3246 = vld [vmem:[%s464 + $0x80] sm:$0xf]
      %v3247 = vld [vmem:[%s464 + $0x84] sm:$0xf]
      %v3248 = vld [vmem:[%s464 + $0x88] sm:$0xf]
      %v3249 = vld [vmem:[%s464 + $0x8c] sm:$0xf]
      %v3250 = vld [vmem:[%s464 + $0x90] sm:$0xf]
      %v3251 = vld [vmem:[%s464 + $0x94] sm:$0xf]
      %v3252 = vld [vmem:[%s464 + $0x98] sm:$0xf]
      %v3253 = vld [vmem:[%s464 + $0x9c] sm:$0xf]
      %v3254 = vld [vmem:[%s464 + $0xa0] sm:$0xf]
      %v3255 = vld [vmem:[%s464 + $0xa4] sm:$0xf]
      %v3256 = vld [vmem:[%s464 + $0xa8] sm:$0xf]
      %v3257 = vld [vmem:[%s464 + $0xac] sm:$0xf]
      %v3258 = vld [vmem:[%s464 + $0xb0] sm:$0xf]
      %v3259 = vld [vmem:[%s464 + $0xb4] sm:$0xf]
      %v3260 = vld [vmem:[%s464 + $0xb8] sm:$0xf]
      %v3261 = vld [vmem:[%s464 + $0xbc] sm:$0xf]
      %v3262 = vld [vmem:[%s464 + $0xc0] sm:$0xf]
      %v3263 = vld [vmem:[%s464 + $0xc4] sm:$0xf]
      %v3264 = vld [vmem:[%s464 + $0xc8] sm:$0xf]
      %v3265 = vld [vmem:[%s464 + $0xcc] sm:$0xf]
      %v3266 = vld [vmem:[%s464 + $0xd0] sm:$0xf]
      %v3267 = vld [vmem:[%s464 + $0xd4] sm:$0xf]
      %v3268 = vld [vmem:[%s464 + $0xd8] sm:$0xf]
      %v3269 = vld [vmem:[%s464 + $0xdc] sm:$0xf]
      %v3270 = vld [vmem:[%s464 + $0xe0] sm:$0xf]
      %v3271 = vld [vmem:[%s464 + $0xe4] sm:$0xf]
      %v3272 = vld [vmem:[%s464 + $0xe8] sm:$0xf]
      %v3273 = vld [vmem:[%s464 + $0xec] sm:$0xf]
      %v3274 = vld [vmem:[%s464 + $0xf0] sm:$0xf]
      %v3275 = vld [vmem:[%s464 + $0xf4] sm:$0xf]
      %v3276 = vld [vmem:[%s464 + $0xf8] sm:$0xf]
      %v3277 = vld [vmem:[%s464 + $0xfc] sm:$0xf]
      %v3278 = vld [vmem:[%s5] sm:$0x3]
      %v3343 = vunpack.c.l.b16 %v3214
      %v3344 = vunpack.c.l.b16 %v3215
      %v3345 = vunpack.c.l.b16 %v3216
      %v3346 = vunpack.c.l.b16 %v3217
      %v3347 = vunpack.c.l.b16 %v3218
      %v3348 = vunpack.c.l.b16 %v3219
      %v3349 = vunpack.c.l.b16 %v3220
      %v3350 = vunpack.c.l.b16 %v3221
      %v3351 = vunpack.c.l.b16 %v3222
      %v3352 = vunpack.c.l.b16 %v3223
      %v3353 = vunpack.c.l.b16 %v3224
      %v3354 = vunpack.c.l.b16 %v3225
      %v3355 = vunpack.c.l.b16 %v3226
      %v3356 = vunpack.c.l.b16 %v3227
      %v3357 = vunpack.c.l.b16 %v3228
      %v3358 = vunpack.c.l.b16 %v3229
      %v3359 = vunpack.c.l.b16 %v3230
      %v3360 = vunpack.c.l.b16 %v3231
      %v3361 = vunpack.c.l.b16 %v3232
      %v3362 = vunpack.c.l.b16 %v3233
      %v3363 = vunpack.c.l.b16 %v3234
      %v3364 = vunpack.c.l.b16 %v3235
      %v3365 = vunpack.c.l.b16 %v3236
      %v3366 = vunpack.c.l.b16 %v3237
      %v3367 = vunpack.c.l.b16 %v3238
      %v3368 = vunpack.c.l.b16 %v3239
      %v3369 = vunpack.c.l.b16 %v3240
      %v3370 = vunpack.c.l.b16 %v3241
      %v3371 = vunpack.c.l.b16 %v3242
      %v3372 = vunpack.c.l.b16 %v3243
      %v3373 = vunpack.c.l.b16 %v3244
      %v3374 = vunpack.c.l.b16 %v3245
      %v3375 = vunpack.c.l.b16 %v3246
      %v3376 = vunpack.c.l.b16 %v3247
      %v3377 = vunpack.c.l.b16 %v3248
      %v3378 = vunpack.c.l.b16 %v3249
      %v3379 = vunpack.c.l.b16 %v3250
      %v3380 = vunpack.c.l.b16 %v3251
      %v3381 = vunpack.c.l.b16 %v3252
      %v3382 = vunpack.c.l.b16 %v3253
      %v3383 = vunpack.c.l.b16 %v3254
      %v3384 = vunpack.c.l.b16 %v3255
      %v3385 = vunpack.c.l.b16 %v3256
      %v3386 = vunpack.c.l.b16 %v3257
      %v3387 = vunpack.c.l.b16 %v3258
      %v3388 = vunpack.c.l.b16 %v3259
      %v3389 = vunpack.c.l.b16 %v3260
      %v3390 = vunpack.c.l.b16 %v3261
      %v3391 = vunpack.c.l.b16 %v3262
      %v3392 = vunpack.c.l.b16 %v3263
      %v3393 = vunpack.c.l.b16 %v3264
      %v3394 = vunpack.c.l.b16 %v3265
      %v3395 = vunpack.c.l.b16 %v3266
      %v3396 = vunpack.c.l.b16 %v3267
      %v3397 = vunpack.c.l.b16 %v3268
      %v3398 = vunpack.c.l.b16 %v3269
      %v3399 = vunpack.c.l.b16 %v3270
      %v3400 = vunpack.c.l.b16 %v3271
      %v3401 = vunpack.c.l.b16 %v3272
      %v3402 = vunpack.c.l.b16 %v3273
      %v3403 = vunpack.c.l.b16 %v3274
      %v3404 = vunpack.c.l.b16 %v3275
      %v3405 = vunpack.c.l.b16 %v3276
      %v3406 = vunpack.c.l.b16 %v3277
      %v3407 = vpack.c.b16 %v3344, %v3343
      %v3408 = vpack.c.b16 %v3346, %v3345
      %v3409 = vpack.c.b16 %v3348, %v3347
      %v3410 = vpack.c.b16 %v3350, %v3349
      %v3411 = vpack.c.b16 %v3352, %v3351
      %v3412 = vpack.c.b16 %v3354, %v3353
      %v3413 = vpack.c.b16 %v3356, %v3355
      %v3414 = vpack.c.b16 %v3358, %v3357
      %v3415 = vpack.c.b16 %v3360, %v3359
      %v3416 = vpack.c.b16 %v3362, %v3361
      %v3417 = vpack.c.b16 %v3364, %v3363
      %v3418 = vpack.c.b16 %v3366, %v3365
      %v3419 = vpack.c.b16 %v3368, %v3367
      %v3420 = vpack.c.b16 %v3370, %v3369
      %v3421 = vpack.c.b16 %v3372, %v3371
      %v3422 = vpack.c.b16 %v3374, %v3373
      %v3423 = vpack.c.b16 %v3376, %v3375
      %v3424 = vpack.c.b16 %v3378, %v3377
      %v3425 = vpack.c.b16 %v3380, %v3379
      %v3426 = vpack.c.b16 %v3382, %v3381
      %v3427 = vpack.c.b16 %v3384, %v3383
      %v3428 = vpack.c.b16 %v3386, %v3385
      %v3429 = vpack.c.b16 %v3388, %v3387
      %v3430 = vpack.c.b16 %v3390, %v3389
      %v3431 = vpack.c.b16 %v3392, %v3391
      %v3432 = vpack.c.b16 %v3394, %v3393
      %v3433 = vpack.c.b16 %v3396, %v3395
      %v3434 = vpack.c.b16 %v3398, %v3397
      %v3435 = vpack.c.b16 %v3400, %v3399
      %v3436 = vpack.c.b16 %v3402, %v3401
      %v3437 = vpack.c.b16 %v3404, %v3403
      %v3438 = vpack.c.b16 %v3406, %v3405
      %vm3439 = vcmask 31744
      %v3441 = vsel %vm3439, %v3407, 0
      %v3444 = vsel %vm3439, %v3408, 0
      %v3447 = vsel %vm3439, %v3409, 0
      %v3450 = vsel %vm3439, %v3410, 0
      %v3453 = vsel %vm3439, %v3411, 0
      %v3456 = vsel %vm3439, %v3412, 0
      %v3459 = vsel %vm3439, %v3413, 0
      %v3462 = vsel %vm3439, %v3414, 0
      %v3465 = vsel %vm3439, %v3415, 0
      %v3468 = vsel %vm3439, %v3416, 0
      %v3471 = vsel %vm3439, %v3417, 0
      %v3474 = vsel %vm3439, %v3418, 0
      %v3477 = vsel %vm3439, %v3419, 0
      %v3480 = vsel %vm3439, %v3420, 0
      %v3483 = vsel %vm3439, %v3421, 0
      %v3486 = vsel %vm3439, %v3422, 0
      %v3489 = vsel %vm3439, %v3423, 0
      %v3492 = vsel %vm3439, %v3424, 0
      %v3495 = vsel %vm3439, %v3425, 0
      %v3498 = vsel %vm3439, %v3426, 0
      %v3501 = vsel %vm3439, %v3427, 0
      %v3504 = vsel %vm3439, %v3428, 0
      %v3507 = vsel %vm3439, %v3429, 0
      %v3510 = vsel %vm3439, %v3430, 0
      %v3513 = vsel %vm3439, %v3431, 0
      %v3516 = vsel %vm3439, %v3432, 0
      %v3519 = vsel %vm3439, %v3433, 0
      %v3522 = vsel %vm3439, %v3434, 0
      %v3525 = vsel %vm3439, %v3435, 0
      %v3528 = vsel %vm3439, %v3436, 0
      %v3531 = vsel %vm3439, %v3437, 0
      %v3534 = vsel %vm3439, %v3438, 0
      %vm3536 = vcmask 1041408
      %v3538 = vsel %vm3536, %v3278, 0
      %3540 = vmatprep.subr.bf16.mxu0 0
      %3541 = vmatpush1.bf16.msra.mxu0 0
      %3542 = vmatprep.subr.bf16.mxu0 0
      %3543 = vmatpush1.bf16.msra.mxu0 0
      %3544 = vmatprep.subr.bf16.mxu0 0
      %3545 = vmatpush1.bf16.msra.mxu0 0
      %3546 = vmatprep.subr.bf16.mxu0 0
      %3547 = vmatpush1.bf16.msra.mxu0 0
      %3548 = vmatprep.subr.bf16.mxu0 0
      %3549 = vmatpush1.bf16.msra.mxu0 0
      %3550 = vmatprep.subr.bf16.mxu0 0
      %3551 = vmatpush1.bf16.msra.mxu0 0
      %3552 = vmatprep.subr.bf16.mxu0 0
      %3553 = vmatpush1.bf16.msra.mxu0 0
      %3554 = vmatprep.subr.bf16.mxu0 0
      %3555 = vmatpush1.bf16.msra.mxu0 %v3538
      %3556 = vmatprep.subr.bf16.mxu0 0
      %3557 = vmatpush2.bf16.msra.mxu0 0
      %3558 = vmatprep.subr.bf16.mxu0 0
      %3559 = vmatpush2.bf16.msra.mxu0 0
      %3560 = vmatprep.subr.bf16.mxu0 0
      %3561 = vmatpush2.bf16.msra.mxu0 0
      %3562 = vmatprep.subr.bf16.mxu0 0
      %3563 = vmatpush2.bf16.msra.mxu0 0
      %3564 = vmatprep.subr.bf16.mxu0 0
      %3565 = vmatpush2.bf16.msra.mxu0 0
      %3566 = vmatprep.subr.bf16.mxu0 0
      %3567 = vmatpush2.bf16.msra.mxu0 0
      %3568 = vmatprep.subr.bf16.mxu0 0
      %3569 = vmatpush2.bf16.msra.mxu0 0
      %3570 = vmatprep.subr.bf16.mxu0 0
      %3571 = vmatpush2.bf16.msra.mxu0 0
      %3572 = vmatprep.mubr.bf16.mxu0 0
      %3573 = vmatmul.mubr.bf16.gmra.mxu0 %v3441
      %v3574 = vpop.f32.mrf.mxu0
      %v3575 = vadd.f32 0.0, %v3574
      %v3576 = vpop.f32.mrf.mxu0
      %v3577 = vpop.f32.mrf.mxu0
      %v3578 = vadd.f32 0.0, %v3577
      %v3579 = vpop.f32.mrf.mxu0
      %3580 = vmatprep.mubr.bf16.mxu0 0
      %3581 = vmatmul.mubr.bf16.gmra.mxu0 %v3444
      %v3582 = vpop.f32.mrf.mxu0
      %v3583 = vadd.f32 0.0, %v3582
      %v3584 = vpop.f32.mrf.mxu0
      %v3585 = vpop.f32.mrf.mxu0
      %v3586 = vadd.f32 0.0, %v3585
      %v3587 = vpop.f32.mrf.mxu0
      %3588 = vmatprep.mubr.bf16.mxu0 0
      %3589 = vmatmul.mubr.bf16.gmra.mxu0 %v3447
      %v3590 = vpop.f32.mrf.mxu0
      %v3591 = vadd.f32 0.0, %v3590
      %v3592 = vpop.f32.mrf.mxu0
      %v3593 = vpop.f32.mrf.mxu0
      %v3594 = vadd.f32 0.0, %v3593
      %v3595 = vpop.f32.mrf.mxu0
      %3596 = vmatprep.mubr.bf16.mxu0 0
      %3597 = vmatmul.mubr.bf16.gmra.mxu0 %v3450
      %v3598 = vpop.f32.mrf.mxu0
      %v3599 = vadd.f32 0.0, %v3598
      %v3600 = vpop.f32.mrf.mxu0
      %v3601 = vpop.f32.mrf.mxu0
      %v3602 = vadd.f32 0.0, %v3601
      %v3603 = vpop.f32.mrf.mxu0
      %3604 = vmatprep.mubr.bf16.mxu0 0
      %3605 = vmatmul.mubr.bf16.gmra.mxu0 %v3453
      %v3606 = vpop.f32.mrf.mxu0
      %v3607 = vadd.f32 0.0, %v3606
      %v3608 = vpop.f32.mrf.mxu0
      %v3609 = vpop.f32.mrf.mxu0
      %v3610 = vadd.f32 0.0, %v3609
      %v3611 = vpop.f32.mrf.mxu0
      %3612 = vmatprep.mubr.bf16.mxu0 0
      %3613 = vmatmul.mubr.bf16.gmra.mxu0 %v3456
      %v3614 = vpop.f32.mrf.mxu0
      %v3615 = vadd.f32 0.0, %v3614
      %v3616 = vpop.f32.mrf.mxu0
      %v3617 = vpop.f32.mrf.mxu0
      %v3618 = vadd.f32 0.0, %v3617
      %v3619 = vpop.f32.mrf.mxu0
      %3620 = vmatprep.mubr.bf16.mxu0 0
      %3621 = vmatmul.mubr.bf16.gmra.mxu0 %v3459
      %v3622 = vpop.f32.mrf.mxu0
      %v3623 = vadd.f32 0.0, %v3622
      %v3624 = vpop.f32.mrf.mxu0
      %v3625 = vpop.f32.mrf.mxu0
      %v3626 = vadd.f32 0.0, %v3625
      %v3627 = vpop.f32.mrf.mxu0
      %3628 = vmatprep.mubr.bf16.mxu0 0
      %3629 = vmatmul.mubr.bf16.gmra.mxu0 %v3462
      %v3630 = vpop.f32.mrf.mxu0
      %v3631 = vadd.f32 0.0, %v3630
      %v3632 = vpop.f32.mrf.mxu0
      %v3633 = vpop.f32.mrf.mxu0
      %v3634 = vadd.f32 0.0, %v3633
      %v3635 = vpop.f32.mrf.mxu0
      %3636 = vmatprep.mubr.bf16.mxu0 0
      %3637 = vmatmul.mubr.bf16.gmra.mxu0 %v3465
      %v3638 = vpop.f32.mrf.mxu0
      %v3639 = vadd.f32 0.0, %v3638
      %v3640 = vpop.f32.mrf.mxu0
      %v3641 = vpop.f32.mrf.mxu0
      %v3642 = vadd.f32 0.0, %v3641
      %v3643 = vpop.f32.mrf.mxu0
      %3644 = vmatprep.mubr.bf16.mxu0 0
      %3645 = vmatmul.mubr.bf16.gmra.mxu0 %v3468
      %v3646 = vpop.f32.mrf.mxu0
      %v3647 = vadd.f32 0.0, %v3646
      %v3648 = vpop.f32.mrf.mxu0
      %v3649 = vpop.f32.mrf.mxu0
      %v3650 = vadd.f32 0.0, %v3649
      %v3651 = vpop.f32.mrf.mxu0
      %3652 = vmatprep.mubr.bf16.mxu0 0
      %3653 = vmatmul.mubr.bf16.gmra.mxu0 %v3471
      %v3654 = vpop.f32.mrf.mxu0
      %v3655 = vadd.f32 0.0, %v3654
      %v3656 = vpop.f32.mrf.mxu0
      %v3657 = vpop.f32.mrf.mxu0
      %v3658 = vadd.f32 0.0, %v3657
      %v3659 = vpop.f32.mrf.mxu0
      %3660 = vmatprep.mubr.bf16.mxu0 0
      %3661 = vmatmul.mubr.bf16.gmra.mxu0 %v3474
      %v3662 = vpop.f32.mrf.mxu0
      %v3663 = vadd.f32 0.0, %v3662
      %v3664 = vpop.f32.mrf.mxu0
      %v3665 = vpop.f32.mrf.mxu0
      %v3666 = vadd.f32 0.0, %v3665
      %v3667 = vpop.f32.mrf.mxu0
      %3668 = vmatprep.mubr.bf16.mxu0 0
      %3669 = vmatmul.mubr.bf16.gmra.mxu0 %v3477
      %v3670 = vpop.f32.mrf.mxu0
      %v3671 = vadd.f32 0.0, %v3670
      %v3672 = vpop.f32.mrf.mxu0
      %v3673 = vpop.f32.mrf.mxu0
      %v3674 = vadd.f32 0.0, %v3673
      %v3675 = vpop.f32.mrf.mxu0
      %3676 = vmatprep.mubr.bf16.mxu0 0
      %3677 = vmatmul.mubr.bf16.gmra.mxu0 %v3480
      %v3678 = vpop.f32.mrf.mxu0
      %v3679 = vadd.f32 0.0, %v3678
      %v3680 = vpop.f32.mrf.mxu0
      %v3681 = vpop.f32.mrf.mxu0
      %v3682 = vadd.f32 0.0, %v3681
      %v3683 = vpop.f32.mrf.mxu0
      %3684 = vmatprep.mubr.bf16.mxu0 0
      %3685 = vmatmul.mubr.bf16.gmra.mxu0 %v3483
      %v3686 = vpop.f32.mrf.mxu0
      %v3687 = vadd.f32 0.0, %v3686
      %v3688 = vpop.f32.mrf.mxu0
      %v3689 = vpop.f32.mrf.mxu0
      %v3690 = vadd.f32 0.0, %v3689
      %v3691 = vpop.f32.mrf.mxu0
      %3692 = vmatprep.mubr.bf16.mxu0 0
      %3693 = vmatmul.mubr.bf16.gmra.mxu0 %v3486
      %v3694 = vpop.f32.mrf.mxu0
      %v3695 = vadd.f32 0.0, %v3694
      %v3696 = vpop.f32.mrf.mxu0
      %v3697 = vpop.f32.mrf.mxu0
      %v3698 = vadd.f32 0.0, %v3697
      %v3699 = vpop.f32.mrf.mxu0
      %3700 = vmatprep.mubr.bf16.mxu0 0
      %3701 = vmatmul.mubr.bf16.gmra.mxu0 %v3489
      %v3702 = vpop.f32.mrf.mxu0
      %v3703 = vadd.f32 0.0, %v3702
      %v3704 = vpop.f32.mrf.mxu0
      %v3705 = vpop.f32.mrf.mxu0
      %v3706 = vadd.f32 0.0, %v3705
      %v3707 = vpop.f32.mrf.mxu0
      %3708 = vmatprep.mubr.bf16.mxu0 0
      %3709 = vmatmul.mubr.bf16.gmra.mxu0 %v3492
      %v3710 = vpop.f32.mrf.mxu0
      %v3711 = vadd.f32 0.0, %v3710
      %v3712 = vpop.f32.mrf.mxu0
      %v3713 = vpop.f32.mrf.mxu0
      %v3714 = vadd.f32 0.0, %v3713
      %v3715 = vpop.f32.mrf.mxu0
      %3716 = vmatprep.mubr.bf16.mxu0 0
      %3717 = vmatmul.mubr.bf16.gmra.mxu0 %v3495
      %v3718 = vpop.f32.mrf.mxu0
      %v3719 = vadd.f32 0.0, %v3718
      %v3720 = vpop.f32.mrf.mxu0
      %v3721 = vpop.f32.mrf.mxu0
      %v3722 = vadd.f32 0.0, %v3721
      %v3723 = vpop.f32.mrf.mxu0
      %3724 = vmatprep.mubr.bf16.mxu0 0
      %3725 = vmatmul.mubr.bf16.gmra.mxu0 %v3498
      %v3726 = vpop.f32.mrf.mxu0
      %v3727 = vadd.f32 0.0, %v3726
      %v3728 = vpop.f32.mrf.mxu0
      %v3729 = vpop.f32.mrf.mxu0
      %v3730 = vadd.f32 0.0, %v3729
      %v3731 = vpop.f32.mrf.mxu0
      %3732 = vmatprep.mubr.bf16.mxu0 0
      %3733 = vmatmul.mubr.bf16.gmra.mxu0 %v3501
      %v3734 = vpop.f32.mrf.mxu0
      %v3735 = vadd.f32 0.0, %v3734
      %v3736 = vpop.f32.mrf.mxu0
      %v3737 = vpop.f32.mrf.mxu0
      %v3738 = vadd.f32 0.0, %v3737
      %v3739 = vpop.f32.mrf.mxu0
      %3740 = vmatprep.mubr.bf16.mxu0 0
      %3741 = vmatmul.mubr.bf16.gmra.mxu0 %v3504
      %v3742 = vpop.f32.mrf.mxu0
      %v3743 = vadd.f32 0.0, %v3742
      %v3744 = vpop.f32.mrf.mxu0
      %v3745 = vpop.f32.mrf.mxu0
      %v3746 = vadd.f32 0.0, %v3745
      %v3747 = vpop.f32.mrf.mxu0
      %3748 = vmatprep.mubr.bf16.mxu0 0
      %3749 = vmatmul.mubr.bf16.gmra.mxu0 %v3507
      %v3750 = vpop.f32.mrf.mxu0
      %v3751 = vadd.f32 0.0, %v3750
      %v3752 = vpop.f32.mrf.mxu0
      %v3753 = vpop.f32.mrf.mxu0
      %v3754 = vadd.f32 0.0, %v3753
      %v3755 = vpop.f32.mrf.mxu0
      %3756 = vmatprep.mubr.bf16.mxu0 0
      %3757 = vmatmul.mubr.bf16.gmra.mxu0 %v3510
      %v3758 = vpop.f32.mrf.mxu0
      %v3759 = vadd.f32 0.0, %v3758
      %v3760 = vpop.f32.mrf.mxu0
      %v3761 = vpop.f32.mrf.mxu0
      %v3762 = vadd.f32 0.0, %v3761
      %v3763 = vpop.f32.mrf.mxu0
      %3764 = vmatprep.mubr.bf16.mxu0 0
      %3765 = vmatmul.mubr.bf16.gmra.mxu0 %v3513
      %v3766 = vpop.f32.mrf.mxu0
      %v3767 = vadd.f32 0.0, %v3766
      %v3768 = vpop.f32.mrf.mxu0
      %v3769 = vpop.f32.mrf.mxu0
      %v3770 = vadd.f32 0.0, %v3769
      %v3771 = vpop.f32.mrf.mxu0
      %3772 = vmatprep.mubr.bf16.mxu0 0
      %3773 = vmatmul.mubr.bf16.gmra.mxu0 %v3516
      %v3774 = vpop.f32.mrf.mxu0
      %v3775 = vadd.f32 0.0, %v3774
      %v3776 = vpop.f32.mrf.mxu0
      %v3777 = vpop.f32.mrf.mxu0
      %v3778 = vadd.f32 0.0, %v3777
      %v3779 = vpop.f32.mrf.mxu0
      %3780 = vmatprep.mubr.bf16.mxu0 0
      %3781 = vmatmul.mubr.bf16.gmra.mxu0 %v3519
      %v3782 = vpop.f32.mrf.mxu0
      %v3783 = vadd.f32 0.0, %v3782
      %v3784 = vpop.f32.mrf.mxu0
      %v3785 = vpop.f32.mrf.mxu0
      %v3786 = vadd.f32 0.0, %v3785
      %v3787 = vpop.f32.mrf.mxu0
      %3788 = vmatprep.mubr.bf16.mxu0 0
      %3789 = vmatmul.mubr.bf16.gmra.mxu0 %v3522
      %v3790 = vpop.f32.mrf.mxu0
      %v3791 = vadd.f32 0.0, %v3790
      %v3792 = vpop.f32.mrf.mxu0
      %v3793 = vpop.f32.mrf.mxu0
      %v3794 = vadd.f32 0.0, %v3793
      %v3795 = vpop.f32.mrf.mxu0
      %3796 = vmatprep.mubr.bf16.mxu0 0
      %3797 = vmatmul.mubr.bf16.gmra.mxu0 %v3525
      %v3798 = vpop.f32.mrf.mxu0
      %v3799 = vadd.f32 0.0, %v3798
      %v3800 = vpop.f32.mrf.mxu0
      %v3801 = vpop.f32.mrf.mxu0
      %v3802 = vadd.f32 0.0, %v3801
      %v3803 = vpop.f32.mrf.mxu0
      %3804 = vmatprep.mubr.bf16.mxu0 0
      %3805 = vmatmul.mubr.bf16.gmra.mxu0 %v3528
      %v3806 = vpop.f32.mrf.mxu0
      %v3807 = vadd.f32 0.0, %v3806
      %v3808 = vpop.f32.mrf.mxu0
      %v3809 = vpop.f32.mrf.mxu0
      %v3810 = vadd.f32 0.0, %v3809
      %v3811 = vpop.f32.mrf.mxu0
      %3812 = vmatprep.mubr.bf16.mxu0 0
      %3813 = vmatmul.mubr.bf16.gmra.mxu0 %v3531
      %v3814 = vpop.f32.mrf.mxu0
      %v3815 = vadd.f32 0.0, %v3814
      %v3816 = vpop.f32.mrf.mxu0
      %v3817 = vpop.f32.mrf.mxu0
      %v3818 = vadd.f32 0.0, %v3817
      %v3819 = vpop.f32.mrf.mxu0
      %3820 = vmatprep.mubr.bf16.mxu0 0
      %3821 = vmatmul.mubr.bf16.gmra.mxu0 %v3534
      %v3822 = vpop.f32.mrf.mxu0
      %v3823 = vadd.f32 0.0, %v3822
      %v3824 = vpop.f32.mrf.mxu0
      %v3825 = vpop.f32.mrf.mxu0
      %v3826 = vadd.f32 0.0, %v3825
      %v3827 = vpop.f32.mrf.mxu0
      %3828 = vdwg.mxu0
      %v3829 = vshrl.u32 %v3140, 16
      %v3831 = vrot.slane %v3829, 2
      %v3832 = vshll.u32 %v3140, 16
      %v3834 = vrot.slane %v3832, 3
      %v3835 = vor.u32 %v3831, %v3834
      %v3836 = vshrl.u32 %v3142, 16
      %v3838 = vrot.slane %v3836, 2
      %v3839 = vshll.u32 %v3142, 16
      %v3841 = vrot.slane %v3839, 3
      %v3842 = vor.u32 %v3838, %v3841
      %v3843 = vsel %vm2334, %v3835, %v3842
      %v3844 = vshrl.u32 %v3144, 16
      %v3846 = vrot.slane %v3844, 2
      %v3847 = vshll.u32 %v3144, 16
      %v3849 = vrot.slane %v3847, 3
      %v3850 = vor.u32 %v3846, %v3849
      %v3851 = vsel %vm2334, %v3842, %v3850
      %v3852 = vshrl.u32 %v3146, 16
      %v3854 = vrot.slane %v3852, 2
      %v3855 = vshll.u32 %v3146, 16
      %v3857 = vrot.slane %v3855, 3
      %v3858 = vor.u32 %v3854, %v3857
      %v3859 = vsel %vm2334, %v3850, %v3858
      %v3860 = vshrl.u32 %v3148, 16
      %v3862 = vrot.slane %v3860, 2
      %v3863 = vshll.u32 %v3148, 16
      %v3865 = vrot.slane %v3863, 3
      %v3866 = vor.u32 %v3862, %v3865
      %v3867 = vsel %vm2334, %v3858, %v3866
      %v3868 = vshrl.u32 %v3150, 16
      %v3870 = vrot.slane %v3868, 2
      %v3871 = vshll.u32 %v3150, 16
      %v3873 = vrot.slane %v3871, 3
      %v3874 = vor.u32 %v3870, %v3873
      %v3875 = vsel %vm2334, %v3866, %v3874
      %v3876 = vshrl.u32 %v3152, 16
      %v3878 = vrot.slane %v3876, 2
      %v3879 = vshll.u32 %v3152, 16
      %v3881 = vrot.slane %v3879, 3
      %v3882 = vor.u32 %v3878, %v3881
      %v3883 = vsel %vm2334, %v3874, %v3882
      %v3884 = vshrl.u32 %v3154, 16
      %v3886 = vrot.slane %v3884, 2
      %v3887 = vshll.u32 %v3154, 16
      %v3889 = vrot.slane %v3887, 3
      %v3890 = vor.u32 %v3886, %v3889
      %v3891 = vsel %vm2334, %v3882, %v3890
      %v3892 = vshrl.u32 %v3156, 16
      %v3894 = vrot.slane %v3892, 2
      %v3895 = vshll.u32 %v3156, 16
      %v3897 = vrot.slane %v3895, 3
      %v3898 = vor.u32 %v3894, %v3897
      %v3899 = vsel %vm2334, %v3890, %v3898
      %v3900 = vshrl.u32 %v3158, 16
      %v3902 = vrot.slane %v3900, 2
      %v3903 = vshll.u32 %v3158, 16
      %v3905 = vrot.slane %v3903, 3
      %v3906 = vor.u32 %v3902, %v3905
      %v3907 = vsel %vm2334, %v3898, %v3906
      %v3908 = vshrl.u32 %v3160, 16
      %v3910 = vrot.slane %v3908, 2
      %v3911 = vshll.u32 %v3160, 16
      %v3913 = vrot.slane %v3911, 3
      %v3914 = vor.u32 %v3910, %v3913
      %v3915 = vsel %vm2334, %v3906, %v3914
      %v3916 = vshrl.u32 %v3162, 16
      %v3918 = vrot.slane %v3916, 2
      %v3919 = vshll.u32 %v3162, 16
      %v3921 = vrot.slane %v3919, 3
      %v3922 = vor.u32 %v3918, %v3921
      %v3923 = vsel %vm2334, %v3914, %v3922
      %v3924 = vshrl.u32 %v3164, 16
      %v3926 = vrot.slane %v3924, 2
      %v3927 = vshll.u32 %v3164, 16
      %v3929 = vrot.slane %v3927, 3
      %v3930 = vor.u32 %v3926, %v3929
      %v3931 = vsel %vm2334, %v3922, %v3930
      %v3932 = vshrl.u32 %v3166, 16
      %v3934 = vrot.slane %v3932, 2
      %v3935 = vshll.u32 %v3166, 16
      %v3937 = vrot.slane %v3935, 3
      %v3938 = vor.u32 %v3934, %v3937
      %v3939 = vsel %vm2334, %v3930, %v3938
      %v3940 = vshrl.u32 %v3168, 16
      %v3942 = vrot.slane %v3940, 2
      %v3943 = vshll.u32 %v3168, 16
      %v3945 = vrot.slane %v3943, 3
      %v3946 = vor.u32 %v3942, %v3945
      %v3947 = vsel %vm2334, %v3938, %v3946
      %v3948 = vshrl.u32 %v3170, 16
      %v3950 = vrot.slane %v3948, 2
      %v3951 = vshll.u32 %v3170, 16
      %v3953 = vrot.slane %v3951, 3
      %v3954 = vor.u32 %v3950, %v3953
      %v3955 = vsel %vm2334, %v3946, %v3954
      %v3956 = vshrl.u32 %v3172, 16
      %v3958 = vrot.slane %v3956, 2
      %v3959 = vshll.u32 %v3172, 16
      %v3961 = vrot.slane %v3959, 3
      %v3962 = vor.u32 %v3958, %v3961
      %v3963 = vsel %vm2334, %v3954, %v3962
      %v3964 = vshrl.u32 %v3174, 16
      %v3966 = vrot.slane %v3964, 2
      %v3967 = vshll.u32 %v3174, 16
      %v3969 = vrot.slane %v3967, 3
      %v3970 = vor.u32 %v3966, %v3969
      %v3971 = vsel %vm2334, %v3962, %v3970
      %v3972 = vshrl.u32 %v3176, 16
      %v3974 = vrot.slane %v3972, 2
      %v3975 = vshll.u32 %v3176, 16
      %v3977 = vrot.slane %v3975, 3
      %v3978 = vor.u32 %v3974, %v3977
      %v3979 = vsel %vm2334, %v3970, %v3978
      %v3980 = vshrl.u32 %v3178, 16
      %v3982 = vrot.slane %v3980, 2
      %v3983 = vshll.u32 %v3178, 16
      %v3985 = vrot.slane %v3983, 3
      %v3986 = vor.u32 %v3982, %v3985
      %v3987 = vsel %vm2334, %v3978, %v3986
      %v3988 = vshrl.u32 %v3180, 16
      %v3990 = vrot.slane %v3988, 2
      %v3991 = vshll.u32 %v3180, 16
      %v3993 = vrot.slane %v3991, 3
      %v3994 = vor.u32 %v3990, %v3993
      %v3995 = vsel %vm2334, %v3986, %v3994
      %v3996 = vshrl.u32 %v3182, 16
      %v3998 = vrot.slane %v3996, 2
      %v3999 = vshll.u32 %v3182, 16
      %v4001 = vrot.slane %v3999, 3
      %v4002 = vor.u32 %v3998, %v4001
      %v4003 = vsel %vm2334, %v3994, %v4002
      %v4004 = vshrl.u32 %v3184, 16
      %v4006 = vrot.slane %v4004, 2
      %v4007 = vshll.u32 %v3184, 16
      %v4009 = vrot.slane %v4007, 3
      %v4010 = vor.u32 %v4006, %v4009
      %v4011 = vsel %vm2334, %v4002, %v4010
      %v4012 = vshrl.u32 %v3186, 16
      %v4014 = vrot.slane %v4012, 2
      %v4015 = vshll.u32 %v3186, 16
      %v4017 = vrot.slane %v4015, 3
      %v4018 = vor.u32 %v4014, %v4017
      %v4019 = vsel %vm2334, %v4010, %v4018
      %v4020 = vshrl.u32 %v3188, 16
      %v4022 = vrot.slane %v4020, 2
      %v4023 = vshll.u32 %v3188, 16
      %v4025 = vrot.slane %v4023, 3
      %v4026 = vor.u32 %v4022, %v4025
      %v4027 = vsel %vm2334, %v4018, %v4026
      %v4028 = vshrl.u32 %v3190, 16
      %v4030 = vrot.slane %v4028, 2
      %v4031 = vshll.u32 %v3190, 16
      %v4033 = vrot.slane %v4031, 3
      %v4034 = vor.u32 %v4030, %v4033
      %v4035 = vsel %vm2334, %v4026, %v4034
      %v4036 = vshrl.u32 %v3192, 16
      %v4038 = vrot.slane %v4036, 2
      %v4039 = vshll.u32 %v3192, 16
      %v4041 = vrot.slane %v4039, 3
      %v4042 = vor.u32 %v4038, %v4041
      %v4043 = vsel %vm2334, %v4034, %v4042
      %v4044 = vshrl.u32 %v3194, 16
      %v4046 = vrot.slane %v4044, 2
      %v4047 = vshll.u32 %v3194, 16
      %v4049 = vrot.slane %v4047, 3
      %v4050 = vor.u32 %v4046, %v4049
      %v4051 = vsel %vm2334, %v4042, %v4050
      %v4052 = vshrl.u32 %v3196, 16
      %v4054 = vrot.slane %v4052, 2
      %v4055 = vshll.u32 %v3196, 16
      %v4057 = vrot.slane %v4055, 3
      %v4058 = vor.u32 %v4054, %v4057
      %v4059 = vsel %vm2334, %v4050, %v4058
      %v4060 = vshrl.u32 %v3198, 16
      %v4062 = vrot.slane %v4060, 2
      %v4063 = vshll.u32 %v3198, 16
      %v4065 = vrot.slane %v4063, 3
      %v4066 = vor.u32 %v4062, %v4065
      %v4067 = vsel %vm2334, %v4058, %v4066
      %v4068 = vshrl.u32 %v3200, 16
      %v4070 = vrot.slane %v4068, 2
      %v4071 = vshll.u32 %v3200, 16
      %v4073 = vrot.slane %v4071, 3
      %v4074 = vor.u32 %v4070, %v4073
      %v4075 = vsel %vm2334, %v4066, %v4074
      %v4076 = vshrl.u32 %v3202, 16
      %v4078 = vrot.slane %v4076, 2
      %v4079 = vshll.u32 %v3202, 16
      %v4081 = vrot.slane %v4079, 3
      %v4082 = vor.u32 %v4078, %v4081
      %v4083 = vsel %vm2334, %v4074, %v4082
      %v4084 = vshrl.u32 %v3204, 16
      %v4086 = vrot.slane %v4084, 2
      %v4087 = vshll.u32 %v3204, 16
      %v4089 = vrot.slane %v4087, 3
      %v4090 = vor.u32 %v4086, %v4089
      %v4091 = vsel %vm2334, %v4082, %v4090
      %v4101 = vunpack.c.l.b16 %v3205
      %v4102 = vunpack.c.l.b16 %v3206
      %v4103 = vunpack.c.l.b16 %v3207
      %v4104 = vunpack.c.l.b16 %v3208
      %v4105 = vunpack.c.l.b16 %v3209
      %v4106 = vunpack.c.l.b16 %v3210
      %v4107 = vunpack.c.l.b16 %v3211
      %v4108 = vunpack.c.l.b16 %v3212
      %v4109 = vunpack.c.l.b16 %v3213
      %v4110 = vpack.c.b16 %v4102, %v4101
      %v4111 = vpack.c.b16 %v4104, %v4103
      %v4112 = vpack.c.b16 %v4106, %v4105
      %v4113 = vpack.c.b16 %v4108, %v4107
      %v4114 = vpack.c.b16 %v4109, %v4109
      %vm4119 = vcmask 588800
      %v4121 = vsel %vm4119, %v3843, 0
      %v4124 = vsel %vm4119, %v3851, 0
      %v4127 = vsel %vm4119, %v3859, 0
      %v4130 = vsel %vm4119, %v3867, 0
      %v4133 = vsel %vm4119, %v3875, 0
      %v4136 = vsel %vm4119, %v3883, 0
      %v4139 = vsel %vm4119, %v3891, 0
      %v4142 = vsel %vm4119, %v3899, 0
      %v4145 = vsel %vm4119, %v3907, 0
      %v4148 = vsel %vm4119, %v3915, 0
      %v4151 = vsel %vm4119, %v3923, 0
      %v4154 = vsel %vm4119, %v3931, 0
      %v4157 = vsel %vm4119, %v3939, 0
      %v4160 = vsel %vm4119, %v3947, 0
      %v4163 = vsel %vm4119, %v3955, 0
      %v4166 = vsel %vm4119, %v3963, 0
      %v4169 = vsel %vm4119, %v3971, 0
      %v4172 = vsel %vm4119, %v3979, 0
      %v4175 = vsel %vm4119, %v3987, 0
      %v4178 = vsel %vm4119, %v3995, 0
      %v4181 = vsel %vm4119, %v4003, 0
      %v4184 = vsel %vm4119, %v4011, 0
      %v4187 = vsel %vm4119, %v4019, 0
      %v4190 = vsel %vm4119, %v4027, 0
      %v4193 = vsel %vm4119, %v4035, 0
      %v4196 = vsel %vm4119, %v4043, 0
      %v4199 = vsel %vm4119, %v4051, 0
      %v4202 = vsel %vm4119, %v4059, 0
      %v4205 = vsel %vm4119, %v4067, 0
      %v4208 = vsel %vm4119, %v4075, 0
      %v4211 = vsel %vm4119, %v4083, 0
      %v4214 = vsel %vm4119, %v4091, 0
      %vm4216 = vcmask 1043456
      %v4218 = vsel %vm4216, %v4114, 0
      %4220 = vmatprep.subr.bf16.mxu0 0
      %4221 = vmatpush1.bf16.msra.mxu0 0
      %4222 = vmatprep.subr.bf16.mxu0 0
      %4223 = vmatpush1.bf16.msra.mxu0 0
      %4224 = vmatprep.subr.bf16.mxu0 0
      %4225 = vmatpush1.bf16.msra.mxu0 0
      %4226 = vmatprep.subr.bf16.mxu0 0
      %4227 = vmatpush1.bf16.msra.mxu0 %v4218
      %4228 = vmatprep.subr.bf16.mxu0 0
      %4229 = vmatpush1.bf16.msra.mxu0 %v4113
      %4230 = vmatprep.subr.bf16.mxu0 0
      %4231 = vmatpush1.bf16.msra.mxu0 %v4112
      %4232 = vmatprep.subr.bf16.mxu0 0
      %4233 = vmatpush1.bf16.msra.mxu0 %v4111
      %4234 = vmatprep.subr.bf16.mxu0 0
      %4235 = vmatpush1.bf16.msra.mxu0 %v4110
      %4236 = vmatprep.subr.bf16.mxu0 0
      %4237 = vmatpush2.bf16.msra.mxu0 0
      %4238 = vmatprep.subr.bf16.mxu0 0
      %4239 = vmatpush2.bf16.msra.mxu0 0
      %4240 = vmatprep.subr.bf16.mxu0 0
      %4241 = vmatpush2.bf16.msra.mxu0 0
      %4242 = vmatprep.subr.bf16.mxu0 0
      %4243 = vmatpush2.bf16.msra.mxu0 0
      %4244 = vmatprep.subr.bf16.mxu0 0
      %4245 = vmatpush2.bf16.msra.mxu0 0
      %4246 = vmatprep.subr.bf16.mxu0 0
      %4247 = vmatpush2.bf16.msra.mxu0 0
      %4248 = vmatprep.subr.bf16.mxu0 0
      %4249 = vmatpush2.bf16.msra.mxu0 0
      %4250 = vmatprep.subr.bf16.mxu0 0
      %4251 = vmatpush2.bf16.msra.mxu0 0
      %4252 = vmatprep.mubr.bf16.mxu0 0
      %4253 = vmatmul.mubr.bf16.gmra.mxu0 %v4121
      %v4254 = vpop.f32.mrf.mxu0
      %v4255 = vadd.f32 %v3575, %v4254
      %v4256 = vpop.f32.mrf.mxu0
      %v4257 = vpop.f32.mrf.mxu0
      %v4258 = vadd.f32 %v3578, %v4257
      %v4259 = vpop.f32.mrf.mxu0
      %4260 = vmatprep.mubr.bf16.mxu0 0
      %4261 = vmatmul.mubr.bf16.gmra.mxu0 %v4124
      %v4262 = vpop.f32.mrf.mxu0
      %v4263 = vadd.f32 %v3583, %v4262
      %v4264 = vpop.f32.mrf.mxu0
      %v4265 = vpop.f32.mrf.mxu0
      %v4266 = vadd.f32 %v3586, %v4265
      %v4267 = vpop.f32.mrf.mxu0
      %4268 = vmatprep.mubr.bf16.mxu0 0
      %4269 = vmatmul.mubr.bf16.gmra.mxu0 %v4127
      %v4270 = vpop.f32.mrf.mxu0
      %v4271 = vadd.f32 %v3591, %v4270
      %v4272 = vpop.f32.mrf.mxu0
      %v4273 = vpop.f32.mrf.mxu0
      %v4274 = vadd.f32 %v3594, %v4273
      %v4275 = vpop.f32.mrf.mxu0
      %4276 = vmatprep.mubr.bf16.mxu0 0
      %4277 = vmatmul.mubr.bf16.gmra.mxu0 %v4130
      %v4278 = vpop.f32.mrf.mxu0
      %v4279 = vadd.f32 %v3599, %v4278
      %v4280 = vpop.f32.mrf.mxu0
      %v4281 = vpop.f32.mrf.mxu0
      %v4282 = vadd.f32 %v3602, %v4281
      %v4283 = vpop.f32.mrf.mxu0
      %4284 = vmatprep.mubr.bf16.mxu0 0
      %4285 = vmatmul.mubr.bf16.gmra.mxu0 %v4133
      %v4286 = vpop.f32.mrf.mxu0
      %v4287 = vadd.f32 %v3607, %v4286
      %v4288 = vpop.f32.mrf.mxu0
      %v4289 = vpop.f32.mrf.mxu0
      %v4290 = vadd.f32 %v3610, %v4289
      %v4291 = vpop.f32.mrf.mxu0
      %4292 = vmatprep.mubr.bf16.mxu0 0
      %4293 = vmatmul.mubr.bf16.gmra.mxu0 %v4136
      %v4294 = vpop.f32.mrf.mxu0
      %v4295 = vadd.f32 %v3615, %v4294
      %v4296 = vpop.f32.mrf.mxu0
      %v4297 = vpop.f32.mrf.mxu0
      %v4298 = vadd.f32 %v3618, %v4297
      %v4299 = vpop.f32.mrf.mxu0
      %4300 = vmatprep.mubr.bf16.mxu0 0
      %4301 = vmatmul.mubr.bf16.gmra.mxu0 %v4139
      %v4302 = vpop.f32.mrf.mxu0
      %v4303 = vadd.f32 %v3623, %v4302
      %v4304 = vpop.f32.mrf.mxu0
      %v4305 = vpop.f32.mrf.mxu0
      %v4306 = vadd.f32 %v3626, %v4305
      %v4307 = vpop.f32.mrf.mxu0
      %4308 = vmatprep.mubr.bf16.mxu0 0
      %4309 = vmatmul.mubr.bf16.gmra.mxu0 %v4142
      %v4310 = vpop.f32.mrf.mxu0
      %v4311 = vadd.f32 %v3631, %v4310
      %v4312 = vpop.f32.mrf.mxu0
      %v4313 = vpop.f32.mrf.mxu0
      %v4314 = vadd.f32 %v3634, %v4313
      %v4315 = vpop.f32.mrf.mxu0
      %4316 = vmatprep.mubr.bf16.mxu0 0
      %4317 = vmatmul.mubr.bf16.gmra.mxu0 %v4145
      %v4318 = vpop.f32.mrf.mxu0
      %v4319 = vadd.f32 %v3639, %v4318
      %v4320 = vpop.f32.mrf.mxu0
      %v4321 = vpop.f32.mrf.mxu0
      %v4322 = vadd.f32 %v3642, %v4321
      %v4323 = vpop.f32.mrf.mxu0
      %4324 = vmatprep.mubr.bf16.mxu0 0
      %4325 = vmatmul.mubr.bf16.gmra.mxu0 %v4148
      %v4326 = vpop.f32.mrf.mxu0
      %v4327 = vadd.f32 %v3647, %v4326
      %v4328 = vpop.f32.mrf.mxu0
      %v4329 = vpop.f32.mrf.mxu0
      %v4330 = vadd.f32 %v3650, %v4329
      %v4331 = vpop.f32.mrf.mxu0
      %4332 = vmatprep.mubr.bf16.mxu0 0
      %4333 = vmatmul.mubr.bf16.gmra.mxu0 %v4151
      %v4334 = vpop.f32.mrf.mxu0
      %v4335 = vadd.f32 %v3655, %v4334
      %v4336 = vpop.f32.mrf.mxu0
      %v4337 = vpop.f32.mrf.mxu0
      %v4338 = vadd.f32 %v3658, %v4337
      %v4339 = vpop.f32.mrf.mxu0
      %4340 = vmatprep.mubr.bf16.mxu0 0
      %4341 = vmatmul.mubr.bf16.gmra.mxu0 %v4154
      %v4342 = vpop.f32.mrf.mxu0
      %v4343 = vadd.f32 %v3663, %v4342
      %v4344 = vpop.f32.mrf.mxu0
      %v4345 = vpop.f32.mrf.mxu0
      %v4346 = vadd.f32 %v3666, %v4345
      %v4347 = vpop.f32.mrf.mxu0
      %4348 = vmatprep.mubr.bf16.mxu0 0
      %4349 = vmatmul.mubr.bf16.gmra.mxu0 %v4157
      %v4350 = vpop.f32.mrf.mxu0
      %v4351 = vadd.f32 %v3671, %v4350
      %v4352 = vpop.f32.mrf.mxu0
      %v4353 = vpop.f32.mrf.mxu0
      %v4354 = vadd.f32 %v3674, %v4353
      %v4355 = vpop.f32.mrf.mxu0
      %4356 = vmatprep.mubr.bf16.mxu0 0
      %4357 = vmatmul.mubr.bf16.gmra.mxu0 %v4160
      %v4358 = vpop.f32.mrf.mxu0
      %v4359 = vadd.f32 %v3679, %v4358
      %v4360 = vpop.f32.mrf.mxu0
      %v4361 = vpop.f32.mrf.mxu0
      %v4362 = vadd.f32 %v3682, %v4361
      %v4363 = vpop.f32.mrf.mxu0
      %4364 = vmatprep.mubr.bf16.mxu0 0
      %4365 = vmatmul.mubr.bf16.gmra.mxu0 %v4163
      %v4366 = vpop.f32.mrf.mxu0
      %v4367 = vadd.f32 %v3687, %v4366
      %v4368 = vpop.f32.mrf.mxu0
      %v4369 = vpop.f32.mrf.mxu0
      %v4370 = vadd.f32 %v3690, %v4369
      %v4371 = vpop.f32.mrf.mxu0
      %4372 = vmatprep.mubr.bf16.mxu0 0
      %4373 = vmatmul.mubr.bf16.gmra.mxu0 %v4166
      %v4374 = vpop.f32.mrf.mxu0
      %v4375 = vadd.f32 %v3695, %v4374
      %v4376 = vpop.f32.mrf.mxu0
      %v4377 = vpop.f32.mrf.mxu0
      %v4378 = vadd.f32 %v3698, %v4377
      %v4379 = vpop.f32.mrf.mxu0
      %4380 = vmatprep.mubr.bf16.mxu0 0
      %4381 = vmatmul.mubr.bf16.gmra.mxu0 %v4169
      %v4382 = vpop.f32.mrf.mxu0
      %v4383 = vadd.f32 %v3703, %v4382
      %v4384 = vpop.f32.mrf.mxu0
      %v4385 = vpop.f32.mrf.mxu0
      %v4386 = vadd.f32 %v3706, %v4385
      %v4387 = vpop.f32.mrf.mxu0
      %4388 = vmatprep.mubr.bf16.mxu0 0
      %4389 = vmatmul.mubr.bf16.gmra.mxu0 %v4172
      %v4390 = vpop.f32.mrf.mxu0
      %v4391 = vadd.f32 %v3711, %v4390
      %v4392 = vpop.f32.mrf.mxu0
      %v4393 = vpop.f32.mrf.mxu0
      %v4394 = vadd.f32 %v3714, %v4393
      %v4395 = vpop.f32.mrf.mxu0
      %4396 = vmatprep.mubr.bf16.mxu0 0
      %4397 = vmatmul.mubr.bf16.gmra.mxu0 %v4175
      %v4398 = vpop.f32.mrf.mxu0
      %v4399 = vadd.f32 %v3719, %v4398
      %v4400 = vpop.f32.mrf.mxu0
      %v4401 = vpop.f32.mrf.mxu0
      %v4402 = vadd.f32 %v3722, %v4401
      %v4403 = vpop.f32.mrf.mxu0
      %4404 = vmatprep.mubr.bf16.mxu0 0
      %4405 = vmatmul.mubr.bf16.gmra.mxu0 %v4178
      %v4406 = vpop.f32.mrf.mxu0
      %v4407 = vadd.f32 %v3727, %v4406
      %v4408 = vpop.f32.mrf.mxu0
      %v4409 = vpop.f32.mrf.mxu0
      %v4410 = vadd.f32 %v3730, %v4409
      %v4411 = vpop.f32.mrf.mxu0
      %4412 = vmatprep.mubr.bf16.mxu0 0
      %4413 = vmatmul.mubr.bf16.gmra.mxu0 %v4181
      %v4414 = vpop.f32.mrf.mxu0
      %v4415 = vadd.f32 %v3735, %v4414
      %v4416 = vpop.f32.mrf.mxu0
      %v4417 = vpop.f32.mrf.mxu0
      %v4418 = vadd.f32 %v3738, %v4417
      %v4419 = vpop.f32.mrf.mxu0
      %4420 = vmatprep.mubr.bf16.mxu0 0
      %4421 = vmatmul.mubr.bf16.gmra.mxu0 %v4184
      %v4422 = vpop.f32.mrf.mxu0
      %v4423 = vadd.f32 %v3743, %v4422
      %v4424 = vpop.f32.mrf.mxu0
      %v4425 = vpop.f32.mrf.mxu0
      %v4426 = vadd.f32 %v3746, %v4425
      %v4427 = vpop.f32.mrf.mxu0
      %4428 = vmatprep.mubr.bf16.mxu0 0
      %4429 = vmatmul.mubr.bf16.gmra.mxu0 %v4187
      %v4430 = vpop.f32.mrf.mxu0
      %v4431 = vadd.f32 %v3751, %v4430
      %v4432 = vpop.f32.mrf.mxu0
      %v4433 = vpop.f32.mrf.mxu0
      %v4434 = vadd.f32 %v3754, %v4433
      %v4435 = vpop.f32.mrf.mxu0
      %4436 = vmatprep.mubr.bf16.mxu0 0
      %4437 = vmatmul.mubr.bf16.gmra.mxu0 %v4190
      %v4438 = vpop.f32.mrf.mxu0
      %v4439 = vadd.f32 %v3759, %v4438
      %v4440 = vpop.f32.mrf.mxu0
      %v4441 = vpop.f32.mrf.mxu0
      %v4442 = vadd.f32 %v3762, %v4441
      %v4443 = vpop.f32.mrf.mxu0
      %4444 = vmatprep.mubr.bf16.mxu0 0
      %4445 = vmatmul.mubr.bf16.gmra.mxu0 %v4193
      %v4446 = vpop.f32.mrf.mxu0
      %v4447 = vadd.f32 %v3767, %v4446
      %v4448 = vpop.f32.mrf.mxu0
      %v4449 = vpop.f32.mrf.mxu0
      %v4450 = vadd.f32 %v3770, %v4449
      %v4451 = vpop.f32.mrf.mxu0
      %4452 = vmatprep.mubr.bf16.mxu0 0
      %4453 = vmatmul.mubr.bf16.gmra.mxu0 %v4196
      %v4454 = vpop.f32.mrf.mxu0
      %v4455 = vadd.f32 %v3775, %v4454
      %v4456 = vpop.f32.mrf.mxu0
      %v4457 = vpop.f32.mrf.mxu0
      %v4458 = vadd.f32 %v3778, %v4457
      %v4459 = vpop.f32.mrf.mxu0
      %4460 = vmatprep.mubr.bf16.mxu0 0
      %4461 = vmatmul.mubr.bf16.gmra.mxu0 %v4199
      %v4462 = vpop.f32.mrf.mxu0
      %v4463 = vadd.f32 %v3783, %v4462
      %v4464 = vpop.f32.mrf.mxu0
      %v4465 = vpop.f32.mrf.mxu0
      %v4466 = vadd.f32 %v3786, %v4465
      %v4467 = vpop.f32.mrf.mxu0
      %4468 = vmatprep.mubr.bf16.mxu0 0
      %4469 = vmatmul.mubr.bf16.gmra.mxu0 %v4202
      %v4470 = vpop.f32.mrf.mxu0
      %v4471 = vadd.f32 %v3791, %v4470
      %v4472 = vpop.f32.mrf.mxu0
      %v4473 = vpop.f32.mrf.mxu0
      %v4474 = vadd.f32 %v3794, %v4473
      %v4475 = vpop.f32.mrf.mxu0
      %4476 = vmatprep.mubr.bf16.mxu0 0
      %4477 = vmatmul.mubr.bf16.gmra.mxu0 %v4205
      %v4478 = vpop.f32.mrf.mxu0
      %v4479 = vadd.f32 %v3799, %v4478
      %v4480 = vpop.f32.mrf.mxu0
      %v4481 = vpop.f32.mrf.mxu0
      %v4482 = vadd.f32 %v3802, %v4481
      %v4483 = vpop.f32.mrf.mxu0
      %4484 = vmatprep.mubr.bf16.mxu0 0
      %4485 = vmatmul.mubr.bf16.gmra.mxu0 %v4208
      %v4486 = vpop.f32.mrf.mxu0
      %v4487 = vadd.f32 %v3807, %v4486
      %v4488 = vpop.f32.mrf.mxu0
      %v4489 = vpop.f32.mrf.mxu0
      %v4490 = vadd.f32 %v3810, %v4489
      %v4491 = vpop.f32.mrf.mxu0
      %4492 = vmatprep.mubr.bf16.mxu0 0
      %4493 = vmatmul.mubr.bf16.gmra.mxu0 %v4211
      %v4494 = vpop.f32.mrf.mxu0
      %v4495 = vadd.f32 %v3815, %v4494
      %v4496 = vpop.f32.mrf.mxu0
      %v4497 = vpop.f32.mrf.mxu0
      %v4498 = vadd.f32 %v3818, %v4497
      %v4499 = vpop.f32.mrf.mxu0
      %4500 = vmatprep.mubr.bf16.mxu0 0
      %4501 = vmatmul.mubr.bf16.gmra.mxu0 %v4214
      %v4502 = vpop.f32.mrf.mxu0
      %v4503 = vadd.f32 %v3823, %v4502
      %v4504 = vpop.f32.mrf.mxu0
      %v4505 = vpop.f32.mrf.mxu0
      %v4506 = vadd.f32 %v3826, %v4505
      %v4507 = vpop.f32.mrf.mxu0
      %4508 = vdwg.mxu0
      %4509 = vst.msk [vmem:[%s470] sm:$0xff] %vm2669, %v4255
      %4510 = vst.msk [vmem:[%s470 + $0x8] sm:$0xff] %vm2669, %v4258
      %4511 = vst.msk [vmem:[%s470 + $0x10] sm:$0xff] %vm2669, %v4263
      %4512 = vst.msk [vmem:[%s470 + $0x18] sm:$0xff] %vm2669, %v4266
      %4513 = vst.msk [vmem:[%s470 + $0x20] sm:$0xff] %vm2669, %v4271
      %4514 = vst.msk [vmem:[%s470 + $0x28] sm:$0xff] %vm2669, %v4274
      %4515 = vst.msk [vmem:[%s470 + $0x30] sm:$0xff] %vm2669, %v4279
      %4516 = vst.msk [vmem:[%s470 + $0x38] sm:$0xff] %vm2669, %v4282
      %4517 = vst.msk [vmem:[%s470 + $0x40] sm:$0xff] %vm2669, %v4287
      %4518 = vst.msk [vmem:[%s470 + $0x48] sm:$0xff] %vm2669, %v4290
      %4519 = vst.msk [vmem:[%s470 + $0x50] sm:$0xff] %vm2669, %v4295
      %4520 = vst.msk [vmem:[%s470 + $0x58] sm:$0xff] %vm2669, %v4298
      %4521 = vst.msk [vmem:[%s470 + $0x60] sm:$0xff] %vm2669, %v4303
      %4522 = vst.msk [vmem:[%s470 + $0x68] sm:$0xff] %vm2669, %v4306
      %4523 = vst.msk [vmem:[%s470 + $0x70] sm:$0xff] %vm2669, %v4311
      %4524 = vst.msk [vmem:[%s470 + $0x78] sm:$0xff] %vm2669, %v4314
      %4525 = vst.msk [vmem:[%s470 + $0x80] sm:$0xff] %vm2669, %v4319
      %4526 = vst.msk [vmem:[%s470 + $0x88] sm:$0xff] %vm2669, %v4322
      %4527 = vst.msk [vmem:[%s470 + $0x90] sm:$0xff] %vm2669, %v4327
      %4528 = vst.msk [vmem:[%s470 + $0x98] sm:$0xff] %vm2669, %v4330
      %4529 = vst.msk [vmem:[%s470 + $0xa0] sm:$0xff] %vm2669, %v4335
      %4530 = vst.msk [vmem:[%s470 + $0xa8] sm:$0xff] %vm2669, %v4338
      %4531 = vst.msk [vmem:[%s470 + $0xb0] sm:$0xff] %vm2669, %v4343
      %4532 = vst.msk [vmem:[%s470 + $0xb8] sm:$0xff] %vm2669, %v4346
      %4533 = vst.msk [vmem:[%s470 + $0xc0] sm:$0xff] %vm2669, %v4351
      %4534 = vst.msk [vmem:[%s470 + $0xc8] sm:$0xff] %vm2669, %v4354
      %4535 = vst.msk [vmem:[%s470 + $0xd0] sm:$0xff] %vm2669, %v4359
      %4536 = vst.msk [vmem:[%s470 + $0xd8] sm:$0xff] %vm2669, %v4362
      %4537 = vst.msk [vmem:[%s470 + $0xe0] sm:$0xff] %vm2669, %v4367
      %4538 = vst.msk [vmem:[%s470 + $0xe8] sm:$0xff] %vm2669, %v4370
      %4539 = vst.msk [vmem:[%s470 + $0xf0] sm:$0xff] %vm2669, %v4375
      %4540 = vst.msk [vmem:[%s470 + $0xf8] sm:$0xff] %vm2669, %v4378
      %4541 = vst.msk [vmem:[%s470 + $0x100] sm:$0xff] %vm2669, %v4383
      %4542 = vst.msk [vmem:[%s470 + $0x108] sm:$0xff] %vm2669, %v4386
      %4543 = vst.msk [vmem:[%s470 + $0x110] sm:$0xff] %vm2669, %v4391
      %4544 = vst.msk [vmem:[%s470 + $0x118] sm:$0xff] %vm2669, %v4394
      %4545 = vst.msk [vmem:[%s470 + $0x120] sm:$0xff] %vm2669, %v4399
      %4546 = vst.msk [vmem:[%s470 + $0x128] sm:$0xff] %vm2669, %v4402
      %4547 = vst.msk [vmem:[%s470 + $0x130] sm:$0xff] %vm2669, %v4407
      %4548 = vst.msk [vmem:[%s470 + $0x138] sm:$0xff] %vm2669, %v4410
      %4549 = vst.msk [vmem:[%s470 + $0x140] sm:$0xff] %vm2669, %v4415
      %4550 = vst.msk [vmem:[%s470 + $0x148] sm:$0xff] %vm2669, %v4418
      %4551 = vst.msk [vmem:[%s470 + $0x150] sm:$0xff] %vm2669, %v4423
      %4552 = vst.msk [vmem:[%s470 + $0x158] sm:$0xff] %vm2669, %v4426
      %4553 = vst.msk [vmem:[%s470 + $0x160] sm:$0xff] %vm2669, %v4431
      %4554 = vst.msk [vmem:[%s470 + $0x168] sm:$0xff] %vm2669, %v4434
      %4555 = vst.msk [vmem:[%s470 + $0x170] sm:$0xff] %vm2669, %v4439
      %4556 = vst.msk [vmem:[%s470 + $0x178] sm:$0xff] %vm2669, %v4442
      %4557 = vst.msk [vmem:[%s470 + $0x180] sm:$0xff] %vm2669, %v4447
      %4558 = vst.msk [vmem:[%s470 + $0x188] sm:$0xff] %vm2669, %v4450
      %4559 = vst.msk [vmem:[%s470 + $0x190] sm:$0xff] %vm2669, %v4455
      %4560 = vst.msk [vmem:[%s470 + $0x198] sm:$0xff] %vm2669, %v4458
      %4561 = vst.msk [vmem:[%s470 + $0x1a0] sm:$0xff] %vm2669, %v4463
      %4562 = vst.msk [vmem:[%s470 + $0x1a8] sm:$0xff] %vm2669, %v4466
      %4563 = vst.msk [vmem:[%s470 + $0x1b0] sm:$0xff] %vm2669, %v4471
      %4564 = vst.msk [vmem:[%s470 + $0x1b8] sm:$0xff] %vm2669, %v4474
      %4565 = vst.msk [vmem:[%s470 + $0x1c0] sm:$0xff] %vm2669, %v4479
      %4566 = vst.msk [vmem:[%s470 + $0x1c8] sm:$0xff] %vm2669, %v4482
      %4567 = vst.msk [vmem:[%s470 + $0x1d0] sm:$0xff] %vm2669, %v4487
      %4568 = vst.msk [vmem:[%s470 + $0x1d8] sm:$0xff] %vm2669, %v4490
      %4569 = vst.msk [vmem:[%s470 + $0x1e0] sm:$0xff] %vm2669, %v4495
      %4570 = vst.msk [vmem:[%s470 + $0x1e8] sm:$0xff] %vm2669, %v4498
      %4571 = vst.msk [vmem:[%s470 + $0x1f0] sm:$0xff] %vm2669, %v4503
      %4572 = vst.msk [vmem:[%s470 + $0x1f8] sm:$0xff] %vm2669, %v4506
      %v4573 = vsel %vm1194, %v4255, 0.0
      %v4574 = vsel %vm1195, %v4258, 0.0
      %v4575 = vsel %vm1196, %v4263, 0.0
      %v4576 = vsel %vm1197, %v4266, 0.0
      %v4577 = vsel %vm1198, %v4271, 0.0
      %v4578 = vsel %vm1199, %v4274, 0.0
      %v4579 = vsel %vm1200, %v4279, 0.0
      %v4580 = vsel %vm1201, %v4282, 0.0
      %v4581 = vsel %vm1202, %v4287, 0.0
      %v4582 = vsel %vm1203, %v4290, 0.0
      %v4583 = vsel %vm1204, %v4295, 0.0
      %v4584 = vsel %vm1205, %v4298, 0.0
      %v4585 = vsel %vm1206, %v4303, 0.0
      %v4586 = vsel %vm1207, %v4306, 0.0
      %v4587 = vsel %vm1208, %v4311, 0.0
      %v4588 = vsel %vm1209, %v4314, 0.0
      %v4589 = vsel %vm1210, %v4319, 0.0
      %v4590 = vsel %vm1211, %v4322, 0.0
      %v4591 = vsel %vm1212, %v4327, 0.0
      %v4592 = vsel %vm1213, %v4330, 0.0
      %v4593 = vsel %vm1214, %v4335, 0.0
      %v4594 = vsel %vm1215, %v4338, 0.0
      %v4595 = vsel %vm1216, %v4343, 0.0
      %v4596 = vsel %vm1217, %v4346, 0.0
      %v4597 = vsel %vm1218, %v4351, 0.0
      %v4598 = vsel %vm1219, %v4354, 0.0
      %v4599 = vsel %vm1220, %v4359, 0.0
      %v4600 = vsel %vm1221, %v4362, 0.0
      %v4601 = vsel %vm1222, %v4367, 0.0
      %v4602 = vsel %vm1223, %v4370, 0.0
      %v4603 = vsel %vm1224, %v4375, 0.0
      %v4604 = vsel %vm1225, %v4378, 0.0
      %v4605 = vsel %vm1226, %v4383, 0.0
      %v4606 = vsel %vm1227, %v4386, 0.0
      %v4607 = vsel %vm1228, %v4391, 0.0
      %v4608 = vsel %vm1229, %v4394, 0.0
      %v4609 = vsel %vm1230, %v4399, 0.0
      %v4610 = vsel %vm1231, %v4402, 0.0
      %v4611 = vsel %vm1232, %v4407, 0.0
      %v4612 = vsel %vm1233, %v4410, 0.0
      %v4613 = vsel %vm1234, %v4415, 0.0
      %v4614 = vsel %vm1235, %v4418, 0.0
      %v4615 = vsel %vm1236, %v4423, 0.0
      %v4616 = vsel %vm1237, %v4426, 0.0
      %v4617 = vsel %vm1238, %v4431, 0.0
      %v4618 = vsel %vm1239, %v4434, 0.0
      %v4619 = vsel %vm1240, %v4439, 0.0
      %v4620 = vsel %vm1241, %v4442, 0.0
      %v4621 = vsel %vm1242, %v4447, 0.0
      %v4622 = vsel %vm1243, %v4450, 0.0
      %v4623 = vsel %vm1244, %v4455, 0.0
      %v4624 = vsel %vm1245, %v4458, 0.0
      %v4625 = vsel %vm1246, %v4463, 0.0
      %v4626 = vsel %vm1247, %v4466, 0.0
      %v4627 = vsel %vm1248, %v4471, 0.0
      %v4628 = vsel %vm1249, %v4474, 0.0
      %v4629 = vsel %vm1250, %v4479, 0.0
      %v4630 = vsel %vm1251, %v4482, 0.0
      %v4631 = vsel %vm1252, %v4487, 0.0
      %v4632 = vsel %vm1253, %v4490, 0.0
      %v4633 = vsel %vm1254, %v4495, 0.0
      %v4634 = vsel %vm1255, %v4498, 0.0
      %v4635 = vsel %vm1256, %v4503, 0.0
      %v4636 = vsel %vm1257, %v4506, 0.0
      %v4637 = vsel %vm2669, %v4573, 0.0
      %v4638 = vsel %vm2669, %v4574, 0.0
      %v4639 = vadd.f32 %v4637, %v4638
      %v4640 = vsel %vm2669, %v4575, 0.0
      %v4641 = vadd.f32 %v4639, %v4640
      %v4642 = vsel %vm2669, %v4576, 0.0
      %v4643 = vadd.f32 %v4641, %v4642
      %v4644 = vsel %vm2669, %v4577, 0.0
      %v4645 = vadd.f32 %v4643, %v4644
      %v4646 = vsel %vm2669, %v4578, 0.0
      %v4647 = vadd.f32 %v4645, %v4646
      %v4648 = vsel %vm2669, %v4579, 0.0
      %v4649 = vadd.f32 %v4647, %v4648
      %v4650 = vsel %vm2669, %v4580, 0.0
      %v4651 = vadd.f32 %v4649, %v4650
      %v4652 = vsel %vm2669, %v4581, 0.0
      %v4653 = vadd.f32 %v4651, %v4652
      %v4654 = vsel %vm2669, %v4582, 0.0
      %v4655 = vadd.f32 %v4653, %v4654
      %v4656 = vsel %vm2669, %v4583, 0.0
      %v4657 = vadd.f32 %v4655, %v4656
      %v4658 = vsel %vm2669, %v4584, 0.0
      %v4659 = vadd.f32 %v4657, %v4658
      %v4660 = vsel %vm2669, %v4585, 0.0
      %v4661 = vadd.f32 %v4659, %v4660
      %v4662 = vsel %vm2669, %v4586, 0.0
      %v4663 = vadd.f32 %v4661, %v4662
      %v4664 = vsel %vm2669, %v4587, 0.0
      %v4665 = vadd.f32 %v4663, %v4664
      %v4666 = vsel %vm2669, %v4588, 0.0
      %v4667 = vadd.f32 %v4665, %v4666
      %v4668 = vsel %vm2669, %v4589, 0.0
      %v4669 = vadd.f32 %v4667, %v4668
      %v4670 = vsel %vm2669, %v4590, 0.0
      %v4671 = vadd.f32 %v4669, %v4670
      %v4672 = vsel %vm2669, %v4591, 0.0
      %v4673 = vadd.f32 %v4671, %v4672
      %v4674 = vsel %vm2669, %v4592, 0.0
      %v4675 = vadd.f32 %v4673, %v4674
      %v4676 = vsel %vm2669, %v4593, 0.0
      %v4677 = vadd.f32 %v4675, %v4676
      %v4678 = vsel %vm2669, %v4594, 0.0
      %v4679 = vadd.f32 %v4677, %v4678
      %v4680 = vsel %vm2669, %v4595, 0.0
      %v4681 = vadd.f32 %v4679, %v4680
      %v4682 = vsel %vm2669, %v4596, 0.0
      %v4683 = vadd.f32 %v4681, %v4682
      %v4684 = vsel %vm2669, %v4597, 0.0
      %v4685 = vadd.f32 %v4683, %v4684
      %v4686 = vsel %vm2669, %v4598, 0.0
      %v4687 = vadd.f32 %v4685, %v4686
      %v4688 = vsel %vm2669, %v4599, 0.0
      %v4689 = vadd.f32 %v4687, %v4688
      %v4690 = vsel %vm2669, %v4600, 0.0
      %v4691 = vadd.f32 %v4689, %v4690
      %v4692 = vsel %vm2669, %v4601, 0.0
      %v4693 = vadd.f32 %v4691, %v4692
      %v4694 = vsel %vm2669, %v4602, 0.0
      %v4695 = vadd.f32 %v4693, %v4694
      %v4696 = vsel %vm2669, %v4603, 0.0
      %v4697 = vadd.f32 %v4695, %v4696
      %v4698 = vsel %vm2669, %v4604, 0.0
      %v4699 = vadd.f32 %v4697, %v4698
      %v4700 = vsel %vm2669, %v4605, 0.0
      %v4701 = vadd.f32 %v4699, %v4700
      %v4702 = vsel %vm2669, %v4606, 0.0
      %v4703 = vadd.f32 %v4701, %v4702
      %v4704 = vsel %vm2669, %v4607, 0.0
      %v4705 = vadd.f32 %v4703, %v4704
      %v4706 = vsel %vm2669, %v4608, 0.0
      %v4707 = vadd.f32 %v4705, %v4706
      %v4708 = vsel %vm2669, %v4609, 0.0
      %v4709 = vadd.f32 %v4707, %v4708
      %v4710 = vsel %vm2669, %v4610, 0.0
      %v4711 = vadd.f32 %v4709, %v4710
      %v4712 = vsel %vm2669, %v4611, 0.0
      %v4713 = vadd.f32 %v4711, %v4712
      %v4714 = vsel %vm2669, %v4612, 0.0
      %v4715 = vadd.f32 %v4713, %v4714
      %v4716 = vsel %vm2669, %v4613, 0.0
      %v4717 = vadd.f32 %v4715, %v4716
      %v4718 = vsel %vm2669, %v4614, 0.0
      %v4719 = vadd.f32 %v4717, %v4718
      %v4720 = vsel %vm2669, %v4615, 0.0
      %v4721 = vadd.f32 %v4719, %v4720
      %v4722 = vsel %vm2669, %v4616, 0.0
      %v4723 = vadd.f32 %v4721, %v4722
      %v4724 = vsel %vm2669, %v4617, 0.0
      %v4725 = vadd.f32 %v4723, %v4724
      %v4726 = vsel %vm2669, %v4618, 0.0
      %v4727 = vadd.f32 %v4725, %v4726
      %v4728 = vsel %vm2669, %v4619, 0.0
      %v4729 = vadd.f32 %v4727, %v4728
      %v4730 = vsel %vm2669, %v4620, 0.0
      %v4731 = vadd.f32 %v4729, %v4730
      %v4732 = vsel %vm2669, %v4621, 0.0
      %v4733 = vadd.f32 %v4731, %v4732
      %v4734 = vsel %vm2669, %v4622, 0.0
      %v4735 = vadd.f32 %v4733, %v4734
      %v4736 = vsel %vm2669, %v4623, 0.0
      %v4737 = vadd.f32 %v4735, %v4736
      %v4738 = vsel %vm2669, %v4624, 0.0
      %v4739 = vadd.f32 %v4737, %v4738
      %v4740 = vsel %vm2669, %v4625, 0.0
      %v4741 = vadd.f32 %v4739, %v4740
      %v4742 = vsel %vm2669, %v4626, 0.0
      %v4743 = vadd.f32 %v4741, %v4742
      %v4744 = vsel %vm2669, %v4627, 0.0
      %v4745 = vadd.f32 %v4743, %v4744
      %v4746 = vsel %vm2669, %v4628, 0.0
      %v4747 = vadd.f32 %v4745, %v4746
      %v4748 = vsel %vm2669, %v4629, 0.0
      %v4749 = vadd.f32 %v4747, %v4748
      %v4750 = vsel %vm2669, %v4630, 0.0
      %v4751 = vadd.f32 %v4749, %v4750
      %v4752 = vsel %vm2669, %v4631, 0.0
      %v4753 = vadd.f32 %v4751, %v4752
      %v4754 = vsel %vm2669, %v4632, 0.0
      %v4755 = vadd.f32 %v4753, %v4754
      %v4756 = vsel %vm2669, %v4633, 0.0
      %v4757 = vadd.f32 %v4755, %v4756
      %v4758 = vsel %vm2669, %v4634, 0.0
      %v4759 = vadd.f32 %v4757, %v4758
      %v4760 = vsel %vm2669, %v4635, 0.0
      %v4761 = vadd.f32 %v4759, %v4760
      %v4762 = vsel %vm2669, %v4636, 0.0
      %v4763 = vadd.f32 %v4761, %v4762
      %v4764 = vrot.slane %v4763, 4
      %v4765 = vadd.f32 %v4763, %v4764
      %v4766 = vrot.slane %v4765, 2
      %v4767 = vadd.f32 %v4765, %v4766
      %v4768 = vrot.slane %v4767, 1
      %v4769 = vadd.f32 %v4767, %v4768
      %v4770 = vmul.f32 %v4255, %v4255
      %v4771 = vmul.f32 %v4258, %v4258
      %v4772 = vmul.f32 %v4263, %v4263
      %v4773 = vmul.f32 %v4266, %v4266
      %v4774 = vmul.f32 %v4271, %v4271
      %v4775 = vmul.f32 %v4274, %v4274
      %v4776 = vmul.f32 %v4279, %v4279
      %v4777 = vmul.f32 %v4282, %v4282
      %v4778 = vmul.f32 %v4287, %v4287
      %v4779 = vmul.f32 %v4290, %v4290
      %v4780 = vmul.f32 %v4295, %v4295
      %v4781 = vmul.f32 %v4298, %v4298
      %v4782 = vmul.f32 %v4303, %v4303
      %v4783 = vmul.f32 %v4306, %v4306
      %v4784 = vmul.f32 %v4311, %v4311
      %v4785 = vmul.f32 %v4314, %v4314
      %v4786 = vmul.f32 %v4319, %v4319
      %v4787 = vmul.f32 %v4322, %v4322
      %v4788 = vmul.f32 %v4327, %v4327
      %v4789 = vmul.f32 %v4330, %v4330
      %v4790 = vmul.f32 %v4335, %v4335
      %v4791 = vmul.f32 %v4338, %v4338
      %v4792 = vmul.f32 %v4343, %v4343
      %v4793 = vmul.f32 %v4346, %v4346
      %v4794 = vmul.f32 %v4351, %v4351
      %v4795 = vmul.f32 %v4354, %v4354
      %v4796 = vmul.f32 %v4359, %v4359
      %v4797 = vmul.f32 %v4362, %v4362
      %v4798 = vmul.f32 %v4367, %v4367
      %v4799 = vmul.f32 %v4370, %v4370
      %v4800 = vmul.f32 %v4375, %v4375
      %v4801 = vmul.f32 %v4378, %v4378
      %v4802 = vmul.f32 %v4383, %v4383
      %v4803 = vmul.f32 %v4386, %v4386
      %v4804 = vmul.f32 %v4391, %v4391
      %v4805 = vmul.f32 %v4394, %v4394
      %v4806 = vmul.f32 %v4399, %v4399
      %v4807 = vmul.f32 %v4402, %v4402
      %v4808 = vmul.f32 %v4407, %v4407
      %v4809 = vmul.f32 %v4410, %v4410
      %v4810 = vmul.f32 %v4415, %v4415
      %v4811 = vmul.f32 %v4418, %v4418
      %v4812 = vmul.f32 %v4423, %v4423
      %v4813 = vmul.f32 %v4426, %v4426
      %v4814 = vmul.f32 %v4431, %v4431
      %v4815 = vmul.f32 %v4434, %v4434
      %v4816 = vmul.f32 %v4439, %v4439
      %v4817 = vmul.f32 %v4442, %v4442
      %v4818 = vmul.f32 %v4447, %v4447
      %v4819 = vmul.f32 %v4450, %v4450
      %v4820 = vmul.f32 %v4455, %v4455
      %v4821 = vmul.f32 %v4458, %v4458
      %v4822 = vmul.f32 %v4463, %v4463
      %v4823 = vmul.f32 %v4466, %v4466
      %v4824 = vmul.f32 %v4471, %v4471
      %v4825 = vmul.f32 %v4474, %v4474
      %v4826 = vmul.f32 %v4479, %v4479
      %v4827 = vmul.f32 %v4482, %v4482
      %v4828 = vmul.f32 %v4487, %v4487
      %v4829 = vmul.f32 %v4490, %v4490
      %v4830 = vmul.f32 %v4495, %v4495
      %v4831 = vmul.f32 %v4498, %v4498
      %v4832 = vmul.f32 %v4503, %v4503
      %v4833 = vmul.f32 %v4506, %v4506
      %v4834 = vsel %vm1194, %v4770, 0.0
      %v4835 = vsel %vm1195, %v4771, 0.0
      %v4836 = vsel %vm1196, %v4772, 0.0
      %v4837 = vsel %vm1197, %v4773, 0.0
      %v4838 = vsel %vm1198, %v4774, 0.0
      %v4839 = vsel %vm1199, %v4775, 0.0
      %v4840 = vsel %vm1200, %v4776, 0.0
      %v4841 = vsel %vm1201, %v4777, 0.0
      %v4842 = vsel %vm1202, %v4778, 0.0
      %v4843 = vsel %vm1203, %v4779, 0.0
      %v4844 = vsel %vm1204, %v4780, 0.0
      %v4845 = vsel %vm1205, %v4781, 0.0
      %v4846 = vsel %vm1206, %v4782, 0.0
      %v4847 = vsel %vm1207, %v4783, 0.0
      %v4848 = vsel %vm1208, %v4784, 0.0
      %v4849 = vsel %vm1209, %v4785, 0.0
      %v4850 = vsel %vm1210, %v4786, 0.0
      %v4851 = vsel %vm1211, %v4787, 0.0
      %v4852 = vsel %vm1212, %v4788, 0.0
      %v4853 = vsel %vm1213, %v4789, 0.0
      %v4854 = vsel %vm1214, %v4790, 0.0
      %v4855 = vsel %vm1215, %v4791, 0.0
      %v4856 = vsel %vm1216, %v4792, 0.0
      %v4857 = vsel %vm1217, %v4793, 0.0
      %v4858 = vsel %vm1218, %v4794, 0.0
      %v4859 = vsel %vm1219, %v4795, 0.0
      %v4860 = vsel %vm1220, %v4796, 0.0
      %v4861 = vsel %vm1221, %v4797, 0.0
      %v4862 = vsel %vm1222, %v4798, 0.0
      %v4863 = vsel %vm1223, %v4799, 0.0
      %v4864 = vsel %vm1224, %v4800, 0.0
      %v4865 = vsel %vm1225, %v4801, 0.0
      %v4866 = vsel %vm1226, %v4802, 0.0
      %v4867 = vsel %vm1227, %v4803, 0.0
      %v4868 = vsel %vm1228, %v4804, 0.0
      %v4869 = vsel %vm1229, %v4805, 0.0
      %v4870 = vsel %vm1230, %v4806, 0.0
      %v4871 = vsel %vm1231, %v4807, 0.0
      %v4872 = vsel %vm1232, %v4808, 0.0
      %v4873 = vsel %vm1233, %v4809, 0.0
      %v4874 = vsel %vm1234, %v4810, 0.0
      %v4875 = vsel %vm1235, %v4811, 0.0
      %v4876 = vsel %vm1236, %v4812, 0.0
      %v4877 = vsel %vm1237, %v4813, 0.0
      %v4878 = vsel %vm1238, %v4814, 0.0
      %v4879 = vsel %vm1239, %v4815, 0.0
      %v4880 = vsel %vm1240, %v4816, 0.0
      %v4881 = vsel %vm1241, %v4817, 0.0
      %v4882 = vsel %vm1242, %v4818, 0.0
      %v4883 = vsel %vm1243, %v4819, 0.0
      %v4884 = vsel %vm1244, %v4820, 0.0
      %v4885 = vsel %vm1245, %v4821, 0.0
      %v4886 = vsel %vm1246, %v4822, 0.0
      %v4887 = vsel %vm1247, %v4823, 0.0
      %v4888 = vsel %vm1248, %v4824, 0.0
      %v4889 = vsel %vm1249, %v4825, 0.0
      %v4890 = vsel %vm1250, %v4826, 0.0
      %v4891 = vsel %vm1251, %v4827, 0.0
      %v4892 = vsel %vm1252, %v4828, 0.0
      %v4893 = vsel %vm1253, %v4829, 0.0
      %v4894 = vsel %vm1254, %v4830, 0.0
      %v4895 = vsel %vm1255, %v4831, 0.0
      %v4896 = vsel %vm1256, %v4832, 0.0
      %v4897 = vsel %vm1257, %v4833, 0.0
      %v4898 = vsel %vm2669, %v4834, 0.0
      %v4899 = vsel %vm2669, %v4835, 0.0
      %v4900 = vadd.f32 %v4898, %v4899
      %v4901 = vsel %vm2669, %v4836, 0.0
      %v4902 = vadd.f32 %v4900, %v4901
      %v4903 = vsel %vm2669, %v4837, 0.0
      %v4904 = vadd.f32 %v4902, %v4903
      %v4905 = vsel %vm2669, %v4838, 0.0
      %v4906 = vadd.f32 %v4904, %v4905
      %v4907 = vsel %vm2669, %v4839, 0.0
      %v4908 = vadd.f32 %v4906, %v4907
      %v4909 = vsel %vm2669, %v4840, 0.0
      %v4910 = vadd.f32 %v4908, %v4909
      %v4911 = vsel %vm2669, %v4841, 0.0
      %v4912 = vadd.f32 %v4910, %v4911
      %v4913 = vsel %vm2669, %v4842, 0.0
      %v4914 = vadd.f32 %v4912, %v4913
      %v4915 = vsel %vm2669, %v4843, 0.0
      %v4916 = vadd.f32 %v4914, %v4915
      %v4917 = vsel %vm2669, %v4844, 0.0
      %v4918 = vadd.f32 %v4916, %v4917
      %v4919 = vsel %vm2669, %v4845, 0.0
      %v4920 = vadd.f32 %v4918, %v4919
      %v4921 = vsel %vm2669, %v4846, 0.0
      %v4922 = vadd.f32 %v4920, %v4921
      %v4923 = vsel %vm2669, %v4847, 0.0
      %v4924 = vadd.f32 %v4922, %v4923
      %v4925 = vsel %vm2669, %v4848, 0.0
      %v4926 = vadd.f32 %v4924, %v4925
      %v4927 = vsel %vm2669, %v4849, 0.0
      %v4928 = vadd.f32 %v4926, %v4927
      %v4929 = vsel %vm2669, %v4850, 0.0
      %v4930 = vadd.f32 %v4928, %v4929
      %v4931 = vsel %vm2669, %v4851, 0.0
      %v4932 = vadd.f32 %v4930, %v4931
      %v4933 = vsel %vm2669, %v4852, 0.0
      %v4934 = vadd.f32 %v4932, %v4933
      %v4935 = vsel %vm2669, %v4853, 0.0
      %v4936 = vadd.f32 %v4934, %v4935
      %v4937 = vsel %vm2669, %v4854, 0.0
      %v4938 = vadd.f32 %v4936, %v4937
      %v4939 = vsel %vm2669, %v4855, 0.0
      %v4940 = vadd.f32 %v4938, %v4939
      %v4941 = vsel %vm2669, %v4856, 0.0
      %v4942 = vadd.f32 %v4940, %v4941
      %v4943 = vsel %vm2669, %v4857, 0.0
      %v4944 = vadd.f32 %v4942, %v4943
      %v4945 = vsel %vm2669, %v4858, 0.0
      %v4946 = vadd.f32 %v4944, %v4945
      %v4947 = vsel %vm2669, %v4859, 0.0
      %v4948 = vadd.f32 %v4946, %v4947
      %v4949 = vsel %vm2669, %v4860, 0.0
      %v4950 = vadd.f32 %v4948, %v4949
      %v4951 = vsel %vm2669, %v4861, 0.0
      %v4952 = vadd.f32 %v4950, %v4951
      %v4953 = vsel %vm2669, %v4862, 0.0
      %v4954 = vadd.f32 %v4952, %v4953
      %v4955 = vsel %vm2669, %v4863, 0.0
      %v4956 = vadd.f32 %v4954, %v4955
      %v4957 = vsel %vm2669, %v4864, 0.0
      %v4958 = vadd.f32 %v4956, %v4957
      %v4959 = vsel %vm2669, %v4865, 0.0
      %v4960 = vadd.f32 %v4958, %v4959
      %v4961 = vsel %vm2669, %v4866, 0.0
      %v4962 = vadd.f32 %v4960, %v4961
      %v4963 = vsel %vm2669, %v4867, 0.0
      %v4964 = vadd.f32 %v4962, %v4963
      %v4965 = vsel %vm2669, %v4868, 0.0
      %v4966 = vadd.f32 %v4964, %v4965
      %v4967 = vsel %vm2669, %v4869, 0.0
      %v4968 = vadd.f32 %v4966, %v4967
      %v4969 = vsel %vm2669, %v4870, 0.0
      %v4970 = vadd.f32 %v4968, %v4969
      %v4971 = vsel %vm2669, %v4871, 0.0
      %v4972 = vadd.f32 %v4970, %v4971
      %v4973 = vsel %vm2669, %v4872, 0.0
      %v4974 = vadd.f32 %v4972, %v4973
      %v4975 = vsel %vm2669, %v4873, 0.0
      %v4976 = vadd.f32 %v4974, %v4975
      %v4977 = vsel %vm2669, %v4874, 0.0
      %v4978 = vadd.f32 %v4976, %v4977
      %v4979 = vsel %vm2669, %v4875, 0.0
      %v4980 = vadd.f32 %v4978, %v4979
      %v4981 = vsel %vm2669, %v4876, 0.0
      %v4982 = vadd.f32 %v4980, %v4981
      %v4983 = vsel %vm2669, %v4877, 0.0
      %v4984 = vadd.f32 %v4982, %v4983
      %v4985 = vsel %vm2669, %v4878, 0.0
      %v4986 = vadd.f32 %v4984, %v4985
      %v4987 = vsel %vm2669, %v4879, 0.0
      %v4988 = vadd.f32 %v4986, %v4987
      %v4989 = vsel %vm2669, %v4880, 0.0
      %v4990 = vadd.f32 %v4988, %v4989
      %v4991 = vsel %vm2669, %v4881, 0.0
      %v4992 = vadd.f32 %v4990, %v4991
      %v4993 = vsel %vm2669, %v4882, 0.0
      %v4994 = vadd.f32 %v4992, %v4993
      %v4995 = vsel %vm2669, %v4883, 0.0
      %v4996 = vadd.f32 %v4994, %v4995
      %v4997 = vsel %vm2669, %v4884, 0.0
      %v4998 = vadd.f32 %v4996, %v4997
      %v4999 = vsel %vm2669, %v4885, 0.0
      %v5000 = vadd.f32 %v4998, %v4999
      %v5001 = vsel %vm2669, %v4886, 0.0
      %v5002 = vadd.f32 %v5000, %v5001
      %v5003 = vsel %vm2669, %v4887, 0.0
      %v5004 = vadd.f32 %v5002, %v5003
      %v5005 = vsel %vm2669, %v4888, 0.0
      %v5006 = vadd.f32 %v5004, %v5005
      %v5007 = vsel %vm2669, %v4889, 0.0
      %v5008 = vadd.f32 %v5006, %v5007
      %v5009 = vsel %vm2669, %v4890, 0.0
      %v5010 = vadd.f32 %v5008, %v5009
      %v5011 = vsel %vm2669, %v4891, 0.0
      %v5012 = vadd.f32 %v5010, %v5011
      %v5013 = vsel %vm2669, %v4892, 0.0
      %v5014 = vadd.f32 %v5012, %v5013
      %v5015 = vsel %vm2669, %v4893, 0.0
      %v5016 = vadd.f32 %v5014, %v5015
      %v5017 = vsel %vm2669, %v4894, 0.0
      %v5018 = vadd.f32 %v5016, %v5017
      %v5019 = vsel %vm2669, %v4895, 0.0
      %v5020 = vadd.f32 %v5018, %v5019
      %v5021 = vsel %vm2669, %v4896, 0.0
      %v5022 = vadd.f32 %v5020, %v5021
      %v5023 = vsel %vm2669, %v4897, 0.0
      %v5024 = vadd.f32 %v5022, %v5023
      %v5025 = vrot.slane %v5024, 4
      %v5026 = vadd.f32 %v5024, %v5025
      %v5027 = vrot.slane %v5026, 2
      %v5028 = vadd.f32 %v5026, %v5027
      %v5029 = vrot.slane %v5028, 1
      %v5030 = vadd.f32 %v5028, %v5029
      %vm5031 = vcmask 1040384
      %v5032 = vsel %vm5031, %v4769, %v5030
      %vm5033 = vcmask 58368
      %5034 = vst.msk [vmem:[%s475] sm:$0x3] %vm5033, %v5032
      %s5035 = smul.u32 64, %s22
      %p5036 = scmp.lt.s32.totalorder %s5035, 127
      %s5037 = scalar_select %p5036, %s5035, 127
      %s5038 = smul.addr %s5037, 8
      %s5039 = scalar_lea.vmem %s9, %s5038
      %p5040 = scmp.lt.s32.totalorder %s22, 1
      %s5041 = scalar_select %p5040, %s22, 1
      %s5042 = smul.addr %s5041, 2
      %s5043 = scalar_lea.vmem %s10, %s5042
      // Predicated region
      $region57: #{residual_block_forward.4} parent=55 // pred_check
        %p5044 = pneg %p258
      $region58: #{residual_block_forward.4} parent=55 // pred_check_branch
        %5046 = sbr.rel (%p5044) target = $region60
      $region59: #{residual_block_forward.4} parent=55 // pred_region
        %s5047 = smul.u32 64, %s22
      $region60: #{residual_block_forward.4} parent=55 // pred_fallthru
        _
      // Predicated region
      $region61: #{residual_block_forward.4} parent=55 // pred_check
        %p5048 = pneg %p284
      $region62: #{residual_block_forward.4} parent=55 // pred_check_branch
        %5050 = sbr.rel (%p5048) target = $region64
      $region63: #{residual_block_forward.4} parent=55 // pred_region
        _
      $region64: #{residual_block_forward.4} parent=55 // pred_fallthru
        _
    $region56: #{residual_block_forward.4} parent=5 // pred_fallthru
      _
    %p5051 = scmp.le.s32.totalorder 2, %s17
    // Predicated region
    $region65: #{residual_block_forward.4} parent=5 // pred_check
      %p5052 = pneg %p5051
    $region66: #{residual_block_forward.4} parent=5 // pred_check_branch
      %5054 = sbr.rel (%p5052) target = $region68
    $region67: #{residual_block_forward.4} parent=5 // pred_region
      %s5055 = ssub.s32 %s17, 2
      // Predicated region
      $region69: #{residual_block_forward.4} parent=67 // pred_check
        %p5056 = pneg %p264
      $region70: #{residual_block_forward.4} parent=67 // pred_check_branch
        %5058 = sbr.rel (%p5056) target = $region72
      $region71: #{residual_block_forward.4} parent=67 // pred_region
        %s5059 = smul.u32 64, %s23
        %p5060 = scmp.lt.s32.totalorder %s5059, 127
        %s5061 = scalar_select %p5060, %s5059, 127
        %s5062 = smul.addr %s5061, 8
        %s5063 = scalar_lea.vmem %s9, %s5062
      $region72: #{residual_block_forward.4} parent=67 // pred_fallthru
        _
      // Predicated region
      $region73: #{residual_block_forward.4} parent=67 // pred_check
        %p5064 = pneg %p290
      $region74: #{residual_block_forward.4} parent=67 // pred_check_branch
        %5066 = sbr.rel (%p5064) target = $region76
      $region75: #{residual_block_forward.4} parent=67 // pred_region
        %p5067 = scmp.lt.s32.totalorder %s23, 1
        %s5068 = scalar_select %p5067, %s23, 1
        %s5069 = smul.addr %s5068, 2
        %s5070 = scalar_lea.vmem %s10, %s5069
      $region76: #{residual_block_forward.4} parent=67 // pred_fallthru
        _
    $region68: #{residual_block_forward.4} parent=5 // pred_fallthru
      _
  $region6: #{residual_block_forward.4} parent=0 // loop_footer
    %s21 = sadd.s32 1, %s17
  $region7: #{residual_block_forward.4} parent=0 // loop_footer_branch
    %16 = sbr.rel target = $region3
  $region8: #{residual_block_forward.4} parent=0 // loop_exit
    _

</llo_original>
